<compile_context>
chip_gen: v5e
topology: v5e:2x2
jax: 0.10.0
libtpu: 0.0.40
codegen_flags: <defaults>
</compile_context>

<pallas_src>
import jax
import jax.numpy as jnp
from jax.experimental import pallas as pl
from jax.experimental.pallas import tpu as pltpu


def _round_up(x, m):
    return (x + m - 1) // m * m


def _pick_tile(dim_p, target):
    """Largest multiple of 128 that is <= target and divides dim_p.

    dim_p must already be a positive multiple of 128, so 128 always works.
    """
    t = min(target, dim_p)
    t = max((t // 128) * 128, 128)
    while dim_p % t:
        t -= 128
    return t


def _vmem_capacity_bytes():
    try:
        return int(pltpu.get_tpu_info().vmem_capacity_bytes)
    except Exception:
        return 64 * 1024 * 1024  # conservative (v7x per-TC VMEM)


def mm_plus_mm_kernel(a_ref, b_ref, c_ref, d_ref, o_ref):
    # One fused accumulator update per k-step: both MXU partials are summed
    # first, then a single read-modify-write of the resident (tm, tn) f32
    # output tile (init at k==0, add afterwards).
    partial = (
        jnp.dot(a_ref[...], b_ref[...], preferred_element_type=jnp.float32)
        + jnp.dot(c_ref[...], d_ref[...], preferred_element_type=jnp.float32)
    )

    @pl.when(pl.program_id(2) == 0)
    def _():
        o_ref[...] = partial

    @pl.when(pl.program_id(2) != 0)
    def _():
        o_ref[...] += partial


def _xla_fallback(input1, input2, input3, input4, out_dtype):
    t1 = jnp.dot(input1, input2, preferred_element_type=jnp.float32)
    t2 = jnp.dot(input3, input4, preferred_element_type=jnp.float32)
    return (t1 + t2).astype(out_dtype)


def mm_plus_mm(input1, input2, input3, input4, *,
               min_work_for_pallas=1 << 25,
               force_pallas=False):
    M, K = input1.shape
    K2, N = input2.shape
    assert input3.shape == (M, K) and input4.shape == (K2, N) and K == K2
    out_dtype = jnp.result_type(input1.dtype, input2.dtype,
                                input3.dtype, input4.dtype)

    # Tiny problems: custom-call dispatch + padding copies would dominate;
    # XLA's fused GEMM is the right tool there.
    if not force_pallas and (M * N * K < min_work_for_pallas):
        return _xla_fallback(input1, input2, input3, input4, out_dtype)

    # --- tile selection (generation-aware) ------------------------------
    Mp, Kp, Np = _round_up(M, 128), _round_up(K, 128), _round_up(N, 128)

    vmem_cap = _vmem_capacity_bytes()
    big_vmem = vmem_cap >= 96 * 1024 * 1024        # v5e / v6e (128 MiB)
    target_tm = 512
    target_tn = 512
    target_tk = 2048 if big_vmem else 1024         # v7x keeps tk modest

    tm = _pick_tile(Mp, target_tm)
    tn = _pick_tile(Np, target_tn)
    tk = _pick_tile(Kp, target_tk)

    # Megacore (v7x has 2 TCs sharded over the parallel axes): make sure
    # there are at least 2 output tiles, otherwise one core idles.
    while (Mp // tm) * (Np // tn) < 2:
        if tm >= tn and tm > 128:
            tm = _pick_tile(Mp, tm // 2)
        elif tn > 128:
            tn = _pick_tile(Np, tn // 2)
        else:
            break

    grid = (Mp // tm, Np // tn, Kp // tk)
    n_out_tiles = grid[0] * grid[1]
    if not force_pallas and (grid[2] < 2 or n_out_tiles < 2):
        # Grid collapses to (nearly) a single step: no pipelining benefit.
        return _xla_fallback(input1, input2, input3, input4, out_dtype)

    # --- pad only to 128-multiples (exact for matmul) -------------------
    def pad(x, rows, cols):
        r, c = x.shape
        if r == rows and c == cols:
            return x
        return jnp.pad(x, ((0, rows - r), (0, cols - c)))

    a = pad(input1, Mp, Kp)
    b = pad(input2, Kp, Np)
    c = pad(input3, Mp, Kp)
    d = pad(input4, Kp, Np)

    itemsize = jnp.dtype(a.dtype).itemsize
    # Double-buffered (A,B) + (C,D) input tiles + double-buffered f32 output.
    vmem_needed = (2 * 2 * (tm * tk + tk * tn) * itemsize
                   + 2 * tm * tn * 4)
    vmem_limit = int(min(max(vmem_needed + (8 << 20), 32 << 20),
                         int(0.72 * vmem_cap)))
    vmem_limit = max(vmem_limit, vmem_needed + (2 << 20))

    cost = pl.CostEstimate(
        flops=4 * M * N * K,                       # two GEMMs
        transcendentals=0,
        bytes_accessed=2 * (M * K + K * N) * itemsize + M * N * 4,
    )

    # Serpentine k ordering: reverse the reduction direction on odd j so the
    # tiles loaded at the last k-step are reused when j advances.
    kt = grid[2]

    def _k_ser(j, k):
        return k + (j % 2) * (kt - 1 - 2 * k)

    a_spec = pl.BlockSpec((tm, tk), lambda i, j, k: (i, _k_ser(j, k)))
    b_spec = pl.BlockSpec((tk, tn), lambda i, j, k: (_k_ser(j, k), j))
    c_spec = pl.BlockSpec((tm, tk), lambda i, j, k: (i, _k_ser(j, k)))
    d_spec = pl.BlockSpec((tk, tn), lambda i, j, k: (_k_ser(j, k), j))

    out = pl.pallas_call(
        mm_plus_mm_kernel,
        out_shape=jax.ShapeDtypeStruct((Mp, Np), jnp.float32),
        grid_spec=pltpu.PrefetchScalarGridSpec(
            num_scalar_prefetch=0,
            grid=grid,
            in_specs=[a_spec, b_spec, c_spec, d_spec],
            out_specs=pl.BlockSpec((tm, tn), lambda i, j, k: (i, j)),
        ),
        compiler_params=pltpu.CompilerParams(
            dimension_semantics=("parallel", "parallel", "arbitrary"),
            vmem_limit_bytes=vmem_limit,
        ),
        cost_estimate=cost,
    )(a, b, c, d)

    if Mp != M or Np != N:
        out = out[:M, :N]
    return out.astype(out_dtype)


if __name__ == "__main__":
    key = jax.random.PRNGKey(0)
    ks = jax.random.split(key, 12)

    # Case 1: the literal module shapes (3x3) — XLA fallback path.
    small = [jax.random.normal(ks[i], (3, 3), dtype=jnp.float32)
             for i in range(4)]
    out_s = jax.block_until_ready(mm_plus_mm(*small))
    ref_s = small[0] @ small[1] + small[2] @ small[3]
    assert jnp.allclose(out_s, ref_s, atol=1e-4, rtol=1e-4), \
        "fallback-path mismatch vs reference"

    # Case 2: aligned shapes — tiled Pallas path with multi-step reduction,
    # serpentine k ordering and direct output accumulation.
    M, K, N = 512, 2048, 512
    a = jax.random.normal(ks[4], (M, K), dtype=jnp.float32)
    b = jax.random.normal(ks[5], (K, N), dtype=jnp.float32)
    c = jax.random.normal(ks[6], (M, K), dtype=jnp.float32)
    d = jax.random.normal(ks[7], (K, N), dtype=jnp.float32)
    out = jax.block_until_ready(mm_plus_mm(a, b, c, d, force_pallas=True))
    ref = a @ b + c @ d
    assert jnp.allclose(out, ref, atol=2e-2, rtol=2e-2), \
        "pallas-path (aligned) mismatch vs reference"

    # Case 3: unaligned shapes — exercises 128-padding + output slicing.
    M, K, N = 260, 1100, 200
    a = jax.random.normal(ks[8], (M, K), dtype=jnp.float32)
    b = jax.random.normal(ks[9], (K, N), dtype=jnp.float32)
    c = jax.random.normal(ks[10], (M, K), dtype=jnp.float32)
    d = jax.random.normal(ks[11], (K, N), dtype=jnp.float32)
    out = jax.block_until_ready(mm_plus_mm(a, b, c, d, force_pallas=True))
    ref = a @ b + c @ d
    assert jnp.allclose(out, ref, atol=2e-2, rtol=2e-2), \
        "pallas-path (padded) mismatch vs reference"

    print("KERNEL_OK")
</pallas_src>

<mosaic_0001>
module attributes {stable_mosaic.version = 11 : i64} {
  func.func @mm_plus_mm_kernel(%arg0: i32, %arg1: i32, %arg2: i32, %arg3: memref<256x1024xf32, #tpu.memory_space<vmem>>, %arg4: memref<1024x512xf32, #tpu.memory_space<vmem>>, %arg5: memref<256x1024xf32, #tpu.memory_space<vmem>>, %arg6: memref<1024x512xf32, #tpu.memory_space<vmem>>, %arg7: memref<256x512xf32, #tpu.memory_space<vmem>>) attributes {dimension_semantics = [#tpu.dimension_semantics<parallel>, #tpu.dimension_semantics<parallel>, #tpu.dimension_semantics<arbitrary>], iteration_bounds = array<i64: 2, 1, 2>, scalar_prefetch = 0 : i64, scratch_operands = 0 : i64, tpu.core_type = #tpu.core_type<tc>, window_params = [{transform_indices = @transform_0, window_bounds = array<i64: 256, 1024>}, {transform_indices = @transform_1, window_bounds = array<i64: 1024, 512>}, {transform_indices = @transform_2, window_bounds = array<i64: 256, 1024>}, {transform_indices = @transform_3, window_bounds = array<i64: 1024, 512>}, {transform_indices = @transform_4, window_bounds = array<i64: 256, 512>}]} {
    %c0 = arith.constant 0 : index
    %c0_0 = arith.constant 0 : index
    %0 = vector.load %arg3[%c0, %c0_0] : memref<256x1024xf32, #tpu.memory_space<vmem>>, vector<256x1024xf32>
    %c0_1 = arith.constant 0 : index
    %c0_2 = arith.constant 0 : index
    %1 = vector.load %arg4[%c0_1, %c0_2] : memref<1024x512xf32, #tpu.memory_space<vmem>>, vector<1024x512xf32>
    %cst = arith.constant dense<0.000000e+00> : vector<256x512xf32>
    %2 = tpu.matmul %0, %1, %cst {dimension_numbers = #tpu.dot_dimension_numbers<[1], [0], [0], [1], [0, 0, 1, 1], [], []>} : vector<256x1024xf32>, vector<1024x512xf32>, vector<256x512xf32> -> vector<256x512xf32>
    %c0_3 = arith.constant 0 : index
    %c0_4 = arith.constant 0 : index
    %3 = vector.load %arg5[%c0_3, %c0_4] : memref<256x1024xf32, #tpu.memory_space<vmem>>, vector<256x1024xf32>
    %c0_5 = arith.constant 0 : index
    %c0_6 = arith.constant 0 : index
    %4 = vector.load %arg6[%c0_5, %c0_6] : memref<1024x512xf32, #tpu.memory_space<vmem>>, vector<1024x512xf32>
    %cst_7 = arith.constant dense<0.000000e+00> : vector<256x512xf32>
    %5 = tpu.matmul %3, %4, %cst_7 {dimension_numbers = #tpu.dot_dimension_numbers<[1], [0], [0], [1], [0, 0, 1, 1], [], []>} : vector<256x1024xf32>, vector<1024x512xf32>, vector<256x512xf32> -> vector<256x512xf32>
    %6 = arith.addf %2, %5 : vector<256x512xf32>
    %c0_i32 = arith.constant 0 : i32
    %7 = arith.cmpi eq, %arg2, %c0_i32 : i32
    %8 = arith.extui %7 : i1 to i32
    %c0_i32_8 = arith.constant 0 : i32
    %9 = arith.cmpi ne, %8, %c0_i32_8 : i32
    scf.if %9 {
      %c0_11 = arith.constant 0 : index
      %c0_12 = arith.constant 0 : index
      %13 = vector.load %arg7[%c0_11, %c0_12] : memref<256x512xf32, #tpu.memory_space<vmem>>, vector<256x512xf32>
      tpu.vector_store %arg7[%c0_11, %c0_12], %6 {strides = array<i32>} : memref<256x512xf32, #tpu.memory_space<vmem>>, vector<256x512xf32>,
    } else {
    }
    %c0_i32_9 = arith.constant 0 : i32
    %10 = arith.cmpi ne, %arg2, %c0_i32_9 : i32
    %11 = arith.extui %10 : i1 to i32
    %c0_i32_10 = arith.constant 0 : i32
    %12 = arith.cmpi ne, %11, %c0_i32_10 : i32
    scf.if %12 {
      %c0_11 = arith.constant 0 : index
      %c0_12 = arith.constant 0 : index
      %13 = vector.load %arg7[%c0_11, %c0_12] : memref<256x512xf32, #tpu.memory_space<vmem>>, vector<256x512xf32>
      %14 = arith.addf %13, %6 : vector<256x512xf32>
      %c0_13 = arith.constant 0 : index
      %c0_14 = arith.constant 0 : index
      %15 = vector.load %arg7[%c0_13, %c0_14] : memref<256x512xf32, #tpu.memory_space<vmem>>, vector<256x512xf32>
      tpu.vector_store %arg7[%c0_13, %c0_14], %14 {strides = array<i32>} : memref<256x512xf32, #tpu.memory_space<vmem>>, vector<256x512xf32>,
    } else {
    }
    return
  }
  func.func @transform_0(%arg0: i32, %arg1: i32, %arg2: i32) -> (i32, i32) {
    %c2_i32 = arith.constant 2 : i32
    %c0_i32 = arith.constant 0 : i32
    %0 = arith.cmpi eq, %c2_i32, %c0_i32 : i32
    %c1_i32 = arith.constant 1 : i32
    %1 = arith.select %0, %c1_i32, %c2_i32 : i32
    %2 = arith.remsi %arg1, %1 : i32
    %c0_i32_0 = arith.constant 0 : i32
    %3 = arith.cmpi ne, %2, %c0_i32_0 : i32
    %c0_i32_1 = arith.constant 0 : i32
    %4 = arith.cmpi slt, %2, %c0_i32_1 : i32
    %c0_i32_2 = arith.constant 0 : i32
    %5 = arith.cmpi slt, %1, %c0_i32_2 : i32
    %6 = arith.xori %4, %5 : i1
    %7 = arith.andi %6, %3 : i1
    %8 = arith.addi %2, %1 : i32
    %9 = arith.select %7, %8, %2 : i32
    %c2_i32_3 = arith.constant 2 : i32
    %10 = arith.muli %c2_i32_3, %arg2 : i32
    %c1_i32_4 = arith.constant 1 : i32
    %11 = arith.subi %c1_i32_4, %10 : i32
    %12 = arith.muli %9, %11 : i32
    %13 = arith.addi %arg2, %12 : i32
    %c0_i32_5 = arith.constant 0 : i32
    return %arg0, %13 : i32, i32
  }
  func.func @transform_1(%arg0: i32, %arg1: i32, %arg2: i32) -> (i32, i32) {
    %c2_i32 = arith.constant 2 : i32
    %c0_i32 = arith.constant 0 : i32
    %0 = arith.cmpi eq, %c2_i32, %c0_i32 : i32
    %c1_i32 = arith.constant 1 : i32
    %1 = arith.select %0, %c1_i32, %c2_i32 : i32
    %2 = arith.remsi %arg1, %1 : i32
    %c0_i32_0 = arith.constant 0 : i32
    %3 = arith.cmpi ne, %2, %c0_i32_0 : i32
    %c0_i32_1 = arith.constant 0 : i32
    %4 = arith.cmpi slt, %2, %c0_i32_1 : i32
    %c0_i32_2 = arith.constant 0 : i32
    %5 = arith.cmpi slt, %1, %c0_i32_2 : i32
    %6 = arith.xori %4, %5 : i1
    %7 = arith.andi %6, %3 : i1
    %8 = arith.addi %2, %1 : i32
    %9 = arith.select %7, %8, %2 : i32
    %c2_i32_3 = arith.constant 2 : i32
    %10 = arith.muli %c2_i32_3, %arg2 : i32
    %c1_i32_4 = arith.constant 1 : i32
    %11 = arith.subi %c1_i32_4, %10 : i32
    %12 = arith.muli %9, %11 : i32
    %13 = arith.addi %arg2, %12 : i32
    %c0_i32_5 = arith.constant 0 : i32
    return %13, %arg1 : i32, i32
  }
  func.func @transform_2(%arg0: i32, %arg1: i32, %arg2: i32) -> (i32, i32) {
    %c2_i32 = arith.constant 2 : i32
    %c0_i32 = arith.constant 0 : i32
    %0 = arith.cmpi eq, %c2_i32, %c0_i32 : i32
    %c1_i32 = arith.constant 1 : i32
    %1 = arith.select %0, %c1_i32, %c2_i32 : i32
    %2 = arith.remsi %arg1, %1 : i32
    %c0_i32_0 = arith.constant 0 : i32
    %3 = arith.cmpi ne, %2, %c0_i32_0 : i32
    %c0_i32_1 = arith.constant 0 : i32
    %4 = arith.cmpi slt, %2, %c0_i32_1 : i32
    %c0_i32_2 = arith.constant 0 : i32
    %5 = arith.cmpi slt, %1, %c0_i32_2 : i32
    %6 = arith.xori %4, %5 : i1
    %7 = arith.andi %6, %3 : i1
    %8 = arith.addi %2, %1 : i32
    %9 = arith.select %7, %8, %2 : i32
    %c2_i32_3 = arith.constant 2 : i32
    %10 = arith.muli %c2_i32_3, %arg2 : i32
    %c1_i32_4 = arith.constant 1 : i32
    %11 = arith.subi %c1_i32_4, %10 : i32
    %12 = arith.muli %9, %11 : i32
    %13 = arith.addi %arg2, %12 : i32
    %c0_i32_5 = arith.constant 0 : i32
    return %arg0, %13 : i32, i32
  }
  func.func @transform_3(%arg0: i32, %arg1: i32, %arg2: i32) -> (i32, i32) {
    %c2_i32 = arith.constant 2 : i32
    %c0_i32 = arith.constant 0 : i32
    %0 = arith.cmpi eq, %c2_i32, %c0_i32 : i32
    %c1_i32 = arith.constant 1 : i32
    %1 = arith.select %0, %c1_i32, %c2_i32 : i32
    %2 = arith.remsi %arg1, %1 : i32
    %c0_i32_0 = arith.constant 0 : i32
    %3 = arith.cmpi ne, %2, %c0_i32_0 : i32
    %c0_i32_1 = arith.constant 0 : i32
    %4 = arith.cmpi slt, %2, %c0_i32_1 : i32
    %c0_i32_2 = arith.constant 0 : i32
    %5 = arith.cmpi slt, %1, %c0_i32_2 : i32
    %6 = arith.xori %4, %5 : i1
    %7 = arith.andi %6, %3 : i1
    %8 = arith.addi %2, %1 : i32
    %9 = arith.select %7, %8, %2 : i32
    %c2_i32_3 = arith.constant 2 : i32
    %10 = arith.muli %c2_i32_3, %arg2 : i32
    %c1_i32_4 = arith.constant 1 : i32
    %11 = arith.subi %c1_i32_4, %10 : i32
    %12 = arith.muli %9, %11 : i32
    %13 = arith.addi %arg2, %12 : i32
    %c0_i32_5 = arith.constant 0 : i32
    return %13, %arg1 : i32, i32
  }
  func.func @transform_4(%arg0: i32, %arg1: i32, %arg2: i32) -> (i32, i32) {
    %c0_i32 = arith.constant 0 : i32
    return %arg0, %arg1 : i32, i32
  }
}

</mosaic_0001>

<llo_original>
// kernel: tpu_custom_call.1
$region0: #{tpu_custom_call.1}
  #allocation0 [shape = 'u32[]', space=smem, size = 0x4, offset = 0x4, fixed_abs, tag = 'smem constant byte address 0x4 - core index']
  #allocation1 [shape = 'u32[72,128]{1,0:T(1,128)}', space=vmem, size = 0x9000, scoped, tag = 'internal scratch']
  %s0 = inlined_call_operand.hbm [shape: f32[512,2048], index: 0, kind: input, shape index: {}]
  %s1 = inlined_call_operand.hbm [shape: f32[2048,512], index: 1, kind: input, shape index: {}]
  %s2 = inlined_call_operand.hbm [shape: f32[512,2048], index: 2, kind: input, shape index: {}]
  %s3 = inlined_call_operand.hbm [shape: f32[2048,512], index: 3, kind: input, shape index: {}]
  %s4 = inlined_call_operand.hbm [shape: f32[512,512], index: 4, kind: output, shape index: {}]
  %s5 = sld [smem:[#allocation0]]
  $region73: #{tpu_custom_call.1} parent=0
    _
  %s7 = ssub.s32 1, %s5
  %s8 = scalar_select 0, %s7, %s5
  $region1: #{tpu_custom_call.1} parent=0
    #allocation2 [shape = 'u8[2097152]{0}', space=vmem, size = 0x200000, scoped, tag = 'input window, operand 0']
    #allocation3 [shape = 's32[2]{0}', space=sflag, size = 0x8, scoped, tag = 'scoped memory for tpu_custom_call.1']
    #allocation4 [shape = 's32[2]{0}', space=sflag, size = 0x8, scoped, tag = 'scoped memory for tpu_custom_call.1']
    #allocation5 [shape = 'u8[4194304]{0}', space=vmem, size = 0x400000, scoped, tag = 'input window, operand 1']
    #allocation6 [shape = 's32[2]{0}', space=sflag, size = 0x8, scoped, tag = 'scoped memory for tpu_custom_call.1']
    #allocation7 [shape = 'u8[2097152]{0}', space=vmem, size = 0x200000, scoped, tag = 'input window, operand 2']
    #allocation8 [shape = 'u8[4194304]{0}', space=vmem, size = 0x400000, scoped, tag = 'input window, operand 3']
    #allocation9 [shape = 's32[2]{0}', space=sflag, size = 0x8, scoped, tag = 'scoped memory for tpu_custom_call.1']
    #allocation10 [shape = 'u8[1048576]{0}', space=vmem, size = 0x100000, scoped, tag = 'output window, operand 0']
    %9 = vsyncpa [#allocation3], 0
    %s10 = scalar_lea.sflag [#allocation3], 1
    %11 = vsyncpa %s10, 0
    %12 = vsyncpa [#allocation6], 0
    %s13 = scalar_lea.sflag [#allocation6], 1
    %14 = vsyncpa %s13, 0
    %15 = vsyncpa [#allocation9], 0
    %s16 = scalar_lea.sflag [#allocation9], 1
    %17 = vsyncpa %s16, 0
    %18 = vsyncpa [#allocation4], 0
    %s19 = scalar_lea.sflag [#allocation4], 1
    %20 = vsyncpa %s19, 0
    loop: start=0, step=1, limit=6
    $region2: #{tpu_custom_call.1} parent=1 // loop_pre_header
      _
    $region3: #{tpu_custom_call.1} parent=1 // loop_header
      %s22 = sphi 0, %s26
      %p23 = scmp.ge.s32.totalorder %s22, 6
      %s29 = sphi 0, %s48
      %s30 = sphi 0, %s44
      %s31 = sphi 0, %s40
      %s32 = sphi 0, %s29
      %s33 = sphi 0, %s30
      %s34 = sphi 0, %s31
      %s35 = sphi 0, %s32
      %s36 = sphi 0, %s33
      %s37 = sphi 0, %s34
      %s85 = sphi 0, %s87
      %s88 = sphi 0, %s85
      %s89 = sphi 0, %s88
      %s105 = sphi 0, %s89
      %s145 = sphi 0, %s147
      %s148 = sphi 0, %s145
      %s149 = sphi 0, %s148
      %s165 = sphi 0, %s149
      %s205 = sphi 0, %s207
      %s208 = sphi 0, %s205
      %s209 = sphi 0, %s208
      %s225 = sphi 0, %s209
      %s265 = sphi 0, %s267
      %s268 = sphi 0, %s265
      %s269 = sphi 0, %s268
      %s285 = sphi 0, %s269
      %s293 = sphi 0, %s295
      %s296 = sphi 0, %s293
      %s297 = sphi 0, %s296
      %s313 = sphi 0, %s297
    $region4: #{tpu_custom_call.1} parent=1 // loop_header_branch
      %25 = sbr.rel (%p23) target = $region8
    $region5: #{tpu_custom_call.1} parent=1 // loop_body
      %s27 = ssub.s32 %s22, 1
      %s28 = ssub.s32 %s22, 2
      %s38 = sadd.s32 1, %s31
      %p39 = scmp.ge.s32.totalorder %s38, 2
      %s40 = scalar_select %p39, 0, %s38
      %s41 = sadd.s32 1, %s30
      %s42 = scalar_select %p39, %s41, %s30
      %p43 = scmp.ge.s32.totalorder %s42, 1
      %s44 = scalar_select %p43, 0, %s42
      %s45 = sadd.s32 1, %s29
      %s46 = scalar_select %p43, %s45, %s29
      %p47 = scmp.ge.s32.totalorder %s46, 2
      %s48 = scalar_select %p47, 0, %s46
      %p49 = scmp.lt.s32.totalorder %s30, 0
      %s50 = ssub.s32 0, %s30
      %s51 = scalar_select %p49, %s50, %s30
      %s52 = sand.u32 %s51, 1
      %s53 = ssub.s32 0, %s52
      %s54 = scalar_select %p49, %s53, %s52
      %p55 = scmp.ne.s32.totalorder %s54, 0
      %p56 = scmp.lt.s32.totalorder %s54, 0
      %p57 = pnand %p56, %p55
      %p58 = pneg %p57
      %s59 = sadd.s32 %s54, 2
      %s60 = scalar_select %p58, %s59, %s54
      %s61 = smul.u32 %s31, 2
      %s62 = ssub.s32 1, %s61
      %s63 = smul.u32 %s60, %s62
      %s64 = sadd.s32 %s31, %s63
      %p65 = scmp.lt.s32.totalorder %s44, 0
      %s66 = ssub.s32 0, %s44
      %s67 = scalar_select %p65, %s66, %s44
      %s68 = sand.u32 %s67, 1
      %s69 = ssub.s32 0, %s68
      %s70 = scalar_select %p65, %s69, %s68
      %p71 = scmp.ne.s32.totalorder %s70, 0
      %p72 = scmp.lt.s32.totalorder %s70, 0
      %p73 = pnand %p72, %p71
      %p74 = pneg %p73
      %s75 = sadd.s32 %s70, 2
      %s76 = scalar_select %p74, %s75, %s70
      %s77 = smul.u32 %s40, 2
      %s78 = ssub.s32 1, %s77
      %s79 = smul.u32 %s76, %s78
      %s80 = sadd.s32 %s40, %s79
      %s81 = ssub.s32 %s29, %s48
      %s82 = ssub.s32 %s64, %s80
      %s83 = sor.u32 %s81, %s82
      %p84 = scmp.eq.s32.totalorder %s83, 0
      %s86 = sadd.s32 %s85, 1
      %s87 = scalar_select %p84, %s85, %s86
      %p90 = pneg %p84
      %p91 = scmp.eq.s32.totalorder %s22, 3
      %p92 = por %p90, %p91
      %p93 = scmp.ne.s32.totalorder %s85, %s88
      %p94 = scmp.eq.s32.totalorder %s22, 0
      %p95 = por %p93, %p94
      %p96 = scmp.ne.s32.totalorder %s85, %s88
      %p97 = scmp.eq.s32.totalorder %s27, 3
      %p98 = por %p96, %p97
      %p99 = scmp.ne.s32.totalorder %s88, %s89
      %p100 = scmp.eq.s32.totalorder %s27, 0
      %p101 = por %p99, %p100
      %p102 = scmp.ne.s32.totalorder %s88, %s89
      %p103 = scmp.eq.s32.totalorder %s28, 3
      %p104 = por %p102, %p103
      %p106 = scmp.ne.s32.totalorder %s89, %s105
      %p107 = scmp.eq.s32.totalorder %s28, 0
      %p108 = por %p106, %p107
      %p109 = scmp.lt.s32.totalorder %s30, 0
      %s110 = ssub.s32 0, %s30
      %s111 = scalar_select %p109, %s110, %s30
      %s112 = sand.u32 %s111, 1
      %s113 = ssub.s32 0, %s112
      %s114 = scalar_select %p109, %s113, %s112
      %p115 = scmp.ne.s32.totalorder %s114, 0
      %p116 = scmp.lt.s32.totalorder %s114, 0
      %p117 = pnand %p116, %p115
      %p118 = pneg %p117
      %s119 = sadd.s32 %s114, 2
      %s120 = scalar_select %p118, %s119, %s114
      %s121 = smul.u32 %s31, 2
      %s122 = ssub.s32 1, %s121
      %s123 = smul.u32 %s120, %s122
      %s124 = sadd.s32 %s31, %s123
      %p125 = scmp.lt.s32.totalorder %s44, 0
      %s126 = ssub.s32 0, %s44
      %s127 = scalar_select %p125, %s126, %s44
      %s128 = sand.u32 %s127, 1
      %s129 = ssub.s32 0, %s128
      %s130 = scalar_select %p125, %s129, %s128
      %p131 = scmp.ne.s32.totalorder %s130, 0
      %p132 = scmp.lt.s32.totalorder %s130, 0
      %p133 = pnand %p132, %p131
      %p134 = pneg %p133
      %s135 = sadd.s32 %s130, 2
      %s136 = scalar_select %p134, %s135, %s130
      %s137 = smul.u32 %s40, 2
      %s138 = ssub.s32 1, %s137
      %s139 = smul.u32 %s136, %s138
      %s140 = sadd.s32 %s40, %s139
      %s141 = ssub.s32 %s124, %s140
      %s142 = ssub.s32 %s30, %s44
      %s143 = sor.u32 %s141, %s142
      %p144 = scmp.eq.s32.totalorder %s143, 0
      %s146 = sadd.s32 %s145, 1
      %s147 = scalar_select %p144, %s145, %s146
      %p150 = pneg %p144
      %p151 = scmp.eq.s32.totalorder %s22, 3
      %p152 = por %p150, %p151
      %p153 = scmp.ne.s32.totalorder %s145, %s148
      %p154 = scmp.eq.s32.totalorder %s22, 0
      %p155 = por %p153, %p154
      %p156 = scmp.ne.s32.totalorder %s145, %s148
      %p157 = scmp.eq.s32.totalorder %s27, 3
      %p158 = por %p156, %p157
      %p159 = scmp.ne.s32.totalorder %s148, %s149
      %p160 = scmp.eq.s32.totalorder %s27, 0
      %p161 = por %p159, %p160
      %p162 = scmp.ne.s32.totalorder %s148, %s149
      %p163 = scmp.eq.s32.totalorder %s28, 3
      %p164 = por %p162, %p163
      %p166 = scmp.ne.s32.totalorder %s149, %s165
      %p167 = scmp.eq.s32.totalorder %s28, 0
      %p168 = por %p166, %p167
      %p169 = scmp.lt.s32.totalorder %s30, 0
      %s170 = ssub.s32 0, %s30
      %s171 = scalar_select %p169, %s170, %s30
      %s172 = sand.u32 %s171, 1
      %s173 = ssub.s32 0, %s172
      %s174 = scalar_select %p169, %s173, %s172
      %p175 = scmp.ne.s32.totalorder %s174, 0
      %p176 = scmp.lt.s32.totalorder %s174, 0
      %p177 = pnand %p176, %p175
      %p178 = pneg %p177
      %s179 = sadd.s32 %s174, 2
      %s180 = scalar_select %p178, %s179, %s174
      %s181 = smul.u32 %s31, 2
      %s182 = ssub.s32 1, %s181
      %s183 = smul.u32 %s180, %s182
      %s184 = sadd.s32 %s31, %s183
      %p185 = scmp.lt.s32.totalorder %s44, 0
      %s186 = ssub.s32 0, %s44
      %s187 = scalar_select %p185, %s186, %s44
      %s188 = sand.u32 %s187, 1
      %s189 = ssub.s32 0, %s188
      %s190 = scalar_select %p185, %s189, %s188
      %p191 = scmp.ne.s32.totalorder %s190, 0
      %p192 = scmp.lt.s32.totalorder %s190, 0
      %p193 = pnand %p192, %p191
      %p194 = pneg %p193
      %s195 = sadd.s32 %s190, 2
      %s196 = scalar_select %p194, %s195, %s190
      %s197 = smul.u32 %s40, 2
      %s198 = ssub.s32 1, %s197
      %s199 = smul.u32 %s196, %s198
      %s200 = sadd.s32 %s40, %s199
      %s201 = ssub.s32 %s29, %s48
      %s202 = ssub.s32 %s184, %s200
      %s203 = sor.u32 %s201, %s202
      %p204 = scmp.eq.s32.totalorder %s203, 0
      %s206 = sadd.s32 %s205, 1
      %s207 = scalar_select %p204, %s205, %s206
      %p210 = pneg %p204
      %p211 = scmp.eq.s32.totalorder %s22, 3
      %p212 = por %p210, %p211
      %p213 = scmp.ne.s32.totalorder %s205, %s208
      %p214 = scmp.eq.s32.totalorder %s22, 0
      %p215 = por %p213, %p214
      %p216 = scmp.ne.s32.totalorder %s205, %s208
      %p217 = scmp.eq.s32.totalorder %s27, 3
      %p218 = por %p216, %p217
      %p219 = scmp.ne.s32.totalorder %s208, %s209
      %p220 = scmp.eq.s32.totalorder %s27, 0
      %p221 = por %p219, %p220
      %p222 = scmp.ne.s32.totalorder %s208, %s209
      %p223 = scmp.eq.s32.totalorder %s28, 3
      %p224 = por %p222, %p223
      %p226 = scmp.ne.s32.totalorder %s209, %s225
      %p227 = scmp.eq.s32.totalorder %s28, 0
      %p228 = por %p226, %p227
      %p229 = scmp.lt.s32.totalorder %s30, 0
      %s230 = ssub.s32 0, %s30
      %s231 = scalar_select %p229, %s230, %s30
      %s232 = sand.u32 %s231, 1
      %s233 = ssub.s32 0, %s232
      %s234 = scalar_select %p229, %s233, %s232
      %p235 = scmp.ne.s32.totalorder %s234, 0
      %p236 = scmp.lt.s32.totalorder %s234, 0
      %p237 = pnand %p236, %p235
      %p238 = pneg %p237
      %s239 = sadd.s32 %s234, 2
      %s240 = scalar_select %p238, %s239, %s234
      %s241 = smul.u32 %s31, 2
      %s242 = ssub.s32 1, %s241
      %s243 = smul.u32 %s240, %s242
      %s244 = sadd.s32 %s31, %s243
      %p245 = scmp.lt.s32.totalorder %s44, 0
      %s246 = ssub.s32 0, %s44
      %s247 = scalar_select %p245, %s246, %s44
      %s248 = sand.u32 %s247, 1
      %s249 = ssub.s32 0, %s248
      %s250 = scalar_select %p245, %s249, %s248
      %p251 = scmp.ne.s32.totalorder %s250, 0
      %p252 = scmp.lt.s32.totalorder %s250, 0
      %p253 = pnand %p252, %p251
      %p254 = pneg %p253
      %s255 = sadd.s32 %s250, 2
      %s256 = scalar_select %p254, %s255, %s250
      %s257 = smul.u32 %s40, 2
      %s258 = ssub.s32 1, %s257
      %s259 = smul.u32 %s256, %s258
      %s260 = sadd.s32 %s40, %s259
      %s261 = ssub.s32 %s244, %s260
      %s262 = ssub.s32 %s30, %s44
      %s263 = sor.u32 %s261, %s262
      %p264 = scmp.eq.s32.totalorder %s263, 0
      %s266 = sadd.s32 %s265, 1
      %s267 = scalar_select %p264, %s265, %s266
      %p270 = pneg %p264
      %p271 = scmp.eq.s32.totalorder %s22, 3
      %p272 = por %p270, %p271
      %p273 = scmp.ne.s32.totalorder %s265, %s268
      %p274 = scmp.eq.s32.totalorder %s22, 0
      %p275 = por %p273, %p274
      %p276 = scmp.ne.s32.totalorder %s265, %s268
      %p277 = scmp.eq.s32.totalorder %s27, 3
      %p278 = por %p276, %p277
      %p279 = scmp.ne.s32.totalorder %s268, %s269
      %p280 = scmp.eq.s32.totalorder %s27, 0
      %p281 = por %p279, %p280
      %p282 = scmp.ne.s32.totalorder %s268, %s269
      %p283 = scmp.eq.s32.totalorder %s28, 3
      %p284 = por %p282, %p283
      %p286 = scmp.ne.s32.totalorder %s269, %s285
      %p287 = scmp.eq.s32.totalorder %s28, 0
      %p288 = por %p286, %p287
      %s289 = ssub.s32 %s29, %s48
      %s290 = ssub.s32 %s30, %s44
      %s291 = sor.u32 %s289, %s290
      %p292 = scmp.eq.s32.totalorder %s291, 0
      %s294 = sadd.s32 %s293, 1
      %s295 = scalar_select %p292, %s293, %s294
      %p298 = pneg %p292
      %p299 = scmp.eq.s32.totalorder %s22, 3
      %p300 = por %p298, %p299
      %p301 = scmp.ne.s32.totalorder %s293, %s296
      %p302 = scmp.eq.s32.totalorder %s22, 0
      %p303 = por %p301, %p302
      %p304 = scmp.ne.s32.totalorder %s293, %s296
      %p305 = scmp.eq.s32.totalorder %s27, 3
      %p306 = por %p304, %p305
      %p307 = scmp.ne.s32.totalorder %s296, %s297
      %p308 = scmp.eq.s32.totalorder %s27, 0
      %p309 = por %p307, %p308
      %p310 = scmp.ne.s32.totalorder %s296, %s297
      %p311 = scmp.eq.s32.totalorder %s28, 3
      %p312 = por %p310, %p311
      %p314 = scmp.ne.s32.totalorder %s297, %s313
      %p315 = scmp.eq.s32.totalorder %s28, 0
      %p316 = por %p314, %p315
      %p317 = scmp.le.s32.totalorder 1, %s22
      %p318 = scmp.lt.s32.totalorder %s22, 5
      %p319 = pnand %p317, %p318
      %p320 = pneg %p319
      // Predicated region
      $region9: #{tpu_custom_call.1} parent=5 // pred_check
        _
      $region10: #{tpu_custom_call.1} parent=5 // pred_check_branch
        %322 = sbr.rel (%p319) target = $region12
      $region11: #{tpu_custom_call.1} parent=5 // pred_region
        %s323 = ssub.s32 %s22, 1
      $region12: #{tpu_custom_call.1} parent=5 // pred_fallthru
        _
      %p324 = scmp.lt.s32.totalorder %s22, 4
      // Predicated region
      $region13: #{tpu_custom_call.1} parent=5 // pred_check
        %p325 = pneg %p324
      $region14: #{tpu_custom_call.1} parent=5 // pred_check_branch
        %327 = sbr.rel (%p325) target = $region16
      $region15: #{tpu_custom_call.1} parent=5 // pred_region
        // Predicated region
        $region17: #{tpu_custom_call.1} parent=15 // pred_check
          %p328 = pneg %p95
        $region18: #{tpu_custom_call.1} parent=15 // pred_check_branch
          %330 = sbr.rel (%p328) target = $region20
        $region19: #{tpu_custom_call.1} parent=15 // pred_region
          %s331 = sand.u32 %s85, 1
          %s332 = scalar_lea.sflag [#allocation3], %s331
          %s333 = sand.u32 %s85, 1
          %s334 = smul.addr %s333, 2048
          %s335 = scalar_lea.vmem [#allocation2], %s334
          %p336 = scmp.lt.s32.totalorder %s30, 0
          %s337 = ssub.s32 0, %s30
          %s338 = scalar_select %p336, %s337, %s30
          %s339 = sand.u32 %s338, 1
          %s340 = ssub.s32 0, %s339
          %s341 = scalar_select %p336, %s340, %s339
          %p342 = scmp.ne.s32.totalorder %s341, 0
          %p343 = scmp.lt.s32.totalorder %s341, 0
          %p344 = pnand %p343, %p342
          %p345 = pneg %p344
          %s346 = sadd.s32 %s341, 2
          %s347 = scalar_select %p345, %s346, %s341
          %s348 = smul.u32 %s31, 2
          %s349 = ssub.s32 1, %s348
          %s350 = smul.u32 %s347, %s349
          %s351 = sadd.s32 %s31, %s350
          %s352 = smul.u32 32, %s29
          %s353 = smul.u32 8, %s351
          %355 = vsyncadd %s332, 0
          %s356 = smul.addr %s352, 16
          %s357 = sadd.s32 %s353, %s356
          %s358 = smul.addr %s357, 8
          %s359 = scalar_lea.hbm %s0, %s358
          %s360 = sshll.u32 %s359, 4
          %s361 = int_to_ptr.hbm [resolvable:$true] %s360
          %s362 = sshll.u32 %s335, 4
          %s363 = int_to_ptr.vmem [resolvable:$true] %s362
          %368 = dma.hbm_to_vmem [thread:$0]  %s361, 32768, %s363, %s332, 2048, 1024, 64
        $region20: #{tpu_custom_call.1} parent=15 // pred_fallthru
          _
        // Predicated region
        $region21: #{tpu_custom_call.1} parent=15 // pred_check
          %p369 = pneg %p155
        $region22: #{tpu_custom_call.1} parent=15 // pred_check_branch
          %371 = sbr.rel (%p369) target = $region24
        $region23: #{tpu_custom_call.1} parent=15 // pred_region
          %s372 = sand.u32 %s22, 1
          %s373 = scalar_lea.sflag [#allocation6], %s372
          %s374 = sand.u32 %s145, 1
          %s375 = smul.addr %s374, 4096
          %s376 = scalar_lea.vmem [#allocation5], %s375
          %p377 = scmp.lt.s32.totalorder %s30, 0
          %s378 = ssub.s32 0, %s30
          %s379 = scalar_select %p377, %s378, %s30
          %s380 = sand.u32 %s379, 1
          %s381 = ssub.s32 0, %s380
          %s382 = scalar_select %p377, %s381, %s380
          %p383 = scmp.ne.s32.totalorder %s382, 0
          %p384 = scmp.lt.s32.totalorder %s382, 0
          %p385 = pnand %p384, %p383
          %p386 = pneg %p385
          %s387 = sadd.s32 %s382, 2
          %s388 = scalar_select %p386, %s387, %s382
          %s389 = smul.u32 %s31, 2
          %s390 = ssub.s32 1, %s389
          %s391 = smul.u32 %s388, %s390
          %s392 = sadd.s32 %s31, %s391
          %s393 = smul.u32 128, %s392
          %s394 = smul.u32 4, %s30
          %396 = vsyncadd %s373, 0
          %s397 = smul.addr %s393, 4
          %s398 = sadd.s32 %s394, %s397
          %s399 = smul.addr %s398, 8
          %s400 = scalar_lea.hbm %s1, %s399
          %s401 = sshll.u32 %s400, 4
          %s402 = int_to_ptr.hbm [resolvable:$true] %s401
          %s403 = sshll.u32 %s376, 4
          %s404 = int_to_ptr.vmem [resolvable:$true] %s403
          %409 = dma.hbm_to_vmem [thread:$0]  %s402, 65536, %s404, %s373, 512, 512, 32
        $region24: #{tpu_custom_call.1} parent=15 // pred_fallthru
          _
        // Predicated region
        $region25: #{tpu_custom_call.1} parent=15 // pred_check
          %p410 = pneg %p215
        $region26: #{tpu_custom_call.1} parent=15 // pred_check_branch
          %412 = sbr.rel (%p410) target = $region28
        $region27: #{tpu_custom_call.1} parent=15 // pred_region
          %s413 = sand.u32 %s22, 1
          %s414 = scalar_lea.sflag [#allocation6], %s413
          %s415 = sand.u32 %s205, 1
          %s416 = smul.addr %s415, 2048
          %s417 = scalar_lea.vmem [#allocation7], %s416
          %p418 = scmp.lt.s32.totalorder %s30, 0
          %s419 = ssub.s32 0, %s30
          %s420 = scalar_select %p418, %s419, %s30
          %s421 = sand.u32 %s420, 1
          %s422 = ssub.s32 0, %s421
          %s423 = scalar_select %p418, %s422, %s421
          %p424 = scmp.ne.s32.totalorder %s423, 0
          %p425 = scmp.lt.s32.totalorder %s423, 0
          %p426 = pnand %p425, %p424
          %p427 = pneg %p426
          %s428 = sadd.s32 %s423, 2
          %s429 = scalar_select %p427, %s428, %s423
          %s430 = smul.u32 %s31, 2
          %s431 = ssub.s32 1, %s430
          %s432 = smul.u32 %s429, %s431
          %s433 = sadd.s32 %s31, %s432
          %s434 = smul.u32 32, %s29
          %s435 = smul.u32 8, %s433
          %437 = vsyncadd %s414, 0
          %s438 = smul.addr %s434, 16
          %s439 = sadd.s32 %s435, %s438
          %s440 = smul.addr %s439, 8
          %s441 = scalar_lea.hbm %s2, %s440
          %s442 = sshll.u32 %s441, 4
          %s443 = int_to_ptr.hbm [resolvable:$true] %s442
          %s444 = sshll.u32 %s417, 4
          %s445 = int_to_ptr.vmem [resolvable:$true] %s444
          %450 = dma.hbm_to_vmem [thread:$0]  %s443, 32768, %s445, %s414, 2048, 1024, 64
        $region28: #{tpu_custom_call.1} parent=15 // pred_fallthru
          _
        // Predicated region
        $region29: #{tpu_custom_call.1} parent=15 // pred_check
          %p451 = pneg %p275
        $region30: #{tpu_custom_call.1} parent=15 // pred_check_branch
          %453 = sbr.rel (%p451) target = $region32
        $region31: #{tpu_custom_call.1} parent=15 // pred_region
          %s454 = sand.u32 %s265, 1
          %s455 = scalar_lea.sflag [#allocation9], %s454
          %s456 = sand.u32 %s265, 1
          %s457 = smul.addr %s456, 4096
          %s458 = scalar_lea.vmem [#allocation8], %s457
          %p459 = scmp.lt.s32.totalorder %s30, 0
          %s460 = ssub.s32 0, %s30
          %s461 = scalar_select %p459, %s460, %s30
          %s462 = sand.u32 %s461, 1
          %s463 = ssub.s32 0, %s462
          %s464 = scalar_select %p459, %s463, %s462
          %p465 = scmp.ne.s32.totalorder %s464, 0
          %p466 = scmp.lt.s32.totalorder %s464, 0
          %p467 = pnand %p466, %p465
          %p468 = pneg %p467
          %s469 = sadd.s32 %s464, 2
          %s470 = scalar_select %p468, %s469, %s464
          %s471 = smul.u32 %s31, 2
          %s472 = ssub.s32 1, %s471
          %s473 = smul.u32 %s470, %s472
          %s474 = sadd.s32 %s31, %s473
          %s475 = smul.u32 128, %s474
          %s476 = smul.u32 4, %s30
          %478 = vsyncadd %s455, 0
          %s479 = smul.addr %s475, 4
          %s480 = sadd.s32 %s476, %s479
          %s481 = smul.addr %s480, 8
          %s482 = scalar_lea.hbm %s3, %s481
          %s483 = sshll.u32 %s482, 4
          %s484 = int_to_ptr.hbm [resolvable:$true] %s483
          %s485 = sshll.u32 %s458, 4
          %s486 = int_to_ptr.vmem [resolvable:$true] %s485
          %491 = dma.hbm_to_vmem [thread:$0]  %s484, 65536, %s486, %s455, 512, 512, 32
        $region32: #{tpu_custom_call.1} parent=15 // pred_fallthru
          _
      $region16: #{tpu_custom_call.1} parent=5 // pred_fallthru
        _
      %p492 = scmp.le.s32.totalorder 1, %s22
      %p493 = scmp.lt.s32.totalorder %s22, 5
      %p494 = pnand %p492, %p493
      %p495 = pneg %p494
      // Predicated region
      $region33: #{tpu_custom_call.1} parent=5 // pred_check
        _
      $region34: #{tpu_custom_call.1} parent=5 // pred_check_branch
        %497 = sbr.rel (%p494) target = $region36
      $region35: #{tpu_custom_call.1} parent=5 // pred_region
        %s498 = ssub.s32 %s22, 1
        %s499 = sand.u32 %s88, 1
        %s500 = scalar_lea.sflag [#allocation3], %s499
        %s501 = sand.u32 %s88, 1
        %s502 = smul.addr %s501, 2048
        %s503 = scalar_lea.vmem [#allocation2], %s502
        // Predicated region
        $region37: #{tpu_custom_call.1} parent=35 // pred_check
          %p504 = pneg %p101
        $region38: #{tpu_custom_call.1} parent=35 // pred_check_branch
          %506 = sbr.rel (%p504) target = $region40
        $region39: #{tpu_custom_call.1} parent=35 // pred_region
          %508 = dma.done %s500, 32768
        $region40: #{tpu_custom_call.1} parent=35 // pred_fallthru
          _
        %s509 = sand.u32 %s27, 1
        %s510 = scalar_lea.sflag [#allocation6], %s509
        %s511 = sand.u32 %s148, 1
        %s512 = smul.addr %s511, 4096
        %s513 = scalar_lea.vmem [#allocation5], %s512
        // Predicated region
        $region41: #{tpu_custom_call.1} parent=35 // pred_check
          %p514 = pneg %p161
        $region42: #{tpu_custom_call.1} parent=35 // pred_check_branch
          %516 = sbr.rel (%p514) target = $region44
        $region43: #{tpu_custom_call.1} parent=35 // pred_region
          %518 = dma.done %s510, 65536
        $region44: #{tpu_custom_call.1} parent=35 // pred_fallthru
          _
        %s519 = sand.u32 %s27, 1
        %s520 = scalar_lea.sflag [#allocation6], %s519
        %s521 = sand.u32 %s208, 1
        %s522 = smul.addr %s521, 2048
        %s523 = scalar_lea.vmem [#allocation7], %s522
        // Predicated region
        $region45: #{tpu_custom_call.1} parent=35 // pred_check
          %p524 = pneg %p221
        $region46: #{tpu_custom_call.1} parent=35 // pred_check_branch
          %526 = sbr.rel (%p524) target = $region48
        $region47: #{tpu_custom_call.1} parent=35 // pred_region
          %528 = dma.done %s520, 32768
        $region48: #{tpu_custom_call.1} parent=35 // pred_fallthru
          _
        %s529 = sand.u32 %s268, 1
        %s530 = scalar_lea.sflag [#allocation9], %s529
        %s531 = sand.u32 %s268, 1
        %s532 = smul.addr %s531, 4096
        %s533 = scalar_lea.vmem [#allocation8], %s532
        // Predicated region
        $region49: #{tpu_custom_call.1} parent=35 // pred_check
          %p534 = pneg %p281
        $region50: #{tpu_custom_call.1} parent=35 // pred_check_branch
          %536 = sbr.rel (%p534) target = $region52
        $region51: #{tpu_custom_call.1} parent=35 // pred_region
          %538 = dma.done %s530, 65536
        $region52: #{tpu_custom_call.1} parent=35 // pred_fallthru
          _
        %s539 = sand.u32 %s88, 1
        %s540 = scalar_lea.sflag [#allocation3], %s539
        %s541 = sand.u32 %s88, 1
        %s542 = smul.addr %s541, 2048
        %s543 = scalar_lea.vmem [#allocation2], %s542
        %p544 = pneg %p101
        %p545 = pneg %p98
        %s546 = sand.u32 %s27, 1
        %s547 = scalar_lea.sflag [#allocation6], %s546
        %s548 = sand.u32 %s148, 1
        %s549 = smul.addr %s548, 4096
        %s550 = scalar_lea.vmem [#allocation5], %s549
        %p551 = pneg %p161
        %p552 = pneg %p158
        %s553 = sand.u32 %s27, 1
        %s554 = scalar_lea.sflag [#allocation6], %s553
        %s555 = sand.u32 %s208, 1
        %s556 = smul.addr %s555, 2048
        %s557 = scalar_lea.vmem [#allocation7], %s556
        %p558 = pneg %p221
        %p559 = pneg %p218
        %s560 = sand.u32 %s268, 1
        %s561 = scalar_lea.sflag [#allocation9], %s560
        %s562 = sand.u32 %s268, 1
        %s563 = smul.addr %s562, 4096
        %s564 = scalar_lea.vmem [#allocation8], %s563
        %p565 = pneg %p281
        %p566 = pneg %p278
        %p567 = pneg %p309
        %p568 = pneg %p306
        %s569 = sand.u32 %s296, 1
        %s570 = scalar_lea.sflag [#allocation4], %s569
        %s571 = sand.u32 %s296, 1
        %s572 = smul.addr %s571, 1024
        %s573 = scalar_lea.vmem [#allocation10], %s572
        %p574 = scmp.lt.s32.totalorder %s33, 0
        %s575 = ssub.s32 0, %s33
        %s576 = scalar_select %p574, %s575, %s33
        %s577 = sand.u32 %s576, 1
        %s578 = ssub.s32 0, %s577
        %s579 = scalar_select %p574, %s578, %s577
        %p580 = scmp.ne.s32.totalorder %s579, 0
        %p581 = scmp.lt.s32.totalorder %s579, 0
        %p582 = pnand %p581, %p580
        %p583 = pneg %p582
        %s584 = sadd.s32 %s579, 2
        %s585 = scalar_select %p583, %s584, %s579
        %s586 = smul.u32 %s34, 2
        %s587 = ssub.s32 1, %s586
        %s588 = smul.u32 %s585, %s587
        %s589 = sadd.s32 %s34, %s588
        %s590 = smul.u32 32, %s32
        %s591 = smul.u32 8, %s589
        %p592 = scmp.lt.s32.totalorder %s33, 0
        %s593 = ssub.s32 0, %s33
        %s594 = scalar_select %p592, %s593, %s33
        %s595 = sand.u32 %s594, 1
        %s596 = ssub.s32 0, %s595
        %s597 = scalar_select %p592, %s596, %s595
        %p598 = scmp.ne.s32.totalorder %s597, 0
        %p599 = scmp.lt.s32.totalorder %s597, 0
        %p600 = pnand %p599, %p598
        %p601 = pneg %p600
        %s602 = sadd.s32 %s597, 2
        %s603 = scalar_select %p601, %s602, %s597
        %s604 = smul.u32 %s34, 2
        %s605 = ssub.s32 1, %s604
        %s606 = smul.u32 %s603, %s605
        %s607 = sadd.s32 %s34, %s606
        %s608 = smul.u32 128, %s607
        %s609 = smul.u32 4, %s33
        %p610 = scmp.lt.s32.totalorder %s33, 0
        %s611 = ssub.s32 0, %s33
        %s612 = scalar_select %p610, %s611, %s33
        %s613 = sand.u32 %s612, 1
        %s614 = ssub.s32 0, %s613
        %s615 = scalar_select %p610, %s614, %s613
        %p616 = scmp.ne.s32.totalorder %s615, 0
        %p617 = scmp.lt.s32.totalorder %s615, 0
        %p618 = pnand %p617, %p616
        %p619 = pneg %p618
        %s620 = sadd.s32 %s615, 2
        %s621 = scalar_select %p619, %s620, %s615
        %s622 = smul.u32 %s34, 2
        %s623 = ssub.s32 1, %s622
        %s624 = smul.u32 %s621, %s623
        %s625 = sadd.s32 %s34, %s624
        %s626 = smul.u32 32, %s32
        %s627 = smul.u32 8, %s625
        %p628 = scmp.lt.s32.totalorder %s33, 0
        %s629 = ssub.s32 0, %s33
        %s630 = scalar_select %p628, %s629, %s33
        %s631 = sand.u32 %s630, 1
        %s632 = ssub.s32 0, %s631
        %s633 = scalar_select %p628, %s632, %s631
        %p634 = scmp.ne.s32.totalorder %s633, 0
        %p635 = scmp.lt.s32.totalorder %s633, 0
        %p636 = pnand %p635, %p634
        %p637 = pneg %p636
        %s638 = sadd.s32 %s633, 2
        %s639 = scalar_select %p637, %s638, %s633
        %s640 = smul.u32 %s34, 2
        %s641 = ssub.s32 1, %s640
        %s642 = smul.u32 %s639, %s641
        %s643 = sadd.s32 %s34, %s642
        %s644 = smul.u32 128, %s643
        %s645 = smul.u32 4, %s33
        %s646 = smul.u32 32, %s32
        %s647 = smul.u32 4, %s33
        %v648 = vld [vmem:[%s503] sm:$0xff]
        %v649 = vld [vmem:[%s503 + $0x8] sm:$0xff]
        %v650 = vld [vmem:[%s503 + $0x10] sm:$0xff]
        %v651 = vld [vmem:[%s503 + $0x18] sm:$0xff]
        %v652 = vld [vmem:[%s503 + $0x20] sm:$0xff]
        %v653 = vld [vmem:[%s503 + $0x28] sm:$0xff]
        %v654 = vld [vmem:[%s503 + $0x30] sm:$0xff]
        %v655 = vld [vmem:[%s503 + $0x38] sm:$0xff]
        %v656 = vld [vmem:[%s503 + $0x40] sm:$0xff]
        %v657 = vld [vmem:[%s503 + $0x48] sm:$0xff]
        %v658 = vld [vmem:[%s503 + $0x50] sm:$0xff]
        %v659 = vld [vmem:[%s503 + $0x58] sm:$0xff]
        %v660 = vld [vmem:[%s503 + $0x60] sm:$0xff]
        %v661 = vld [vmem:[%s503 + $0x68] sm:$0xff]
        %v662 = vld [vmem:[%s503 + $0x70] sm:$0xff]
        %v663 = vld [vmem:[%s503 + $0x78] sm:$0xff]
        %v664 = vld [vmem:[%s503 + $0x80] sm:$0xff]
        %v665 = vld [vmem:[%s503 + $0x88] sm:$0xff]
        %v666 = vld [vmem:[%s503 + $0x90] sm:$0xff]
        %v667 = vld [vmem:[%s503 + $0x98] sm:$0xff]
        %v668 = vld [vmem:[%s503 + $0xa0] sm:$0xff]
        %v669 = vld [vmem:[%s503 + $0xa8] sm:$0xff]
        %v670 = vld [vmem:[%s503 + $0xb0] sm:$0xff]
        %v671 = vld [vmem:[%s503 + $0xb8] sm:$0xff]
        %v672 = vld [vmem:[%s503 + $0xc0] sm:$0xff]
        %v673 = vld [vmem:[%s503 + $0xc8] sm:$0xff]
        %v674 = vld [vmem:[%s503 + $0xd0] sm:$0xff]
        %v675 = vld [vmem:[%s503 + $0xd8] sm:$0xff]
        %v676 = vld [vmem:[%s503 + $0xe0] sm:$0xff]
        %v677 = vld [vmem:[%s503 + $0xe8] sm:$0xff]
        %v678 = vld [vmem:[%s503 + $0xf0] sm:$0xff]
        %v679 = vld [vmem:[%s503 + $0xf8] sm:$0xff]
        %v680 = vld [vmem:[%s503 + $0x100] sm:$0xff]
        %v681 = vld [vmem:[%s503 + $0x108] sm:$0xff]
        %v682 = vld [vmem:[%s503 + $0x110] sm:$0xff]
        %v683 = vld [vmem:[%s503 + $0x118] sm:$0xff]
        %v684 = vld [vmem:[%s503 + $0x120] sm:$0xff]
        %v685 = vld [vmem:[%s503 + $0x128] sm:$0xff]
        %v686 = vld [vmem:[%s503 + $0x130] sm:$0xff]
        %v687 = vld [vmem:[%s503 + $0x138] sm:$0xff]
        %v688 = vld [vmem:[%s503 + $0x140] sm:$0xff]
        %v689 = vld [vmem:[%s503 + $0x148] sm:$0xff]
        %v690 = vld [vmem:[%s503 + $0x150] sm:$0xff]
        %v691 = vld [vmem:[%s503 + $0x158] sm:$0xff]
        %v692 = vld [vmem:[%s503 + $0x160] sm:$0xff]
        %v693 = vld [vmem:[%s503 + $0x168] sm:$0xff]
        %v694 = vld [vmem:[%s503 + $0x170] sm:$0xff]
        %v695 = vld [vmem:[%s503 + $0x178] sm:$0xff]
        %v696 = vld [vmem:[%s503 + $0x180] sm:$0xff]
        %v697 = vld [vmem:[%s503 + $0x188] sm:$0xff]
        %v698 = vld [vmem:[%s503 + $0x190] sm:$0xff]
        %v699 = vld [vmem:[%s503 + $0x198] sm:$0xff]
        %v700 = vld [vmem:[%s503 + $0x1a0] sm:$0xff]
        %v701 = vld [vmem:[%s503 + $0x1a8] sm:$0xff]
        %v702 = vld [vmem:[%s503 + $0x1b0] sm:$0xff]
        %v703 = vld [vmem:[%s503 + $0x1b8] sm:$0xff]
        %v704 = vld [vmem:[%s503 + $0x1c0] sm:$0xff]
        %v705 = vld [vmem:[%s503 + $0x1c8] sm:$0xff]
        %v706 = vld [vmem:[%s503 + $0x1d0] sm:$0xff]
        %v707 = vld [vmem:[%s503 + $0x1d8] sm:$0xff]
        %v708 = vld [vmem:[%s503 + $0x1e0] sm:$0xff]
        %v709 = vld [vmem:[%s503 + $0x1e8] sm:$0xff]
        %v710 = vld [vmem:[%s503 + $0x1f0] sm:$0xff]
        %v711 = vld [vmem:[%s503 + $0x1f8] sm:$0xff]
        %v712 = vld [vmem:[%s503 + $0x200] sm:$0xff]
        %v713 = vld [vmem:[%s503 + $0x208] sm:$0xff]
        %v714 = vld [vmem:[%s503 + $0x210] sm:$0xff]
        %v715 = vld [vmem:[%s503 + $0x218] sm:$0xff]
        %v716 = vld [vmem:[%s503 + $0x220] sm:$0xff]
        %v717 = vld [vmem:[%s503 + $0x228] sm:$0xff]
        %v718 = vld [vmem:[%s503 + $0x230] sm:$0xff]
        %v719 = vld [vmem:[%s503 + $0x238] sm:$0xff]
        %v720 = vld [vmem:[%s503 + $0x240] sm:$0xff]
        %v721 = vld [vmem:[%s503 + $0x248] sm:$0xff]
        %v722 = vld [vmem:[%s503 + $0x250] sm:$0xff]
        %v723 = vld [vmem:[%s503 + $0x258] sm:$0xff]
        %v724 = vld [vmem:[%s503 + $0x260] sm:$0xff]
        %v725 = vld [vmem:[%s503 + $0x268] sm:$0xff]
        %v726 = vld [vmem:[%s503 + $0x270] sm:$0xff]
        %v727 = vld [vmem:[%s503 + $0x278] sm:$0xff]
        %v728 = vld [vmem:[%s503 + $0x280] sm:$0xff]
        %v729 = vld [vmem:[%s503 + $0x288] sm:$0xff]
        %v730 = vld [vmem:[%s503 + $0x290] sm:$0xff]
        %v731 = vld [vmem:[%s503 + $0x298] sm:$0xff]
        %v732 = vld [vmem:[%s503 + $0x2a0] sm:$0xff]
        %v733 = vld [vmem:[%s503 + $0x2a8] sm:$0xff]
        %v734 = vld [vmem:[%s503 + $0x2b0] sm:$0xff]
        %v735 = vld [vmem:[%s503 + $0x2b8] sm:$0xff]
        %v736 = vld [vmem:[%s503 + $0x2c0] sm:$0xff]
        %v737 = vld [vmem:[%s503 + $0x2c8] sm:$0xff]
        %v738 = vld [vmem:[%s503 + $0x2d0] sm:$0xff]
        %v739 = vld [vmem:[%s503 + $0x2d8] sm:$0xff]
        %v740 = vld [vmem:[%s503 + $0x2e0] sm:$0xff]
        %v741 = vld [vmem:[%s503 + $0x2e8] sm:$0xff]
        %v742 = vld [vmem:[%s503 + $0x2f0] sm:$0xff]
        %v743 = vld [vmem:[%s503 + $0x2f8] sm:$0xff]
        %v744 = vld [vmem:[%s503 + $0x300] sm:$0xff]
        %v745 = vld [vmem:[%s503 + $0x308] sm:$0xff]
        %v746 = vld [vmem:[%s503 + $0x310] sm:$0xff]
        %v747 = vld [vmem:[%s503 + $0x318] sm:$0xff]
        %v748 = vld [vmem:[%s503 + $0x320] sm:$0xff]
        %v749 = vld [vmem:[%s503 + $0x328] sm:$0xff]
        %v750 = vld [vmem:[%s503 + $0x330] sm:$0xff]
        %v751 = vld [vmem:[%s503 + $0x338] sm:$0xff]
        %v752 = vld [vmem:[%s503 + $0x340] sm:$0xff]
        %v753 = vld [vmem:[%s503 + $0x348] sm:$0xff]
        %v754 = vld [vmem:[%s503 + $0x350] sm:$0xff]
        %v755 = vld [vmem:[%s503 + $0x358] sm:$0xff]
        %v756 = vld [vmem:[%s503 + $0x360] sm:$0xff]
        %v757 = vld [vmem:[%s503 + $0x368] sm:$0xff]
        %v758 = vld [vmem:[%s503 + $0x370] sm:$0xff]
        %v759 = vld [vmem:[%s503 + $0x378] sm:$0xff]
        %v760 = vld [vmem:[%s503 + $0x380] sm:$0xff]
        %v761 = vld [vmem:[%s503 + $0x388] sm:$0xff]
        %v762 = vld [vmem:[%s503 + $0x390] sm:$0xff]
        %v763 = vld [vmem:[%s503 + $0x398] sm:$0xff]
        %v764 = vld [vmem:[%s503 + $0x3a0] sm:$0xff]
        %v765 = vld [vmem:[%s503 + $0x3a8] sm:$0xff]
        %v766 = vld [vmem:[%s503 + $0x3b0] sm:$0xff]
        %v767 = vld [vmem:[%s503 + $0x3b8] sm:$0xff]
        %v768 = vld [vmem:[%s503 + $0x3c0] sm:$0xff]
        %v769 = vld [vmem:[%s503 + $0x3c8] sm:$0xff]
        %v770 = vld [vmem:[%s503 + $0x3d0] sm:$0xff]
        %v771 = vld [vmem:[%s503 + $0x3d8] sm:$0xff]
        %v772 = vld [vmem:[%s503 + $0x3e0] sm:$0xff]
        %v773 = vld [vmem:[%s503 + $0x3e8] sm:$0xff]
        %v774 = vld [vmem:[%s503 + $0x3f0] sm:$0xff]
        %v775 = vld [vmem:[%s503 + $0x3f8] sm:$0xff]
        %v776 = vld [vmem:[%s503 + $0x400] sm:$0xff]
        %v777 = vld [vmem:[%s503 + $0x408] sm:$0xff]
        %v778 = vld [vmem:[%s503 + $0x410] sm:$0xff]
        %v779 = vld [vmem:[%s503 + $0x418] sm:$0xff]
        %v780 = vld [vmem:[%s503 + $0x420] sm:$0xff]
        %v781 = vld [vmem:[%s503 + $0x428] sm:$0xff]
        %v782 = vld [vmem:[%s503 + $0x430] sm:$0xff]
        %v783 = vld [vmem:[%s503 + $0x438] sm:$0xff]
        %v784 = vld [vmem:[%s503 + $0x440] sm:$0xff]
        %v785 = vld [vmem:[%s503 + $0x448] sm:$0xff]
        %v786 = vld [vmem:[%s503 + $0x450] sm:$0xff]
        %v787 = vld [vmem:[%s503 + $0x458] sm:$0xff]
        %v788 = vld [vmem:[%s503 + $0x460] sm:$0xff]
        %v789 = vld [vmem:[%s503 + $0x468] sm:$0xff]
        %v790 = vld [vmem:[%s503 + $0x470] sm:$0xff]
        %v791 = vld [vmem:[%s503 + $0x478] sm:$0xff]
        %v792 = vld [vmem:[%s503 + $0x480] sm:$0xff]
        %v793 = vld [vmem:[%s503 + $0x488] sm:$0xff]
        %v794 = vld [vmem:[%s503 + $0x490] sm:$0xff]
        %v795 = vld [vmem:[%s503 + $0x498] sm:$0xff]
        %v796 = vld [vmem:[%s503 + $0x4a0] sm:$0xff]
        %v797 = vld [vmem:[%s503 + $0x4a8] sm:$0xff]
        %v798 = vld [vmem:[%s503 + $0x4b0] sm:$0xff]
        %v799 = vld [vmem:[%s503 + $0x4b8] sm:$0xff]
        %v800 = vld [vmem:[%s503 + $0x4c0] sm:$0xff]
        %v801 = vld [vmem:[%s503 + $0x4c8] sm:$0xff]
        %v802 = vld [vmem:[%s503 + $0x4d0] sm:$0xff]
        %v803 = vld [vmem:[%s503 + $0x4d8] sm:$0xff]
        %v804 = vld [vmem:[%s503 + $0x4e0] sm:$0xff]
        %v805 = vld [vmem:[%s503 + $0x4e8] sm:$0xff]
        %v806 = vld [vmem:[%s503 + $0x4f0] sm:$0xff]
        %v807 = vld [vmem:[%s503 + $0x4f8] sm:$0xff]
        %v808 = vld [vmem:[%s503 + $0x500] sm:$0xff]
        %v809 = vld [vmem:[%s503 + $0x508] sm:$0xff]
        %v810 = vld [vmem:[%s503 + $0x510] sm:$0xff]
        %v811 = vld [vmem:[%s503 + $0x518] sm:$0xff]
        %v812 = vld [vmem:[%s503 + $0x520] sm:$0xff]
        %v813 = vld [vmem:[%s503 + $0x528] sm:$0xff]
        %v814 = vld [vmem:[%s503 + $0x530] sm:$0xff]
        %v815 = vld [vmem:[%s503 + $0x538] sm:$0xff]
        %v816 = vld [vmem:[%s503 + $0x540] sm:$0xff]
        %v817 = vld [vmem:[%s503 + $0x548] sm:$0xff]
        %v818 = vld [vmem:[%s503 + $0x550] sm:$0xff]
        %v819 = vld [vmem:[%s503 + $0x558] sm:$0xff]
        %v820 = vld [vmem:[%s503 + $0x560] sm:$0xff]
        %v821 = vld [vmem:[%s503 + $0x568] sm:$0xff]
        %v822 = vld [vmem:[%s503 + $0x570] sm:$0xff]
        %v823 = vld [vmem:[%s503 + $0x578] sm:$0xff]
        %v824 = vld [vmem:[%s503 + $0x580] sm:$0xff]
        %v825 = vld [vmem:[%s503 + $0x588] sm:$0xff]
        %v826 = vld [vmem:[%s503 + $0x590] sm:$0xff]
        %v827 = vld [vmem:[%s503 + $0x598] sm:$0xff]
        %v828 = vld [vmem:[%s503 + $0x5a0] sm:$0xff]
        %v829 = vld [vmem:[%s503 + $0x5a8] sm:$0xff]
        %v830 = vld [vmem:[%s503 + $0x5b0] sm:$0xff]
        %v831 = vld [vmem:[%s503 + $0x5b8] sm:$0xff]
        %v832 = vld [vmem:[%s503 + $0x5c0] sm:$0xff]
        %v833 = vld [vmem:[%s503 + $0x5c8] sm:$0xff]
        %v834 = vld [vmem:[%s503 + $0x5d0] sm:$0xff]
        %v835 = vld [vmem:[%s503 + $0x5d8] sm:$0xff]
        %v836 = vld [vmem:[%s503 + $0x5e0] sm:$0xff]
        %v837 = vld [vmem:[%s503 + $0x5e8] sm:$0xff]
        %v838 = vld [vmem:[%s503 + $0x5f0] sm:$0xff]
        %v839 = vld [vmem:[%s503 + $0x5f8] sm:$0xff]
        %v840 = vld [vmem:[%s503 + $0x600] sm:$0xff]
        %v841 = vld [vmem:[%s503 + $0x608] sm:$0xff]
        %v842 = vld [vmem:[%s503 + $0x610] sm:$0xff]
        %v843 = vld [vmem:[%s503 + $0x618] sm:$0xff]
        %v844 = vld [vmem:[%s503 + $0x620] sm:$0xff]
        %v845 = vld [vmem:[%s503 + $0x628] sm:$0xff]
        %v846 = vld [vmem:[%s503 + $0x630] sm:$0xff]
        %v847 = vld [vmem:[%s503 + $0x638] sm:$0xff]
        %v848 = vld [vmem:[%s503 + $0x640] sm:$0xff]
        %v849 = vld [vmem:[%s503 + $0x648] sm:$0xff]
        %v850 = vld [vmem:[%s503 + $0x650] sm:$0xff]
        %v851 = vld [vmem:[%s503 + $0x658] sm:$0xff]
        %v852 = vld [vmem:[%s503 + $0x660] sm:$0xff]
        %v853 = vld [vmem:[%s503 + $0x668] sm:$0xff]
        %v854 = vld [vmem:[%s503 + $0x670] sm:$0xff]
        %v855 = vld [vmem:[%s503 + $0x678] sm:$0xff]
        %v856 = vld [vmem:[%s503 + $0x680] sm:$0xff]
        %v857 = vld [vmem:[%s503 + $0x688] sm:$0xff]
        %v858 = vld [vmem:[%s503 + $0x690] sm:$0xff]
        %v859 = vld [vmem:[%s503 + $0x698] sm:$0xff]
        %v860 = vld [vmem:[%s503 + $0x6a0] sm:$0xff]
        %v861 = vld [vmem:[%s503 + $0x6a8] sm:$0xff]
        %v862 = vld [vmem:[%s503 + $0x6b0] sm:$0xff]
        %v863 = vld [vmem:[%s503 + $0x6b8] sm:$0xff]
        %v864 = vld [vmem:[%s503 + $0x6c0] sm:$0xff]
        %v865 = vld [vmem:[%s503 + $0x6c8] sm:$0xff]
        %v866 = vld [vmem:[%s503 + $0x6d0] sm:$0xff]
        %v867 = vld [vmem:[%s503 + $0x6d8] sm:$0xff]
        %v868 = vld [vmem:[%s503 + $0x6e0] sm:$0xff]
        %v869 = vld [vmem:[%s503 + $0x6e8] sm:$0xff]
        %v870 = vld [vmem:[%s503 + $0x6f0] sm:$0xff]
        %v871 = vld [vmem:[%s503 + $0x6f8] sm:$0xff]
        %v872 = vld [vmem:[%s503 + $0x700] sm:$0xff]
        %v873 = vld [vmem:[%s503 + $0x708] sm:$0xff]
        %v874 = vld [vmem:[%s503 + $0x710] sm:$0xff]
        %v875 = vld [vmem:[%s503 + $0x718] sm:$0xff]
        %v876 = vld [vmem:[%s503 + $0x720] sm:$0xff]
        %v877 = vld [vmem:[%s503 + $0x728] sm:$0xff]
        %v878 = vld [vmem:[%s503 + $0x730] sm:$0xff]
        %v879 = vld [vmem:[%s503 + $0x738] sm:$0xff]
        %v880 = vld [vmem:[%s503 + $0x740] sm:$0xff]
        %v881 = vld [vmem:[%s503 + $0x748] sm:$0xff]
        %v882 = vld [vmem:[%s503 + $0x750] sm:$0xff]
        %v883 = vld [vmem:[%s503 + $0x758] sm:$0xff]
        %v884 = vld [vmem:[%s503 + $0x760] sm:$0xff]
        %v885 = vld [vmem:[%s503 + $0x768] sm:$0xff]
        %v886 = vld [vmem:[%s503 + $0x770] sm:$0xff]
        %v887 = vld [vmem:[%s503 + $0x778] sm:$0xff]
        %v888 = vld [vmem:[%s503 + $0x780] sm:$0xff]
        %v889 = vld [vmem:[%s503 + $0x788] sm:$0xff]
        %v890 = vld [vmem:[%s503 + $0x790] sm:$0xff]
        %v891 = vld [vmem:[%s503 + $0x798] sm:$0xff]
        %v892 = vld [vmem:[%s503 + $0x7a0] sm:$0xff]
        %v893 = vld [vmem:[%s503 + $0x7a8] sm:$0xff]
        %v894 = vld [vmem:[%s503 + $0x7b0] sm:$0xff]
        %v895 = vld [vmem:[%s503 + $0x7b8] sm:$0xff]
        %v896 = vld [vmem:[%s503 + $0x7c0] sm:$0xff]
        %v897 = vld [vmem:[%s503 + $0x7c8] sm:$0xff]
        %v898 = vld [vmem:[%s503 + $0x7d0] sm:$0xff]
        %v899 = vld [vmem:[%s503 + $0x7d8] sm:$0xff]
        %v900 = vld [vmem:[%s503 + $0x7e0] sm:$0xff]
        %v901 = vld [vmem:[%s503 + $0x7e8] sm:$0xff]
        %v902 = vld [vmem:[%s503 + $0x7f0] sm:$0xff]
        %v903 = vld [vmem:[%s503 + $0x7f8] sm:$0xff]
        %v904 = vld [vmem:[%s513] sm:$0xff]
        %v905 = vld [vmem:[%s513 + $0x8] sm:$0xff]
        %v906 = vld [vmem:[%s513 + $0x10] sm:$0xff]
        %v907 = vld [vmem:[%s513 + $0x18] sm:$0xff]
        %v908 = vld [vmem:[%s513 + $0x20] sm:$0xff]
        %v909 = vld [vmem:[%s513 + $0x28] sm:$0xff]
        %v910 = vld [vmem:[%s513 + $0x30] sm:$0xff]
        %v911 = vld [vmem:[%s513 + $0x38] sm:$0xff]
        %v912 = vld [vmem:[%s513 + $0x40] sm:$0xff]
        %v913 = vld [vmem:[%s513 + $0x48] sm:$0xff]
        %v914 = vld [vmem:[%s513 + $0x50] sm:$0xff]
        %v915 = vld [vmem:[%s513 + $0x58] sm:$0xff]
        %v916 = vld [vmem:[%s513 + $0x60] sm:$0xff]
        %v917 = vld [vmem:[%s513 + $0x68] sm:$0xff]
        %v918 = vld [vmem:[%s513 + $0x70] sm:$0xff]
        %v919 = vld [vmem:[%s513 + $0x78] sm:$0xff]
        %v920 = vld [vmem:[%s513 + $0x80] sm:$0xff]
        %v921 = vld [vmem:[%s513 + $0x88] sm:$0xff]
        %v922 = vld [vmem:[%s513 + $0x90] sm:$0xff]
        %v923 = vld [vmem:[%s513 + $0x98] sm:$0xff]
        %v924 = vld [vmem:[%s513 + $0xa0] sm:$0xff]
        %v925 = vld [vmem:[%s513 + $0xa8] sm:$0xff]
        %v926 = vld [vmem:[%s513 + $0xb0] sm:$0xff]
        %v927 = vld [vmem:[%s513 + $0xb8] sm:$0xff]
        %v928 = vld [vmem:[%s513 + $0xc0] sm:$0xff]
        %v929 = vld [vmem:[%s513 + $0xc8] sm:$0xff]
        %v930 = vld [vmem:[%s513 + $0xd0] sm:$0xff]
        %v931 = vld [vmem:[%s513 + $0xd8] sm:$0xff]
        %v932 = vld [vmem:[%s513 + $0xe0] sm:$0xff]
        %v933 = vld [vmem:[%s513 + $0xe8] sm:$0xff]
        %v934 = vld [vmem:[%s513 + $0xf0] sm:$0xff]
        %v935 = vld [vmem:[%s513 + $0xf8] sm:$0xff]
        %v936 = vld [vmem:[%s513 + $0x100] sm:$0xff]
        %v937 = vld [vmem:[%s513 + $0x108] sm:$0xff]
        %v938 = vld [vmem:[%s513 + $0x110] sm:$0xff]
        %v939 = vld [vmem:[%s513 + $0x118] sm:$0xff]
        %v940 = vld [vmem:[%s513 + $0x120] sm:$0xff]
        %v941 = vld [vmem:[%s513 + $0x128] sm:$0xff]
        %v942 = vld [vmem:[%s513 + $0x130] sm:$0xff]
        %v943 = vld [vmem:[%s513 + $0x138] sm:$0xff]
        %v944 = vld [vmem:[%s513 + $0x140] sm:$0xff]
        %v945 = vld [vmem:[%s513 + $0x148] sm:$0xff]
        %v946 = vld [vmem:[%s513 + $0x150] sm:$0xff]
        %v947 = vld [vmem:[%s513 + $0x158] sm:$0xff]
        %v948 = vld [vmem:[%s513 + $0x160] sm:$0xff]
        %v949 = vld [vmem:[%s513 + $0x168] sm:$0xff]
        %v950 = vld [vmem:[%s513 + $0x170] sm:$0xff]
        %v951 = vld [vmem:[%s513 + $0x178] sm:$0xff]
        %v952 = vld [vmem:[%s513 + $0x180] sm:$0xff]
        %v953 = vld [vmem:[%s513 + $0x188] sm:$0xff]
        %v954 = vld [vmem:[%s513 + $0x190] sm:$0xff]
        %v955 = vld [vmem:[%s513 + $0x198] sm:$0xff]
        %v956 = vld [vmem:[%s513 + $0x1a0] sm:$0xff]
        %v957 = vld [vmem:[%s513 + $0x1a8] sm:$0xff]
        %v958 = vld [vmem:[%s513 + $0x1b0] sm:$0xff]
        %v959 = vld [vmem:[%s513 + $0x1b8] sm:$0xff]
        %v960 = vld [vmem:[%s513 + $0x1c0] sm:$0xff]
        %v961 = vld [vmem:[%s513 + $0x1c8] sm:$0xff]
        %v962 = vld [vmem:[%s513 + $0x1d0] sm:$0xff]
        %v963 = vld [vmem:[%s513 + $0x1d8] sm:$0xff]
        %v964 = vld [vmem:[%s513 + $0x1e0] sm:$0xff]
        %v965 = vld [vmem:[%s513 + $0x1e8] sm:$0xff]
        %v966 = vld [vmem:[%s513 + $0x1f0] sm:$0xff]
        %v967 = vld [vmem:[%s513 + $0x1f8] sm:$0xff]
        %v968 = vld [vmem:[%s513 + $0x200] sm:$0xff]
        %v969 = vld [vmem:[%s513 + $0x208] sm:$0xff]
        %v970 = vld [vmem:[%s513 + $0x210] sm:$0xff]
        %v971 = vld [vmem:[%s513 + $0x218] sm:$0xff]
        %v972 = vld [vmem:[%s513 + $0x220] sm:$0xff]
        %v973 = vld [vmem:[%s513 + $0x228] sm:$0xff]
        %v974 = vld [vmem:[%s513 + $0x230] sm:$0xff]
        %v975 = vld [vmem:[%s513 + $0x238] sm:$0xff]
        %v976 = vld [vmem:[%s513 + $0x240] sm:$0xff]
        %v977 = vld [vmem:[%s513 + $0x248] sm:$0xff]
        %v978 = vld [vmem:[%s513 + $0x250] sm:$0xff]
        %v979 = vld [vmem:[%s513 + $0x258] sm:$0xff]
        %v980 = vld [vmem:[%s513 + $0x260] sm:$0xff]
        %v981 = vld [vmem:[%s513 + $0x268] sm:$0xff]
        %v982 = vld [vmem:[%s513 + $0x270] sm:$0xff]
        %v983 = vld [vmem:[%s513 + $0x278] sm:$0xff]
        %v984 = vld [vmem:[%s513 + $0x280] sm:$0xff]
        %v985 = vld [vmem:[%s513 + $0x288] sm:$0xff]
        %v986 = vld [vmem:[%s513 + $0x290] sm:$0xff]
        %v987 = vld [vmem:[%s513 + $0x298] sm:$0xff]
        %v988 = vld [vmem:[%s513 + $0x2a0] sm:$0xff]
        %v989 = vld [vmem:[%s513 + $0x2a8] sm:$0xff]
        %v990 = vld [vmem:[%s513 + $0x2b0] sm:$0xff]
        %v991 = vld [vmem:[%s513 + $0x2b8] sm:$0xff]
        %v992 = vld [vmem:[%s513 + $0x2c0] sm:$0xff]
        %v993 = vld [vmem:[%s513 + $0x2c8] sm:$0xff]
        %v994 = vld [vmem:[%s513 + $0x2d0] sm:$0xff]
        %v995 = vld [vmem:[%s513 + $0x2d8] sm:$0xff]
        %v996 = vld [vmem:[%s513 + $0x2e0] sm:$0xff]
        %v997 = vld [vmem:[%s513 + $0x2e8] sm:$0xff]
        %v998 = vld [vmem:[%s513 + $0x2f0] sm:$0xff]
        %v999 = vld [vmem:[%s513 + $0x2f8] sm:$0xff]
        %v1000 = vld [vmem:[%s513 + $0x300] sm:$0xff]
        %v1001 = vld [vmem:[%s513 + $0x308] sm:$0xff]
        %v1002 = vld [vmem:[%s513 + $0x310] sm:$0xff]
        %v1003 = vld [vmem:[%s513 + $0x318] sm:$0xff]
        %v1004 = vld [vmem:[%s513 + $0x320] sm:$0xff]
        %v1005 = vld [vmem:[%s513 + $0x328] sm:$0xff]
        %v1006 = vld [vmem:[%s513 + $0x330] sm:$0xff]
        %v1007 = vld [vmem:[%s513 + $0x338] sm:$0xff]
        %v1008 = vld [vmem:[%s513 + $0x340] sm:$0xff]
        %v1009 = vld [vmem:[%s513 + $0x348] sm:$0xff]
        %v1010 = vld [vmem:[%s513 + $0x350] sm:$0xff]
        %v1011 = vld [vmem:[%s513 + $0x358] sm:$0xff]
        %v1012 = vld [vmem:[%s513 + $0x360] sm:$0xff]
        %v1013 = vld [vmem:[%s513 + $0x368] sm:$0xff]
        %v1014 = vld [vmem:[%s513 + $0x370] sm:$0xff]
        %v1015 = vld [vmem:[%s513 + $0x378] sm:$0xff]
        %v1016 = vld [vmem:[%s513 + $0x380] sm:$0xff]
        %v1017 = vld [vmem:[%s513 + $0x388] sm:$0xff]
        %v1018 = vld [vmem:[%s513 + $0x390] sm:$0xff]
        %v1019 = vld [vmem:[%s513 + $0x398] sm:$0xff]
        %v1020 = vld [vmem:[%s513 + $0x3a0] sm:$0xff]
        %v1021 = vld [vmem:[%s513 + $0x3a8] sm:$0xff]
        %v1022 = vld [vmem:[%s513 + $0x3b0] sm:$0xff]
        %v1023 = vld [vmem:[%s513 + $0x3b8] sm:$0xff]
        %v1024 = vld [vmem:[%s513 + $0x3c0] sm:$0xff]
        %v1025 = vld [vmem:[%s513 + $0x3c8] sm:$0xff]
        %v1026 = vld [vmem:[%s513 + $0x3d0] sm:$0xff]
        %v1027 = vld [vmem:[%s513 + $0x3d8] sm:$0xff]
        %v1028 = vld [vmem:[%s513 + $0x3e0] sm:$0xff]
        %v1029 = vld [vmem:[%s513 + $0x3e8] sm:$0xff]
        %v1030 = vld [vmem:[%s513 + $0x3f0] sm:$0xff]
        %v1031 = vld [vmem:[%s513 + $0x3f8] sm:$0xff]
        %v1032 = vld [vmem:[%s513 + $0x400] sm:$0xff]
        %v1033 = vld [vmem:[%s513 + $0x408] sm:$0xff]
        %v1034 = vld [vmem:[%s513 + $0x410] sm:$0xff]
        %v1035 = vld [vmem:[%s513 + $0x418] sm:$0xff]
        %v1036 = vld [vmem:[%s513 + $0x420] sm:$0xff]
        %v1037 = vld [vmem:[%s513 + $0x428] sm:$0xff]
        %v1038 = vld [vmem:[%s513 + $0x430] sm:$0xff]
        %v1039 = vld [vmem:[%s513 + $0x438] sm:$0xff]
        %v1040 = vld [vmem:[%s513 + $0x440] sm:$0xff]
        %v1041 = vld [vmem:[%s513 + $0x448] sm:$0xff]
        %v1042 = vld [vmem:[%s513 + $0x450] sm:$0xff]
        %v1043 = vld [vmem:[%s513 + $0x458] sm:$0xff]
        %v1044 = vld [vmem:[%s513 + $0x460] sm:$0xff]
        %v1045 = vld [vmem:[%s513 + $0x468] sm:$0xff]
        %v1046 = vld [vmem:[%s513 + $0x470] sm:$0xff]
        %v1047 = vld [vmem:[%s513 + $0x478] sm:$0xff]
        %v1048 = vld [vmem:[%s513 + $0x480] sm:$0xff]
        %v1049 = vld [vmem:[%s513 + $0x488] sm:$0xff]
        %v1050 = vld [vmem:[%s513 + $0x490] sm:$0xff]
        %v1051 = vld [vmem:[%s513 + $0x498] sm:$0xff]
        %v1052 = vld [vmem:[%s513 + $0x4a0] sm:$0xff]
        %v1053 = vld [vmem:[%s513 + $0x4a8] sm:$0xff]
        %v1054 = vld [vmem:[%s513 + $0x4b0] sm:$0xff]
        %v1055 = vld [vmem:[%s513 + $0x4b8] sm:$0xff]
        %v1056 = vld [vmem:[%s513 + $0x4c0] sm:$0xff]
        %v1057 = vld [vmem:[%s513 + $0x4c8] sm:$0xff]
        %v1058 = vld [vmem:[%s513 + $0x4d0] sm:$0xff]
        %v1059 = vld [vmem:[%s513 + $0x4d8] sm:$0xff]
        %v1060 = vld [vmem:[%s513 + $0x4e0] sm:$0xff]
        %v1061 = vld [vmem:[%s513 + $0x4e8] sm:$0xff]
        %v1062 = vld [vmem:[%s513 + $0x4f0] sm:$0xff]
        %v1063 = vld [vmem:[%s513 + $0x4f8] sm:$0xff]
        %v1064 = vld [vmem:[%s513 + $0x500] sm:$0xff]
        %v1065 = vld [vmem:[%s513 + $0x508] sm:$0xff]
        %v1066 = vld [vmem:[%s513 + $0x510] sm:$0xff]
        %v1067 = vld [vmem:[%s513 + $0x518] sm:$0xff]
        %v1068 = vld [vmem:[%s513 + $0x520] sm:$0xff]
        %v1069 = vld [vmem:[%s513 + $0x528] sm:$0xff]
        %v1070 = vld [vmem:[%s513 + $0x530] sm:$0xff]
        %v1071 = vld [vmem:[%s513 + $0x538] sm:$0xff]
        %v1072 = vld [vmem:[%s513 + $0x540] sm:$0xff]
        %v1073 = vld [vmem:[%s513 + $0x548] sm:$0xff]
        %v1074 = vld [vmem:[%s513 + $0x550] sm:$0xff]
        %v1075 = vld [vmem:[%s513 + $0x558] sm:$0xff]
        %v1076 = vld [vmem:[%s513 + $0x560] sm:$0xff]
        %v1077 = vld [vmem:[%s513 + $0x568] sm:$0xff]
        %v1078 = vld [vmem:[%s513 + $0x570] sm:$0xff]
        %v1079 = vld [vmem:[%s513 + $0x578] sm:$0xff]
        %v1080 = vld [vmem:[%s513 + $0x580] sm:$0xff]
        %v1081 = vld [vmem:[%s513 + $0x588] sm:$0xff]
        %v1082 = vld [vmem:[%s513 + $0x590] sm:$0xff]
        %v1083 = vld [vmem:[%s513 + $0x598] sm:$0xff]
        %v1084 = vld [vmem:[%s513 + $0x5a0] sm:$0xff]
        %v1085 = vld [vmem:[%s513 + $0x5a8] sm:$0xff]
        %v1086 = vld [vmem:[%s513 + $0x5b0] sm:$0xff]
        %v1087 = vld [vmem:[%s513 + $0x5b8] sm:$0xff]
        %v1088 = vld [vmem:[%s513 + $0x5c0] sm:$0xff]
        %v1089 = vld [vmem:[%s513 + $0x5c8] sm:$0xff]
        %v1090 = vld [vmem:[%s513 + $0x5d0] sm:$0xff]
        %v1091 = vld [vmem:[%s513 + $0x5d8] sm:$0xff]
        %v1092 = vld [vmem:[%s513 + $0x5e0] sm:$0xff]
        %v1093 = vld [vmem:[%s513 + $0x5e8] sm:$0xff]
        %v1094 = vld [vmem:[%s513 + $0x5f0] sm:$0xff]
        %v1095 = vld [vmem:[%s513 + $0x5f8] sm:$0xff]
        %v1096 = vld [vmem:[%s513 + $0x600] sm:$0xff]
        %v1097 = vld [vmem:[%s513 + $0x608] sm:$0xff]
        %v1098 = vld [vmem:[%s513 + $0x610] sm:$0xff]
        %v1099 = vld [vmem:[%s513 + $0x618] sm:$0xff]
        %v1100 = vld [vmem:[%s513 + $0x620] sm:$0xff]
        %v1101 = vld [vmem:[%s513 + $0x628] sm:$0xff]
        %v1102 = vld [vmem:[%s513 + $0x630] sm:$0xff]
        %v1103 = vld [vmem:[%s513 + $0x638] sm:$0xff]
        %v1104 = vld [vmem:[%s513 + $0x640] sm:$0xff]
        %v1105 = vld [vmem:[%s513 + $0x648] sm:$0xff]
        %v1106 = vld [vmem:[%s513 + $0x650] sm:$0xff]
        %v1107 = vld [vmem:[%s513 + $0x658] sm:$0xff]
        %v1108 = vld [vmem:[%s513 + $0x660] sm:$0xff]
        %v1109 = vld [vmem:[%s513 + $0x668] sm:$0xff]
        %v1110 = vld [vmem:[%s513 + $0x670] sm:$0xff]
        %v1111 = vld [vmem:[%s513 + $0x678] sm:$0xff]
        %v1112 = vld [vmem:[%s513 + $0x680] sm:$0xff]
        %v1113 = vld [vmem:[%s513 + $0x688] sm:$0xff]
        %v1114 = vld [vmem:[%s513 + $0x690] sm:$0xff]
        %v1115 = vld [vmem:[%s513 + $0x698] sm:$0xff]
        %v1116 = vld [vmem:[%s513 + $0x6a0] sm:$0xff]
        %v1117 = vld [vmem:[%s513 + $0x6a8] sm:$0xff]
        %v1118 = vld [vmem:[%s513 + $0x6b0] sm:$0xff]
        %v1119 = vld [vmem:[%s513 + $0x6b8] sm:$0xff]
        %v1120 = vld [vmem:[%s513 + $0x6c0] sm:$0xff]
        %v1121 = vld [vmem:[%s513 + $0x6c8] sm:$0xff]
        %v1122 = vld [vmem:[%s513 + $0x6d0] sm:$0xff]
        %v1123 = vld [vmem:[%s513 + $0x6d8] sm:$0xff]
        %v1124 = vld [vmem:[%s513 + $0x6e0] sm:$0xff]
        %v1125 = vld [vmem:[%s513 + $0x6e8] sm:$0xff]
        %v1126 = vld [vmem:[%s513 + $0x6f0] sm:$0xff]
        %v1127 = vld [vmem:[%s513 + $0x6f8] sm:$0xff]
        %v1128 = vld [vmem:[%s513 + $0x700] sm:$0xff]
        %v1129 = vld [vmem:[%s513 + $0x708] sm:$0xff]
        %v1130 = vld [vmem:[%s513 + $0x710] sm:$0xff]
        %v1131 = vld [vmem:[%s513 + $0x718] sm:$0xff]
        %v1132 = vld [vmem:[%s513 + $0x720] sm:$0xff]
        %v1133 = vld [vmem:[%s513 + $0x728] sm:$0xff]
        %v1134 = vld [vmem:[%s513 + $0x730] sm:$0xff]
        %v1135 = vld [vmem:[%s513 + $0x738] sm:$0xff]
        %v1136 = vld [vmem:[%s513 + $0x740] sm:$0xff]
        %v1137 = vld [vmem:[%s513 + $0x748] sm:$0xff]
        %v1138 = vld [vmem:[%s513 + $0x750] sm:$0xff]
        %v1139 = vld [vmem:[%s513 + $0x758] sm:$0xff]
        %v1140 = vld [vmem:[%s513 + $0x760] sm:$0xff]
        %v1141 = vld [vmem:[%s513 + $0x768] sm:$0xff]
        %v1142 = vld [vmem:[%s513 + $0x770] sm:$0xff]
        %v1143 = vld [vmem:[%s513 + $0x778] sm:$0xff]
        %v1144 = vld [vmem:[%s513 + $0x780] sm:$0xff]
        %v1145 = vld [vmem:[%s513 + $0x788] sm:$0xff]
        %v1146 = vld [vmem:[%s513 + $0x790] sm:$0xff]
        %v1147 = vld [vmem:[%s513 + $0x798] sm:$0xff]
        %v1148 = vld [vmem:[%s513 + $0x7a0] sm:$0xff]
        %v1149 = vld [vmem:[%s513 + $0x7a8] sm:$0xff]
        %v1150 = vld [vmem:[%s513 + $0x7b0] sm:$0xff]
        %v1151 = vld [vmem:[%s513 + $0x7b8] sm:$0xff]
        %v1152 = vld [vmem:[%s513 + $0x7c0] sm:$0xff]
        %v1153 = vld [vmem:[%s513 + $0x7c8] sm:$0xff]
        %v1154 = vld [vmem:[%s513 + $0x7d0] sm:$0xff]
        %v1155 = vld [vmem:[%s513 + $0x7d8] sm:$0xff]
        %v1156 = vld [vmem:[%s513 + $0x7e0] sm:$0xff]
        %v1157 = vld [vmem:[%s513 + $0x7e8] sm:$0xff]
        %v1158 = vld [vmem:[%s513 + $0x7f0] sm:$0xff]
        %v1159 = vld [vmem:[%s513 + $0x7f8] sm:$0xff]
        %v1160 = vld [vmem:[%s513 + $0x800] sm:$0xff]
        %v1161 = vld [vmem:[%s513 + $0x808] sm:$0xff]
        %v1162 = vld [vmem:[%s513 + $0x810] sm:$0xff]
        %v1163 = vld [vmem:[%s513 + $0x818] sm:$0xff]
        %v1164 = vld [vmem:[%s513 + $0x820] sm:$0xff]
        %v1165 = vld [vmem:[%s513 + $0x828] sm:$0xff]
        %v1166 = vld [vmem:[%s513 + $0x830] sm:$0xff]
        %v1167 = vld [vmem:[%s513 + $0x838] sm:$0xff]
        %v1168 = vld [vmem:[%s513 + $0x840] sm:$0xff]
        %v1169 = vld [vmem:[%s513 + $0x848] sm:$0xff]
        %v1170 = vld [vmem:[%s513 + $0x850] sm:$0xff]
        %v1171 = vld [vmem:[%s513 + $0x858] sm:$0xff]
        %v1172 = vld [vmem:[%s513 + $0x860] sm:$0xff]
        %v1173 = vld [vmem:[%s513 + $0x868] sm:$0xff]
        %v1174 = vld [vmem:[%s513 + $0x870] sm:$0xff]
        %v1175 = vld [vmem:[%s513 + $0x878] sm:$0xff]
        %v1176 = vld [vmem:[%s513 + $0x880] sm:$0xff]
        %v1177 = vld [vmem:[%s513 + $0x888] sm:$0xff]
        %v1178 = vld [vmem:[%s513 + $0x890] sm:$0xff]
        %v1179 = vld [vmem:[%s513 + $0x898] sm:$0xff]
        %v1180 = vld [vmem:[%s513 + $0x8a0] sm:$0xff]
        %v1181 = vld [vmem:[%s513 + $0x8a8] sm:$0xff]
        %v1182 = vld [vmem:[%s513 + $0x8b0] sm:$0xff]
        %v1183 = vld [vmem:[%s513 + $0x8b8] sm:$0xff]
        %v1184 = vld [vmem:[%s513 + $0x8c0] sm:$0xff]
        %v1185 = vld [vmem:[%s513 + $0x8c8] sm:$0xff]
        %v1186 = vld [vmem:[%s513 + $0x8d0] sm:$0xff]
        %v1187 = vld [vmem:[%s513 + $0x8d8] sm:$0xff]
        %v1188 = vld [vmem:[%s513 + $0x8e0] sm:$0xff]
        %v1189 = vld [vmem:[%s513 + $0x8e8] sm:$0xff]
        %v1190 = vld [vmem:[%s513 + $0x8f0] sm:$0xff]
        %v1191 = vld [vmem:[%s513 + $0x8f8] sm:$0xff]
        %v1192 = vld [vmem:[%s513 + $0x900] sm:$0xff]
        %v1193 = vld [vmem:[%s513 + $0x908] sm:$0xff]
        %v1194 = vld [vmem:[%s513 + $0x910] sm:$0xff]
        %v1195 = vld [vmem:[%s513 + $0x918] sm:$0xff]
        %v1196 = vld [vmem:[%s513 + $0x920] sm:$0xff]
        %v1197 = vld [vmem:[%s513 + $0x928] sm:$0xff]
        %v1198 = vld [vmem:[%s513 + $0x930] sm:$0xff]
        %v1199 = vld [vmem:[%s513 + $0x938] sm:$0xff]
        %v1200 = vld [vmem:[%s513 + $0x940] sm:$0xff]
        %v1201 = vld [vmem:[%s513 + $0x948] sm:$0xff]
        %v1202 = vld [vmem:[%s513 + $0x950] sm:$0xff]
        %v1203 = vld [vmem:[%s513 + $0x958] sm:$0xff]
        %v1204 = vld [vmem:[%s513 + $0x960] sm:$0xff]
        %v1205 = vld [vmem:[%s513 + $0x968] sm:$0xff]
        %v1206 = vld [vmem:[%s513 + $0x970] sm:$0xff]
        %v1207 = vld [vmem:[%s513 + $0x978] sm:$0xff]
        %v1208 = vld [vmem:[%s513 + $0x980] sm:$0xff]
        %v1209 = vld [vmem:[%s513 + $0x988] sm:$0xff]
        %v1210 = vld [vmem:[%s513 + $0x990] sm:$0xff]
        %v1211 = vld [vmem:[%s513 + $0x998] sm:$0xff]
        %v1212 = vld [vmem:[%s513 + $0x9a0] sm:$0xff]
        %v1213 = vld [vmem:[%s513 + $0x9a8] sm:$0xff]
        %v1214 = vld [vmem:[%s513 + $0x9b0] sm:$0xff]
        %v1215 = vld [vmem:[%s513 + $0x9b8] sm:$0xff]
        %v1216 = vld [vmem:[%s513 + $0x9c0] sm:$0xff]
        %v1217 = vld [vmem:[%s513 + $0x9c8] sm:$0xff]
        %v1218 = vld [vmem:[%s513 + $0x9d0] sm:$0xff]
        %v1219 = vld [vmem:[%s513 + $0x9d8] sm:$0xff]
        %v1220 = vld [vmem:[%s513 + $0x9e0] sm:$0xff]
        %v1221 = vld [vmem:[%s513 + $0x9e8] sm:$0xff]
        %v1222 = vld [vmem:[%s513 + $0x9f0] sm:$0xff]
        %v1223 = vld [vmem:[%s513 + $0x9f8] sm:$0xff]
        %v1224 = vld [vmem:[%s513 + $0xa00] sm:$0xff]
        %v1225 = vld [vmem:[%s513 + $0xa08] sm:$0xff]
        %v1226 = vld [vmem:[%s513 + $0xa10] sm:$0xff]
        %v1227 = vld [vmem:[%s513 + $0xa18] sm:$0xff]
        %v1228 = vld [vmem:[%s513 + $0xa20] sm:$0xff]
        %v1229 = vld [vmem:[%s513 + $0xa28] sm:$0xff]
        %v1230 = vld [vmem:[%s513 + $0xa30] sm:$0xff]
        %v1231 = vld [vmem:[%s513 + $0xa38] sm:$0xff]
        %v1232 = vld [vmem:[%s513 + $0xa40] sm:$0xff]
        %v1233 = vld [vmem:[%s513 + $0xa48] sm:$0xff]
        %v1234 = vld [vmem:[%s513 + $0xa50] sm:$0xff]
        %v1235 = vld [vmem:[%s513 + $0xa58] sm:$0xff]
        %v1236 = vld [vmem:[%s513 + $0xa60] sm:$0xff]
        %v1237 = vld [vmem:[%s513 + $0xa68] sm:$0xff]
        %v1238 = vld [vmem:[%s513 + $0xa70] sm:$0xff]
        %v1239 = vld [vmem:[%s513 + $0xa78] sm:$0xff]
        %v1240 = vld [vmem:[%s513 + $0xa80] sm:$0xff]
        %v1241 = vld [vmem:[%s513 + $0xa88] sm:$0xff]
        %v1242 = vld [vmem:[%s513 + $0xa90] sm:$0xff]
        %v1243 = vld [vmem:[%s513 + $0xa98] sm:$0xff]
        %v1244 = vld [vmem:[%s513 + $0xaa0] sm:$0xff]
        %v1245 = vld [vmem:[%s513 + $0xaa8] sm:$0xff]
        %v1246 = vld [vmem:[%s513 + $0xab0] sm:$0xff]
        %v1247 = vld [vmem:[%s513 + $0xab8] sm:$0xff]
        %v1248 = vld [vmem:[%s513 + $0xac0] sm:$0xff]
        %v1249 = vld [vmem:[%s513 + $0xac8] sm:$0xff]
        %v1250 = vld [vmem:[%s513 + $0xad0] sm:$0xff]
        %v1251 = vld [vmem:[%s513 + $0xad8] sm:$0xff]
        %v1252 = vld [vmem:[%s513 + $0xae0] sm:$0xff]
        %v1253 = vld [vmem:[%s513 + $0xae8] sm:$0xff]
        %v1254 = vld [vmem:[%s513 + $0xaf0] sm:$0xff]
        %v1255 = vld [vmem:[%s513 + $0xaf8] sm:$0xff]
        %v1256 = vld [vmem:[%s513 + $0xb00] sm:$0xff]
        %v1257 = vld [vmem:[%s513 + $0xb08] sm:$0xff]
        %v1258 = vld [vmem:[%s513 + $0xb10] sm:$0xff]
        %v1259 = vld [vmem:[%s513 + $0xb18] sm:$0xff]
        %v1260 = vld [vmem:[%s513 + $0xb20] sm:$0xff]
        %v1261 = vld [vmem:[%s513 + $0xb28] sm:$0xff]
        %v1262 = vld [vmem:[%s513 + $0xb30] sm:$0xff]
        %v1263 = vld [vmem:[%s513 + $0xb38] sm:$0xff]
        %v1264 = vld [vmem:[%s513 + $0xb40] sm:$0xff]
        %v1265 = vld [vmem:[%s513 + $0xb48] sm:$0xff]
        %v1266 = vld [vmem:[%s513 + $0xb50] sm:$0xff]
        %v1267 = vld [vmem:[%s513 + $0xb58] sm:$0xff]
        %v1268 = vld [vmem:[%s513 + $0xb60] sm:$0xff]
        %v1269 = vld [vmem:[%s513 + $0xb68] sm:$0xff]
        %v1270 = vld [vmem:[%s513 + $0xb70] sm:$0xff]
        %v1271 = vld [vmem:[%s513 + $0xb78] sm:$0xff]
        %v1272 = vld [vmem:[%s513 + $0xb80] sm:$0xff]
        %v1273 = vld [vmem:[%s513 + $0xb88] sm:$0xff]
        %v1274 = vld [vmem:[%s513 + $0xb90] sm:$0xff]
        %v1275 = vld [vmem:[%s513 + $0xb98] sm:$0xff]
        %v1276 = vld [vmem:[%s513 + $0xba0] sm:$0xff]
        %v1277 = vld [vmem:[%s513 + $0xba8] sm:$0xff]
        %v1278 = vld [vmem:[%s513 + $0xbb0] sm:$0xff]
        %v1279 = vld [vmem:[%s513 + $0xbb8] sm:$0xff]
        %v1280 = vld [vmem:[%s513 + $0xbc0] sm:$0xff]
        %v1281 = vld [vmem:[%s513 + $0xbc8] sm:$0xff]
        %v1282 = vld [vmem:[%s513 + $0xbd0] sm:$0xff]
        %v1283 = vld [vmem:[%s513 + $0xbd8] sm:$0xff]
        %v1284 = vld [vmem:[%s513 + $0xbe0] sm:$0xff]
        %v1285 = vld [vmem:[%s513 + $0xbe8] sm:$0xff]
        %v1286 = vld [vmem:[%s513 + $0xbf0] sm:$0xff]
        %v1287 = vld [vmem:[%s513 + $0xbf8] sm:$0xff]
        %v1288 = vld [vmem:[%s513 + $0xc00] sm:$0xff]
        %v1289 = vld [vmem:[%s513 + $0xc08] sm:$0xff]
        %v1290 = vld [vmem:[%s513 + $0xc10] sm:$0xff]
        %v1291 = vld [vmem:[%s513 + $0xc18] sm:$0xff]
        %v1292 = vld [vmem:[%s513 + $0xc20] sm:$0xff]
        %v1293 = vld [vmem:[%s513 + $0xc28] sm:$0xff]
        %v1294 = vld [vmem:[%s513 + $0xc30] sm:$0xff]
        %v1295 = vld [vmem:[%s513 + $0xc38] sm:$0xff]
        %v1296 = vld [vmem:[%s513 + $0xc40] sm:$0xff]
        %v1297 = vld [vmem:[%s513 + $0xc48] sm:$0xff]
        %v1298 = vld [vmem:[%s513 + $0xc50] sm:$0xff]
        %v1299 = vld [vmem:[%s513 + $0xc58] sm:$0xff]
        %v1300 = vld [vmem:[%s513 + $0xc60] sm:$0xff]
        %v1301 = vld [vmem:[%s513 + $0xc68] sm:$0xff]
        %v1302 = vld [vmem:[%s513 + $0xc70] sm:$0xff]
        %v1303 = vld [vmem:[%s513 + $0xc78] sm:$0xff]
        %v1304 = vld [vmem:[%s513 + $0xc80] sm:$0xff]
        %v1305 = vld [vmem:[%s513 + $0xc88] sm:$0xff]
        %v1306 = vld [vmem:[%s513 + $0xc90] sm:$0xff]
        %v1307 = vld [vmem:[%s513 + $0xc98] sm:$0xff]
        %v1308 = vld [vmem:[%s513 + $0xca0] sm:$0xff]
        %v1309 = vld [vmem:[%s513 + $0xca8] sm:$0xff]
        %v1310 = vld [vmem:[%s513 + $0xcb0] sm:$0xff]
        %v1311 = vld [vmem:[%s513 + $0xcb8] sm:$0xff]
        %v1312 = vld [vmem:[%s513 + $0xcc0] sm:$0xff]
        %v1313 = vld [vmem:[%s513 + $0xcc8] sm:$0xff]
        %v1314 = vld [vmem:[%s513 + $0xcd0] sm:$0xff]
        %v1315 = vld [vmem:[%s513 + $0xcd8] sm:$0xff]
        %v1316 = vld [vmem:[%s513 + $0xce0] sm:$0xff]
        %v1317 = vld [vmem:[%s513 + $0xce8] sm:$0xff]
        %v1318 = vld [vmem:[%s513 + $0xcf0] sm:$0xff]
        %v1319 = vld [vmem:[%s513 + $0xcf8] sm:$0xff]
        %v1320 = vld [vmem:[%s513 + $0xd00] sm:$0xff]
        %v1321 = vld [vmem:[%s513 + $0xd08] sm:$0xff]
        %v1322 = vld [vmem:[%s513 + $0xd10] sm:$0xff]
        %v1323 = vld [vmem:[%s513 + $0xd18] sm:$0xff]
        %v1324 = vld [vmem:[%s513 + $0xd20] sm:$0xff]
        %v1325 = vld [vmem:[%s513 + $0xd28] sm:$0xff]
        %v1326 = vld [vmem:[%s513 + $0xd30] sm:$0xff]
        %v1327 = vld [vmem:[%s513 + $0xd38] sm:$0xff]
        %v1328 = vld [vmem:[%s513 + $0xd40] sm:$0xff]
        %v1329 = vld [vmem:[%s513 + $0xd48] sm:$0xff]
        %v1330 = vld [vmem:[%s513 + $0xd50] sm:$0xff]
        %v1331 = vld [vmem:[%s513 + $0xd58] sm:$0xff]
        %v1332 = vld [vmem:[%s513 + $0xd60] sm:$0xff]
        %v1333 = vld [vmem:[%s513 + $0xd68] sm:$0xff]
        %v1334 = vld [vmem:[%s513 + $0xd70] sm:$0xff]
        %v1335 = vld [vmem:[%s513 + $0xd78] sm:$0xff]
        %v1336 = vld [vmem:[%s513 + $0xd80] sm:$0xff]
        %v1337 = vld [vmem:[%s513 + $0xd88] sm:$0xff]
        %v1338 = vld [vmem:[%s513 + $0xd90] sm:$0xff]
        %v1339 = vld [vmem:[%s513 + $0xd98] sm:$0xff]
        %v1340 = vld [vmem:[%s513 + $0xda0] sm:$0xff]
        %v1341 = vld [vmem:[%s513 + $0xda8] sm:$0xff]
        %v1342 = vld [vmem:[%s513 + $0xdb0] sm:$0xff]
        %v1343 = vld [vmem:[%s513 + $0xdb8] sm:$0xff]
        %v1344 = vld [vmem:[%s513 + $0xdc0] sm:$0xff]
        %v1345 = vld [vmem:[%s513 + $0xdc8] sm:$0xff]
        %v1346 = vld [vmem:[%s513 + $0xdd0] sm:$0xff]
        %v1347 = vld [vmem:[%s513 + $0xdd8] sm:$0xff]
        %v1348 = vld [vmem:[%s513 + $0xde0] sm:$0xff]
        %v1349 = vld [vmem:[%s513 + $0xde8] sm:$0xff]
        %v1350 = vld [vmem:[%s513 + $0xdf0] sm:$0xff]
        %v1351 = vld [vmem:[%s513 + $0xdf8] sm:$0xff]
        %v1352 = vld [vmem:[%s513 + $0xe00] sm:$0xff]
        %v1353 = vld [vmem:[%s513 + $0xe08] sm:$0xff]
        %v1354 = vld [vmem:[%s513 + $0xe10] sm:$0xff]
        %v1355 = vld [vmem:[%s513 + $0xe18] sm:$0xff]
        %v1356 = vld [vmem:[%s513 + $0xe20] sm:$0xff]
        %v1357 = vld [vmem:[%s513 + $0xe28] sm:$0xff]
        %v1358 = vld [vmem:[%s513 + $0xe30] sm:$0xff]
        %v1359 = vld [vmem:[%s513 + $0xe38] sm:$0xff]
        %v1360 = vld [vmem:[%s513 + $0xe40] sm:$0xff]
        %v1361 = vld [vmem:[%s513 + $0xe48] sm:$0xff]
        %v1362 = vld [vmem:[%s513 + $0xe50] sm:$0xff]
        %v1363 = vld [vmem:[%s513 + $0xe58] sm:$0xff]
        %v1364 = vld [vmem:[%s513 + $0xe60] sm:$0xff]
        %v1365 = vld [vmem:[%s513 + $0xe68] sm:$0xff]
        %v1366 = vld [vmem:[%s513 + $0xe70] sm:$0xff]
        %v1367 = vld [vmem:[%s513 + $0xe78] sm:$0xff]
        %v1368 = vld [vmem:[%s513 + $0xe80] sm:$0xff]
        %v1369 = vld [vmem:[%s513 + $0xe88] sm:$0xff]
        %v1370 = vld [vmem:[%s513 + $0xe90] sm:$0xff]
        %v1371 = vld [vmem:[%s513 + $0xe98] sm:$0xff]
        %v1372 = vld [vmem:[%s513 + $0xea0] sm:$0xff]
        %v1373 = vld [vmem:[%s513 + $0xea8] sm:$0xff]
        %v1374 = vld [vmem:[%s513 + $0xeb0] sm:$0xff]
        %v1375 = vld [vmem:[%s513 + $0xeb8] sm:$0xff]
        %v1376 = vld [vmem:[%s513 + $0xec0] sm:$0xff]
        %v1377 = vld [vmem:[%s513 + $0xec8] sm:$0xff]
        %v1378 = vld [vmem:[%s513 + $0xed0] sm:$0xff]
        %v1379 = vld [vmem:[%s513 + $0xed8] sm:$0xff]
        %v1380 = vld [vmem:[%s513 + $0xee0] sm:$0xff]
        %v1381 = vld [vmem:[%s513 + $0xee8] sm:$0xff]
        %v1382 = vld [vmem:[%s513 + $0xef0] sm:$0xff]
        %v1383 = vld [vmem:[%s513 + $0xef8] sm:$0xff]
        %v1384 = vld [vmem:[%s513 + $0xf00] sm:$0xff]
        %v1385 = vld [vmem:[%s513 + $0xf08] sm:$0xff]
        %v1386 = vld [vmem:[%s513 + $0xf10] sm:$0xff]
        %v1387 = vld [vmem:[%s513 + $0xf18] sm:$0xff]
        %v1388 = vld [vmem:[%s513 + $0xf20] sm:$0xff]
        %v1389 = vld [vmem:[%s513 + $0xf28] sm:$0xff]
        %v1390 = vld [vmem:[%s513 + $0xf30] sm:$0xff]
        %v1391 = vld [vmem:[%s513 + $0xf38] sm:$0xff]
        %v1392 = vld [vmem:[%s513 + $0xf40] sm:$0xff]
        %v1393 = vld [vmem:[%s513 + $0xf48] sm:$0xff]
        %v1394 = vld [vmem:[%s513 + $0xf50] sm:$0xff]
        %v1395 = vld [vmem:[%s513 + $0xf58] sm:$0xff]
        %v1396 = vld [vmem:[%s513 + $0xf60] sm:$0xff]
        %v1397 = vld [vmem:[%s513 + $0xf68] sm:$0xff]
        %v1398 = vld [vmem:[%s513 + $0xf70] sm:$0xff]
        %v1399 = vld [vmem:[%s513 + $0xf78] sm:$0xff]
        %v1400 = vld [vmem:[%s513 + $0xf80] sm:$0xff]
        %v1401 = vld [vmem:[%s513 + $0xf88] sm:$0xff]
        %v1402 = vld [vmem:[%s513 + $0xf90] sm:$0xff]
        %v1403 = vld [vmem:[%s513 + $0xf98] sm:$0xff]
        %v1404 = vld [vmem:[%s513 + $0xfa0] sm:$0xff]
        %v1405 = vld [vmem:[%s513 + $0xfa8] sm:$0xff]
        %v1406 = vld [vmem:[%s513 + $0xfb0] sm:$0xff]
        %v1407 = vld [vmem:[%s513 + $0xfb8] sm:$0xff]
        %v1408 = vld [vmem:[%s513 + $0xfc0] sm:$0xff]
        %v1409 = vld [vmem:[%s513 + $0xfc8] sm:$0xff]
        %v1410 = vld [vmem:[%s513 + $0xfd0] sm:$0xff]
        %v1411 = vld [vmem:[%s513 + $0xfd8] sm:$0xff]
        %v1412 = vld [vmem:[%s513 + $0xfe0] sm:$0xff]
        %v1413 = vld [vmem:[%s513 + $0xfe8] sm:$0xff]
        %v1414 = vld [vmem:[%s513 + $0xff0] sm:$0xff]
        %v1415 = vld [vmem:[%s513 + $0xff8] sm:$0xff]
        %v1416 = vld [vmem:[%s523] sm:$0xff]
        %v1417 = vld [vmem:[%s523 + $0x8] sm:$0xff]
        %v1418 = vld [vmem:[%s523 + $0x10] sm:$0xff]
        %v1419 = vld [vmem:[%s523 + $0x18] sm:$0xff]
        %v1420 = vld [vmem:[%s523 + $0x20] sm:$0xff]
        %v1421 = vld [vmem:[%s523 + $0x28] sm:$0xff]
        %v1422 = vld [vmem:[%s523 + $0x30] sm:$0xff]
        %v1423 = vld [vmem:[%s523 + $0x38] sm:$0xff]
        %v1424 = vld [vmem:[%s523 + $0x40] sm:$0xff]
        %v1425 = vld [vmem:[%s523 + $0x48] sm:$0xff]
        %v1426 = vld [vmem:[%s523 + $0x50] sm:$0xff]
        %v1427 = vld [vmem:[%s523 + $0x58] sm:$0xff]
        %v1428 = vld [vmem:[%s523 + $0x60] sm:$0xff]
        %v1429 = vld [vmem:[%s523 + $0x68] sm:$0xff]
        %v1430 = vld [vmem:[%s523 + $0x70] sm:$0xff]
        %v1431 = vld [vmem:[%s523 + $0x78] sm:$0xff]
        %v1432 = vld [vmem:[%s523 + $0x80] sm:$0xff]
        %v1433 = vld [vmem:[%s523 + $0x88] sm:$0xff]
        %v1434 = vld [vmem:[%s523 + $0x90] sm:$0xff]
        %v1435 = vld [vmem:[%s523 + $0x98] sm:$0xff]
        %v1436 = vld [vmem:[%s523 + $0xa0] sm:$0xff]
        %v1437 = vld [vmem:[%s523 + $0xa8] sm:$0xff]
        %v1438 = vld [vmem:[%s523 + $0xb0] sm:$0xff]
        %v1439 = vld [vmem:[%s523 + $0xb8] sm:$0xff]
        %v1440 = vld [vmem:[%s523 + $0xc0] sm:$0xff]
        %v1441 = vld [vmem:[%s523 + $0xc8] sm:$0xff]
        %v1442 = vld [vmem:[%s523 + $0xd0] sm:$0xff]
        %v1443 = vld [vmem:[%s523 + $0xd8] sm:$0xff]
        %v1444 = vld [vmem:[%s523 + $0xe0] sm:$0xff]
        %v1445 = vld [vmem:[%s523 + $0xe8] sm:$0xff]
        %v1446 = vld [vmem:[%s523 + $0xf0] sm:$0xff]
        %v1447 = vld [vmem:[%s523 + $0xf8] sm:$0xff]
        %v1448 = vld [vmem:[%s523 + $0x100] sm:$0xff]
        %v1449 = vld [vmem:[%s523 + $0x108] sm:$0xff]
        %v1450 = vld [vmem:[%s523 + $0x110] sm:$0xff]
        %v1451 = vld [vmem:[%s523 + $0x118] sm:$0xff]
        %v1452 = vld [vmem:[%s523 + $0x120] sm:$0xff]
        %v1453 = vld [vmem:[%s523 + $0x128] sm:$0xff]
        %v1454 = vld [vmem:[%s523 + $0x130] sm:$0xff]
        %v1455 = vld [vmem:[%s523 + $0x138] sm:$0xff]
        %v1456 = vld [vmem:[%s523 + $0x140] sm:$0xff]
        %v1457 = vld [vmem:[%s523 + $0x148] sm:$0xff]
        %v1458 = vld [vmem:[%s523 + $0x150] sm:$0xff]
        %v1459 = vld [vmem:[%s523 + $0x158] sm:$0xff]
        %v1460 = vld [vmem:[%s523 + $0x160] sm:$0xff]
        %v1461 = vld [vmem:[%s523 + $0x168] sm:$0xff]
        %v1462 = vld [vmem:[%s523 + $0x170] sm:$0xff]
        %v1463 = vld [vmem:[%s523 + $0x178] sm:$0xff]
        %v1464 = vld [vmem:[%s523 + $0x180] sm:$0xff]
        %v1465 = vld [vmem:[%s523 + $0x188] sm:$0xff]
        %v1466 = vld [vmem:[%s523 + $0x190] sm:$0xff]
        %v1467 = vld [vmem:[%s523 + $0x198] sm:$0xff]
        %v1468 = vld [vmem:[%s523 + $0x1a0] sm:$0xff]
        %v1469 = vld [vmem:[%s523 + $0x1a8] sm:$0xff]
        %v1470 = vld [vmem:[%s523 + $0x1b0] sm:$0xff]
        %v1471 = vld [vmem:[%s523 + $0x1b8] sm:$0xff]
        %v1472 = vld [vmem:[%s523 + $0x1c0] sm:$0xff]
        %v1473 = vld [vmem:[%s523 + $0x1c8] sm:$0xff]
        %v1474 = vld [vmem:[%s523 + $0x1d0] sm:$0xff]
        %v1475 = vld [vmem:[%s523 + $0x1d8] sm:$0xff]
        %v1476 = vld [vmem:[%s523 + $0x1e0] sm:$0xff]
        %v1477 = vld [vmem:[%s523 + $0x1e8] sm:$0xff]
        %v1478 = vld [vmem:[%s523 + $0x1f0] sm:$0xff]
        %v1479 = vld [vmem:[%s523 + $0x1f8] sm:$0xff]
        %v1480 = vld [vmem:[%s523 + $0x200] sm:$0xff]
        %v1481 = vld [vmem:[%s523 + $0x208] sm:$0xff]
        %v1482 = vld [vmem:[%s523 + $0x210] sm:$0xff]
        %v1483 = vld [vmem:[%s523 + $0x218] sm:$0xff]
        %v1484 = vld [vmem:[%s523 + $0x220] sm:$0xff]
        %v1485 = vld [vmem:[%s523 + $0x228] sm:$0xff]
        %v1486 = vld [vmem:[%s523 + $0x230] sm:$0xff]
        %v1487 = vld [vmem:[%s523 + $0x238] sm:$0xff]
        %v1488 = vld [vmem:[%s523 + $0x240] sm:$0xff]
        %v1489 = vld [vmem:[%s523 + $0x248] sm:$0xff]
        %v1490 = vld [vmem:[%s523 + $0x250] sm:$0xff]
        %v1491 = vld [vmem:[%s523 + $0x258] sm:$0xff]
        %v1492 = vld [vmem:[%s523 + $0x260] sm:$0xff]
        %v1493 = vld [vmem:[%s523 + $0x268] sm:$0xff]
        %v1494 = vld [vmem:[%s523 + $0x270] sm:$0xff]
        %v1495 = vld [vmem:[%s523 + $0x278] sm:$0xff]
        %v1496 = vld [vmem:[%s523 + $0x280] sm:$0xff]
        %v1497 = vld [vmem:[%s523 + $0x288] sm:$0xff]
        %v1498 = vld [vmem:[%s523 + $0x290] sm:$0xff]
        %v1499 = vld [vmem:[%s523 + $0x298] sm:$0xff]
        %v1500 = vld [vmem:[%s523 + $0x2a0] sm:$0xff]
        %v1501 = vld [vmem:[%s523 + $0x2a8] sm:$0xff]
        %v1502 = vld [vmem:[%s523 + $0x2b0] sm:$0xff]
        %v1503 = vld [vmem:[%s523 + $0x2b8] sm:$0xff]
        %v1504 = vld [vmem:[%s523 + $0x2c0] sm:$0xff]
        %v1505 = vld [vmem:[%s523 + $0x2c8] sm:$0xff]
        %v1506 = vld [vmem:[%s523 + $0x2d0] sm:$0xff]
        %v1507 = vld [vmem:[%s523 + $0x2d8] sm:$0xff]
        %v1508 = vld [vmem:[%s523 + $0x2e0] sm:$0xff]
        %v1509 = vld [vmem:[%s523 + $0x2e8] sm:$0xff]
        %v1510 = vld [vmem:[%s523 + $0x2f0] sm:$0xff]
        %v1511 = vld [vmem:[%s523 + $0x2f8] sm:$0xff]
        %v1512 = vld [vmem:[%s523 + $0x300] sm:$0xff]
        %v1513 = vld [vmem:[%s523 + $0x308] sm:$0xff]
        %v1514 = vld [vmem:[%s523 + $0x310] sm:$0xff]
        %v1515 = vld [vmem:[%s523 + $0x318] sm:$0xff]
        %v1516 = vld [vmem:[%s523 + $0x320] sm:$0xff]
        %v1517 = vld [vmem:[%s523 + $0x328] sm:$0xff]
        %v1518 = vld [vmem:[%s523 + $0x330] sm:$0xff]
        %v1519 = vld [vmem:[%s523 + $0x338] sm:$0xff]
        %v1520 = vld [vmem:[%s523 + $0x340] sm:$0xff]
        %v1521 = vld [vmem:[%s523 + $0x348] sm:$0xff]
        %v1522 = vld [vmem:[%s523 + $0x350] sm:$0xff]
        %v1523 = vld [vmem:[%s523 + $0x358] sm:$0xff]
        %v1524 = vld [vmem:[%s523 + $0x360] sm:$0xff]
        %v1525 = vld [vmem:[%s523 + $0x368] sm:$0xff]
        %v1526 = vld [vmem:[%s523 + $0x370] sm:$0xff]
        %v1527 = vld [vmem:[%s523 + $0x378] sm:$0xff]
        %v1528 = vld [vmem:[%s523 + $0x380] sm:$0xff]
        %v1529 = vld [vmem:[%s523 + $0x388] sm:$0xff]
        %v1530 = vld [vmem:[%s523 + $0x390] sm:$0xff]
        %v1531 = vld [vmem:[%s523 + $0x398] sm:$0xff]
        %v1532 = vld [vmem:[%s523 + $0x3a0] sm:$0xff]
        %v1533 = vld [vmem:[%s523 + $0x3a8] sm:$0xff]
        %v1534 = vld [vmem:[%s523 + $0x3b0] sm:$0xff]
        %v1535 = vld [vmem:[%s523 + $0x3b8] sm:$0xff]
        %v1536 = vld [vmem:[%s523 + $0x3c0] sm:$0xff]
        %v1537 = vld [vmem:[%s523 + $0x3c8] sm:$0xff]
        %v1538 = vld [vmem:[%s523 + $0x3d0] sm:$0xff]
        %v1539 = vld [vmem:[%s523 + $0x3d8] sm:$0xff]
        %v1540 = vld [vmem:[%s523 + $0x3e0] sm:$0xff]
        %v1541 = vld [vmem:[%s523 + $0x3e8] sm:$0xff]
        %v1542 = vld [vmem:[%s523 + $0x3f0] sm:$0xff]
        %v1543 = vld [vmem:[%s523 + $0x3f8] sm:$0xff]
        %v1544 = vld [vmem:[%s523 + $0x400] sm:$0xff]
        %v1545 = vld [vmem:[%s523 + $0x408] sm:$0xff]
        %v1546 = vld [vmem:[%s523 + $0x410] sm:$0xff]
        %v1547 = vld [vmem:[%s523 + $0x418] sm:$0xff]
        %v1548 = vld [vmem:[%s523 + $0x420] sm:$0xff]
        %v1549 = vld [vmem:[%s523 + $0x428] sm:$0xff]
        %v1550 = vld [vmem:[%s523 + $0x430] sm:$0xff]
        %v1551 = vld [vmem:[%s523 + $0x438] sm:$0xff]
        %v1552 = vld [vmem:[%s523 + $0x440] sm:$0xff]
        %v1553 = vld [vmem:[%s523 + $0x448] sm:$0xff]
        %v1554 = vld [vmem:[%s523 + $0x450] sm:$0xff]
        %v1555 = vld [vmem:[%s523 + $0x458] sm:$0xff]
        %v1556 = vld [vmem:[%s523 + $0x460] sm:$0xff]
        %v1557 = vld [vmem:[%s523 + $0x468] sm:$0xff]
        %v1558 = vld [vmem:[%s523 + $0x470] sm:$0xff]
        %v1559 = vld [vmem:[%s523 + $0x478] sm:$0xff]
        %v1560 = vld [vmem:[%s523 + $0x480] sm:$0xff]
        %v1561 = vld [vmem:[%s523 + $0x488] sm:$0xff]
        %v1562 = vld [vmem:[%s523 + $0x490] sm:$0xff]
        %v1563 = vld [vmem:[%s523 + $0x498] sm:$0xff]
        %v1564 = vld [vmem:[%s523 + $0x4a0] sm:$0xff]
        %v1565 = vld [vmem:[%s523 + $0x4a8] sm:$0xff]
        %v1566 = vld [vmem:[%s523 + $0x4b0] sm:$0xff]
        %v1567 = vld [vmem:[%s523 + $0x4b8] sm:$0xff]
        %v1568 = vld [vmem:[%s523 + $0x4c0] sm:$0xff]
        %v1569 = vld [vmem:[%s523 + $0x4c8] sm:$0xff]
        %v1570 = vld [vmem:[%s523 + $0x4d0] sm:$0xff]
        %v1571 = vld [vmem:[%s523 + $0x4d8] sm:$0xff]
        %v1572 = vld [vmem:[%s523 + $0x4e0] sm:$0xff]
        %v1573 = vld [vmem:[%s523 + $0x4e8] sm:$0xff]
        %v1574 = vld [vmem:[%s523 + $0x4f0] sm:$0xff]
        %v1575 = vld [vmem:[%s523 + $0x4f8] sm:$0xff]
        %v1576 = vld [vmem:[%s523 + $0x500] sm:$0xff]
        %v1577 = vld [vmem:[%s523 + $0x508] sm:$0xff]
        %v1578 = vld [vmem:[%s523 + $0x510] sm:$0xff]
        %v1579 = vld [vmem:[%s523 + $0x518] sm:$0xff]
        %v1580 = vld [vmem:[%s523 + $0x520] sm:$0xff]
        %v1581 = vld [vmem:[%s523 + $0x528] sm:$0xff]
        %v1582 = vld [vmem:[%s523 + $0x530] sm:$0xff]
        %v1583 = vld [vmem:[%s523 + $0x538] sm:$0xff]
        %v1584 = vld [vmem:[%s523 + $0x540] sm:$0xff]
        %v1585 = vld [vmem:[%s523 + $0x548] sm:$0xff]
        %v1586 = vld [vmem:[%s523 + $0x550] sm:$0xff]
        %v1587 = vld [vmem:[%s523 + $0x558] sm:$0xff]
        %v1588 = vld [vmem:[%s523 + $0x560] sm:$0xff]
        %v1589 = vld [vmem:[%s523 + $0x568] sm:$0xff]
        %v1590 = vld [vmem:[%s523 + $0x570] sm:$0xff]
        %v1591 = vld [vmem:[%s523 + $0x578] sm:$0xff]
        %v1592 = vld [vmem:[%s523 + $0x580] sm:$0xff]
        %v1593 = vld [vmem:[%s523 + $0x588] sm:$0xff]
        %v1594 = vld [vmem:[%s523 + $0x590] sm:$0xff]
        %v1595 = vld [vmem:[%s523 + $0x598] sm:$0xff]
        %v1596 = vld [vmem:[%s523 + $0x5a0] sm:$0xff]
        %v1597 = vld [vmem:[%s523 + $0x5a8] sm:$0xff]
        %v1598 = vld [vmem:[%s523 + $0x5b0] sm:$0xff]
        %v1599 = vld [vmem:[%s523 + $0x5b8] sm:$0xff]
        %v1600 = vld [vmem:[%s523 + $0x5c0] sm:$0xff]
        %v1601 = vld [vmem:[%s523 + $0x5c8] sm:$0xff]
        %v1602 = vld [vmem:[%s523 + $0x5d0] sm:$0xff]
        %v1603 = vld [vmem:[%s523 + $0x5d8] sm:$0xff]
        %v1604 = vld [vmem:[%s523 + $0x5e0] sm:$0xff]
        %v1605 = vld [vmem:[%s523 + $0x5e8] sm:$0xff]
        %v1606 = vld [vmem:[%s523 + $0x5f0] sm:$0xff]
        %v1607 = vld [vmem:[%s523 + $0x5f8] sm:$0xff]
        %v1608 = vld [vmem:[%s523 + $0x600] sm:$0xff]
        %v1609 = vld [vmem:[%s523 + $0x608] sm:$0xff]
        %v1610 = vld [vmem:[%s523 + $0x610] sm:$0xff]
        %v1611 = vld [vmem:[%s523 + $0x618] sm:$0xff]
        %v1612 = vld [vmem:[%s523 + $0x620] sm:$0xff]
        %v1613 = vld [vmem:[%s523 + $0x628] sm:$0xff]
        %v1614 = vld [vmem:[%s523 + $0x630] sm:$0xff]
        %v1615 = vld [vmem:[%s523 + $0x638] sm:$0xff]
        %v1616 = vld [vmem:[%s523 + $0x640] sm:$0xff]
        %v1617 = vld [vmem:[%s523 + $0x648] sm:$0xff]
        %v1618 = vld [vmem:[%s523 + $0x650] sm:$0xff]
        %v1619 = vld [vmem:[%s523 + $0x658] sm:$0xff]
        %v1620 = vld [vmem:[%s523 + $0x660] sm:$0xff]
        %v1621 = vld [vmem:[%s523 + $0x668] sm:$0xff]
        %v1622 = vld [vmem:[%s523 + $0x670] sm:$0xff]
        %v1623 = vld [vmem:[%s523 + $0x678] sm:$0xff]
        %v1624 = vld [vmem:[%s523 + $0x680] sm:$0xff]
        %v1625 = vld [vmem:[%s523 + $0x688] sm:$0xff]
        %v1626 = vld [vmem:[%s523 + $0x690] sm:$0xff]
        %v1627 = vld [vmem:[%s523 + $0x698] sm:$0xff]
        %v1628 = vld [vmem:[%s523 + $0x6a0] sm:$0xff]
        %v1629 = vld [vmem:[%s523 + $0x6a8] sm:$0xff]
        %v1630 = vld [vmem:[%s523 + $0x6b0] sm:$0xff]
        %v1631 = vld [vmem:[%s523 + $0x6b8] sm:$0xff]
        %v1632 = vld [vmem:[%s523 + $0x6c0] sm:$0xff]
        %v1633 = vld [vmem:[%s523 + $0x6c8] sm:$0xff]
        %v1634 = vld [vmem:[%s523 + $0x6d0] sm:$0xff]
        %v1635 = vld [vmem:[%s523 + $0x6d8] sm:$0xff]
        %v1636 = vld [vmem:[%s523 + $0x6e0] sm:$0xff]
        %v1637 = vld [vmem:[%s523 + $0x6e8] sm:$0xff]
        %v1638 = vld [vmem:[%s523 + $0x6f0] sm:$0xff]
        %v1639 = vld [vmem:[%s523 + $0x6f8] sm:$0xff]
        %v1640 = vld [vmem:[%s523 + $0x700] sm:$0xff]
        %v1641 = vld [vmem:[%s523 + $0x708] sm:$0xff]
        %v1642 = vld [vmem:[%s523 + $0x710] sm:$0xff]
        %v1643 = vld [vmem:[%s523 + $0x718] sm:$0xff]
        %v1644 = vld [vmem:[%s523 + $0x720] sm:$0xff]
        %v1645 = vld [vmem:[%s523 + $0x728] sm:$0xff]
        %v1646 = vld [vmem:[%s523 + $0x730] sm:$0xff]
        %v1647 = vld [vmem:[%s523 + $0x738] sm:$0xff]
        %v1648 = vld [vmem:[%s523 + $0x740] sm:$0xff]
        %v1649 = vld [vmem:[%s523 + $0x748] sm:$0xff]
        %v1650 = vld [vmem:[%s523 + $0x750] sm:$0xff]
        %v1651 = vld [vmem:[%s523 + $0x758] sm:$0xff]
        %v1652 = vld [vmem:[%s523 + $0x760] sm:$0xff]
        %v1653 = vld [vmem:[%s523 + $0x768] sm:$0xff]
        %v1654 = vld [vmem:[%s523 + $0x770] sm:$0xff]
        %v1655 = vld [vmem:[%s523 + $0x778] sm:$0xff]
        %v1656 = vld [vmem:[%s523 + $0x780] sm:$0xff]
        %v1657 = vld [vmem:[%s523 + $0x788] sm:$0xff]
        %v1658 = vld [vmem:[%s523 + $0x790] sm:$0xff]
        %v1659 = vld [vmem:[%s523 + $0x798] sm:$0xff]
        %v1660 = vld [vmem:[%s523 + $0x7a0] sm:$0xff]
        %v1661 = vld [vmem:[%s523 + $0x7a8] sm:$0xff]
        %v1662 = vld [vmem:[%s523 + $0x7b0] sm:$0xff]
        %v1663 = vld [vmem:[%s523 + $0x7b8] sm:$0xff]
        %v1664 = vld [vmem:[%s523 + $0x7c0] sm:$0xff]
        %v1665 = vld [vmem:[%s523 + $0x7c8] sm:$0xff]
        %v1666 = vld [vmem:[%s523 + $0x7d0] sm:$0xff]
        %v1667 = vld [vmem:[%s523 + $0x7d8] sm:$0xff]
        %v1668 = vld [vmem:[%s523 + $0x7e0] sm:$0xff]
        %v1669 = vld [vmem:[%s523 + $0x7e8] sm:$0xff]
        %v1670 = vld [vmem:[%s523 + $0x7f0] sm:$0xff]
        %v1671 = vld [vmem:[%s523 + $0x7f8] sm:$0xff]
        %v1672 = vld [vmem:[%s533] sm:$0xff]
        %v1673 = vld [vmem:[%s533 + $0x8] sm:$0xff]
        %v1674 = vld [vmem:[%s533 + $0x10] sm:$0xff]
        %v1675 = vld [vmem:[%s533 + $0x18] sm:$0xff]
        %v1676 = vld [vmem:[%s533 + $0x20] sm:$0xff]
        %v1677 = vld [vmem:[%s533 + $0x28] sm:$0xff]
        %v1678 = vld [vmem:[%s533 + $0x30] sm:$0xff]
        %v1679 = vld [vmem:[%s533 + $0x38] sm:$0xff]
        %v1680 = vld [vmem:[%s533 + $0x40] sm:$0xff]
        %v1681 = vld [vmem:[%s533 + $0x48] sm:$0xff]
        %v1682 = vld [vmem:[%s533 + $0x50] sm:$0xff]
        %v1683 = vld [vmem:[%s533 + $0x58] sm:$0xff]
        %v1684 = vld [vmem:[%s533 + $0x60] sm:$0xff]
        %v1685 = vld [vmem:[%s533 + $0x68] sm:$0xff]
        %v1686 = vld [vmem:[%s533 + $0x70] sm:$0xff]
        %v1687 = vld [vmem:[%s533 + $0x78] sm:$0xff]
        %v1688 = vld [vmem:[%s533 + $0x80] sm:$0xff]
        %v1689 = vld [vmem:[%s533 + $0x88] sm:$0xff]
        %v1690 = vld [vmem:[%s533 + $0x90] sm:$0xff]
        %v1691 = vld [vmem:[%s533 + $0x98] sm:$0xff]
        %v1692 = vld [vmem:[%s533 + $0xa0] sm:$0xff]
        %v1693 = vld [vmem:[%s533 + $0xa8] sm:$0xff]
        %v1694 = vld [vmem:[%s533 + $0xb0] sm:$0xff]
        %v1695 = vld [vmem:[%s533 + $0xb8] sm:$0xff]
        %v1696 = vld [vmem:[%s533 + $0xc0] sm:$0xff]
        %v1697 = vld [vmem:[%s533 + $0xc8] sm:$0xff]
        %v1698 = vld [vmem:[%s533 + $0xd0] sm:$0xff]
        %v1699 = vld [vmem:[%s533 + $0xd8] sm:$0xff]
        %v1700 = vld [vmem:[%s533 + $0xe0] sm:$0xff]
        %v1701 = vld [vmem:[%s533 + $0xe8] sm:$0xff]
        %v1702 = vld [vmem:[%s533 + $0xf0] sm:$0xff]
        %v1703 = vld [vmem:[%s533 + $0xf8] sm:$0xff]
        %v1704 = vld [vmem:[%s533 + $0x100] sm:$0xff]
        %v1705 = vld [vmem:[%s533 + $0x108] sm:$0xff]
        %v1706 = vld [vmem:[%s533 + $0x110] sm:$0xff]
        %v1707 = vld [vmem:[%s533 + $0x118] sm:$0xff]
        %v1708 = vld [vmem:[%s533 + $0x120] sm:$0xff]
        %v1709 = vld [vmem:[%s533 + $0x128] sm:$0xff]
        %v1710 = vld [vmem:[%s533 + $0x130] sm:$0xff]
        %v1711 = vld [vmem:[%s533 + $0x138] sm:$0xff]
        %v1712 = vld [vmem:[%s533 + $0x140] sm:$0xff]
        %v1713 = vld [vmem:[%s533 + $0x148] sm:$0xff]
        %v1714 = vld [vmem:[%s533 + $0x150] sm:$0xff]
        %v1715 = vld [vmem:[%s533 + $0x158] sm:$0xff]
        %v1716 = vld [vmem:[%s533 + $0x160] sm:$0xff]
        %v1717 = vld [vmem:[%s533 + $0x168] sm:$0xff]
        %v1718 = vld [vmem:[%s533 + $0x170] sm:$0xff]
        %v1719 = vld [vmem:[%s533 + $0x178] sm:$0xff]
        %v1720 = vld [vmem:[%s533 + $0x180] sm:$0xff]
        %v1721 = vld [vmem:[%s533 + $0x188] sm:$0xff]
        %v1722 = vld [vmem:[%s533 + $0x190] sm:$0xff]
        %v1723 = vld [vmem:[%s533 + $0x198] sm:$0xff]
        %v1724 = vld [vmem:[%s533 + $0x1a0] sm:$0xff]
        %v1725 = vld [vmem:[%s533 + $0x1a8] sm:$0xff]
        %v1726 = vld [vmem:[%s533 + $0x1b0] sm:$0xff]
        %v1727 = vld [vmem:[%s533 + $0x1b8] sm:$0xff]
        %v1728 = vld [vmem:[%s533 + $0x1c0] sm:$0xff]
        %v1729 = vld [vmem:[%s533 + $0x1c8] sm:$0xff]
        %v1730 = vld [vmem:[%s533 + $0x1d0] sm:$0xff]
        %v1731 = vld [vmem:[%s533 + $0x1d8] sm:$0xff]
        %v1732 = vld [vmem:[%s533 + $0x1e0] sm:$0xff]
        %v1733 = vld [vmem:[%s533 + $0x1e8] sm:$0xff]
        %v1734 = vld [vmem:[%s533 + $0x1f0] sm:$0xff]
        %v1735 = vld [vmem:[%s533 + $0x1f8] sm:$0xff]
        %v1736 = vld [vmem:[%s533 + $0x200] sm:$0xff]
        %v1737 = vld [vmem:[%s533 + $0x208] sm:$0xff]
        %v1738 = vld [vmem:[%s533 + $0x210] sm:$0xff]
        %v1739 = vld [vmem:[%s533 + $0x218] sm:$0xff]
        %v1740 = vld [vmem:[%s533 + $0x220] sm:$0xff]
        %v1741 = vld [vmem:[%s533 + $0x228] sm:$0xff]
        %v1742 = vld [vmem:[%s533 + $0x230] sm:$0xff]
        %v1743 = vld [vmem:[%s533 + $0x238] sm:$0xff]
        %v1744 = vld [vmem:[%s533 + $0x240] sm:$0xff]
        %v1745 = vld [vmem:[%s533 + $0x248] sm:$0xff]
        %v1746 = vld [vmem:[%s533 + $0x250] sm:$0xff]
        %v1747 = vld [vmem:[%s533 + $0x258] sm:$0xff]
        %v1748 = vld [vmem:[%s533 + $0x260] sm:$0xff]
        %v1749 = vld [vmem:[%s533 + $0x268] sm:$0xff]
        %v1750 = vld [vmem:[%s533 + $0x270] sm:$0xff]
        %v1751 = vld [vmem:[%s533 + $0x278] sm:$0xff]
        %v1752 = vld [vmem:[%s533 + $0x280] sm:$0xff]
        %v1753 = vld [vmem:[%s533 + $0x288] sm:$0xff]
        %v1754 = vld [vmem:[%s533 + $0x290] sm:$0xff]
        %v1755 = vld [vmem:[%s533 + $0x298] sm:$0xff]
        %v1756 = vld [vmem:[%s533 + $0x2a0] sm:$0xff]
        %v1757 = vld [vmem:[%s533 + $0x2a8] sm:$0xff]
        %v1758 = vld [vmem:[%s533 + $0x2b0] sm:$0xff]
        %v1759 = vld [vmem:[%s533 + $0x2b8] sm:$0xff]
        %v1760 = vld [vmem:[%s533 + $0x2c0] sm:$0xff]
        %v1761 = vld [vmem:[%s533 + $0x2c8] sm:$0xff]
        %v1762 = vld [vmem:[%s533 + $0x2d0] sm:$0xff]
        %v1763 = vld [vmem:[%s533 + $0x2d8] sm:$0xff]
        %v1764 = vld [vmem:[%s533 + $0x2e0] sm:$0xff]
        %v1765 = vld [vmem:[%s533 + $0x2e8] sm:$0xff]
        %v1766 = vld [vmem:[%s533 + $0x2f0] sm:$0xff]
        %v1767 = vld [vmem:[%s533 + $0x2f8] sm:$0xff]
        %v1768 = vld [vmem:[%s533 + $0x300] sm:$0xff]
        %v1769 = vld [vmem:[%s533 + $0x308] sm:$0xff]
        %v1770 = vld [vmem:[%s533 + $0x310] sm:$0xff]
        %v1771 = vld [vmem:[%s533 + $0x318] sm:$0xff]
        %v1772 = vld [vmem:[%s533 + $0x320] sm:$0xff]
        %v1773 = vld [vmem:[%s533 + $0x328] sm:$0xff]
        %v1774 = vld [vmem:[%s533 + $0x330] sm:$0xff]
        %v1775 = vld [vmem:[%s533 + $0x338] sm:$0xff]
        %v1776 = vld [vmem:[%s533 + $0x340] sm:$0xff]
        %v1777 = vld [vmem:[%s533 + $0x348] sm:$0xff]
        %v1778 = vld [vmem:[%s533 + $0x350] sm:$0xff]
        %v1779 = vld [vmem:[%s533 + $0x358] sm:$0xff]
        %v1780 = vld [vmem:[%s533 + $0x360] sm:$0xff]
        %v1781 = vld [vmem:[%s533 + $0x368] sm:$0xff]
        %v1782 = vld [vmem:[%s533 + $0x370] sm:$0xff]
        %v1783 = vld [vmem:[%s533 + $0x378] sm:$0xff]
        %v1784 = vld [vmem:[%s533 + $0x380] sm:$0xff]
        %v1785 = vld [vmem:[%s533 + $0x388] sm:$0xff]
        %v1786 = vld [vmem:[%s533 + $0x390] sm:$0xff]
        %v1787 = vld [vmem:[%s533 + $0x398] sm:$0xff]
        %v1788 = vld [vmem:[%s533 + $0x3a0] sm:$0xff]
        %v1789 = vld [vmem:[%s533 + $0x3a8] sm:$0xff]
        %v1790 = vld [vmem:[%s533 + $0x3b0] sm:$0xff]
        %v1791 = vld [vmem:[%s533 + $0x3b8] sm:$0xff]
        %v1792 = vld [vmem:[%s533 + $0x3c0] sm:$0xff]
        %v1793 = vld [vmem:[%s533 + $0x3c8] sm:$0xff]
        %v1794 = vld [vmem:[%s533 + $0x3d0] sm:$0xff]
        %v1795 = vld [vmem:[%s533 + $0x3d8] sm:$0xff]
        %v1796 = vld [vmem:[%s533 + $0x3e0] sm:$0xff]
        %v1797 = vld [vmem:[%s533 + $0x3e8] sm:$0xff]
        %v1798 = vld [vmem:[%s533 + $0x3f0] sm:$0xff]
        %v1799 = vld [vmem:[%s533 + $0x3f8] sm:$0xff]
        %v1800 = vld [vmem:[%s533 + $0x400] sm:$0xff]
        %v1801 = vld [vmem:[%s533 + $0x408] sm:$0xff]
        %v1802 = vld [vmem:[%s533 + $0x410] sm:$0xff]
        %v1803 = vld [vmem:[%s533 + $0x418] sm:$0xff]
        %v1804 = vld [vmem:[%s533 + $0x420] sm:$0xff]
        %v1805 = vld [vmem:[%s533 + $0x428] sm:$0xff]
        %v1806 = vld [vmem:[%s533 + $0x430] sm:$0xff]
        %v1807 = vld [vmem:[%s533 + $0x438] sm:$0xff]
        %v1808 = vld [vmem:[%s533 + $0x440] sm:$0xff]
        %v1809 = vld [vmem:[%s533 + $0x448] sm:$0xff]
        %v1810 = vld [vmem:[%s533 + $0x450] sm:$0xff]
        %v1811 = vld [vmem:[%s533 + $0x458] sm:$0xff]
        %v1812 = vld [vmem:[%s533 + $0x460] sm:$0xff]
        %v1813 = vld [vmem:[%s533 + $0x468] sm:$0xff]
        %v1814 = vld [vmem:[%s533 + $0x470] sm:$0xff]
        %v1815 = vld [vmem:[%s533 + $0x478] sm:$0xff]
        %v1816 = vld [vmem:[%s533 + $0x480] sm:$0xff]
        %v1817 = vld [vmem:[%s533 + $0x488] sm:$0xff]
        %v1818 = vld [vmem:[%s533 + $0x490] sm:$0xff]
        %v1819 = vld [vmem:[%s533 + $0x498] sm:$0xff]
        %v1820 = vld [vmem:[%s533 + $0x4a0] sm:$0xff]
        %v1821 = vld [vmem:[%s533 + $0x4a8] sm:$0xff]
        %v1822 = vld [vmem:[%s533 + $0x4b0] sm:$0xff]
        %v1823 = vld [vmem:[%s533 + $0x4b8] sm:$0xff]
        %v1824 = vld [vmem:[%s533 + $0x4c0] sm:$0xff]
        %v1825 = vld [vmem:[%s533 + $0x4c8] sm:$0xff]
        %v1826 = vld [vmem:[%s533 + $0x4d0] sm:$0xff]
        %v1827 = vld [vmem:[%s533 + $0x4d8] sm:$0xff]
        %v1828 = vld [vmem:[%s533 + $0x4e0] sm:$0xff]
        %v1829 = vld [vmem:[%s533 + $0x4e8] sm:$0xff]
        %v1830 = vld [vmem:[%s533 + $0x4f0] sm:$0xff]
        %v1831 = vld [vmem:[%s533 + $0x4f8] sm:$0xff]
        %v1832 = vld [vmem:[%s533 + $0x500] sm:$0xff]
        %v1833 = vld [vmem:[%s533 + $0x508] sm:$0xff]
        %v1834 = vld [vmem:[%s533 + $0x510] sm:$0xff]
        %v1835 = vld [vmem:[%s533 + $0x518] sm:$0xff]
        %v1836 = vld [vmem:[%s533 + $0x520] sm:$0xff]
        %v1837 = vld [vmem:[%s533 + $0x528] sm:$0xff]
        %v1838 = vld [vmem:[%s533 + $0x530] sm:$0xff]
        %v1839 = vld [vmem:[%s533 + $0x538] sm:$0xff]
        %v1840 = vld [vmem:[%s533 + $0x540] sm:$0xff]
        %v1841 = vld [vmem:[%s533 + $0x548] sm:$0xff]
        %v1842 = vld [vmem:[%s533 + $0x550] sm:$0xff]
        %v1843 = vld [vmem:[%s533 + $0x558] sm:$0xff]
        %v1844 = vld [vmem:[%s533 + $0x560] sm:$0xff]
        %v1845 = vld [vmem:[%s533 + $0x568] sm:$0xff]
        %v1846 = vld [vmem:[%s533 + $0x570] sm:$0xff]
        %v1847 = vld [vmem:[%s533 + $0x578] sm:$0xff]
        %v1848 = vld [vmem:[%s533 + $0x580] sm:$0xff]
        %v1849 = vld [vmem:[%s533 + $0x588] sm:$0xff]
        %v1850 = vld [vmem:[%s533 + $0x590] sm:$0xff]
        %v1851 = vld [vmem:[%s533 + $0x598] sm:$0xff]
        %v1852 = vld [vmem:[%s533 + $0x5a0] sm:$0xff]
        %v1853 = vld [vmem:[%s533 + $0x5a8] sm:$0xff]
        %v1854 = vld [vmem:[%s533 + $0x5b0] sm:$0xff]
        %v1855 = vld [vmem:[%s533 + $0x5b8] sm:$0xff]
        %v1856 = vld [vmem:[%s533 + $0x5c0] sm:$0xff]
        %v1857 = vld [vmem:[%s533 + $0x5c8] sm:$0xff]
        %v1858 = vld [vmem:[%s533 + $0x5d0] sm:$0xff]
        %v1859 = vld [vmem:[%s533 + $0x5d8] sm:$0xff]
        %v1860 = vld [vmem:[%s533 + $0x5e0] sm:$0xff]
        %v1861 = vld [vmem:[%s533 + $0x5e8] sm:$0xff]
        %v1862 = vld [vmem:[%s533 + $0x5f0] sm:$0xff]
        %v1863 = vld [vmem:[%s533 + $0x5f8] sm:$0xff]
        %v1864 = vld [vmem:[%s533 + $0x600] sm:$0xff]
        %v1865 = vld [vmem:[%s533 + $0x608] sm:$0xff]
        %v1866 = vld [vmem:[%s533 + $0x610] sm:$0xff]
        %v1867 = vld [vmem:[%s533 + $0x618] sm:$0xff]
        %v1868 = vld [vmem:[%s533 + $0x620] sm:$0xff]
        %v1869 = vld [vmem:[%s533 + $0x628] sm:$0xff]
        %v1870 = vld [vmem:[%s533 + $0x630] sm:$0xff]
        %v1871 = vld [vmem:[%s533 + $0x638] sm:$0xff]
        %v1872 = vld [vmem:[%s533 + $0x640] sm:$0xff]
        %v1873 = vld [vmem:[%s533 + $0x648] sm:$0xff]
        %v1874 = vld [vmem:[%s533 + $0x650] sm:$0xff]
        %v1875 = vld [vmem:[%s533 + $0x658] sm:$0xff]
        %v1876 = vld [vmem:[%s533 + $0x660] sm:$0xff]
        %v1877 = vld [vmem:[%s533 + $0x668] sm:$0xff]
        %v1878 = vld [vmem:[%s533 + $0x670] sm:$0xff]
        %v1879 = vld [vmem:[%s533 + $0x678] sm:$0xff]
        %v1880 = vld [vmem:[%s533 + $0x680] sm:$0xff]
        %v1881 = vld [vmem:[%s533 + $0x688] sm:$0xff]
        %v1882 = vld [vmem:[%s533 + $0x690] sm:$0xff]
        %v1883 = vld [vmem:[%s533 + $0x698] sm:$0xff]
        %v1884 = vld [vmem:[%s533 + $0x6a0] sm:$0xff]
        %v1885 = vld [vmem:[%s533 + $0x6a8] sm:$0xff]
        %v1886 = vld [vmem:[%s533 + $0x6b0] sm:$0xff]
        %v1887 = vld [vmem:[%s533 + $0x6b8] sm:$0xff]
        %v1888 = vld [vmem:[%s533 + $0x6c0] sm:$0xff]
        %v1889 = vld [vmem:[%s533 + $0x6c8] sm:$0xff]
        %v1890 = vld [vmem:[%s533 + $0x6d0] sm:$0xff]
        %v1891 = vld [vmem:[%s533 + $0x6d8] sm:$0xff]
        %v1892 = vld [vmem:[%s533 + $0x6e0] sm:$0xff]
        %v1893 = vld [vmem:[%s533 + $0x6e8] sm:$0xff]
        %v1894 = vld [vmem:[%s533 + $0x6f0] sm:$0xff]
        %v1895 = vld [vmem:[%s533 + $0x6f8] sm:$0xff]
        %v1896 = vld [vmem:[%s533 + $0x700] sm:$0xff]
        %v1897 = vld [vmem:[%s533 + $0x708] sm:$0xff]
        %v1898 = vld [vmem:[%s533 + $0x710] sm:$0xff]
        %v1899 = vld [vmem:[%s533 + $0x718] sm:$0xff]
        %v1900 = vld [vmem:[%s533 + $0x720] sm:$0xff]
        %v1901 = vld [vmem:[%s533 + $0x728] sm:$0xff]
        %v1902 = vld [vmem:[%s533 + $0x730] sm:$0xff]
        %v1903 = vld [vmem:[%s533 + $0x738] sm:$0xff]
        %v1904 = vld [vmem:[%s533 + $0x740] sm:$0xff]
        %v1905 = vld [vmem:[%s533 + $0x748] sm:$0xff]
        %v1906 = vld [vmem:[%s533 + $0x750] sm:$0xff]
        %v1907 = vld [vmem:[%s533 + $0x758] sm:$0xff]
        %v1908 = vld [vmem:[%s533 + $0x760] sm:$0xff]
        %v1909 = vld [vmem:[%s533 + $0x768] sm:$0xff]
        %v1910 = vld [vmem:[%s533 + $0x770] sm:$0xff]
        %v1911 = vld [vmem:[%s533 + $0x778] sm:$0xff]
        %v1912 = vld [vmem:[%s533 + $0x780] sm:$0xff]
        %v1913 = vld [vmem:[%s533 + $0x788] sm:$0xff]
        %v1914 = vld [vmem:[%s533 + $0x790] sm:$0xff]
        %v1915 = vld [vmem:[%s533 + $0x798] sm:$0xff]
        %v1916 = vld [vmem:[%s533 + $0x7a0] sm:$0xff]
        %v1917 = vld [vmem:[%s533 + $0x7a8] sm:$0xff]
        %v1918 = vld [vmem:[%s533 + $0x7b0] sm:$0xff]
        %v1919 = vld [vmem:[%s533 + $0x7b8] sm:$0xff]
        %v1920 = vld [vmem:[%s533 + $0x7c0] sm:$0xff]
        %v1921 = vld [vmem:[%s533 + $0x7c8] sm:$0xff]
        %v1922 = vld [vmem:[%s533 + $0x7d0] sm:$0xff]
        %v1923 = vld [vmem:[%s533 + $0x7d8] sm:$0xff]
        %v1924 = vld [vmem:[%s533 + $0x7e0] sm:$0xff]
        %v1925 = vld [vmem:[%s533 + $0x7e8] sm:$0xff]
        %v1926 = vld [vmem:[%s533 + $0x7f0] sm:$0xff]
        %v1927 = vld [vmem:[%s533 + $0x7f8] sm:$0xff]
        %v1928 = vld [vmem:[%s533 + $0x800] sm:$0xff]
        %v1929 = vld [vmem:[%s533 + $0x808] sm:$0xff]
        %v1930 = vld [vmem:[%s533 + $0x810] sm:$0xff]
        %v1931 = vld [vmem:[%s533 + $0x818] sm:$0xff]
        %v1932 = vld [vmem:[%s533 + $0x820] sm:$0xff]
        %v1933 = vld [vmem:[%s533 + $0x828] sm:$0xff]
        %v1934 = vld [vmem:[%s533 + $0x830] sm:$0xff]
        %v1935 = vld [vmem:[%s533 + $0x838] sm:$0xff]
        %v1936 = vld [vmem:[%s533 + $0x840] sm:$0xff]
        %v1937 = vld [vmem:[%s533 + $0x848] sm:$0xff]
        %v1938 = vld [vmem:[%s533 + $0x850] sm:$0xff]
        %v1939 = vld [vmem:[%s533 + $0x858] sm:$0xff]
        %v1940 = vld [vmem:[%s533 + $0x860] sm:$0xff]
        %v1941 = vld [vmem:[%s533 + $0x868] sm:$0xff]
        %v1942 = vld [vmem:[%s533 + $0x870] sm:$0xff]
        %v1943 = vld [vmem:[%s533 + $0x878] sm:$0xff]
        %v1944 = vld [vmem:[%s533 + $0x880] sm:$0xff]
        %v1945 = vld [vmem:[%s533 + $0x888] sm:$0xff]
        %v1946 = vld [vmem:[%s533 + $0x890] sm:$0xff]
        %v1947 = vld [vmem:[%s533 + $0x898] sm:$0xff]
        %v1948 = vld [vmem:[%s533 + $0x8a0] sm:$0xff]
        %v1949 = vld [vmem:[%s533 + $0x8a8] sm:$0xff]
        %v1950 = vld [vmem:[%s533 + $0x8b0] sm:$0xff]
        %v1951 = vld [vmem:[%s533 + $0x8b8] sm:$0xff]
        %v1952 = vld [vmem:[%s533 + $0x8c0] sm:$0xff]
        %v1953 = vld [vmem:[%s533 + $0x8c8] sm:$0xff]
        %v1954 = vld [vmem:[%s533 + $0x8d0] sm:$0xff]
        %v1955 = vld [vmem:[%s533 + $0x8d8] sm:$0xff]
        %v1956 = vld [vmem:[%s533 + $0x8e0] sm:$0xff]
        %v1957 = vld [vmem:[%s533 + $0x8e8] sm:$0xff]
        %v1958 = vld [vmem:[%s533 + $0x8f0] sm:$0xff]
        %v1959 = vld [vmem:[%s533 + $0x8f8] sm:$0xff]
        %v1960 = vld [vmem:[%s533 + $0x900] sm:$0xff]
        %v1961 = vld [vmem:[%s533 + $0x908] sm:$0xff]
        %v1962 = vld [vmem:[%s533 + $0x910] sm:$0xff]
        %v1963 = vld [vmem:[%s533 + $0x918] sm:$0xff]
        %v1964 = vld [vmem:[%s533 + $0x920] sm:$0xff]
        %v1965 = vld [vmem:[%s533 + $0x928] sm:$0xff]
        %v1966 = vld [vmem:[%s533 + $0x930] sm:$0xff]
        %v1967 = vld [vmem:[%s533 + $0x938] sm:$0xff]
        %v1968 = vld [vmem:[%s533 + $0x940] sm:$0xff]
        %v1969 = vld [vmem:[%s533 + $0x948] sm:$0xff]
        %v1970 = vld [vmem:[%s533 + $0x950] sm:$0xff]
        %v1971 = vld [vmem:[%s533 + $0x958] sm:$0xff]
        %v1972 = vld [vmem:[%s533 + $0x960] sm:$0xff]
        %v1973 = vld [vmem:[%s533 + $0x968] sm:$0xff]
        %v1974 = vld [vmem:[%s533 + $0x970] sm:$0xff]
        %v1975 = vld [vmem:[%s533 + $0x978] sm:$0xff]
        %v1976 = vld [vmem:[%s533 + $0x980] sm:$0xff]
        %v1977 = vld [vmem:[%s533 + $0x988] sm:$0xff]
        %v1978 = vld [vmem:[%s533 + $0x990] sm:$0xff]
        %v1979 = vld [vmem:[%s533 + $0x998] sm:$0xff]
        %v1980 = vld [vmem:[%s533 + $0x9a0] sm:$0xff]
        %v1981 = vld [vmem:[%s533 + $0x9a8] sm:$0xff]
        %v1982 = vld [vmem:[%s533 + $0x9b0] sm:$0xff]
        %v1983 = vld [vmem:[%s533 + $0x9b8] sm:$0xff]
        %v1984 = vld [vmem:[%s533 + $0x9c0] sm:$0xff]
        %v1985 = vld [vmem:[%s533 + $0x9c8] sm:$0xff]
        %v1986 = vld [vmem:[%s533 + $0x9d0] sm:$0xff]
        %v1987 = vld [vmem:[%s533 + $0x9d8] sm:$0xff]
        %v1988 = vld [vmem:[%s533 + $0x9e0] sm:$0xff]
        %v1989 = vld [vmem:[%s533 + $0x9e8] sm:$0xff]
        %v1990 = vld [vmem:[%s533 + $0x9f0] sm:$0xff]
        %v1991 = vld [vmem:[%s533 + $0x9f8] sm:$0xff]
        %v1992 = vld [vmem:[%s533 + $0xa00] sm:$0xff]
        %v1993 = vld [vmem:[%s533 + $0xa08] sm:$0xff]
        %v1994 = vld [vmem:[%s533 + $0xa10] sm:$0xff]
        %v1995 = vld [vmem:[%s533 + $0xa18] sm:$0xff]
        %v1996 = vld [vmem:[%s533 + $0xa20] sm:$0xff]
        %v1997 = vld [vmem:[%s533 + $0xa28] sm:$0xff]
        %v1998 = vld [vmem:[%s533 + $0xa30] sm:$0xff]
        %v1999 = vld [vmem:[%s533 + $0xa38] sm:$0xff]
        %v2000 = vld [vmem:[%s533 + $0xa40] sm:$0xff]
        %v2001 = vld [vmem:[%s533 + $0xa48] sm:$0xff]
        %v2002 = vld [vmem:[%s533 + $0xa50] sm:$0xff]
        %v2003 = vld [vmem:[%s533 + $0xa58] sm:$0xff]
        %v2004 = vld [vmem:[%s533 + $0xa60] sm:$0xff]
        %v2005 = vld [vmem:[%s533 + $0xa68] sm:$0xff]
        %v2006 = vld [vmem:[%s533 + $0xa70] sm:$0xff]
        %v2007 = vld [vmem:[%s533 + $0xa78] sm:$0xff]
        %v2008 = vld [vmem:[%s533 + $0xa80] sm:$0xff]
        %v2009 = vld [vmem:[%s533 + $0xa88] sm:$0xff]
        %v2010 = vld [vmem:[%s533 + $0xa90] sm:$0xff]
        %v2011 = vld [vmem:[%s533 + $0xa98] sm:$0xff]
        %v2012 = vld [vmem:[%s533 + $0xaa0] sm:$0xff]
        %v2013 = vld [vmem:[%s533 + $0xaa8] sm:$0xff]
        %v2014 = vld [vmem:[%s533 + $0xab0] sm:$0xff]
        %v2015 = vld [vmem:[%s533 + $0xab8] sm:$0xff]
        %v2016 = vld [vmem:[%s533 + $0xac0] sm:$0xff]
        %v2017 = vld [vmem:[%s533 + $0xac8] sm:$0xff]
        %v2018 = vld [vmem:[%s533 + $0xad0] sm:$0xff]
        %v2019 = vld [vmem:[%s533 + $0xad8] sm:$0xff]
        %v2020 = vld [vmem:[%s533 + $0xae0] sm:$0xff]
        %v2021 = vld [vmem:[%s533 + $0xae8] sm:$0xff]
        %v2022 = vld [vmem:[%s533 + $0xaf0] sm:$0xff]
        %v2023 = vld [vmem:[%s533 + $0xaf8] sm:$0xff]
        %v2024 = vld [vmem:[%s533 + $0xb00] sm:$0xff]
        %v2025 = vld [vmem:[%s533 + $0xb08] sm:$0xff]
        %v2026 = vld [vmem:[%s533 + $0xb10] sm:$0xff]
        %v2027 = vld [vmem:[%s533 + $0xb18] sm:$0xff]
        %v2028 = vld [vmem:[%s533 + $0xb20] sm:$0xff]
        %v2029 = vld [vmem:[%s533 + $0xb28] sm:$0xff]
        %v2030 = vld [vmem:[%s533 + $0xb30] sm:$0xff]
        %v2031 = vld [vmem:[%s533 + $0xb38] sm:$0xff]
        %v2032 = vld [vmem:[%s533 + $0xb40] sm:$0xff]
        %v2033 = vld [vmem:[%s533 + $0xb48] sm:$0xff]
        %v2034 = vld [vmem:[%s533 + $0xb50] sm:$0xff]
        %v2035 = vld [vmem:[%s533 + $0xb58] sm:$0xff]
        %v2036 = vld [vmem:[%s533 + $0xb60] sm:$0xff]
        %v2037 = vld [vmem:[%s533 + $0xb68] sm:$0xff]
        %v2038 = vld [vmem:[%s533 + $0xb70] sm:$0xff]
        %v2039 = vld [vmem:[%s533 + $0xb78] sm:$0xff]
        %v2040 = vld [vmem:[%s533 + $0xb80] sm:$0xff]
        %v2041 = vld [vmem:[%s533 + $0xb88] sm:$0xff]
        %v2042 = vld [vmem:[%s533 + $0xb90] sm:$0xff]
        %v2043 = vld [vmem:[%s533 + $0xb98] sm:$0xff]
        %v2044 = vld [vmem:[%s533 + $0xba0] sm:$0xff]
        %v2045 = vld [vmem:[%s533 + $0xba8] sm:$0xff]
        %v2046 = vld [vmem:[%s533 + $0xbb0] sm:$0xff]
        %v2047 = vld [vmem:[%s533 + $0xbb8] sm:$0xff]
        %v2048 = vld [vmem:[%s533 + $0xbc0] sm:$0xff]
        %v2049 = vld [vmem:[%s533 + $0xbc8] sm:$0xff]
        %v2050 = vld [vmem:[%s533 + $0xbd0] sm:$0xff]
        %v2051 = vld [vmem:[%s533 + $0xbd8] sm:$0xff]
        %v2052 = vld [vmem:[%s533 + $0xbe0] sm:$0xff]
        %v2053 = vld [vmem:[%s533 + $0xbe8] sm:$0xff]
        %v2054 = vld [vmem:[%s533 + $0xbf0] sm:$0xff]
        %v2055 = vld [vmem:[%s533 + $0xbf8] sm:$0xff]
        %v2056 = vld [vmem:[%s533 + $0xc00] sm:$0xff]
        %v2057 = vld [vmem:[%s533 + $0xc08] sm:$0xff]
        %v2058 = vld [vmem:[%s533 + $0xc10] sm:$0xff]
        %v2059 = vld [vmem:[%s533 + $0xc18] sm:$0xff]
        %v2060 = vld [vmem:[%s533 + $0xc20] sm:$0xff]
        %v2061 = vld [vmem:[%s533 + $0xc28] sm:$0xff]
        %v2062 = vld [vmem:[%s533 + $0xc30] sm:$0xff]
        %v2063 = vld [vmem:[%s533 + $0xc38] sm:$0xff]
        %v2064 = vld [vmem:[%s533 + $0xc40] sm:$0xff]
        %v2065 = vld [vmem:[%s533 + $0xc48] sm:$0xff]
        %v2066 = vld [vmem:[%s533 + $0xc50] sm:$0xff]
        %v2067 = vld [vmem:[%s533 + $0xc58] sm:$0xff]
        %v2068 = vld [vmem:[%s533 + $0xc60] sm:$0xff]
        %v2069 = vld [vmem:[%s533 + $0xc68] sm:$0xff]
        %v2070 = vld [vmem:[%s533 + $0xc70] sm:$0xff]
        %v2071 = vld [vmem:[%s533 + $0xc78] sm:$0xff]
        %v2072 = vld [vmem:[%s533 + $0xc80] sm:$0xff]
        %v2073 = vld [vmem:[%s533 + $0xc88] sm:$0xff]
        %v2074 = vld [vmem:[%s533 + $0xc90] sm:$0xff]
        %v2075 = vld [vmem:[%s533 + $0xc98] sm:$0xff]
        %v2076 = vld [vmem:[%s533 + $0xca0] sm:$0xff]
        %v2077 = vld [vmem:[%s533 + $0xca8] sm:$0xff]
        %v2078 = vld [vmem:[%s533 + $0xcb0] sm:$0xff]
        %v2079 = vld [vmem:[%s533 + $0xcb8] sm:$0xff]
        %v2080 = vld [vmem:[%s533 + $0xcc0] sm:$0xff]
        %v2081 = vld [vmem:[%s533 + $0xcc8] sm:$0xff]
        %v2082 = vld [vmem:[%s533 + $0xcd0] sm:$0xff]
        %v2083 = vld [vmem:[%s533 + $0xcd8] sm:$0xff]
        %v2084 = vld [vmem:[%s533 + $0xce0] sm:$0xff]
        %v2085 = vld [vmem:[%s533 + $0xce8] sm:$0xff]
        %v2086 = vld [vmem:[%s533 + $0xcf0] sm:$0xff]
        %v2087 = vld [vmem:[%s533 + $0xcf8] sm:$0xff]
        %v2088 = vld [vmem:[%s533 + $0xd00] sm:$0xff]
        %v2089 = vld [vmem:[%s533 + $0xd08] sm:$0xff]
        %v2090 = vld [vmem:[%s533 + $0xd10] sm:$0xff]
        %v2091 = vld [vmem:[%s533 + $0xd18] sm:$0xff]
        %v2092 = vld [vmem:[%s533 + $0xd20] sm:$0xff]
        %v2093 = vld [vmem:[%s533 + $0xd28] sm:$0xff]
        %v2094 = vld [vmem:[%s533 + $0xd30] sm:$0xff]
        %v2095 = vld [vmem:[%s533 + $0xd38] sm:$0xff]
        %v2096 = vld [vmem:[%s533 + $0xd40] sm:$0xff]
        %v2097 = vld [vmem:[%s533 + $0xd48] sm:$0xff]
        %v2098 = vld [vmem:[%s533 + $0xd50] sm:$0xff]
        %v2099 = vld [vmem:[%s533 + $0xd58] sm:$0xff]
        %v2100 = vld [vmem:[%s533 + $0xd60] sm:$0xff]
        %v2101 = vld [vmem:[%s533 + $0xd68] sm:$0xff]
        %v2102 = vld [vmem:[%s533 + $0xd70] sm:$0xff]
        %v2103 = vld [vmem:[%s533 + $0xd78] sm:$0xff]
        %v2104 = vld [vmem:[%s533 + $0xd80] sm:$0xff]
        %v2105 = vld [vmem:[%s533 + $0xd88] sm:$0xff]
        %v2106 = vld [vmem:[%s533 + $0xd90] sm:$0xff]
        %v2107 = vld [vmem:[%s533 + $0xd98] sm:$0xff]
        %v2108 = vld [vmem:[%s533 + $0xda0] sm:$0xff]
        %v2109 = vld [vmem:[%s533 + $0xda8] sm:$0xff]
        %v2110 = vld [vmem:[%s533 + $0xdb0] sm:$0xff]
        %v2111 = vld [vmem:[%s533 + $0xdb8] sm:$0xff]
        %v2112 = vld [vmem:[%s533 + $0xdc0] sm:$0xff]
        %v2113 = vld [vmem:[%s533 + $0xdc8] sm:$0xff]
        %v2114 = vld [vmem:[%s533 + $0xdd0] sm:$0xff]
        %v2115 = vld [vmem:[%s533 + $0xdd8] sm:$0xff]
        %v2116 = vld [vmem:[%s533 + $0xde0] sm:$0xff]
        %v2117 = vld [vmem:[%s533 + $0xde8] sm:$0xff]
        %v2118 = vld [vmem:[%s533 + $0xdf0] sm:$0xff]
        %v2119 = vld [vmem:[%s533 + $0xdf8] sm:$0xff]
        %v2120 = vld [vmem:[%s533 + $0xe00] sm:$0xff]
        %v2121 = vld [vmem:[%s533 + $0xe08] sm:$0xff]
        %v2122 = vld [vmem:[%s533 + $0xe10] sm:$0xff]
        %v2123 = vld [vmem:[%s533 + $0xe18] sm:$0xff]
        %v2124 = vld [vmem:[%s533 + $0xe20] sm:$0xff]
        %v2125 = vld [vmem:[%s533 + $0xe28] sm:$0xff]
        %v2126 = vld [vmem:[%s533 + $0xe30] sm:$0xff]
        %v2127 = vld [vmem:[%s533 + $0xe38] sm:$0xff]
        %v2128 = vld [vmem:[%s533 + $0xe40] sm:$0xff]
        %v2129 = vld [vmem:[%s533 + $0xe48] sm:$0xff]
        %v2130 = vld [vmem:[%s533 + $0xe50] sm:$0xff]
        %v2131 = vld [vmem:[%s533 + $0xe58] sm:$0xff]
        %v2132 = vld [vmem:[%s533 + $0xe60] sm:$0xff]
        %v2133 = vld [vmem:[%s533 + $0xe68] sm:$0xff]
        %v2134 = vld [vmem:[%s533 + $0xe70] sm:$0xff]
        %v2135 = vld [vmem:[%s533 + $0xe78] sm:$0xff]
        %v2136 = vld [vmem:[%s533 + $0xe80] sm:$0xff]
        %v2137 = vld [vmem:[%s533 + $0xe88] sm:$0xff]
        %v2138 = vld [vmem:[%s533 + $0xe90] sm:$0xff]
        %v2139 = vld [vmem:[%s533 + $0xe98] sm:$0xff]
        %v2140 = vld [vmem:[%s533 + $0xea0] sm:$0xff]
        %v2141 = vld [vmem:[%s533 + $0xea8] sm:$0xff]
        %v2142 = vld [vmem:[%s533 + $0xeb0] sm:$0xff]
        %v2143 = vld [vmem:[%s533 + $0xeb8] sm:$0xff]
        %v2144 = vld [vmem:[%s533 + $0xec0] sm:$0xff]
        %v2145 = vld [vmem:[%s533 + $0xec8] sm:$0xff]
        %v2146 = vld [vmem:[%s533 + $0xed0] sm:$0xff]
        %v2147 = vld [vmem:[%s533 + $0xed8] sm:$0xff]
        %v2148 = vld [vmem:[%s533 + $0xee0] sm:$0xff]
        %v2149 = vld [vmem:[%s533 + $0xee8] sm:$0xff]
        %v2150 = vld [vmem:[%s533 + $0xef0] sm:$0xff]
        %v2151 = vld [vmem:[%s533 + $0xef8] sm:$0xff]
        %v2152 = vld [vmem:[%s533 + $0xf00] sm:$0xff]
        %v2153 = vld [vmem:[%s533 + $0xf08] sm:$0xff]
        %v2154 = vld [vmem:[%s533 + $0xf10] sm:$0xff]
        %v2155 = vld [vmem:[%s533 + $0xf18] sm:$0xff]
        %v2156 = vld [vmem:[%s533 + $0xf20] sm:$0xff]
        %v2157 = vld [vmem:[%s533 + $0xf28] sm:$0xff]
        %v2158 = vld [vmem:[%s533 + $0xf30] sm:$0xff]
        %v2159 = vld [vmem:[%s533 + $0xf38] sm:$0xff]
        %v2160 = vld [vmem:[%s533 + $0xf40] sm:$0xff]
        %v2161 = vld [vmem:[%s533 + $0xf48] sm:$0xff]
        %v2162 = vld [vmem:[%s533 + $0xf50] sm:$0xff]
        %v2163 = vld [vmem:[%s533 + $0xf58] sm:$0xff]
        %v2164 = vld [vmem:[%s533 + $0xf60] sm:$0xff]
        %v2165 = vld [vmem:[%s533 + $0xf68] sm:$0xff]
        %v2166 = vld [vmem:[%s533 + $0xf70] sm:$0xff]
        %v2167 = vld [vmem:[%s533 + $0xf78] sm:$0xff]
        %v2168 = vld [vmem:[%s533 + $0xf80] sm:$0xff]
        %v2169 = vld [vmem:[%s533 + $0xf88] sm:$0xff]
        %v2170 = vld [vmem:[%s533 + $0xf90] sm:$0xff]
        %v2171 = vld [vmem:[%s533 + $0xf98] sm:$0xff]
        %v2172 = vld [vmem:[%s533 + $0xfa0] sm:$0xff]
        %v2173 = vld [vmem:[%s533 + $0xfa8] sm:$0xff]
        %v2174 = vld [vmem:[%s533 + $0xfb0] sm:$0xff]
        %v2175 = vld [vmem:[%s533 + $0xfb8] sm:$0xff]
        %v2176 = vld [vmem:[%s533 + $0xfc0] sm:$0xff]
        %v2177 = vld [vmem:[%s533 + $0xfc8] sm:$0xff]
        %v2178 = vld [vmem:[%s533 + $0xfd0] sm:$0xff]
        %v2179 = vld [vmem:[%s533 + $0xfd8] sm:$0xff]
        %v2180 = vld [vmem:[%s533 + $0xfe0] sm:$0xff]
        %v2181 = vld [vmem:[%s533 + $0xfe8] sm:$0xff]
        %v2182 = vld [vmem:[%s533 + $0xff0] sm:$0xff]
        %v2183 = vld [vmem:[%s533 + $0xff8] sm:$0xff]
        %2184 = vmatpush.msra.mxu0 %v1732
        %2185 = vmatpush.msra.mxu0 %v1728
        %2186 = vmatpush.msra.mxu0 %v1724
        %2187 = vmatpush.msra.mxu0 %v1720
        %2188 = vmatpush.msra.mxu0 %v1716
        %2189 = vmatpush.msra.mxu0 %v1712
        %2190 = vmatpush.msra.mxu0 %v1708
        %2191 = vmatpush.msra.mxu0 %v1704
        %2192 = vmatpush.msra.mxu0 %v1700
        %2193 = vmatpush.msra.mxu0 %v1696
        %2194 = vmatpush.msra.mxu0 %v1692
        %2195 = vmatpush.msra.mxu0 %v1688
        %2196 = vmatpush.msra.mxu0 %v1684
        %2197 = vmatpush.msra.mxu0 %v1680
        %2198 = vmatpush.msra.mxu0 %v1676
        %2199 = vmatpush.msra.mxu0 %v1672
        %2200 = vmatmul.f32.gmra.mxu0 %v1416
        %v2201 = vpop.f32.mrf.mxu0
        %v2202 = vadd.f32 0.0, %v2201
        %2203 = vmatmul.f32.gmra.mxu0 %v1424
        %v2204 = vpop.f32.mrf.mxu0
        %v2205 = vadd.f32 0.0, %v2204
        %2206 = vmatmul.f32.gmra.mxu0 %v1432
        %v2207 = vpop.f32.mrf.mxu0
        %v2208 = vadd.f32 0.0, %v2207
        %2209 = vmatmul.f32.gmra.mxu0 %v1440
        %v2210 = vpop.f32.mrf.mxu0
        %v2211 = vadd.f32 0.0, %v2210
        %2212 = vmatmul.f32.gmra.mxu0 %v1448
        %v2213 = vpop.f32.mrf.mxu0
        %v2214 = vadd.f32 0.0, %v2213
        %2215 = vmatmul.f32.gmra.mxu0 %v1456
        %v2216 = vpop.f32.mrf.mxu0
        %v2217 = vadd.f32 0.0, %v2216
        %2218 = vmatmul.f32.gmra.mxu0 %v1464
        %v2219 = vpop.f32.mrf.mxu0
        %v2220 = vadd.f32 0.0, %v2219
        %2221 = vmatmul.f32.gmra.mxu0 %v1472
        %v2222 = vpop.f32.mrf.mxu0
        %v2223 = vadd.f32 0.0, %v2222
        %2224 = vmatmul.f32.gmra.mxu0 %v1480
        %v2225 = vpop.f32.mrf.mxu0
        %v2226 = vadd.f32 0.0, %v2225
        %2227 = vmatmul.f32.gmra.mxu0 %v1488
        %v2228 = vpop.f32.mrf.mxu0
        %v2229 = vadd.f32 0.0, %v2228
        %2230 = vmatmul.f32.gmra.mxu0 %v1496
        %v2231 = vpop.f32.mrf.mxu0
        %v2232 = vadd.f32 0.0, %v2231
        %2233 = vmatmul.f32.gmra.mxu0 %v1504
        %v2234 = vpop.f32.mrf.mxu0
        %v2235 = vadd.f32 0.0, %v2234
        %2236 = vmatmul.f32.gmra.mxu0 %v1512
        %v2237 = vpop.f32.mrf.mxu0
        %v2238 = vadd.f32 0.0, %v2237
        %2239 = vmatmul.f32.gmra.mxu0 %v1520
        %v2240 = vpop.f32.mrf.mxu0
        %v2241 = vadd.f32 0.0, %v2240
        %2242 = vmatmul.f32.gmra.mxu0 %v1528
        %v2243 = vpop.f32.mrf.mxu0
        %v2244 = vadd.f32 0.0, %v2243
        %2245 = vmatmul.f32.gmra.mxu0 %v1536
        %v2246 = vpop.f32.mrf.mxu0
        %v2247 = vadd.f32 0.0, %v2246
        %2248 = vmatmul.f32.gmra.mxu0 %v1544
        %v2249 = vpop.f32.mrf.mxu0
        %v2250 = vadd.f32 0.0, %v2249
        %2251 = vmatmul.f32.gmra.mxu0 %v1552
        %v2252 = vpop.f32.mrf.mxu0
        %v2253 = vadd.f32 0.0, %v2252
        %2254 = vmatmul.f32.gmra.mxu0 %v1560
        %v2255 = vpop.f32.mrf.mxu0
        %v2256 = vadd.f32 0.0, %v2255
        %2257 = vmatmul.f32.gmra.mxu0 %v1568
        %v2258 = vpop.f32.mrf.mxu0
        %v2259 = vadd.f32 0.0, %v2258
        %2260 = vmatmul.f32.gmra.mxu0 %v1576
        %v2261 = vpop.f32.mrf.mxu0
        %v2262 = vadd.f32 0.0, %v2261
        %2263 = vmatmul.f32.gmra.mxu0 %v1584
        %v2264 = vpop.f32.mrf.mxu0
        %v2265 = vadd.f32 0.0, %v2264
        %2266 = vmatmul.f32.gmra.mxu0 %v1592
        %v2267 = vpop.f32.mrf.mxu0
        %v2268 = vadd.f32 0.0, %v2267
        %2269 = vmatmul.f32.gmra.mxu0 %v1600
        %v2270 = vpop.f32.mrf.mxu0
        %v2271 = vadd.f32 0.0, %v2270
        %2272 = vmatmul.f32.gmra.mxu0 %v1608
        %v2273 = vpop.f32.mrf.mxu0
        %v2274 = vadd.f32 0.0, %v2273
        %2275 = vmatmul.f32.gmra.mxu0 %v1616
        %v2276 = vpop.f32.mrf.mxu0
        %v2277 = vadd.f32 0.0, %v2276
        %2278 = vmatmul.f32.gmra.mxu0 %v1624
        %v2279 = vpop.f32.mrf.mxu0
        %v2280 = vadd.f32 0.0, %v2279
        %2281 = vmatmul.f32.gmra.mxu0 %v1632
        %v2282 = vpop.f32.mrf.mxu0
        %v2283 = vadd.f32 0.0, %v2282
        %2284 = vmatmul.f32.gmra.mxu0 %v1640
        %v2285 = vpop.f32.mrf.mxu0
        %v2286 = vadd.f32 0.0, %v2285
        %2287 = vmatmul.f32.gmra.mxu0 %v1648
        %v2288 = vpop.f32.mrf.mxu0
        %v2289 = vadd.f32 0.0, %v2288
        %2290 = vmatmul.f32.gmra.mxu0 %v1656
        %v2291 = vpop.f32.mrf.mxu0
        %v2292 = vadd.f32 0.0, %v2291
        %2293 = vmatmul.f32.gmra.mxu0 %v1664
        %v2294 = vpop.f32.mrf.mxu0
        %v2295 = vadd.f32 0.0, %v2294
        %2296 = vdwg.mxu0
        %2297 = vmatpush.msra.mxu0 %v1796
        %2298 = vmatpush.msra.mxu0 %v1792
        %2299 = vmatpush.msra.mxu0 %v1788
        %2300 = vmatpush.msra.mxu0 %v1784
        %2301 = vmatpush.msra.mxu0 %v1780
        %2302 = vmatpush.msra.mxu0 %v1776
        %2303 = vmatpush.msra.mxu0 %v1772
        %2304 = vmatpush.msra.mxu0 %v1768
        %2305 = vmatpush.msra.mxu0 %v1764
        %2306 = vmatpush.msra.mxu0 %v1760
        %2307 = vmatpush.msra.mxu0 %v1756
        %2308 = vmatpush.msra.mxu0 %v1752
        %2309 = vmatpush.msra.mxu0 %v1748
        %2310 = vmatpush.msra.mxu0 %v1744
        %2311 = vmatpush.msra.mxu0 %v1740
        %2312 = vmatpush.msra.mxu0 %v1736
        %2313 = vmatmul.f32.gmra.mxu0 %v1417
        %v2314 = vpop.f32.mrf.mxu0
        %v2315 = vadd.f32 %v2202, %v2314
        %2316 = vmatmul.f32.gmra.mxu0 %v1425
        %v2317 = vpop.f32.mrf.mxu0
        %v2318 = vadd.f32 %v2205, %v2317
        %2319 = vmatmul.f32.gmra.mxu0 %v1433
        %v2320 = vpop.f32.mrf.mxu0
        %v2321 = vadd.f32 %v2208, %v2320
        %2322 = vmatmul.f32.gmra.mxu0 %v1441
        %v2323 = vpop.f32.mrf.mxu0
        %v2324 = vadd.f32 %v2211, %v2323
        %2325 = vmatmul.f32.gmra.mxu0 %v1449
        %v2326 = vpop.f32.mrf.mxu0
        %v2327 = vadd.f32 %v2214, %v2326
        %2328 = vmatmul.f32.gmra.mxu0 %v1457
        %v2329 = vpop.f32.mrf.mxu0
        %v2330 = vadd.f32 %v2217, %v2329
        %2331 = vmatmul.f32.gmra.mxu0 %v1465
        %v2332 = vpop.f32.mrf.mxu0
        %v2333 = vadd.f32 %v2220, %v2332
        %2334 = vmatmul.f32.gmra.mxu0 %v1473
        %v2335 = vpop.f32.mrf.mxu0
        %v2336 = vadd.f32 %v2223, %v2335
        %2337 = vmatmul.f32.gmra.mxu0 %v1481
        %v2338 = vpop.f32.mrf.mxu0
        %v2339 = vadd.f32 %v2226, %v2338
        %2340 = vmatmul.f32.gmra.mxu0 %v1489
        %v2341 = vpop.f32.mrf.mxu0
        %v2342 = vadd.f32 %v2229, %v2341
        %2343 = vmatmul.f32.gmra.mxu0 %v1497
        %v2344 = vpop.f32.mrf.mxu0
        %v2345 = vadd.f32 %v2232, %v2344
        %2346 = vmatmul.f32.gmra.mxu0 %v1505
        %v2347 = vpop.f32.mrf.mxu0
        %v2348 = vadd.f32 %v2235, %v2347
        %2349 = vmatmul.f32.gmra.mxu0 %v1513
        %v2350 = vpop.f32.mrf.mxu0
        %v2351 = vadd.f32 %v2238, %v2350
        %2352 = vmatmul.f32.gmra.mxu0 %v1521
        %v2353 = vpop.f32.mrf.mxu0
        %v2354 = vadd.f32 %v2241, %v2353
        %2355 = vmatmul.f32.gmra.mxu0 %v1529
        %v2356 = vpop.f32.mrf.mxu0
        %v2357 = vadd.f32 %v2244, %v2356
        %2358 = vmatmul.f32.gmra.mxu0 %v1537
        %v2359 = vpop.f32.mrf.mxu0
        %v2360 = vadd.f32 %v2247, %v2359
        %2361 = vmatmul.f32.gmra.mxu0 %v1545
        %v2362 = vpop.f32.mrf.mxu0
        %v2363 = vadd.f32 %v2250, %v2362
        %2364 = vmatmul.f32.gmra.mxu0 %v1553
        %v2365 = vpop.f32.mrf.mxu0
        %v2366 = vadd.f32 %v2253, %v2365
        %2367 = vmatmul.f32.gmra.mxu0 %v1561
        %v2368 = vpop.f32.mrf.mxu0
        %v2369 = vadd.f32 %v2256, %v2368
        %2370 = vmatmul.f32.gmra.mxu0 %v1569
        %v2371 = vpop.f32.mrf.mxu0
        %v2372 = vadd.f32 %v2259, %v2371
        %2373 = vmatmul.f32.gmra.mxu0 %v1577
        %v2374 = vpop.f32.mrf.mxu0
        %v2375 = vadd.f32 %v2262, %v2374
        %2376 = vmatmul.f32.gmra.mxu0 %v1585
        %v2377 = vpop.f32.mrf.mxu0
        %v2378 = vadd.f32 %v2265, %v2377
        %2379 = vmatmul.f32.gmra.mxu0 %v1593
        %v2380 = vpop.f32.mrf.mxu0
        %v2381 = vadd.f32 %v2268, %v2380
        %2382 = vmatmul.f32.gmra.mxu0 %v1601
        %v2383 = vpop.f32.mrf.mxu0
        %v2384 = vadd.f32 %v2271, %v2383
        %2385 = vmatmul.f32.gmra.mxu0 %v1609
        %v2386 = vpop.f32.mrf.mxu0
        %v2387 = vadd.f32 %v2274, %v2386
        %2388 = vmatmul.f32.gmra.mxu0 %v1617
        %v2389 = vpop.f32.mrf.mxu0
        %v2390 = vadd.f32 %v2277, %v2389
        %2391 = vmatmul.f32.gmra.mxu0 %v1625
        %v2392 = vpop.f32.mrf.mxu0
        %v2393 = vadd.f32 %v2280, %v2392
        %2394 = vmatmul.f32.gmra.mxu0 %v1633
        %v2395 = vpop.f32.mrf.mxu0
        %v2396 = vadd.f32 %v2283, %v2395
        %2397 = vmatmul.f32.gmra.mxu0 %v1641
        %v2398 = vpop.f32.mrf.mxu0
        %v2399 = vadd.f32 %v2286, %v2398
        %2400 = vmatmul.f32.gmra.mxu0 %v1649
        %v2401 = vpop.f32.mrf.mxu0
        %v2402 = vadd.f32 %v2289, %v2401
        %2403 = vmatmul.f32.gmra.mxu0 %v1657
        %v2404 = vpop.f32.mrf.mxu0
        %v2405 = vadd.f32 %v2292, %v2404
        %2406 = vmatmul.f32.gmra.mxu0 %v1665
        %v2407 = vpop.f32.mrf.mxu0
        %v2408 = vadd.f32 %v2295, %v2407
        %2409 = vdwg.mxu0
        %2410 = vmatpush.msra.mxu0 %v1860
        %2411 = vmatpush.msra.mxu0 %v1856
        %2412 = vmatpush.msra.mxu0 %v1852
        %2413 = vmatpush.msra.mxu0 %v1848
        %2414 = vmatpush.msra.mxu0 %v1844
        %2415 = vmatpush.msra.mxu0 %v1840
        %2416 = vmatpush.msra.mxu0 %v1836
        %2417 = vmatpush.msra.mxu0 %v1832
        %2418 = vmatpush.msra.mxu0 %v1828
        %2419 = vmatpush.msra.mxu0 %v1824
        %2420 = vmatpush.msra.mxu0 %v1820
        %2421 = vmatpush.msra.mxu0 %v1816
        %2422 = vmatpush.msra.mxu0 %v1812
        %2423 = vmatpush.msra.mxu0 %v1808
        %2424 = vmatpush.msra.mxu0 %v1804
        %2425 = vmatpush.msra.mxu0 %v1800
        %2426 = vmatmul.f32.gmra.mxu0 %v1418
        %v2427 = vpop.f32.mrf.mxu0
        %v2428 = vadd.f32 %v2315, %v2427
        %2429 = vmatmul.f32.gmra.mxu0 %v1426
        %v2430 = vpop.f32.mrf.mxu0
        %v2431 = vadd.f32 %v2318, %v2430
        %2432 = vmatmul.f32.gmra.mxu0 %v1434
        %v2433 = vpop.f32.mrf.mxu0
        %v2434 = vadd.f32 %v2321, %v2433
        %2435 = vmatmul.f32.gmra.mxu0 %v1442
        %v2436 = vpop.f32.mrf.mxu0
        %v2437 = vadd.f32 %v2324, %v2436
        %2438 = vmatmul.f32.gmra.mxu0 %v1450
        %v2439 = vpop.f32.mrf.mxu0
        %v2440 = vadd.f32 %v2327, %v2439
        %2441 = vmatmul.f32.gmra.mxu0 %v1458
        %v2442 = vpop.f32.mrf.mxu0
        %v2443 = vadd.f32 %v2330, %v2442
        %2444 = vmatmul.f32.gmra.mxu0 %v1466
        %v2445 = vpop.f32.mrf.mxu0
        %v2446 = vadd.f32 %v2333, %v2445
        %2447 = vmatmul.f32.gmra.mxu0 %v1474
        %v2448 = vpop.f32.mrf.mxu0
        %v2449 = vadd.f32 %v2336, %v2448
        %2450 = vmatmul.f32.gmra.mxu0 %v1482
        %v2451 = vpop.f32.mrf.mxu0
        %v2452 = vadd.f32 %v2339, %v2451
        %2453 = vmatmul.f32.gmra.mxu0 %v1490
        %v2454 = vpop.f32.mrf.mxu0
        %v2455 = vadd.f32 %v2342, %v2454
        %2456 = vmatmul.f32.gmra.mxu0 %v1498
        %v2457 = vpop.f32.mrf.mxu0
        %v2458 = vadd.f32 %v2345, %v2457
        %2459 = vmatmul.f32.gmra.mxu0 %v1506
        %v2460 = vpop.f32.mrf.mxu0
        %v2461 = vadd.f32 %v2348, %v2460
        %2462 = vmatmul.f32.gmra.mxu0 %v1514
        %v2463 = vpop.f32.mrf.mxu0
        %v2464 = vadd.f32 %v2351, %v2463
        %2465 = vmatmul.f32.gmra.mxu0 %v1522
        %v2466 = vpop.f32.mrf.mxu0
        %v2467 = vadd.f32 %v2354, %v2466
        %2468 = vmatmul.f32.gmra.mxu0 %v1530
        %v2469 = vpop.f32.mrf.mxu0
        %v2470 = vadd.f32 %v2357, %v2469
        %2471 = vmatmul.f32.gmra.mxu0 %v1538
        %v2472 = vpop.f32.mrf.mxu0
        %v2473 = vadd.f32 %v2360, %v2472
        %2474 = vmatmul.f32.gmra.mxu0 %v1546
        %v2475 = vpop.f32.mrf.mxu0
        %v2476 = vadd.f32 %v2363, %v2475
        %2477 = vmatmul.f32.gmra.mxu0 %v1554
        %v2478 = vpop.f32.mrf.mxu0
        %v2479 = vadd.f32 %v2366, %v2478
        %2480 = vmatmul.f32.gmra.mxu0 %v1562
        %v2481 = vpop.f32.mrf.mxu0
        %v2482 = vadd.f32 %v2369, %v2481
        %2483 = vmatmul.f32.gmra.mxu0 %v1570
        %v2484 = vpop.f32.mrf.mxu0
        %v2485 = vadd.f32 %v2372, %v2484
        %2486 = vmatmul.f32.gmra.mxu0 %v1578
        %v2487 = vpop.f32.mrf.mxu0
        %v2488 = vadd.f32 %v2375, %v2487
        %2489 = vmatmul.f32.gmra.mxu0 %v1586
        %v2490 = vpop.f32.mrf.mxu0
        %v2491 = vadd.f32 %v2378, %v2490
        %2492 = vmatmul.f32.gmra.mxu0 %v1594
        %v2493 = vpop.f32.mrf.mxu0
        %v2494 = vadd.f32 %v2381, %v2493
        %2495 = vmatmul.f32.gmra.mxu0 %v1602
        %v2496 = vpop.f32.mrf.mxu0
        %v2497 = vadd.f32 %v2384, %v2496
        %2498 = vmatmul.f32.gmra.mxu0 %v1610
        %v2499 = vpop.f32.mrf.mxu0
        %v2500 = vadd.f32 %v2387, %v2499
        %2501 = vmatmul.f32.gmra.mxu0 %v1618
        %v2502 = vpop.f32.mrf.mxu0
        %v2503 = vadd.f32 %v2390, %v2502
        %2504 = vmatmul.f32.gmra.mxu0 %v1626
        %v2505 = vpop.f32.mrf.mxu0
        %v2506 = vadd.f32 %v2393, %v2505
        %2507 = vmatmul.f32.gmra.mxu0 %v1634
        %v2508 = vpop.f32.mrf.mxu0
        %v2509 = vadd.f32 %v2396, %v2508
        %2510 = vmatmul.f32.gmra.mxu0 %v1642
        %v2511 = vpop.f32.mrf.mxu0
        %v2512 = vadd.f32 %v2399, %v2511
        %2513 = vmatmul.f32.gmra.mxu0 %v1650
        %v2514 = vpop.f32.mrf.mxu0
        %v2515 = vadd.f32 %v2402, %v2514
        %2516 = vmatmul.f32.gmra.mxu0 %v1658
        %v2517 = vpop.f32.mrf.mxu0
        %v2518 = vadd.f32 %v2405, %v2517
        %2519 = vmatmul.f32.gmra.mxu0 %v1666
        %v2520 = vpop.f32.mrf.mxu0
        %v2521 = vadd.f32 %v2408, %v2520
        %2522 = vdwg.mxu0
        %2523 = vmatpush.msra.mxu0 %v1924
        %2524 = vmatpush.msra.mxu0 %v1920
        %2525 = vmatpush.msra.mxu0 %v1916
        %2526 = vmatpush.msra.mxu0 %v1912
        %2527 = vmatpush.msra.mxu0 %v1908
        %2528 = vmatpush.msra.mxu0 %v1904
        %2529 = vmatpush.msra.mxu0 %v1900
        %2530 = vmatpush.msra.mxu0 %v1896
        %2531 = vmatpush.msra.mxu0 %v1892
        %2532 = vmatpush.msra.mxu0 %v1888
        %2533 = vmatpush.msra.mxu0 %v1884
        %2534 = vmatpush.msra.mxu0 %v1880
        %2535 = vmatpush.msra.mxu0 %v1876
        %2536 = vmatpush.msra.mxu0 %v1872
        %2537 = vmatpush.msra.mxu0 %v1868
        %2538 = vmatpush.msra.mxu0 %v1864
        %2539 = vmatmul.f32.gmra.mxu0 %v1419
        %v2540 = vpop.f32.mrf.mxu0
        %v2541 = vadd.f32 %v2428, %v2540
        %2542 = vmatmul.f32.gmra.mxu0 %v1427
        %v2543 = vpop.f32.mrf.mxu0
        %v2544 = vadd.f32 %v2431, %v2543
        %2545 = vmatmul.f32.gmra.mxu0 %v1435
        %v2546 = vpop.f32.mrf.mxu0
        %v2547 = vadd.f32 %v2434, %v2546
        %2548 = vmatmul.f32.gmra.mxu0 %v1443
        %v2549 = vpop.f32.mrf.mxu0
        %v2550 = vadd.f32 %v2437, %v2549
        %2551 = vmatmul.f32.gmra.mxu0 %v1451
        %v2552 = vpop.f32.mrf.mxu0
        %v2553 = vadd.f32 %v2440, %v2552
        %2554 = vmatmul.f32.gmra.mxu0 %v1459
        %v2555 = vpop.f32.mrf.mxu0
        %v2556 = vadd.f32 %v2443, %v2555
        %2557 = vmatmul.f32.gmra.mxu0 %v1467
        %v2558 = vpop.f32.mrf.mxu0
        %v2559 = vadd.f32 %v2446, %v2558
        %2560 = vmatmul.f32.gmra.mxu0 %v1475
        %v2561 = vpop.f32.mrf.mxu0
        %v2562 = vadd.f32 %v2449, %v2561
        %2563 = vmatmul.f32.gmra.mxu0 %v1483
        %v2564 = vpop.f32.mrf.mxu0
        %v2565 = vadd.f32 %v2452, %v2564
        %2566 = vmatmul.f32.gmra.mxu0 %v1491
        %v2567 = vpop.f32.mrf.mxu0
        %v2568 = vadd.f32 %v2455, %v2567
        %2569 = vmatmul.f32.gmra.mxu0 %v1499
        %v2570 = vpop.f32.mrf.mxu0
        %v2571 = vadd.f32 %v2458, %v2570
        %2572 = vmatmul.f32.gmra.mxu0 %v1507
        %v2573 = vpop.f32.mrf.mxu0
        %v2574 = vadd.f32 %v2461, %v2573
        %2575 = vmatmul.f32.gmra.mxu0 %v1515
        %v2576 = vpop.f32.mrf.mxu0
        %v2577 = vadd.f32 %v2464, %v2576
        %2578 = vmatmul.f32.gmra.mxu0 %v1523
        %v2579 = vpop.f32.mrf.mxu0
        %v2580 = vadd.f32 %v2467, %v2579
        %2581 = vmatmul.f32.gmra.mxu0 %v1531
        %v2582 = vpop.f32.mrf.mxu0
        %v2583 = vadd.f32 %v2470, %v2582
        %2584 = vmatmul.f32.gmra.mxu0 %v1539
        %v2585 = vpop.f32.mrf.mxu0
        %v2586 = vadd.f32 %v2473, %v2585
        %2587 = vmatmul.f32.gmra.mxu0 %v1547
        %v2588 = vpop.f32.mrf.mxu0
        %v2589 = vadd.f32 %v2476, %v2588
        %2590 = vmatmul.f32.gmra.mxu0 %v1555
        %v2591 = vpop.f32.mrf.mxu0
        %v2592 = vadd.f32 %v2479, %v2591
        %2593 = vmatmul.f32.gmra.mxu0 %v1563
        %v2594 = vpop.f32.mrf.mxu0
        %v2595 = vadd.f32 %v2482, %v2594
        %2596 = vmatmul.f32.gmra.mxu0 %v1571
        %v2597 = vpop.f32.mrf.mxu0
        %v2598 = vadd.f32 %v2485, %v2597
        %2599 = vmatmul.f32.gmra.mxu0 %v1579
        %v2600 = vpop.f32.mrf.mxu0
        %v2601 = vadd.f32 %v2488, %v2600
        %2602 = vmatmul.f32.gmra.mxu0 %v1587
        %v2603 = vpop.f32.mrf.mxu0
        %v2604 = vadd.f32 %v2491, %v2603
        %2605 = vmatmul.f32.gmra.mxu0 %v1595
        %v2606 = vpop.f32.mrf.mxu0
        %v2607 = vadd.f32 %v2494, %v2606
        %2608 = vmatmul.f32.gmra.mxu0 %v1603
        %v2609 = vpop.f32.mrf.mxu0
        %v2610 = vadd.f32 %v2497, %v2609
        %2611 = vmatmul.f32.gmra.mxu0 %v1611
        %v2612 = vpop.f32.mrf.mxu0
        %v2613 = vadd.f32 %v2500, %v2612
        %2614 = vmatmul.f32.gmra.mxu0 %v1619
        %v2615 = vpop.f32.mrf.mxu0
        %v2616 = vadd.f32 %v2503, %v2615
        %2617 = vmatmul.f32.gmra.mxu0 %v1627
        %v2618 = vpop.f32.mrf.mxu0
        %v2619 = vadd.f32 %v2506, %v2618
        %2620 = vmatmul.f32.gmra.mxu0 %v1635
        %v2621 = vpop.f32.mrf.mxu0
        %v2622 = vadd.f32 %v2509, %v2621
        %2623 = vmatmul.f32.gmra.mxu0 %v1643
        %v2624 = vpop.f32.mrf.mxu0
        %v2625 = vadd.f32 %v2512, %v2624
        %2626 = vmatmul.f32.gmra.mxu0 %v1651
        %v2627 = vpop.f32.mrf.mxu0
        %v2628 = vadd.f32 %v2515, %v2627
        %2629 = vmatmul.f32.gmra.mxu0 %v1659
        %v2630 = vpop.f32.mrf.mxu0
        %v2631 = vadd.f32 %v2518, %v2630
        %2632 = vmatmul.f32.gmra.mxu0 %v1667
        %v2633 = vpop.f32.mrf.mxu0
        %v2634 = vadd.f32 %v2521, %v2633
        %2635 = vdwg.mxu0
        %2636 = vmatpush.msra.mxu0 %v1988
        %2637 = vmatpush.msra.mxu0 %v1984
        %2638 = vmatpush.msra.mxu0 %v1980
        %2639 = vmatpush.msra.mxu0 %v1976
        %2640 = vmatpush.msra.mxu0 %v1972
        %2641 = vmatpush.msra.mxu0 %v1968
        %2642 = vmatpush.msra.mxu0 %v1964
        %2643 = vmatpush.msra.mxu0 %v1960
        %2644 = vmatpush.msra.mxu0 %v1956
        %2645 = vmatpush.msra.mxu0 %v1952
        %2646 = vmatpush.msra.mxu0 %v1948
        %2647 = vmatpush.msra.mxu0 %v1944
        %2648 = vmatpush.msra.mxu0 %v1940
        %2649 = vmatpush.msra.mxu0 %v1936
        %2650 = vmatpush.msra.mxu0 %v1932
        %2651 = vmatpush.msra.mxu0 %v1928
        %2652 = vmatmul.f32.gmra.mxu0 %v1420
        %v2653 = vpop.f32.mrf.mxu0
        %v2654 = vadd.f32 %v2541, %v2653
        %2655 = vmatmul.f32.gmra.mxu0 %v1428
        %v2656 = vpop.f32.mrf.mxu0
        %v2657 = vadd.f32 %v2544, %v2656
        %2658 = vmatmul.f32.gmra.mxu0 %v1436
        %v2659 = vpop.f32.mrf.mxu0
        %v2660 = vadd.f32 %v2547, %v2659
        %2661 = vmatmul.f32.gmra.mxu0 %v1444
        %v2662 = vpop.f32.mrf.mxu0
        %v2663 = vadd.f32 %v2550, %v2662
        %2664 = vmatmul.f32.gmra.mxu0 %v1452
        %v2665 = vpop.f32.mrf.mxu0
        %v2666 = vadd.f32 %v2553, %v2665
        %2667 = vmatmul.f32.gmra.mxu0 %v1460
        %v2668 = vpop.f32.mrf.mxu0
        %v2669 = vadd.f32 %v2556, %v2668
        %2670 = vmatmul.f32.gmra.mxu0 %v1468
        %v2671 = vpop.f32.mrf.mxu0
        %v2672 = vadd.f32 %v2559, %v2671
        %2673 = vmatmul.f32.gmra.mxu0 %v1476
        %v2674 = vpop.f32.mrf.mxu0
        %v2675 = vadd.f32 %v2562, %v2674
        %2676 = vmatmul.f32.gmra.mxu0 %v1484
        %v2677 = vpop.f32.mrf.mxu0
        %v2678 = vadd.f32 %v2565, %v2677
        %2679 = vmatmul.f32.gmra.mxu0 %v1492
        %v2680 = vpop.f32.mrf.mxu0
        %v2681 = vadd.f32 %v2568, %v2680
        %2682 = vmatmul.f32.gmra.mxu0 %v1500
        %v2683 = vpop.f32.mrf.mxu0
        %v2684 = vadd.f32 %v2571, %v2683
        %2685 = vmatmul.f32.gmra.mxu0 %v1508
        %v2686 = vpop.f32.mrf.mxu0
        %v2687 = vadd.f32 %v2574, %v2686
        %2688 = vmatmul.f32.gmra.mxu0 %v1516
        %v2689 = vpop.f32.mrf.mxu0
        %v2690 = vadd.f32 %v2577, %v2689
        %2691 = vmatmul.f32.gmra.mxu0 %v1524
        %v2692 = vpop.f32.mrf.mxu0
        %v2693 = vadd.f32 %v2580, %v2692
        %2694 = vmatmul.f32.gmra.mxu0 %v1532
        %v2695 = vpop.f32.mrf.mxu0
        %v2696 = vadd.f32 %v2583, %v2695
        %2697 = vmatmul.f32.gmra.mxu0 %v1540
        %v2698 = vpop.f32.mrf.mxu0
        %v2699 = vadd.f32 %v2586, %v2698
        %2700 = vmatmul.f32.gmra.mxu0 %v1548
        %v2701 = vpop.f32.mrf.mxu0
        %v2702 = vadd.f32 %v2589, %v2701
        %2703 = vmatmul.f32.gmra.mxu0 %v1556
        %v2704 = vpop.f32.mrf.mxu0
        %v2705 = vadd.f32 %v2592, %v2704
        %2706 = vmatmul.f32.gmra.mxu0 %v1564
        %v2707 = vpop.f32.mrf.mxu0
        %v2708 = vadd.f32 %v2595, %v2707
        %2709 = vmatmul.f32.gmra.mxu0 %v1572
        %v2710 = vpop.f32.mrf.mxu0
        %v2711 = vadd.f32 %v2598, %v2710
        %2712 = vmatmul.f32.gmra.mxu0 %v1580
        %v2713 = vpop.f32.mrf.mxu0
        %v2714 = vadd.f32 %v2601, %v2713
        %2715 = vmatmul.f32.gmra.mxu0 %v1588
        %v2716 = vpop.f32.mrf.mxu0
        %v2717 = vadd.f32 %v2604, %v2716
        %2718 = vmatmul.f32.gmra.mxu0 %v1596
        %v2719 = vpop.f32.mrf.mxu0
        %v2720 = vadd.f32 %v2607, %v2719
        %2721 = vmatmul.f32.gmra.mxu0 %v1604
        %v2722 = vpop.f32.mrf.mxu0
        %v2723 = vadd.f32 %v2610, %v2722
        %2724 = vmatmul.f32.gmra.mxu0 %v1612
        %v2725 = vpop.f32.mrf.mxu0
        %v2726 = vadd.f32 %v2613, %v2725
        %2727 = vmatmul.f32.gmra.mxu0 %v1620
        %v2728 = vpop.f32.mrf.mxu0
        %v2729 = vadd.f32 %v2616, %v2728
        %2730 = vmatmul.f32.gmra.mxu0 %v1628
        %v2731 = vpop.f32.mrf.mxu0
        %v2732 = vadd.f32 %v2619, %v2731
        %2733 = vmatmul.f32.gmra.mxu0 %v1636
        %v2734 = vpop.f32.mrf.mxu0
        %v2735 = vadd.f32 %v2622, %v2734
        %2736 = vmatmul.f32.gmra.mxu0 %v1644
        %v2737 = vpop.f32.mrf.mxu0
        %v2738 = vadd.f32 %v2625, %v2737
        %2739 = vmatmul.f32.gmra.mxu0 %v1652
        %v2740 = vpop.f32.mrf.mxu0
        %v2741 = vadd.f32 %v2628, %v2740
        %2742 = vmatmul.f32.gmra.mxu0 %v1660
        %v2743 = vpop.f32.mrf.mxu0
        %v2744 = vadd.f32 %v2631, %v2743
        %2745 = vmatmul.f32.gmra.mxu0 %v1668
        %v2746 = vpop.f32.mrf.mxu0
        %v2747 = vadd.f32 %v2634, %v2746
        %2748 = vdwg.mxu0
        %2749 = vmatpush.msra.mxu0 %v2052
        %2750 = vmatpush.msra.mxu0 %v2048
        %2751 = vmatpush.msra.mxu0 %v2044
        %2752 = vmatpush.msra.mxu0 %v2040
        %2753 = vmatpush.msra.mxu0 %v2036
        %2754 = vmatpush.msra.mxu0 %v2032
        %2755 = vmatpush.msra.mxu0 %v2028
        %2756 = vmatpush.msra.mxu0 %v2024
        %2757 = vmatpush.msra.mxu0 %v2020
        %2758 = vmatpush.msra.mxu0 %v2016
        %2759 = vmatpush.msra.mxu0 %v2012
        %2760 = vmatpush.msra.mxu0 %v2008
        %2761 = vmatpush.msra.mxu0 %v2004
        %2762 = vmatpush.msra.mxu0 %v2000
        %2763 = vmatpush.msra.mxu0 %v1996
        %2764 = vmatpush.msra.mxu0 %v1992
        %2765 = vmatmul.f32.gmra.mxu0 %v1421
        %v2766 = vpop.f32.mrf.mxu0
        %v2767 = vadd.f32 %v2654, %v2766
        %2768 = vmatmul.f32.gmra.mxu0 %v1429
        %v2769 = vpop.f32.mrf.mxu0
        %v2770 = vadd.f32 %v2657, %v2769
        %2771 = vmatmul.f32.gmra.mxu0 %v1437
        %v2772 = vpop.f32.mrf.mxu0
        %v2773 = vadd.f32 %v2660, %v2772
        %2774 = vmatmul.f32.gmra.mxu0 %v1445
        %v2775 = vpop.f32.mrf.mxu0
        %v2776 = vadd.f32 %v2663, %v2775
        %2777 = vmatmul.f32.gmra.mxu0 %v1453
        %v2778 = vpop.f32.mrf.mxu0
        %v2779 = vadd.f32 %v2666, %v2778
        %2780 = vmatmul.f32.gmra.mxu0 %v1461
        %v2781 = vpop.f32.mrf.mxu0
        %v2782 = vadd.f32 %v2669, %v2781
        %2783 = vmatmul.f32.gmra.mxu0 %v1469
        %v2784 = vpop.f32.mrf.mxu0
        %v2785 = vadd.f32 %v2672, %v2784
        %2786 = vmatmul.f32.gmra.mxu0 %v1477
        %v2787 = vpop.f32.mrf.mxu0
        %v2788 = vadd.f32 %v2675, %v2787
        %2789 = vmatmul.f32.gmra.mxu0 %v1485
        %v2790 = vpop.f32.mrf.mxu0
        %v2791 = vadd.f32 %v2678, %v2790
        %2792 = vmatmul.f32.gmra.mxu0 %v1493
        %v2793 = vpop.f32.mrf.mxu0
        %v2794 = vadd.f32 %v2681, %v2793
        %2795 = vmatmul.f32.gmra.mxu0 %v1501
        %v2796 = vpop.f32.mrf.mxu0
        %v2797 = vadd.f32 %v2684, %v2796
        %2798 = vmatmul.f32.gmra.mxu0 %v1509
        %v2799 = vpop.f32.mrf.mxu0
        %v2800 = vadd.f32 %v2687, %v2799
        %2801 = vmatmul.f32.gmra.mxu0 %v1517
        %v2802 = vpop.f32.mrf.mxu0
        %v2803 = vadd.f32 %v2690, %v2802
        %2804 = vmatmul.f32.gmra.mxu0 %v1525
        %v2805 = vpop.f32.mrf.mxu0
        %v2806 = vadd.f32 %v2693, %v2805
        %2807 = vmatmul.f32.gmra.mxu0 %v1533
        %v2808 = vpop.f32.mrf.mxu0
        %v2809 = vadd.f32 %v2696, %v2808
        %2810 = vmatmul.f32.gmra.mxu0 %v1541
        %v2811 = vpop.f32.mrf.mxu0
        %v2812 = vadd.f32 %v2699, %v2811
        %2813 = vmatmul.f32.gmra.mxu0 %v1549
        %v2814 = vpop.f32.mrf.mxu0
        %v2815 = vadd.f32 %v2702, %v2814
        %2816 = vmatmul.f32.gmra.mxu0 %v1557
        %v2817 = vpop.f32.mrf.mxu0
        %v2818 = vadd.f32 %v2705, %v2817
        %2819 = vmatmul.f32.gmra.mxu0 %v1565
        %v2820 = vpop.f32.mrf.mxu0
        %v2821 = vadd.f32 %v2708, %v2820
        %2822 = vmatmul.f32.gmra.mxu0 %v1573
        %v2823 = vpop.f32.mrf.mxu0
        %v2824 = vadd.f32 %v2711, %v2823
        %2825 = vmatmul.f32.gmra.mxu0 %v1581
        %v2826 = vpop.f32.mrf.mxu0
        %v2827 = vadd.f32 %v2714, %v2826
        %2828 = vmatmul.f32.gmra.mxu0 %v1589
        %v2829 = vpop.f32.mrf.mxu0
        %v2830 = vadd.f32 %v2717, %v2829
        %2831 = vmatmul.f32.gmra.mxu0 %v1597
        %v2832 = vpop.f32.mrf.mxu0
        %v2833 = vadd.f32 %v2720, %v2832
        %2834 = vmatmul.f32.gmra.mxu0 %v1605
        %v2835 = vpop.f32.mrf.mxu0
        %v2836 = vadd.f32 %v2723, %v2835
        %2837 = vmatmul.f32.gmra.mxu0 %v1613
        %v2838 = vpop.f32.mrf.mxu0
        %v2839 = vadd.f32 %v2726, %v2838
        %2840 = vmatmul.f32.gmra.mxu0 %v1621
        %v2841 = vpop.f32.mrf.mxu0
        %v2842 = vadd.f32 %v2729, %v2841
        %2843 = vmatmul.f32.gmra.mxu0 %v1629
        %v2844 = vpop.f32.mrf.mxu0
        %v2845 = vadd.f32 %v2732, %v2844
        %2846 = vmatmul.f32.gmra.mxu0 %v1637
        %v2847 = vpop.f32.mrf.mxu0
        %v2848 = vadd.f32 %v2735, %v2847
        %2849 = vmatmul.f32.gmra.mxu0 %v1645
        %v2850 = vpop.f32.mrf.mxu0
        %v2851 = vadd.f32 %v2738, %v2850
        %2852 = vmatmul.f32.gmra.mxu0 %v1653
        %v2853 = vpop.f32.mrf.mxu0
        %v2854 = vadd.f32 %v2741, %v2853
        %2855 = vmatmul.f32.gmra.mxu0 %v1661
        %v2856 = vpop.f32.mrf.mxu0
        %v2857 = vadd.f32 %v2744, %v2856
        %2858 = vmatmul.f32.gmra.mxu0 %v1669
        %v2859 = vpop.f32.mrf.mxu0
        %v2860 = vadd.f32 %v2747, %v2859
        %2861 = vdwg.mxu0
        %2862 = vmatpush.msra.mxu0 %v2116
        %2863 = vmatpush.msra.mxu0 %v2112
        %2864 = vmatpush.msra.mxu0 %v2108
        %2865 = vmatpush.msra.mxu0 %v2104
        %2866 = vmatpush.msra.mxu0 %v2100
        %2867 = vmatpush.msra.mxu0 %v2096
        %2868 = vmatpush.msra.mxu0 %v2092
        %2869 = vmatpush.msra.mxu0 %v2088
        %2870 = vmatpush.msra.mxu0 %v2084
        %2871 = vmatpush.msra.mxu0 %v2080
        %2872 = vmatpush.msra.mxu0 %v2076
        %2873 = vmatpush.msra.mxu0 %v2072
        %2874 = vmatpush.msra.mxu0 %v2068
        %2875 = vmatpush.msra.mxu0 %v2064
        %2876 = vmatpush.msra.mxu0 %v2060
        %2877 = vmatpush.msra.mxu0 %v2056
        %2878 = vmatmul.f32.gmra.mxu0 %v1422
        %v2879 = vpop.f32.mrf.mxu0
        %v2880 = vadd.f32 %v2767, %v2879
        %2881 = vmatmul.f32.gmra.mxu0 %v1430
        %v2882 = vpop.f32.mrf.mxu0
        %v2883 = vadd.f32 %v2770, %v2882
        %2884 = vmatmul.f32.gmra.mxu0 %v1438
        %v2885 = vpop.f32.mrf.mxu0
        %v2886 = vadd.f32 %v2773, %v2885
        %2887 = vmatmul.f32.gmra.mxu0 %v1446
        %v2888 = vpop.f32.mrf.mxu0
        %v2889 = vadd.f32 %v2776, %v2888
        %2890 = vmatmul.f32.gmra.mxu0 %v1454
        %v2891 = vpop.f32.mrf.mxu0
        %v2892 = vadd.f32 %v2779, %v2891
        %2893 = vmatmul.f32.gmra.mxu0 %v1462
        %v2894 = vpop.f32.mrf.mxu0
        %v2895 = vadd.f32 %v2782, %v2894
        %2896 = vmatmul.f32.gmra.mxu0 %v1470
        %v2897 = vpop.f32.mrf.mxu0
        %v2898 = vadd.f32 %v2785, %v2897
        %2899 = vmatmul.f32.gmra.mxu0 %v1478
        %v2900 = vpop.f32.mrf.mxu0
        %v2901 = vadd.f32 %v2788, %v2900
        %2902 = vmatmul.f32.gmra.mxu0 %v1486
        %v2903 = vpop.f32.mrf.mxu0
        %v2904 = vadd.f32 %v2791, %v2903
        %2905 = vmatmul.f32.gmra.mxu0 %v1494
        %v2906 = vpop.f32.mrf.mxu0
        %v2907 = vadd.f32 %v2794, %v2906
        %2908 = vmatmul.f32.gmra.mxu0 %v1502
        %v2909 = vpop.f32.mrf.mxu0
        %v2910 = vadd.f32 %v2797, %v2909
        %2911 = vmatmul.f32.gmra.mxu0 %v1510
        %v2912 = vpop.f32.mrf.mxu0
        %v2913 = vadd.f32 %v2800, %v2912
        %2914 = vmatmul.f32.gmra.mxu0 %v1518
        %v2915 = vpop.f32.mrf.mxu0
        %v2916 = vadd.f32 %v2803, %v2915
        %2917 = vmatmul.f32.gmra.mxu0 %v1526
        %v2918 = vpop.f32.mrf.mxu0
        %v2919 = vadd.f32 %v2806, %v2918
        %2920 = vmatmul.f32.gmra.mxu0 %v1534
        %v2921 = vpop.f32.mrf.mxu0
        %v2922 = vadd.f32 %v2809, %v2921
        %2923 = vmatmul.f32.gmra.mxu0 %v1542
        %v2924 = vpop.f32.mrf.mxu0
        %v2925 = vadd.f32 %v2812, %v2924
        %2926 = vmatmul.f32.gmra.mxu0 %v1550
        %v2927 = vpop.f32.mrf.mxu0
        %v2928 = vadd.f32 %v2815, %v2927
        %2929 = vmatmul.f32.gmra.mxu0 %v1558
        %v2930 = vpop.f32.mrf.mxu0
        %v2931 = vadd.f32 %v2818, %v2930
        %2932 = vmatmul.f32.gmra.mxu0 %v1566
        %v2933 = vpop.f32.mrf.mxu0
        %v2934 = vadd.f32 %v2821, %v2933
        %2935 = vmatmul.f32.gmra.mxu0 %v1574
        %v2936 = vpop.f32.mrf.mxu0
        %v2937 = vadd.f32 %v2824, %v2936
        %2938 = vmatmul.f32.gmra.mxu0 %v1582
        %v2939 = vpop.f32.mrf.mxu0
        %v2940 = vadd.f32 %v2827, %v2939
        %2941 = vmatmul.f32.gmra.mxu0 %v1590
        %v2942 = vpop.f32.mrf.mxu0
        %v2943 = vadd.f32 %v2830, %v2942
        %2944 = vmatmul.f32.gmra.mxu0 %v1598
        %v2945 = vpop.f32.mrf.mxu0
        %v2946 = vadd.f32 %v2833, %v2945
        %2947 = vmatmul.f32.gmra.mxu0 %v1606
        %v2948 = vpop.f32.mrf.mxu0
        %v2949 = vadd.f32 %v2836, %v2948
        %2950 = vmatmul.f32.gmra.mxu0 %v1614
        %v2951 = vpop.f32.mrf.mxu0
        %v2952 = vadd.f32 %v2839, %v2951
        %2953 = vmatmul.f32.gmra.mxu0 %v1622
        %v2954 = vpop.f32.mrf.mxu0
        %v2955 = vadd.f32 %v2842, %v2954
        %2956 = vmatmul.f32.gmra.mxu0 %v1630
        %v2957 = vpop.f32.mrf.mxu0
        %v2958 = vadd.f32 %v2845, %v2957
        %2959 = vmatmul.f32.gmra.mxu0 %v1638
        %v2960 = vpop.f32.mrf.mxu0
        %v2961 = vadd.f32 %v2848, %v2960
        %2962 = vmatmul.f32.gmra.mxu0 %v1646
        %v2963 = vpop.f32.mrf.mxu0
        %v2964 = vadd.f32 %v2851, %v2963
        %2965 = vmatmul.f32.gmra.mxu0 %v1654
        %v2966 = vpop.f32.mrf.mxu0
        %v2967 = vadd.f32 %v2854, %v2966
        %2968 = vmatmul.f32.gmra.mxu0 %v1662
        %v2969 = vpop.f32.mrf.mxu0
        %v2970 = vadd.f32 %v2857, %v2969
        %2971 = vmatmul.f32.gmra.mxu0 %v1670
        %v2972 = vpop.f32.mrf.mxu0
        %v2973 = vadd.f32 %v2860, %v2972
        %2974 = vdwg.mxu0
        %2975 = vmatpush.msra.mxu0 %v2180
        %2976 = vmatpush.msra.mxu0 %v2176
        %2977 = vmatpush.msra.mxu0 %v2172
        %2978 = vmatpush.msra.mxu0 %v2168
        %2979 = vmatpush.msra.mxu0 %v2164
        %2980 = vmatpush.msra.mxu0 %v2160
        %2981 = vmatpush.msra.mxu0 %v2156
        %2982 = vmatpush.msra.mxu0 %v2152
        %2983 = vmatpush.msra.mxu0 %v2148
        %2984 = vmatpush.msra.mxu0 %v2144
        %2985 = vmatpush.msra.mxu0 %v2140
        %2986 = vmatpush.msra.mxu0 %v2136
        %2987 = vmatpush.msra.mxu0 %v2132
        %2988 = vmatpush.msra.mxu0 %v2128
        %2989 = vmatpush.msra.mxu0 %v2124
        %2990 = vmatpush.msra.mxu0 %v2120
        %2991 = vmatmul.f32.gmra.mxu0 %v1423
        %v2992 = vpop.f32.mrf.mxu0
        %v2993 = vadd.f32 %v2880, %v2992
        %2994 = vmatmul.f32.gmra.mxu0 %v1431
        %v2995 = vpop.f32.mrf.mxu0
        %v2996 = vadd.f32 %v2883, %v2995
        %2997 = vmatmul.f32.gmra.mxu0 %v1439
        %v2998 = vpop.f32.mrf.mxu0
        %v2999 = vadd.f32 %v2886, %v2998
        %3000 = vmatmul.f32.gmra.mxu0 %v1447
        %v3001 = vpop.f32.mrf.mxu0
        %v3002 = vadd.f32 %v2889, %v3001
        %3003 = vmatmul.f32.gmra.mxu0 %v1455
        %v3004 = vpop.f32.mrf.mxu0
        %v3005 = vadd.f32 %v2892, %v3004
        %3006 = vmatmul.f32.gmra.mxu0 %v1463
        %v3007 = vpop.f32.mrf.mxu0
        %v3008 = vadd.f32 %v2895, %v3007
        %3009 = vmatmul.f32.gmra.mxu0 %v1471
        %v3010 = vpop.f32.mrf.mxu0
        %v3011 = vadd.f32 %v2898, %v3010
        %3012 = vmatmul.f32.gmra.mxu0 %v1479
        %v3013 = vpop.f32.mrf.mxu0
        %v3014 = vadd.f32 %v2901, %v3013
        %3015 = vmatmul.f32.gmra.mxu0 %v1487
        %v3016 = vpop.f32.mrf.mxu0
        %v3017 = vadd.f32 %v2904, %v3016
        %3018 = vmatmul.f32.gmra.mxu0 %v1495
        %v3019 = vpop.f32.mrf.mxu0
        %v3020 = vadd.f32 %v2907, %v3019
        %3021 = vmatmul.f32.gmra.mxu0 %v1503
        %v3022 = vpop.f32.mrf.mxu0
        %v3023 = vadd.f32 %v2910, %v3022
        %3024 = vmatmul.f32.gmra.mxu0 %v1511
        %v3025 = vpop.f32.mrf.mxu0
        %v3026 = vadd.f32 %v2913, %v3025
        %3027 = vmatmul.f32.gmra.mxu0 %v1519
        %v3028 = vpop.f32.mrf.mxu0
        %v3029 = vadd.f32 %v2916, %v3028
        %3030 = vmatmul.f32.gmra.mxu0 %v1527
        %v3031 = vpop.f32.mrf.mxu0
        %v3032 = vadd.f32 %v2919, %v3031
        %3033 = vmatmul.f32.gmra.mxu0 %v1535
        %v3034 = vpop.f32.mrf.mxu0
        %v3035 = vadd.f32 %v2922, %v3034
        %3036 = vmatmul.f32.gmra.mxu0 %v1543
        %v3037 = vpop.f32.mrf.mxu0
        %v3038 = vadd.f32 %v2925, %v3037
        %3039 = vmatmul.f32.gmra.mxu0 %v1551
        %v3040 = vpop.f32.mrf.mxu0
        %v3041 = vadd.f32 %v2928, %v3040
        %3042 = vmatmul.f32.gmra.mxu0 %v1559
        %v3043 = vpop.f32.mrf.mxu0
        %v3044 = vadd.f32 %v2931, %v3043
        %3045 = vmatmul.f32.gmra.mxu0 %v1567
        %v3046 = vpop.f32.mrf.mxu0
        %v3047 = vadd.f32 %v2934, %v3046
        %3048 = vmatmul.f32.gmra.mxu0 %v1575
        %v3049 = vpop.f32.mrf.mxu0
        %v3050 = vadd.f32 %v2937, %v3049
        %3051 = vmatmul.f32.gmra.mxu0 %v1583
        %v3052 = vpop.f32.mrf.mxu0
        %v3053 = vadd.f32 %v2940, %v3052
        %3054 = vmatmul.f32.gmra.mxu0 %v1591
        %v3055 = vpop.f32.mrf.mxu0
        %v3056 = vadd.f32 %v2943, %v3055
        %3057 = vmatmul.f32.gmra.mxu0 %v1599
        %v3058 = vpop.f32.mrf.mxu0
        %v3059 = vadd.f32 %v2946, %v3058
        %3060 = vmatmul.f32.gmra.mxu0 %v1607
        %v3061 = vpop.f32.mrf.mxu0
        %v3062 = vadd.f32 %v2949, %v3061
        %3063 = vmatmul.f32.gmra.mxu0 %v1615
        %v3064 = vpop.f32.mrf.mxu0
        %v3065 = vadd.f32 %v2952, %v3064
        %3066 = vmatmul.f32.gmra.mxu0 %v1623
        %v3067 = vpop.f32.mrf.mxu0
        %v3068 = vadd.f32 %v2955, %v3067
        %3069 = vmatmul.f32.gmra.mxu0 %v1631
        %v3070 = vpop.f32.mrf.mxu0
        %v3071 = vadd.f32 %v2958, %v3070
        %3072 = vmatmul.f32.gmra.mxu0 %v1639
        %v3073 = vpop.f32.mrf.mxu0
        %v3074 = vadd.f32 %v2961, %v3073
        %3075 = vmatmul.f32.gmra.mxu0 %v1647
        %v3076 = vpop.f32.mrf.mxu0
        %v3077 = vadd.f32 %v2964, %v3076
        %3078 = vmatmul.f32.gmra.mxu0 %v1655
        %v3079 = vpop.f32.mrf.mxu0
        %v3080 = vadd.f32 %v2967, %v3079
        %3081 = vmatmul.f32.gmra.mxu0 %v1663
        %v3082 = vpop.f32.mrf.mxu0
        %v3083 = vadd.f32 %v2970, %v3082
        %3084 = vmatmul.f32.gmra.mxu0 %v1671
        %v3085 = vpop.f32.mrf.mxu0
        %v3086 = vadd.f32 %v2973, %v3085
        %3087 = vdwg.mxu0
        %3088 = vmatpush.msra.mxu0 %v1733
        %3089 = vmatpush.msra.mxu0 %v1729
        %3090 = vmatpush.msra.mxu0 %v1725
        %3091 = vmatpush.msra.mxu0 %v1721
        %3092 = vmatpush.msra.mxu0 %v1717
        %3093 = vmatpush.msra.mxu0 %v1713
        %3094 = vmatpush.msra.mxu0 %v1709
        %3095 = vmatpush.msra.mxu0 %v1705
        %3096 = vmatpush.msra.mxu0 %v1701
        %3097 = vmatpush.msra.mxu0 %v1697
        %3098 = vmatpush.msra.mxu0 %v1693
        %3099 = vmatpush.msra.mxu0 %v1689
        %3100 = vmatpush.msra.mxu0 %v1685
        %3101 = vmatpush.msra.mxu0 %v1681
        %3102 = vmatpush.msra.mxu0 %v1677
        %3103 = vmatpush.msra.mxu0 %v1673
        %3104 = vmatmul.f32.gmra.mxu0 %v1416
        %v3105 = vpop.f32.mrf.mxu0
        %v3106 = vadd.f32 0.0, %v3105
        %3107 = vmatmul.f32.gmra.mxu0 %v1424
        %v3108 = vpop.f32.mrf.mxu0
        %v3109 = vadd.f32 0.0, %v3108
        %3110 = vmatmul.f32.gmra.mxu0 %v1432
        %v3111 = vpop.f32.mrf.mxu0
        %v3112 = vadd.f32 0.0, %v3111
        %3113 = vmatmul.f32.gmra.mxu0 %v1440
        %v3114 = vpop.f32.mrf.mxu0
        %v3115 = vadd.f32 0.0, %v3114
        %3116 = vmatmul.f32.gmra.mxu0 %v1448
        %v3117 = vpop.f32.mrf.mxu0
        %v3118 = vadd.f32 0.0, %v3117
        %3119 = vmatmul.f32.gmra.mxu0 %v1456
        %v3120 = vpop.f32.mrf.mxu0
        %v3121 = vadd.f32 0.0, %v3120
        %3122 = vmatmul.f32.gmra.mxu0 %v1464
        %v3123 = vpop.f32.mrf.mxu0
        %v3124 = vadd.f32 0.0, %v3123
        %3125 = vmatmul.f32.gmra.mxu0 %v1472
        %v3126 = vpop.f32.mrf.mxu0
        %v3127 = vadd.f32 0.0, %v3126
        %3128 = vmatmul.f32.gmra.mxu0 %v1480
        %v3129 = vpop.f32.mrf.mxu0
        %v3130 = vadd.f32 0.0, %v3129
        %3131 = vmatmul.f32.gmra.mxu0 %v1488
        %v3132 = vpop.f32.mrf.mxu0
        %v3133 = vadd.f32 0.0, %v3132
        %3134 = vmatmul.f32.gmra.mxu0 %v1496
        %v3135 = vpop.f32.mrf.mxu0
        %v3136 = vadd.f32 0.0, %v3135
        %3137 = vmatmul.f32.gmra.mxu0 %v1504
        %v3138 = vpop.f32.mrf.mxu0
        %v3139 = vadd.f32 0.0, %v3138
        %3140 = vmatmul.f32.gmra.mxu0 %v1512
        %v3141 = vpop.f32.mrf.mxu0
        %v3142 = vadd.f32 0.0, %v3141
        %3143 = vmatmul.f32.gmra.mxu0 %v1520
        %v3144 = vpop.f32.mrf.mxu0
        %v3145 = vadd.f32 0.0, %v3144
        %3146 = vmatmul.f32.gmra.mxu0 %v1528
        %v3147 = vpop.f32.mrf.mxu0
        %v3148 = vadd.f32 0.0, %v3147
        %3149 = vmatmul.f32.gmra.mxu0 %v1536
        %v3150 = vpop.f32.mrf.mxu0
        %v3151 = vadd.f32 0.0, %v3150
        %3152 = vmatmul.f32.gmra.mxu0 %v1544
        %v3153 = vpop.f32.mrf.mxu0
        %v3154 = vadd.f32 0.0, %v3153
        %3155 = vmatmul.f32.gmra.mxu0 %v1552
        %v3156 = vpop.f32.mrf.mxu0
        %v3157 = vadd.f32 0.0, %v3156
        %3158 = vmatmul.f32.gmra.mxu0 %v1560
        %v3159 = vpop.f32.mrf.mxu0
        %v3160 = vadd.f32 0.0, %v3159
        %3161 = vmatmul.f32.gmra.mxu0 %v1568
        %v3162 = vpop.f32.mrf.mxu0
        %v3163 = vadd.f32 0.0, %v3162
        %3164 = vmatmul.f32.gmra.mxu0 %v1576
        %v3165 = vpop.f32.mrf.mxu0
        %v3166 = vadd.f32 0.0, %v3165
        %3167 = vmatmul.f32.gmra.mxu0 %v1584
        %v3168 = vpop.f32.mrf.mxu0
        %v3169 = vadd.f32 0.0, %v3168
        %3170 = vmatmul.f32.gmra.mxu0 %v1592
        %v3171 = vpop.f32.mrf.mxu0
        %v3172 = vadd.f32 0.0, %v3171
        %3173 = vmatmul.f32.gmra.mxu0 %v1600
        %v3174 = vpop.f32.mrf.mxu0
        %v3175 = vadd.f32 0.0, %v3174
        %3176 = vmatmul.f32.gmra.mxu0 %v1608
        %v3177 = vpop.f32.mrf.mxu0
        %v3178 = vadd.f32 0.0, %v3177
        %3179 = vmatmul.f32.gmra.mxu0 %v1616
        %v3180 = vpop.f32.mrf.mxu0
        %v3181 = vadd.f32 0.0, %v3180
        %3182 = vmatmul.f32.gmra.mxu0 %v1624
        %v3183 = vpop.f32.mrf.mxu0
        %v3184 = vadd.f32 0.0, %v3183
        %3185 = vmatmul.f32.gmra.mxu0 %v1632
        %v3186 = vpop.f32.mrf.mxu0
        %v3187 = vadd.f32 0.0, %v3186
        %3188 = vmatmul.f32.gmra.mxu0 %v1640
        %v3189 = vpop.f32.mrf.mxu0
        %v3190 = vadd.f32 0.0, %v3189
        %3191 = vmatmul.f32.gmra.mxu0 %v1648
        %v3192 = vpop.f32.mrf.mxu0
        %v3193 = vadd.f32 0.0, %v3192
        %3194 = vmatmul.f32.gmra.mxu0 %v1656
        %v3195 = vpop.f32.mrf.mxu0
        %v3196 = vadd.f32 0.0, %v3195
        %3197 = vmatmul.f32.gmra.mxu0 %v1664
        %v3198 = vpop.f32.mrf.mxu0
        %v3199 = vadd.f32 0.0, %v3198
        %3200 = vdwg.mxu0
        %3201 = vmatpush.msra.mxu0 %v1797
        %3202 = vmatpush.msra.mxu0 %v1793
        %3203 = vmatpush.msra.mxu0 %v1789
        %3204 = vmatpush.msra.mxu0 %v1785
        %3205 = vmatpush.msra.mxu0 %v1781
        %3206 = vmatpush.msra.mxu0 %v1777
        %3207 = vmatpush.msra.mxu0 %v1773
        %3208 = vmatpush.msra.mxu0 %v1769
        %3209 = vmatpush.msra.mxu0 %v1765
        %3210 = vmatpush.msra.mxu0 %v1761
        %3211 = vmatpush.msra.mxu0 %v1757
        %3212 = vmatpush.msra.mxu0 %v1753
        %3213 = vmatpush.msra.mxu0 %v1749
        %3214 = vmatpush.msra.mxu0 %v1745
        %3215 = vmatpush.msra.mxu0 %v1741
        %3216 = vmatpush.msra.mxu0 %v1737
        %3217 = vmatmul.f32.gmra.mxu0 %v1417
        %v3218 = vpop.f32.mrf.mxu0
        %v3219 = vadd.f32 %v3106, %v3218
        %3220 = vmatmul.f32.gmra.mxu0 %v1425
        %v3221 = vpop.f32.mrf.mxu0
        %v3222 = vadd.f32 %v3109, %v3221
        %3223 = vmatmul.f32.gmra.mxu0 %v1433
        %v3224 = vpop.f32.mrf.mxu0
        %v3225 = vadd.f32 %v3112, %v3224
        %3226 = vmatmul.f32.gmra.mxu0 %v1441
        %v3227 = vpop.f32.mrf.mxu0
        %v3228 = vadd.f32 %v3115, %v3227
        %3229 = vmatmul.f32.gmra.mxu0 %v1449
        %v3230 = vpop.f32.mrf.mxu0
        %v3231 = vadd.f32 %v3118, %v3230
        %3232 = vmatmul.f32.gmra.mxu0 %v1457
        %v3233 = vpop.f32.mrf.mxu0
        %v3234 = vadd.f32 %v3121, %v3233
        %3235 = vmatmul.f32.gmra.mxu0 %v1465
        %v3236 = vpop.f32.mrf.mxu0
        %v3237 = vadd.f32 %v3124, %v3236
        %3238 = vmatmul.f32.gmra.mxu0 %v1473
        %v3239 = vpop.f32.mrf.mxu0
        %v3240 = vadd.f32 %v3127, %v3239
        %3241 = vmatmul.f32.gmra.mxu0 %v1481
        %v3242 = vpop.f32.mrf.mxu0
        %v3243 = vadd.f32 %v3130, %v3242
        %3244 = vmatmul.f32.gmra.mxu0 %v1489
        %v3245 = vpop.f32.mrf.mxu0
        %v3246 = vadd.f32 %v3133, %v3245
        %3247 = vmatmul.f32.gmra.mxu0 %v1497
        %v3248 = vpop.f32.mrf.mxu0
        %v3249 = vadd.f32 %v3136, %v3248
        %3250 = vmatmul.f32.gmra.mxu0 %v1505
        %v3251 = vpop.f32.mrf.mxu0
        %v3252 = vadd.f32 %v3139, %v3251
        %3253 = vmatmul.f32.gmra.mxu0 %v1513
        %v3254 = vpop.f32.mrf.mxu0
        %v3255 = vadd.f32 %v3142, %v3254
        %3256 = vmatmul.f32.gmra.mxu0 %v1521
        %v3257 = vpop.f32.mrf.mxu0
        %v3258 = vadd.f32 %v3145, %v3257
        %3259 = vmatmul.f32.gmra.mxu0 %v1529
        %v3260 = vpop.f32.mrf.mxu0
        %v3261 = vadd.f32 %v3148, %v3260
        %3262 = vmatmul.f32.gmra.mxu0 %v1537
        %v3263 = vpop.f32.mrf.mxu0
        %v3264 = vadd.f32 %v3151, %v3263
        %3265 = vmatmul.f32.gmra.mxu0 %v1545
        %v3266 = vpop.f32.mrf.mxu0
        %v3267 = vadd.f32 %v3154, %v3266
        %3268 = vmatmul.f32.gmra.mxu0 %v1553
        %v3269 = vpop.f32.mrf.mxu0
        %v3270 = vadd.f32 %v3157, %v3269
        %3271 = vmatmul.f32.gmra.mxu0 %v1561
        %v3272 = vpop.f32.mrf.mxu0
        %v3273 = vadd.f32 %v3160, %v3272
        %3274 = vmatmul.f32.gmra.mxu0 %v1569
        %v3275 = vpop.f32.mrf.mxu0
        %v3276 = vadd.f32 %v3163, %v3275
        %3277 = vmatmul.f32.gmra.mxu0 %v1577
        %v3278 = vpop.f32.mrf.mxu0
        %v3279 = vadd.f32 %v3166, %v3278
        %3280 = vmatmul.f32.gmra.mxu0 %v1585
        %v3281 = vpop.f32.mrf.mxu0
        %v3282 = vadd.f32 %v3169, %v3281
        %3283 = vmatmul.f32.gmra.mxu0 %v1593
        %v3284 = vpop.f32.mrf.mxu0
        %v3285 = vadd.f32 %v3172, %v3284
        %3286 = vmatmul.f32.gmra.mxu0 %v1601
        %v3287 = vpop.f32.mrf.mxu0
        %v3288 = vadd.f32 %v3175, %v3287
        %3289 = vmatmul.f32.gmra.mxu0 %v1609
        %v3290 = vpop.f32.mrf.mxu0
        %v3291 = vadd.f32 %v3178, %v3290
        %3292 = vmatmul.f32.gmra.mxu0 %v1617
        %v3293 = vpop.f32.mrf.mxu0
        %v3294 = vadd.f32 %v3181, %v3293
        %3295 = vmatmul.f32.gmra.mxu0 %v1625
        %v3296 = vpop.f32.mrf.mxu0
        %v3297 = vadd.f32 %v3184, %v3296
        %3298 = vmatmul.f32.gmra.mxu0 %v1633
        %v3299 = vpop.f32.mrf.mxu0
        %v3300 = vadd.f32 %v3187, %v3299
        %3301 = vmatmul.f32.gmra.mxu0 %v1641
        %v3302 = vpop.f32.mrf.mxu0
        %v3303 = vadd.f32 %v3190, %v3302
        %3304 = vmatmul.f32.gmra.mxu0 %v1649
        %v3305 = vpop.f32.mrf.mxu0
        %v3306 = vadd.f32 %v3193, %v3305
        %3307 = vmatmul.f32.gmra.mxu0 %v1657
        %v3308 = vpop.f32.mrf.mxu0
        %v3309 = vadd.f32 %v3196, %v3308
        %3310 = vmatmul.f32.gmra.mxu0 %v1665
        %v3311 = vpop.f32.mrf.mxu0
        %v3312 = vadd.f32 %v3199, %v3311
        %3313 = vdwg.mxu0
        %3314 = vmatpush.msra.mxu0 %v1861
        %3315 = vmatpush.msra.mxu0 %v1857
        %3316 = vmatpush.msra.mxu0 %v1853
        %3317 = vmatpush.msra.mxu0 %v1849
        %3318 = vmatpush.msra.mxu0 %v1845
        %3319 = vmatpush.msra.mxu0 %v1841
        %3320 = vmatpush.msra.mxu0 %v1837
        %3321 = vmatpush.msra.mxu0 %v1833
        %3322 = vmatpush.msra.mxu0 %v1829
        %3323 = vmatpush.msra.mxu0 %v1825
        %3324 = vmatpush.msra.mxu0 %v1821
        %3325 = vmatpush.msra.mxu0 %v1817
        %3326 = vmatpush.msra.mxu0 %v1813
        %3327 = vmatpush.msra.mxu0 %v1809
        %3328 = vmatpush.msra.mxu0 %v1805
        %3329 = vmatpush.msra.mxu0 %v1801
        %3330 = vmatmul.f32.gmra.mxu0 %v1418
        %v3331 = vpop.f32.mrf.mxu0
        %v3332 = vadd.f32 %v3219, %v3331
        %3333 = vmatmul.f32.gmra.mxu0 %v1426
        %v3334 = vpop.f32.mrf.mxu0
        %v3335 = vadd.f32 %v3222, %v3334
        %3336 = vmatmul.f32.gmra.mxu0 %v1434
        %v3337 = vpop.f32.mrf.mxu0
        %v3338 = vadd.f32 %v3225, %v3337
        %3339 = vmatmul.f32.gmra.mxu0 %v1442
        %v3340 = vpop.f32.mrf.mxu0
        %v3341 = vadd.f32 %v3228, %v3340
        %3342 = vmatmul.f32.gmra.mxu0 %v1450
        %v3343 = vpop.f32.mrf.mxu0
        %v3344 = vadd.f32 %v3231, %v3343
        %3345 = vmatmul.f32.gmra.mxu0 %v1458
        %v3346 = vpop.f32.mrf.mxu0
        %v3347 = vadd.f32 %v3234, %v3346
        %3348 = vmatmul.f32.gmra.mxu0 %v1466
        %v3349 = vpop.f32.mrf.mxu0
        %v3350 = vadd.f32 %v3237, %v3349
        %3351 = vmatmul.f32.gmra.mxu0 %v1474
        %v3352 = vpop.f32.mrf.mxu0
        %v3353 = vadd.f32 %v3240, %v3352
        %3354 = vmatmul.f32.gmra.mxu0 %v1482
        %v3355 = vpop.f32.mrf.mxu0
        %v3356 = vadd.f32 %v3243, %v3355
        %3357 = vmatmul.f32.gmra.mxu0 %v1490
        %v3358 = vpop.f32.mrf.mxu0
        %v3359 = vadd.f32 %v3246, %v3358
        %3360 = vmatmul.f32.gmra.mxu0 %v1498
        %v3361 = vpop.f32.mrf.mxu0
        %v3362 = vadd.f32 %v3249, %v3361
        %3363 = vmatmul.f32.gmra.mxu0 %v1506
        %v3364 = vpop.f32.mrf.mxu0
        %v3365 = vadd.f32 %v3252, %v3364
        %3366 = vmatmul.f32.gmra.mxu0 %v1514
        %v3367 = vpop.f32.mrf.mxu0
        %v3368 = vadd.f32 %v3255, %v3367
        %3369 = vmatmul.f32.gmra.mxu0 %v1522
        %v3370 = vpop.f32.mrf.mxu0
        %v3371 = vadd.f32 %v3258, %v3370
        %3372 = vmatmul.f32.gmra.mxu0 %v1530
        %v3373 = vpop.f32.mrf.mxu0
        %v3374 = vadd.f32 %v3261, %v3373
        %3375 = vmatmul.f32.gmra.mxu0 %v1538
        %v3376 = vpop.f32.mrf.mxu0
        %v3377 = vadd.f32 %v3264, %v3376
        %3378 = vmatmul.f32.gmra.mxu0 %v1546
        %v3379 = vpop.f32.mrf.mxu0
        %v3380 = vadd.f32 %v3267, %v3379
        %3381 = vmatmul.f32.gmra.mxu0 %v1554
        %v3382 = vpop.f32.mrf.mxu0
        %v3383 = vadd.f32 %v3270, %v3382
        %3384 = vmatmul.f32.gmra.mxu0 %v1562
        %v3385 = vpop.f32.mrf.mxu0
        %v3386 = vadd.f32 %v3273, %v3385
        %3387 = vmatmul.f32.gmra.mxu0 %v1570
        %v3388 = vpop.f32.mrf.mxu0
        %v3389 = vadd.f32 %v3276, %v3388
        %3390 = vmatmul.f32.gmra.mxu0 %v1578
        %v3391 = vpop.f32.mrf.mxu0
        %v3392 = vadd.f32 %v3279, %v3391
        %3393 = vmatmul.f32.gmra.mxu0 %v1586
        %v3394 = vpop.f32.mrf.mxu0
        %v3395 = vadd.f32 %v3282, %v3394
        %3396 = vmatmul.f32.gmra.mxu0 %v1594
        %v3397 = vpop.f32.mrf.mxu0
        %v3398 = vadd.f32 %v3285, %v3397
        %3399 = vmatmul.f32.gmra.mxu0 %v1602
        %v3400 = vpop.f32.mrf.mxu0
        %v3401 = vadd.f32 %v3288, %v3400
        %3402 = vmatmul.f32.gmra.mxu0 %v1610
        %v3403 = vpop.f32.mrf.mxu0
        %v3404 = vadd.f32 %v3291, %v3403
        %3405 = vmatmul.f32.gmra.mxu0 %v1618
        %v3406 = vpop.f32.mrf.mxu0
        %v3407 = vadd.f32 %v3294, %v3406
        %3408 = vmatmul.f32.gmra.mxu0 %v1626
        %v3409 = vpop.f32.mrf.mxu0
        %v3410 = vadd.f32 %v3297, %v3409
        %3411 = vmatmul.f32.gmra.mxu0 %v1634
        %v3412 = vpop.f32.mrf.mxu0
        %v3413 = vadd.f32 %v3300, %v3412
        %3414 = vmatmul.f32.gmra.mxu0 %v1642
        %v3415 = vpop.f32.mrf.mxu0
        %v3416 = vadd.f32 %v3303, %v3415
        %3417 = vmatmul.f32.gmra.mxu0 %v1650
        %v3418 = vpop.f32.mrf.mxu0
        %v3419 = vadd.f32 %v3306, %v3418
        %3420 = vmatmul.f32.gmra.mxu0 %v1658
        %v3421 = vpop.f32.mrf.mxu0
        %v3422 = vadd.f32 %v3309, %v3421
        %3423 = vmatmul.f32.gmra.mxu0 %v1666
        %v3424 = vpop.f32.mrf.mxu0
        %v3425 = vadd.f32 %v3312, %v3424
        %3426 = vdwg.mxu0
        %3427 = vmatpush.msra.mxu0 %v1925
        %3428 = vmatpush.msra.mxu0 %v1921
        %3429 = vmatpush.msra.mxu0 %v1917
        %3430 = vmatpush.msra.mxu0 %v1913
        %3431 = vmatpush.msra.mxu0 %v1909
        %3432 = vmatpush.msra.mxu0 %v1905
        %3433 = vmatpush.msra.mxu0 %v1901
        %3434 = vmatpush.msra.mxu0 %v1897
        %3435 = vmatpush.msra.mxu0 %v1893
        %3436 = vmatpush.msra.mxu0 %v1889
        %3437 = vmatpush.msra.mxu0 %v1885
        %3438 = vmatpush.msra.mxu0 %v1881
        %3439 = vmatpush.msra.mxu0 %v1877
        %3440 = vmatpush.msra.mxu0 %v1873
        %3441 = vmatpush.msra.mxu0 %v1869
        %3442 = vmatpush.msra.mxu0 %v1865
        %3443 = vmatmul.f32.gmra.mxu0 %v1419
        %v3444 = vpop.f32.mrf.mxu0
        %v3445 = vadd.f32 %v3332, %v3444
        %3446 = vmatmul.f32.gmra.mxu0 %v1427
        %v3447 = vpop.f32.mrf.mxu0
        %v3448 = vadd.f32 %v3335, %v3447
        %3449 = vmatmul.f32.gmra.mxu0 %v1435
        %v3450 = vpop.f32.mrf.mxu0
        %v3451 = vadd.f32 %v3338, %v3450
        %3452 = vmatmul.f32.gmra.mxu0 %v1443
        %v3453 = vpop.f32.mrf.mxu0
        %v3454 = vadd.f32 %v3341, %v3453
        %3455 = vmatmul.f32.gmra.mxu0 %v1451
        %v3456 = vpop.f32.mrf.mxu0
        %v3457 = vadd.f32 %v3344, %v3456
        %3458 = vmatmul.f32.gmra.mxu0 %v1459
        %v3459 = vpop.f32.mrf.mxu0
        %v3460 = vadd.f32 %v3347, %v3459
        %3461 = vmatmul.f32.gmra.mxu0 %v1467
        %v3462 = vpop.f32.mrf.mxu0
        %v3463 = vadd.f32 %v3350, %v3462
        %3464 = vmatmul.f32.gmra.mxu0 %v1475
        %v3465 = vpop.f32.mrf.mxu0
        %v3466 = vadd.f32 %v3353, %v3465
        %3467 = vmatmul.f32.gmra.mxu0 %v1483
        %v3468 = vpop.f32.mrf.mxu0
        %v3469 = vadd.f32 %v3356, %v3468
        %3470 = vmatmul.f32.gmra.mxu0 %v1491
        %v3471 = vpop.f32.mrf.mxu0
        %v3472 = vadd.f32 %v3359, %v3471
        %3473 = vmatmul.f32.gmra.mxu0 %v1499
        %v3474 = vpop.f32.mrf.mxu0
        %v3475 = vadd.f32 %v3362, %v3474
        %3476 = vmatmul.f32.gmra.mxu0 %v1507
        %v3477 = vpop.f32.mrf.mxu0
        %v3478 = vadd.f32 %v3365, %v3477
        %3479 = vmatmul.f32.gmra.mxu0 %v1515
        %v3480 = vpop.f32.mrf.mxu0
        %v3481 = vadd.f32 %v3368, %v3480
        %3482 = vmatmul.f32.gmra.mxu0 %v1523
        %v3483 = vpop.f32.mrf.mxu0
        %v3484 = vadd.f32 %v3371, %v3483
        %3485 = vmatmul.f32.gmra.mxu0 %v1531
        %v3486 = vpop.f32.mrf.mxu0
        %v3487 = vadd.f32 %v3374, %v3486
        %3488 = vmatmul.f32.gmra.mxu0 %v1539
        %v3489 = vpop.f32.mrf.mxu0
        %v3490 = vadd.f32 %v3377, %v3489
        %3491 = vmatmul.f32.gmra.mxu0 %v1547
        %v3492 = vpop.f32.mrf.mxu0
        %v3493 = vadd.f32 %v3380, %v3492
        %3494 = vmatmul.f32.gmra.mxu0 %v1555
        %v3495 = vpop.f32.mrf.mxu0
        %v3496 = vadd.f32 %v3383, %v3495
        %3497 = vmatmul.f32.gmra.mxu0 %v1563
        %v3498 = vpop.f32.mrf.mxu0
        %v3499 = vadd.f32 %v3386, %v3498
        %3500 = vmatmul.f32.gmra.mxu0 %v1571
        %v3501 = vpop.f32.mrf.mxu0
        %v3502 = vadd.f32 %v3389, %v3501
        %3503 = vmatmul.f32.gmra.mxu0 %v1579
        %v3504 = vpop.f32.mrf.mxu0
        %v3505 = vadd.f32 %v3392, %v3504
        %3506 = vmatmul.f32.gmra.mxu0 %v1587
        %v3507 = vpop.f32.mrf.mxu0
        %v3508 = vadd.f32 %v3395, %v3507
        %3509 = vmatmul.f32.gmra.mxu0 %v1595
        %v3510 = vpop.f32.mrf.mxu0
        %v3511 = vadd.f32 %v3398, %v3510
        %3512 = vmatmul.f32.gmra.mxu0 %v1603
        %v3513 = vpop.f32.mrf.mxu0
        %v3514 = vadd.f32 %v3401, %v3513
        %3515 = vmatmul.f32.gmra.mxu0 %v1611
        %v3516 = vpop.f32.mrf.mxu0
        %v3517 = vadd.f32 %v3404, %v3516
        %3518 = vmatmul.f32.gmra.mxu0 %v1619
        %v3519 = vpop.f32.mrf.mxu0
        %v3520 = vadd.f32 %v3407, %v3519
        %3521 = vmatmul.f32.gmra.mxu0 %v1627
        %v3522 = vpop.f32.mrf.mxu0
        %v3523 = vadd.f32 %v3410, %v3522
        %3524 = vmatmul.f32.gmra.mxu0 %v1635
        %v3525 = vpop.f32.mrf.mxu0
        %v3526 = vadd.f32 %v3413, %v3525
        %3527 = vmatmul.f32.gmra.mxu0 %v1643
        %v3528 = vpop.f32.mrf.mxu0
        %v3529 = vadd.f32 %v3416, %v3528
        %3530 = vmatmul.f32.gmra.mxu0 %v1651
        %v3531 = vpop.f32.mrf.mxu0
        %v3532 = vadd.f32 %v3419, %v3531
        %3533 = vmatmul.f32.gmra.mxu0 %v1659
        %v3534 = vpop.f32.mrf.mxu0
        %v3535 = vadd.f32 %v3422, %v3534
        %3536 = vmatmul.f32.gmra.mxu0 %v1667
        %v3537 = vpop.f32.mrf.mxu0
        %v3538 = vadd.f32 %v3425, %v3537
        %3539 = vdwg.mxu0
        %3540 = vmatpush.msra.mxu0 %v1989
        %3541 = vmatpush.msra.mxu0 %v1985
        %3542 = vmatpush.msra.mxu0 %v1981
        %3543 = vmatpush.msra.mxu0 %v1977
        %3544 = vmatpush.msra.mxu0 %v1973
        %3545 = vmatpush.msra.mxu0 %v1969
        %3546 = vmatpush.msra.mxu0 %v1965
        %3547 = vmatpush.msra.mxu0 %v1961
        %3548 = vmatpush.msra.mxu0 %v1957
        %3549 = vmatpush.msra.mxu0 %v1953
        %3550 = vmatpush.msra.mxu0 %v1949
        %3551 = vmatpush.msra.mxu0 %v1945
        %3552 = vmatpush.msra.mxu0 %v1941
        %3553 = vmatpush.msra.mxu0 %v1937
        %3554 = vmatpush.msra.mxu0 %v1933
        %3555 = vmatpush.msra.mxu0 %v1929
        %3556 = vmatmul.f32.gmra.mxu0 %v1420
        %v3557 = vpop.f32.mrf.mxu0
        %v3558 = vadd.f32 %v3445, %v3557
        %3559 = vmatmul.f32.gmra.mxu0 %v1428
        %v3560 = vpop.f32.mrf.mxu0
        %v3561 = vadd.f32 %v3448, %v3560
        %3562 = vmatmul.f32.gmra.mxu0 %v1436
        %v3563 = vpop.f32.mrf.mxu0
        %v3564 = vadd.f32 %v3451, %v3563
        %3565 = vmatmul.f32.gmra.mxu0 %v1444
        %v3566 = vpop.f32.mrf.mxu0
        %v3567 = vadd.f32 %v3454, %v3566
        %3568 = vmatmul.f32.gmra.mxu0 %v1452
        %v3569 = vpop.f32.mrf.mxu0
        %v3570 = vadd.f32 %v3457, %v3569
        %3571 = vmatmul.f32.gmra.mxu0 %v1460
        %v3572 = vpop.f32.mrf.mxu0
        %v3573 = vadd.f32 %v3460, %v3572
        %3574 = vmatmul.f32.gmra.mxu0 %v1468
        %v3575 = vpop.f32.mrf.mxu0
        %v3576 = vadd.f32 %v3463, %v3575
        %3577 = vmatmul.f32.gmra.mxu0 %v1476
        %v3578 = vpop.f32.mrf.mxu0
        %v3579 = vadd.f32 %v3466, %v3578
        %3580 = vmatmul.f32.gmra.mxu0 %v1484
        %v3581 = vpop.f32.mrf.mxu0
        %v3582 = vadd.f32 %v3469, %v3581
        %3583 = vmatmul.f32.gmra.mxu0 %v1492
        %v3584 = vpop.f32.mrf.mxu0
        %v3585 = vadd.f32 %v3472, %v3584
        %3586 = vmatmul.f32.gmra.mxu0 %v1500
        %v3587 = vpop.f32.mrf.mxu0
        %v3588 = vadd.f32 %v3475, %v3587
        %3589 = vmatmul.f32.gmra.mxu0 %v1508
        %v3590 = vpop.f32.mrf.mxu0
        %v3591 = vadd.f32 %v3478, %v3590
        %3592 = vmatmul.f32.gmra.mxu0 %v1516
        %v3593 = vpop.f32.mrf.mxu0
        %v3594 = vadd.f32 %v3481, %v3593
        %3595 = vmatmul.f32.gmra.mxu0 %v1524
        %v3596 = vpop.f32.mrf.mxu0
        %v3597 = vadd.f32 %v3484, %v3596
        %3598 = vmatmul.f32.gmra.mxu0 %v1532
        %v3599 = vpop.f32.mrf.mxu0
        %v3600 = vadd.f32 %v3487, %v3599
        %3601 = vmatmul.f32.gmra.mxu0 %v1540
        %v3602 = vpop.f32.mrf.mxu0
        %v3603 = vadd.f32 %v3490, %v3602
        %3604 = vmatmul.f32.gmra.mxu0 %v1548
        %v3605 = vpop.f32.mrf.mxu0
        %v3606 = vadd.f32 %v3493, %v3605
        %3607 = vmatmul.f32.gmra.mxu0 %v1556
        %v3608 = vpop.f32.mrf.mxu0
        %v3609 = vadd.f32 %v3496, %v3608
        %3610 = vmatmul.f32.gmra.mxu0 %v1564
        %v3611 = vpop.f32.mrf.mxu0
        %v3612 = vadd.f32 %v3499, %v3611
        %3613 = vmatmul.f32.gmra.mxu0 %v1572
        %v3614 = vpop.f32.mrf.mxu0
        %v3615 = vadd.f32 %v3502, %v3614
        %3616 = vmatmul.f32.gmra.mxu0 %v1580
        %v3617 = vpop.f32.mrf.mxu0
        %v3618 = vadd.f32 %v3505, %v3617
        %3619 = vmatmul.f32.gmra.mxu0 %v1588
        %v3620 = vpop.f32.mrf.mxu0
        %v3621 = vadd.f32 %v3508, %v3620
        %3622 = vmatmul.f32.gmra.mxu0 %v1596
        %v3623 = vpop.f32.mrf.mxu0
        %v3624 = vadd.f32 %v3511, %v3623
        %3625 = vmatmul.f32.gmra.mxu0 %v1604
        %v3626 = vpop.f32.mrf.mxu0
        %v3627 = vadd.f32 %v3514, %v3626
        %3628 = vmatmul.f32.gmra.mxu0 %v1612
        %v3629 = vpop.f32.mrf.mxu0
        %v3630 = vadd.f32 %v3517, %v3629
        %3631 = vmatmul.f32.gmra.mxu0 %v1620
        %v3632 = vpop.f32.mrf.mxu0
        %v3633 = vadd.f32 %v3520, %v3632
        %3634 = vmatmul.f32.gmra.mxu0 %v1628
        %v3635 = vpop.f32.mrf.mxu0
        %v3636 = vadd.f32 %v3523, %v3635
        %3637 = vmatmul.f32.gmra.mxu0 %v1636
        %v3638 = vpop.f32.mrf.mxu0
        %v3639 = vadd.f32 %v3526, %v3638
        %3640 = vmatmul.f32.gmra.mxu0 %v1644
        %v3641 = vpop.f32.mrf.mxu0
        %v3642 = vadd.f32 %v3529, %v3641
        %3643 = vmatmul.f32.gmra.mxu0 %v1652
        %v3644 = vpop.f32.mrf.mxu0
        %v3645 = vadd.f32 %v3532, %v3644
        %3646 = vmatmul.f32.gmra.mxu0 %v1660
        %v3647 = vpop.f32.mrf.mxu0
        %v3648 = vadd.f32 %v3535, %v3647
        %3649 = vmatmul.f32.gmra.mxu0 %v1668
        %v3650 = vpop.f32.mrf.mxu0
        %v3651 = vadd.f32 %v3538, %v3650
        %3652 = vdwg.mxu0
        %3653 = vmatpush.msra.mxu0 %v2053
        %3654 = vmatpush.msra.mxu0 %v2049
        %3655 = vmatpush.msra.mxu0 %v2045
        %3656 = vmatpush.msra.mxu0 %v2041
        %3657 = vmatpush.msra.mxu0 %v2037
        %3658 = vmatpush.msra.mxu0 %v2033
        %3659 = vmatpush.msra.mxu0 %v2029
        %3660 = vmatpush.msra.mxu0 %v2025
        %3661 = vmatpush.msra.mxu0 %v2021
        %3662 = vmatpush.msra.mxu0 %v2017
        %3663 = vmatpush.msra.mxu0 %v2013
        %3664 = vmatpush.msra.mxu0 %v2009
        %3665 = vmatpush.msra.mxu0 %v2005
        %3666 = vmatpush.msra.mxu0 %v2001
        %3667 = vmatpush.msra.mxu0 %v1997
        %3668 = vmatpush.msra.mxu0 %v1993
        %3669 = vmatmul.f32.gmra.mxu0 %v1421
        %v3670 = vpop.f32.mrf.mxu0
        %v3671 = vadd.f32 %v3558, %v3670
        %3672 = vmatmul.f32.gmra.mxu0 %v1429
        %v3673 = vpop.f32.mrf.mxu0
        %v3674 = vadd.f32 %v3561, %v3673
        %3675 = vmatmul.f32.gmra.mxu0 %v1437
        %v3676 = vpop.f32.mrf.mxu0
        %v3677 = vadd.f32 %v3564, %v3676
        %3678 = vmatmul.f32.gmra.mxu0 %v1445
        %v3679 = vpop.f32.mrf.mxu0
        %v3680 = vadd.f32 %v3567, %v3679
        %3681 = vmatmul.f32.gmra.mxu0 %v1453
        %v3682 = vpop.f32.mrf.mxu0
        %v3683 = vadd.f32 %v3570, %v3682
        %3684 = vmatmul.f32.gmra.mxu0 %v1461
        %v3685 = vpop.f32.mrf.mxu0
        %v3686 = vadd.f32 %v3573, %v3685
        %3687 = vmatmul.f32.gmra.mxu0 %v1469
        %v3688 = vpop.f32.mrf.mxu0
        %v3689 = vadd.f32 %v3576, %v3688
        %3690 = vmatmul.f32.gmra.mxu0 %v1477
        %v3691 = vpop.f32.mrf.mxu0
        %v3692 = vadd.f32 %v3579, %v3691
        %3693 = vmatmul.f32.gmra.mxu0 %v1485
        %v3694 = vpop.f32.mrf.mxu0
        %v3695 = vadd.f32 %v3582, %v3694
        %3696 = vmatmul.f32.gmra.mxu0 %v1493
        %v3697 = vpop.f32.mrf.mxu0
        %v3698 = vadd.f32 %v3585, %v3697
        %3699 = vmatmul.f32.gmra.mxu0 %v1501
        %v3700 = vpop.f32.mrf.mxu0
        %v3701 = vadd.f32 %v3588, %v3700
        %3702 = vmatmul.f32.gmra.mxu0 %v1509
        %v3703 = vpop.f32.mrf.mxu0
        %v3704 = vadd.f32 %v3591, %v3703
        %3705 = vmatmul.f32.gmra.mxu0 %v1517
        %v3706 = vpop.f32.mrf.mxu0
        %v3707 = vadd.f32 %v3594, %v3706
        %3708 = vmatmul.f32.gmra.mxu0 %v1525
        %v3709 = vpop.f32.mrf.mxu0
        %v3710 = vadd.f32 %v3597, %v3709
        %3711 = vmatmul.f32.gmra.mxu0 %v1533
        %v3712 = vpop.f32.mrf.mxu0
        %v3713 = vadd.f32 %v3600, %v3712
        %3714 = vmatmul.f32.gmra.mxu0 %v1541
        %v3715 = vpop.f32.mrf.mxu0
        %v3716 = vadd.f32 %v3603, %v3715
        %3717 = vmatmul.f32.gmra.mxu0 %v1549
        %v3718 = vpop.f32.mrf.mxu0
        %v3719 = vadd.f32 %v3606, %v3718
        %3720 = vmatmul.f32.gmra.mxu0 %v1557
        %v3721 = vpop.f32.mrf.mxu0
        %v3722 = vadd.f32 %v3609, %v3721
        %3723 = vmatmul.f32.gmra.mxu0 %v1565
        %v3724 = vpop.f32.mrf.mxu0
        %v3725 = vadd.f32 %v3612, %v3724
        %3726 = vmatmul.f32.gmra.mxu0 %v1573
        %v3727 = vpop.f32.mrf.mxu0
        %v3728 = vadd.f32 %v3615, %v3727
        %3729 = vmatmul.f32.gmra.mxu0 %v1581
        %v3730 = vpop.f32.mrf.mxu0
        %v3731 = vadd.f32 %v3618, %v3730
        %3732 = vmatmul.f32.gmra.mxu0 %v1589
        %v3733 = vpop.f32.mrf.mxu0
        %v3734 = vadd.f32 %v3621, %v3733
        %3735 = vmatmul.f32.gmra.mxu0 %v1597
        %v3736 = vpop.f32.mrf.mxu0
        %v3737 = vadd.f32 %v3624, %v3736
        %3738 = vmatmul.f32.gmra.mxu0 %v1605
        %v3739 = vpop.f32.mrf.mxu0
        %v3740 = vadd.f32 %v3627, %v3739
        %3741 = vmatmul.f32.gmra.mxu0 %v1613
        %v3742 = vpop.f32.mrf.mxu0
        %v3743 = vadd.f32 %v3630, %v3742
        %3744 = vmatmul.f32.gmra.mxu0 %v1621
        %v3745 = vpop.f32.mrf.mxu0
        %v3746 = vadd.f32 %v3633, %v3745
        %3747 = vmatmul.f32.gmra.mxu0 %v1629
        %v3748 = vpop.f32.mrf.mxu0
        %v3749 = vadd.f32 %v3636, %v3748
        %3750 = vmatmul.f32.gmra.mxu0 %v1637
        %v3751 = vpop.f32.mrf.mxu0
        %v3752 = vadd.f32 %v3639, %v3751
        %3753 = vmatmul.f32.gmra.mxu0 %v1645
        %v3754 = vpop.f32.mrf.mxu0
        %v3755 = vadd.f32 %v3642, %v3754
        %3756 = vmatmul.f32.gmra.mxu0 %v1653
        %v3757 = vpop.f32.mrf.mxu0
        %v3758 = vadd.f32 %v3645, %v3757
        %3759 = vmatmul.f32.gmra.mxu0 %v1661
        %v3760 = vpop.f32.mrf.mxu0
        %v3761 = vadd.f32 %v3648, %v3760
        %3762 = vmatmul.f32.gmra.mxu0 %v1669
        %v3763 = vpop.f32.mrf.mxu0
        %v3764 = vadd.f32 %v3651, %v3763
        %3765 = vdwg.mxu0
        %3766 = vmatpush.msra.mxu0 %v2117
        %3767 = vmatpush.msra.mxu0 %v2113
        %3768 = vmatpush.msra.mxu0 %v2109
        %3769 = vmatpush.msra.mxu0 %v2105
        %3770 = vmatpush.msra.mxu0 %v2101
        %3771 = vmatpush.msra.mxu0 %v2097
        %3772 = vmatpush.msra.mxu0 %v2093
        %3773 = vmatpush.msra.mxu0 %v2089
        %3774 = vmatpush.msra.mxu0 %v2085
        %3775 = vmatpush.msra.mxu0 %v2081
        %3776 = vmatpush.msra.mxu0 %v2077
        %3777 = vmatpush.msra.mxu0 %v2073
        %3778 = vmatpush.msra.mxu0 %v2069
        %3779 = vmatpush.msra.mxu0 %v2065
        %3780 = vmatpush.msra.mxu0 %v2061
        %3781 = vmatpush.msra.mxu0 %v2057
        %3782 = vmatmul.f32.gmra.mxu0 %v1422
        %v3783 = vpop.f32.mrf.mxu0
        %v3784 = vadd.f32 %v3671, %v3783
        %3785 = vmatmul.f32.gmra.mxu0 %v1430
        %v3786 = vpop.f32.mrf.mxu0
        %v3787 = vadd.f32 %v3674, %v3786
        %3788 = vmatmul.f32.gmra.mxu0 %v1438
        %v3789 = vpop.f32.mrf.mxu0
        %v3790 = vadd.f32 %v3677, %v3789
        %3791 = vmatmul.f32.gmra.mxu0 %v1446
        %v3792 = vpop.f32.mrf.mxu0
        %v3793 = vadd.f32 %v3680, %v3792
        %3794 = vmatmul.f32.gmra.mxu0 %v1454
        %v3795 = vpop.f32.mrf.mxu0
        %v3796 = vadd.f32 %v3683, %v3795
        %3797 = vmatmul.f32.gmra.mxu0 %v1462
        %v3798 = vpop.f32.mrf.mxu0
        %v3799 = vadd.f32 %v3686, %v3798
        %3800 = vmatmul.f32.gmra.mxu0 %v1470
        %v3801 = vpop.f32.mrf.mxu0
        %v3802 = vadd.f32 %v3689, %v3801
        %3803 = vmatmul.f32.gmra.mxu0 %v1478
        %v3804 = vpop.f32.mrf.mxu0
        %v3805 = vadd.f32 %v3692, %v3804
        %3806 = vmatmul.f32.gmra.mxu0 %v1486
        %v3807 = vpop.f32.mrf.mxu0
        %v3808 = vadd.f32 %v3695, %v3807
        %3809 = vmatmul.f32.gmra.mxu0 %v1494
        %v3810 = vpop.f32.mrf.mxu0
        %v3811 = vadd.f32 %v3698, %v3810
        %3812 = vmatmul.f32.gmra.mxu0 %v1502
        %v3813 = vpop.f32.mrf.mxu0
        %v3814 = vadd.f32 %v3701, %v3813
        %3815 = vmatmul.f32.gmra.mxu0 %v1510
        %v3816 = vpop.f32.mrf.mxu0
        %v3817 = vadd.f32 %v3704, %v3816
        %3818 = vmatmul.f32.gmra.mxu0 %v1518
        %v3819 = vpop.f32.mrf.mxu0
        %v3820 = vadd.f32 %v3707, %v3819
        %3821 = vmatmul.f32.gmra.mxu0 %v1526
        %v3822 = vpop.f32.mrf.mxu0
        %v3823 = vadd.f32 %v3710, %v3822
        %3824 = vmatmul.f32.gmra.mxu0 %v1534
        %v3825 = vpop.f32.mrf.mxu0
        %v3826 = vadd.f32 %v3713, %v3825
        %3827 = vmatmul.f32.gmra.mxu0 %v1542
        %v3828 = vpop.f32.mrf.mxu0
        %v3829 = vadd.f32 %v3716, %v3828
        %3830 = vmatmul.f32.gmra.mxu0 %v1550
        %v3831 = vpop.f32.mrf.mxu0
        %v3832 = vadd.f32 %v3719, %v3831
        %3833 = vmatmul.f32.gmra.mxu0 %v1558
        %v3834 = vpop.f32.mrf.mxu0
        %v3835 = vadd.f32 %v3722, %v3834
        %3836 = vmatmul.f32.gmra.mxu0 %v1566
        %v3837 = vpop.f32.mrf.mxu0
        %v3838 = vadd.f32 %v3725, %v3837
        %3839 = vmatmul.f32.gmra.mxu0 %v1574
        %v3840 = vpop.f32.mrf.mxu0
        %v3841 = vadd.f32 %v3728, %v3840
        %3842 = vmatmul.f32.gmra.mxu0 %v1582
        %v3843 = vpop.f32.mrf.mxu0
        %v3844 = vadd.f32 %v3731, %v3843
        %3845 = vmatmul.f32.gmra.mxu0 %v1590
        %v3846 = vpop.f32.mrf.mxu0
        %v3847 = vadd.f32 %v3734, %v3846
        %3848 = vmatmul.f32.gmra.mxu0 %v1598
        %v3849 = vpop.f32.mrf.mxu0
        %v3850 = vadd.f32 %v3737, %v3849
        %3851 = vmatmul.f32.gmra.mxu0 %v1606
        %v3852 = vpop.f32.mrf.mxu0
        %v3853 = vadd.f32 %v3740, %v3852
        %3854 = vmatmul.f32.gmra.mxu0 %v1614
        %v3855 = vpop.f32.mrf.mxu0
        %v3856 = vadd.f32 %v3743, %v3855
        %3857 = vmatmul.f32.gmra.mxu0 %v1622
        %v3858 = vpop.f32.mrf.mxu0
        %v3859 = vadd.f32 %v3746, %v3858
        %3860 = vmatmul.f32.gmra.mxu0 %v1630
        %v3861 = vpop.f32.mrf.mxu0
        %v3862 = vadd.f32 %v3749, %v3861
        %3863 = vmatmul.f32.gmra.mxu0 %v1638
        %v3864 = vpop.f32.mrf.mxu0
        %v3865 = vadd.f32 %v3752, %v3864
        %3866 = vmatmul.f32.gmra.mxu0 %v1646
        %v3867 = vpop.f32.mrf.mxu0
        %v3868 = vadd.f32 %v3755, %v3867
        %3869 = vmatmul.f32.gmra.mxu0 %v1654
        %v3870 = vpop.f32.mrf.mxu0
        %v3871 = vadd.f32 %v3758, %v3870
        %3872 = vmatmul.f32.gmra.mxu0 %v1662
        %v3873 = vpop.f32.mrf.mxu0
        %v3874 = vadd.f32 %v3761, %v3873
        %3875 = vmatmul.f32.gmra.mxu0 %v1670
        %v3876 = vpop.f32.mrf.mxu0
        %v3877 = vadd.f32 %v3764, %v3876
        %3878 = vdwg.mxu0
        %3879 = vmatpush.msra.mxu0 %v2181
        %3880 = vmatpush.msra.mxu0 %v2177
        %3881 = vmatpush.msra.mxu0 %v2173
        %3882 = vmatpush.msra.mxu0 %v2169
        %3883 = vmatpush.msra.mxu0 %v2165
        %3884 = vmatpush.msra.mxu0 %v2161
        %3885 = vmatpush.msra.mxu0 %v2157
        %3886 = vmatpush.msra.mxu0 %v2153
        %3887 = vmatpush.msra.mxu0 %v2149
        %3888 = vmatpush.msra.mxu0 %v2145
        %3889 = vmatpush.msra.mxu0 %v2141
        %3890 = vmatpush.msra.mxu0 %v2137
        %3891 = vmatpush.msra.mxu0 %v2133
        %3892 = vmatpush.msra.mxu0 %v2129
        %3893 = vmatpush.msra.mxu0 %v2125
        %3894 = vmatpush.msra.mxu0 %v2121
        %3895 = vmatmul.f32.gmra.mxu0 %v1423
        %v3896 = vpop.f32.mrf.mxu0
        %v3897 = vadd.f32 %v3784, %v3896
        %3898 = vmatmul.f32.gmra.mxu0 %v1431
        %v3899 = vpop.f32.mrf.mxu0
        %v3900 = vadd.f32 %v3787, %v3899
        %3901 = vmatmul.f32.gmra.mxu0 %v1439
        %v3902 = vpop.f32.mrf.mxu0
        %v3903 = vadd.f32 %v3790, %v3902
        %3904 = vmatmul.f32.gmra.mxu0 %v1447
        %v3905 = vpop.f32.mrf.mxu0
        %v3906 = vadd.f32 %v3793, %v3905
        %3907 = vmatmul.f32.gmra.mxu0 %v1455
        %v3908 = vpop.f32.mrf.mxu0
        %v3909 = vadd.f32 %v3796, %v3908
        %3910 = vmatmul.f32.gmra.mxu0 %v1463
        %v3911 = vpop.f32.mrf.mxu0
        %v3912 = vadd.f32 %v3799, %v3911
        %3913 = vmatmul.f32.gmra.mxu0 %v1471
        %v3914 = vpop.f32.mrf.mxu0
        %v3915 = vadd.f32 %v3802, %v3914
        %3916 = vmatmul.f32.gmra.mxu0 %v1479
        %v3917 = vpop.f32.mrf.mxu0
        %v3918 = vadd.f32 %v3805, %v3917
        %3919 = vmatmul.f32.gmra.mxu0 %v1487
        %v3920 = vpop.f32.mrf.mxu0
        %v3921 = vadd.f32 %v3808, %v3920
        %3922 = vmatmul.f32.gmra.mxu0 %v1495
        %v3923 = vpop.f32.mrf.mxu0
        %v3924 = vadd.f32 %v3811, %v3923
        %3925 = vmatmul.f32.gmra.mxu0 %v1503
        %v3926 = vpop.f32.mrf.mxu0
        %v3927 = vadd.f32 %v3814, %v3926
        %3928 = vmatmul.f32.gmra.mxu0 %v1511
        %v3929 = vpop.f32.mrf.mxu0
        %v3930 = vadd.f32 %v3817, %v3929
        %3931 = vmatmul.f32.gmra.mxu0 %v1519
        %v3932 = vpop.f32.mrf.mxu0
        %v3933 = vadd.f32 %v3820, %v3932
        %3934 = vmatmul.f32.gmra.mxu0 %v1527
        %v3935 = vpop.f32.mrf.mxu0
        %v3936 = vadd.f32 %v3823, %v3935
        %3937 = vmatmul.f32.gmra.mxu0 %v1535
        %v3938 = vpop.f32.mrf.mxu0
        %v3939 = vadd.f32 %v3826, %v3938
        %3940 = vmatmul.f32.gmra.mxu0 %v1543
        %v3941 = vpop.f32.mrf.mxu0
        %v3942 = vadd.f32 %v3829, %v3941
        %3943 = vmatmul.f32.gmra.mxu0 %v1551
        %v3944 = vpop.f32.mrf.mxu0
        %v3945 = vadd.f32 %v3832, %v3944
        %3946 = vmatmul.f32.gmra.mxu0 %v1559
        %v3947 = vpop.f32.mrf.mxu0
        %v3948 = vadd.f32 %v3835, %v3947
        %3949 = vmatmul.f32.gmra.mxu0 %v1567
        %v3950 = vpop.f32.mrf.mxu0
        %v3951 = vadd.f32 %v3838, %v3950
        %3952 = vmatmul.f32.gmra.mxu0 %v1575
        %v3953 = vpop.f32.mrf.mxu0
        %v3954 = vadd.f32 %v3841, %v3953
        %3955 = vmatmul.f32.gmra.mxu0 %v1583
        %v3956 = vpop.f32.mrf.mxu0
        %v3957 = vadd.f32 %v3844, %v3956
        %3958 = vmatmul.f32.gmra.mxu0 %v1591
        %v3959 = vpop.f32.mrf.mxu0
        %v3960 = vadd.f32 %v3847, %v3959
        %3961 = vmatmul.f32.gmra.mxu0 %v1599
        %v3962 = vpop.f32.mrf.mxu0
        %v3963 = vadd.f32 %v3850, %v3962
        %3964 = vmatmul.f32.gmra.mxu0 %v1607
        %v3965 = vpop.f32.mrf.mxu0
        %v3966 = vadd.f32 %v3853, %v3965
        %3967 = vmatmul.f32.gmra.mxu0 %v1615
        %v3968 = vpop.f32.mrf.mxu0
        %v3969 = vadd.f32 %v3856, %v3968
        %3970 = vmatmul.f32.gmra.mxu0 %v1623
        %v3971 = vpop.f32.mrf.mxu0
        %v3972 = vadd.f32 %v3859, %v3971
        %3973 = vmatmul.f32.gmra.mxu0 %v1631
        %v3974 = vpop.f32.mrf.mxu0
        %v3975 = vadd.f32 %v3862, %v3974
        %3976 = vmatmul.f32.gmra.mxu0 %v1639
        %v3977 = vpop.f32.mrf.mxu0
        %v3978 = vadd.f32 %v3865, %v3977
        %3979 = vmatmul.f32.gmra.mxu0 %v1647
        %v3980 = vpop.f32.mrf.mxu0
        %v3981 = vadd.f32 %v3868, %v3980
        %3982 = vmatmul.f32.gmra.mxu0 %v1655
        %v3983 = vpop.f32.mrf.mxu0
        %v3984 = vadd.f32 %v3871, %v3983
        %3985 = vmatmul.f32.gmra.mxu0 %v1663
        %v3986 = vpop.f32.mrf.mxu0
        %v3987 = vadd.f32 %v3874, %v3986
        %3988 = vmatmul.f32.gmra.mxu0 %v1671
        %v3989 = vpop.f32.mrf.mxu0
        %v3990 = vadd.f32 %v3877, %v3989
        %3991 = vdwg.mxu0
        %3992 = vmatpush.msra.mxu0 %v1734
        %3993 = vmatpush.msra.mxu0 %v1730
        %3994 = vmatpush.msra.mxu0 %v1726
        %3995 = vmatpush.msra.mxu0 %v1722
        %3996 = vmatpush.msra.mxu0 %v1718
        %3997 = vmatpush.msra.mxu0 %v1714
        %3998 = vmatpush.msra.mxu0 %v1710
        %3999 = vmatpush.msra.mxu0 %v1706
        %4000 = vmatpush.msra.mxu0 %v1702
        %4001 = vmatpush.msra.mxu0 %v1698
        %4002 = vmatpush.msra.mxu0 %v1694
        %4003 = vmatpush.msra.mxu0 %v1690
        %4004 = vmatpush.msra.mxu0 %v1686
        %4005 = vmatpush.msra.mxu0 %v1682
        %4006 = vmatpush.msra.mxu0 %v1678
        %4007 = vmatpush.msra.mxu0 %v1674
        %4008 = vmatmul.f32.gmra.mxu0 %v1416
        %v4009 = vpop.f32.mrf.mxu0
        %v4010 = vadd.f32 0.0, %v4009
        %4011 = vmatmul.f32.gmra.mxu0 %v1424
        %v4012 = vpop.f32.mrf.mxu0
        %v4013 = vadd.f32 0.0, %v4012
        %4014 = vmatmul.f32.gmra.mxu0 %v1432
        %v4015 = vpop.f32.mrf.mxu0
        %v4016 = vadd.f32 0.0, %v4015
        %4017 = vmatmul.f32.gmra.mxu0 %v1440
        %v4018 = vpop.f32.mrf.mxu0
        %v4019 = vadd.f32 0.0, %v4018
        %4020 = vmatmul.f32.gmra.mxu0 %v1448
        %v4021 = vpop.f32.mrf.mxu0
        %v4022 = vadd.f32 0.0, %v4021
        %4023 = vmatmul.f32.gmra.mxu0 %v1456
        %v4024 = vpop.f32.mrf.mxu0
        %v4025 = vadd.f32 0.0, %v4024
        %4026 = vmatmul.f32.gmra.mxu0 %v1464
        %v4027 = vpop.f32.mrf.mxu0
        %v4028 = vadd.f32 0.0, %v4027
        %4029 = vmatmul.f32.gmra.mxu0 %v1472
        %v4030 = vpop.f32.mrf.mxu0
        %v4031 = vadd.f32 0.0, %v4030
        %4032 = vmatmul.f32.gmra.mxu0 %v1480
        %v4033 = vpop.f32.mrf.mxu0
        %v4034 = vadd.f32 0.0, %v4033
        %4035 = vmatmul.f32.gmra.mxu0 %v1488
        %v4036 = vpop.f32.mrf.mxu0
        %v4037 = vadd.f32 0.0, %v4036
        %4038 = vmatmul.f32.gmra.mxu0 %v1496
        %v4039 = vpop.f32.mrf.mxu0
        %v4040 = vadd.f32 0.0, %v4039
        %4041 = vmatmul.f32.gmra.mxu0 %v1504
        %v4042 = vpop.f32.mrf.mxu0
        %v4043 = vadd.f32 0.0, %v4042
        %4044 = vmatmul.f32.gmra.mxu0 %v1512
        %v4045 = vpop.f32.mrf.mxu0
        %v4046 = vadd.f32 0.0, %v4045
        %4047 = vmatmul.f32.gmra.mxu0 %v1520
        %v4048 = vpop.f32.mrf.mxu0
        %v4049 = vadd.f32 0.0, %v4048
        %4050 = vmatmul.f32.gmra.mxu0 %v1528
        %v4051 = vpop.f32.mrf.mxu0
        %v4052 = vadd.f32 0.0, %v4051
        %4053 = vmatmul.f32.gmra.mxu0 %v1536
        %v4054 = vpop.f32.mrf.mxu0
        %v4055 = vadd.f32 0.0, %v4054
        %4056 = vmatmul.f32.gmra.mxu0 %v1544
        %v4057 = vpop.f32.mrf.mxu0
        %v4058 = vadd.f32 0.0, %v4057
        %4059 = vmatmul.f32.gmra.mxu0 %v1552
        %v4060 = vpop.f32.mrf.mxu0
        %v4061 = vadd.f32 0.0, %v4060
        %4062 = vmatmul.f32.gmra.mxu0 %v1560
        %v4063 = vpop.f32.mrf.mxu0
        %v4064 = vadd.f32 0.0, %v4063
        %4065 = vmatmul.f32.gmra.mxu0 %v1568
        %v4066 = vpop.f32.mrf.mxu0
        %v4067 = vadd.f32 0.0, %v4066
        %4068 = vmatmul.f32.gmra.mxu0 %v1576
        %v4069 = vpop.f32.mrf.mxu0
        %v4070 = vadd.f32 0.0, %v4069
        %4071 = vmatmul.f32.gmra.mxu0 %v1584
        %v4072 = vpop.f32.mrf.mxu0
        %v4073 = vadd.f32 0.0, %v4072
        %4074 = vmatmul.f32.gmra.mxu0 %v1592
        %v4075 = vpop.f32.mrf.mxu0
        %v4076 = vadd.f32 0.0, %v4075
        %4077 = vmatmul.f32.gmra.mxu0 %v1600
        %v4078 = vpop.f32.mrf.mxu0
        %v4079 = vadd.f32 0.0, %v4078
        %4080 = vmatmul.f32.gmra.mxu0 %v1608
        %v4081 = vpop.f32.mrf.mxu0
        %v4082 = vadd.f32 0.0, %v4081
        %4083 = vmatmul.f32.gmra.mxu0 %v1616
        %v4084 = vpop.f32.mrf.mxu0
        %v4085 = vadd.f32 0.0, %v4084
        %4086 = vmatmul.f32.gmra.mxu0 %v1624
        %v4087 = vpop.f32.mrf.mxu0
        %v4088 = vadd.f32 0.0, %v4087
        %4089 = vmatmul.f32.gmra.mxu0 %v1632
        %v4090 = vpop.f32.mrf.mxu0
        %v4091 = vadd.f32 0.0, %v4090
        %4092 = vmatmul.f32.gmra.mxu0 %v1640
        %v4093 = vpop.f32.mrf.mxu0
        %v4094 = vadd.f32 0.0, %v4093
        %4095 = vmatmul.f32.gmra.mxu0 %v1648
        %v4096 = vpop.f32.mrf.mxu0
        %v4097 = vadd.f32 0.0, %v4096
        %4098 = vmatmul.f32.gmra.mxu0 %v1656
        %v4099 = vpop.f32.mrf.mxu0
        %v4100 = vadd.f32 0.0, %v4099
        %4101 = vmatmul.f32.gmra.mxu0 %v1664
        %v4102 = vpop.f32.mrf.mxu0
        %v4103 = vadd.f32 0.0, %v4102
        %4104 = vdwg.mxu0
        %4105 = vmatpush.msra.mxu0 %v1798
        %4106 = vmatpush.msra.mxu0 %v1794
        %4107 = vmatpush.msra.mxu0 %v1790
        %4108 = vmatpush.msra.mxu0 %v1786
        %4109 = vmatpush.msra.mxu0 %v1782
        %4110 = vmatpush.msra.mxu0 %v1778
        %4111 = vmatpush.msra.mxu0 %v1774
        %4112 = vmatpush.msra.mxu0 %v1770
        %4113 = vmatpush.msra.mxu0 %v1766
        %4114 = vmatpush.msra.mxu0 %v1762
        %4115 = vmatpush.msra.mxu0 %v1758
        %4116 = vmatpush.msra.mxu0 %v1754
        %4117 = vmatpush.msra.mxu0 %v1750
        %4118 = vmatpush.msra.mxu0 %v1746
        %4119 = vmatpush.msra.mxu0 %v1742
        %4120 = vmatpush.msra.mxu0 %v1738
        %4121 = vmatmul.f32.gmra.mxu0 %v1417
        %v4122 = vpop.f32.mrf.mxu0
        %v4123 = vadd.f32 %v4010, %v4122
        %4124 = vmatmul.f32.gmra.mxu0 %v1425
        %v4125 = vpop.f32.mrf.mxu0
        %v4126 = vadd.f32 %v4013, %v4125
        %4127 = vmatmul.f32.gmra.mxu0 %v1433
        %v4128 = vpop.f32.mrf.mxu0
        %v4129 = vadd.f32 %v4016, %v4128
        %4130 = vmatmul.f32.gmra.mxu0 %v1441
        %v4131 = vpop.f32.mrf.mxu0
        %v4132 = vadd.f32 %v4019, %v4131
        %4133 = vmatmul.f32.gmra.mxu0 %v1449
        %v4134 = vpop.f32.mrf.mxu0
        %v4135 = vadd.f32 %v4022, %v4134
        %4136 = vmatmul.f32.gmra.mxu0 %v1457
        %v4137 = vpop.f32.mrf.mxu0
        %v4138 = vadd.f32 %v4025, %v4137
        %4139 = vmatmul.f32.gmra.mxu0 %v1465
        %v4140 = vpop.f32.mrf.mxu0
        %v4141 = vadd.f32 %v4028, %v4140
        %4142 = vmatmul.f32.gmra.mxu0 %v1473
        %v4143 = vpop.f32.mrf.mxu0
        %v4144 = vadd.f32 %v4031, %v4143
        %4145 = vmatmul.f32.gmra.mxu0 %v1481
        %v4146 = vpop.f32.mrf.mxu0
        %v4147 = vadd.f32 %v4034, %v4146
        %4148 = vmatmul.f32.gmra.mxu0 %v1489
        %v4149 = vpop.f32.mrf.mxu0
        %v4150 = vadd.f32 %v4037, %v4149
        %4151 = vmatmul.f32.gmra.mxu0 %v1497
        %v4152 = vpop.f32.mrf.mxu0
        %v4153 = vadd.f32 %v4040, %v4152
        %4154 = vmatmul.f32.gmra.mxu0 %v1505
        %v4155 = vpop.f32.mrf.mxu0
        %v4156 = vadd.f32 %v4043, %v4155
        %4157 = vmatmul.f32.gmra.mxu0 %v1513
        %v4158 = vpop.f32.mrf.mxu0
        %v4159 = vadd.f32 %v4046, %v4158
        %4160 = vmatmul.f32.gmra.mxu0 %v1521
        %v4161 = vpop.f32.mrf.mxu0
        %v4162 = vadd.f32 %v4049, %v4161
        %4163 = vmatmul.f32.gmra.mxu0 %v1529
        %v4164 = vpop.f32.mrf.mxu0
        %v4165 = vadd.f32 %v4052, %v4164
        %4166 = vmatmul.f32.gmra.mxu0 %v1537
        %v4167 = vpop.f32.mrf.mxu0
        %v4168 = vadd.f32 %v4055, %v4167
        %4169 = vmatmul.f32.gmra.mxu0 %v1545
        %v4170 = vpop.f32.mrf.mxu0
        %v4171 = vadd.f32 %v4058, %v4170
        %4172 = vmatmul.f32.gmra.mxu0 %v1553
        %v4173 = vpop.f32.mrf.mxu0
        %v4174 = vadd.f32 %v4061, %v4173
        %4175 = vmatmul.f32.gmra.mxu0 %v1561
        %v4176 = vpop.f32.mrf.mxu0
        %v4177 = vadd.f32 %v4064, %v4176
        %4178 = vmatmul.f32.gmra.mxu0 %v1569
        %v4179 = vpop.f32.mrf.mxu0
        %v4180 = vadd.f32 %v4067, %v4179
        %4181 = vmatmul.f32.gmra.mxu0 %v1577
        %v4182 = vpop.f32.mrf.mxu0
        %v4183 = vadd.f32 %v4070, %v4182
        %4184 = vmatmul.f32.gmra.mxu0 %v1585
        %v4185 = vpop.f32.mrf.mxu0
        %v4186 = vadd.f32 %v4073, %v4185
        %4187 = vmatmul.f32.gmra.mxu0 %v1593
        %v4188 = vpop.f32.mrf.mxu0
        %v4189 = vadd.f32 %v4076, %v4188
        %4190 = vmatmul.f32.gmra.mxu0 %v1601
        %v4191 = vpop.f32.mrf.mxu0
        %v4192 = vadd.f32 %v4079, %v4191
        %4193 = vmatmul.f32.gmra.mxu0 %v1609
        %v4194 = vpop.f32.mrf.mxu0
        %v4195 = vadd.f32 %v4082, %v4194
        %4196 = vmatmul.f32.gmra.mxu0 %v1617
        %v4197 = vpop.f32.mrf.mxu0
        %v4198 = vadd.f32 %v4085, %v4197
        %4199 = vmatmul.f32.gmra.mxu0 %v1625
        %v4200 = vpop.f32.mrf.mxu0
        %v4201 = vadd.f32 %v4088, %v4200
        %4202 = vmatmul.f32.gmra.mxu0 %v1633
        %v4203 = vpop.f32.mrf.mxu0
        %v4204 = vadd.f32 %v4091, %v4203
        %4205 = vmatmul.f32.gmra.mxu0 %v1641
        %v4206 = vpop.f32.mrf.mxu0
        %v4207 = vadd.f32 %v4094, %v4206
        %4208 = vmatmul.f32.gmra.mxu0 %v1649
        %v4209 = vpop.f32.mrf.mxu0
        %v4210 = vadd.f32 %v4097, %v4209
        %4211 = vmatmul.f32.gmra.mxu0 %v1657
        %v4212 = vpop.f32.mrf.mxu0
        %v4213 = vadd.f32 %v4100, %v4212
        %4214 = vmatmul.f32.gmra.mxu0 %v1665
        %v4215 = vpop.f32.mrf.mxu0
        %v4216 = vadd.f32 %v4103, %v4215
        %4217 = vdwg.mxu0
        %4218 = vmatpush.msra.mxu0 %v1862
        %4219 = vmatpush.msra.mxu0 %v1858
        %4220 = vmatpush.msra.mxu0 %v1854
        %4221 = vmatpush.msra.mxu0 %v1850
        %4222 = vmatpush.msra.mxu0 %v1846
        %4223 = vmatpush.msra.mxu0 %v1842
        %4224 = vmatpush.msra.mxu0 %v1838
        %4225 = vmatpush.msra.mxu0 %v1834
        %4226 = vmatpush.msra.mxu0 %v1830
        %4227 = vmatpush.msra.mxu0 %v1826
        %4228 = vmatpush.msra.mxu0 %v1822
        %4229 = vmatpush.msra.mxu0 %v1818
        %4230 = vmatpush.msra.mxu0 %v1814
        %4231 = vmatpush.msra.mxu0 %v1810
        %4232 = vmatpush.msra.mxu0 %v1806
        %4233 = vmatpush.msra.mxu0 %v1802
        %4234 = vmatmul.f32.gmra.mxu0 %v1418
        %v4235 = vpop.f32.mrf.mxu0
        %v4236 = vadd.f32 %v4123, %v4235
        %4237 = vmatmul.f32.gmra.mxu0 %v1426
        %v4238 = vpop.f32.mrf.mxu0
        %v4239 = vadd.f32 %v4126, %v4238
        %4240 = vmatmul.f32.gmra.mxu0 %v1434
        %v4241 = vpop.f32.mrf.mxu0
        %v4242 = vadd.f32 %v4129, %v4241
        %4243 = vmatmul.f32.gmra.mxu0 %v1442
        %v4244 = vpop.f32.mrf.mxu0
        %v4245 = vadd.f32 %v4132, %v4244
        %4246 = vmatmul.f32.gmra.mxu0 %v1450
        %v4247 = vpop.f32.mrf.mxu0
        %v4248 = vadd.f32 %v4135, %v4247
        %4249 = vmatmul.f32.gmra.mxu0 %v1458
        %v4250 = vpop.f32.mrf.mxu0
        %v4251 = vadd.f32 %v4138, %v4250
        %4252 = vmatmul.f32.gmra.mxu0 %v1466
        %v4253 = vpop.f32.mrf.mxu0
        %v4254 = vadd.f32 %v4141, %v4253
        %4255 = vmatmul.f32.gmra.mxu0 %v1474
        %v4256 = vpop.f32.mrf.mxu0
        %v4257 = vadd.f32 %v4144, %v4256
        %4258 = vmatmul.f32.gmra.mxu0 %v1482
        %v4259 = vpop.f32.mrf.mxu0
        %v4260 = vadd.f32 %v4147, %v4259
        %4261 = vmatmul.f32.gmra.mxu0 %v1490
        %v4262 = vpop.f32.mrf.mxu0
        %v4263 = vadd.f32 %v4150, %v4262
        %4264 = vmatmul.f32.gmra.mxu0 %v1498
        %v4265 = vpop.f32.mrf.mxu0
        %v4266 = vadd.f32 %v4153, %v4265
        %4267 = vmatmul.f32.gmra.mxu0 %v1506
        %v4268 = vpop.f32.mrf.mxu0
        %v4269 = vadd.f32 %v4156, %v4268
        %4270 = vmatmul.f32.gmra.mxu0 %v1514
        %v4271 = vpop.f32.mrf.mxu0
        %v4272 = vadd.f32 %v4159, %v4271
        %4273 = vmatmul.f32.gmra.mxu0 %v1522
        %v4274 = vpop.f32.mrf.mxu0
        %v4275 = vadd.f32 %v4162, %v4274
        %4276 = vmatmul.f32.gmra.mxu0 %v1530
        %v4277 = vpop.f32.mrf.mxu0
        %v4278 = vadd.f32 %v4165, %v4277
        %4279 = vmatmul.f32.gmra.mxu0 %v1538
        %v4280 = vpop.f32.mrf.mxu0
        %v4281 = vadd.f32 %v4168, %v4280
        %4282 = vmatmul.f32.gmra.mxu0 %v1546
        %v4283 = vpop.f32.mrf.mxu0
        %v4284 = vadd.f32 %v4171, %v4283
        %4285 = vmatmul.f32.gmra.mxu0 %v1554
        %v4286 = vpop.f32.mrf.mxu0
        %v4287 = vadd.f32 %v4174, %v4286
        %4288 = vmatmul.f32.gmra.mxu0 %v1562
        %v4289 = vpop.f32.mrf.mxu0
        %v4290 = vadd.f32 %v4177, %v4289
        %4291 = vmatmul.f32.gmra.mxu0 %v1570
        %v4292 = vpop.f32.mrf.mxu0
        %v4293 = vadd.f32 %v4180, %v4292
        %4294 = vmatmul.f32.gmra.mxu0 %v1578
        %v4295 = vpop.f32.mrf.mxu0
        %v4296 = vadd.f32 %v4183, %v4295
        %4297 = vmatmul.f32.gmra.mxu0 %v1586
        %v4298 = vpop.f32.mrf.mxu0
        %v4299 = vadd.f32 %v4186, %v4298
        %4300 = vmatmul.f32.gmra.mxu0 %v1594
        %v4301 = vpop.f32.mrf.mxu0
        %v4302 = vadd.f32 %v4189, %v4301
        %4303 = vmatmul.f32.gmra.mxu0 %v1602
        %v4304 = vpop.f32.mrf.mxu0
        %v4305 = vadd.f32 %v4192, %v4304
        %4306 = vmatmul.f32.gmra.mxu0 %v1610
        %v4307 = vpop.f32.mrf.mxu0
        %v4308 = vadd.f32 %v4195, %v4307
        %4309 = vmatmul.f32.gmra.mxu0 %v1618
        %v4310 = vpop.f32.mrf.mxu0
        %v4311 = vadd.f32 %v4198, %v4310
        %4312 = vmatmul.f32.gmra.mxu0 %v1626
        %v4313 = vpop.f32.mrf.mxu0
        %v4314 = vadd.f32 %v4201, %v4313
        %4315 = vmatmul.f32.gmra.mxu0 %v1634
        %v4316 = vpop.f32.mrf.mxu0
        %v4317 = vadd.f32 %v4204, %v4316
        %4318 = vmatmul.f32.gmra.mxu0 %v1642
        %v4319 = vpop.f32.mrf.mxu0
        %v4320 = vadd.f32 %v4207, %v4319
        %4321 = vmatmul.f32.gmra.mxu0 %v1650
        %v4322 = vpop.f32.mrf.mxu0
        %v4323 = vadd.f32 %v4210, %v4322
        %4324 = vmatmul.f32.gmra.mxu0 %v1658
        %v4325 = vpop.f32.mrf.mxu0
        %v4326 = vadd.f32 %v4213, %v4325
        %4327 = vmatmul.f32.gmra.mxu0 %v1666
        %v4328 = vpop.f32.mrf.mxu0
        %v4329 = vadd.f32 %v4216, %v4328
        %4330 = vdwg.mxu0
        %4331 = vmatpush.msra.mxu0 %v1926
        %4332 = vmatpush.msra.mxu0 %v1922
        %4333 = vmatpush.msra.mxu0 %v1918
        %4334 = vmatpush.msra.mxu0 %v1914
        %4335 = vmatpush.msra.mxu0 %v1910
        %4336 = vmatpush.msra.mxu0 %v1906
        %4337 = vmatpush.msra.mxu0 %v1902
        %4338 = vmatpush.msra.mxu0 %v1898
        %4339 = vmatpush.msra.mxu0 %v1894
        %4340 = vmatpush.msra.mxu0 %v1890
        %4341 = vmatpush.msra.mxu0 %v1886
        %4342 = vmatpush.msra.mxu0 %v1882
        %4343 = vmatpush.msra.mxu0 %v1878
        %4344 = vmatpush.msra.mxu0 %v1874
        %4345 = vmatpush.msra.mxu0 %v1870
        %4346 = vmatpush.msra.mxu0 %v1866
        %4347 = vmatmul.f32.gmra.mxu0 %v1419
        %v4348 = vpop.f32.mrf.mxu0
        %v4349 = vadd.f32 %v4236, %v4348
        %4350 = vmatmul.f32.gmra.mxu0 %v1427
        %v4351 = vpop.f32.mrf.mxu0
        %v4352 = vadd.f32 %v4239, %v4351
        %4353 = vmatmul.f32.gmra.mxu0 %v1435
        %v4354 = vpop.f32.mrf.mxu0
        %v4355 = vadd.f32 %v4242, %v4354
        %4356 = vmatmul.f32.gmra.mxu0 %v1443
        %v4357 = vpop.f32.mrf.mxu0
        %v4358 = vadd.f32 %v4245, %v4357
        %4359 = vmatmul.f32.gmra.mxu0 %v1451
        %v4360 = vpop.f32.mrf.mxu0
        %v4361 = vadd.f32 %v4248, %v4360
        %4362 = vmatmul.f32.gmra.mxu0 %v1459
        %v4363 = vpop.f32.mrf.mxu0
        %v4364 = vadd.f32 %v4251, %v4363
        %4365 = vmatmul.f32.gmra.mxu0 %v1467
        %v4366 = vpop.f32.mrf.mxu0
        %v4367 = vadd.f32 %v4254, %v4366
        %4368 = vmatmul.f32.gmra.mxu0 %v1475
        %v4369 = vpop.f32.mrf.mxu0
        %v4370 = vadd.f32 %v4257, %v4369
        %4371 = vmatmul.f32.gmra.mxu0 %v1483
        %v4372 = vpop.f32.mrf.mxu0
        %v4373 = vadd.f32 %v4260, %v4372
        %4374 = vmatmul.f32.gmra.mxu0 %v1491
        %v4375 = vpop.f32.mrf.mxu0
        %v4376 = vadd.f32 %v4263, %v4375
        %4377 = vmatmul.f32.gmra.mxu0 %v1499
        %v4378 = vpop.f32.mrf.mxu0
        %v4379 = vadd.f32 %v4266, %v4378
        %4380 = vmatmul.f32.gmra.mxu0 %v1507
        %v4381 = vpop.f32.mrf.mxu0
        %v4382 = vadd.f32 %v4269, %v4381
        %4383 = vmatmul.f32.gmra.mxu0 %v1515
        %v4384 = vpop.f32.mrf.mxu0
        %v4385 = vadd.f32 %v4272, %v4384
        %4386 = vmatmul.f32.gmra.mxu0 %v1523
        %v4387 = vpop.f32.mrf.mxu0
        %v4388 = vadd.f32 %v4275, %v4387
        %4389 = vmatmul.f32.gmra.mxu0 %v1531
        %v4390 = vpop.f32.mrf.mxu0
        %v4391 = vadd.f32 %v4278, %v4390
        %4392 = vmatmul.f32.gmra.mxu0 %v1539
        %v4393 = vpop.f32.mrf.mxu0
        %v4394 = vadd.f32 %v4281, %v4393
        %4395 = vmatmul.f32.gmra.mxu0 %v1547
        %v4396 = vpop.f32.mrf.mxu0
        %v4397 = vadd.f32 %v4284, %v4396
        %4398 = vmatmul.f32.gmra.mxu0 %v1555
        %v4399 = vpop.f32.mrf.mxu0
        %v4400 = vadd.f32 %v4287, %v4399
        %4401 = vmatmul.f32.gmra.mxu0 %v1563
        %v4402 = vpop.f32.mrf.mxu0
        %v4403 = vadd.f32 %v4290, %v4402
        %4404 = vmatmul.f32.gmra.mxu0 %v1571
        %v4405 = vpop.f32.mrf.mxu0
        %v4406 = vadd.f32 %v4293, %v4405
        %4407 = vmatmul.f32.gmra.mxu0 %v1579
        %v4408 = vpop.f32.mrf.mxu0
        %v4409 = vadd.f32 %v4296, %v4408
        %4410 = vmatmul.f32.gmra.mxu0 %v1587
        %v4411 = vpop.f32.mrf.mxu0
        %v4412 = vadd.f32 %v4299, %v4411
        %4413 = vmatmul.f32.gmra.mxu0 %v1595
        %v4414 = vpop.f32.mrf.mxu0
        %v4415 = vadd.f32 %v4302, %v4414
        %4416 = vmatmul.f32.gmra.mxu0 %v1603
        %v4417 = vpop.f32.mrf.mxu0
        %v4418 = vadd.f32 %v4305, %v4417
        %4419 = vmatmul.f32.gmra.mxu0 %v1611
        %v4420 = vpop.f32.mrf.mxu0
        %v4421 = vadd.f32 %v4308, %v4420
        %4422 = vmatmul.f32.gmra.mxu0 %v1619
        %v4423 = vpop.f32.mrf.mxu0
        %v4424 = vadd.f32 %v4311, %v4423
        %4425 = vmatmul.f32.gmra.mxu0 %v1627
        %v4426 = vpop.f32.mrf.mxu0
        %v4427 = vadd.f32 %v4314, %v4426
        %4428 = vmatmul.f32.gmra.mxu0 %v1635
        %v4429 = vpop.f32.mrf.mxu0
        %v4430 = vadd.f32 %v4317, %v4429
        %4431 = vmatmul.f32.gmra.mxu0 %v1643
        %v4432 = vpop.f32.mrf.mxu0
        %v4433 = vadd.f32 %v4320, %v4432
        %4434 = vmatmul.f32.gmra.mxu0 %v1651
        %v4435 = vpop.f32.mrf.mxu0
        %v4436 = vadd.f32 %v4323, %v4435
        %4437 = vmatmul.f32.gmra.mxu0 %v1659
        %v4438 = vpop.f32.mrf.mxu0
        %v4439 = vadd.f32 %v4326, %v4438
        %4440 = vmatmul.f32.gmra.mxu0 %v1667
        %v4441 = vpop.f32.mrf.mxu0
        %v4442 = vadd.f32 %v4329, %v4441
        %4443 = vdwg.mxu0
        %4444 = vmatpush.msra.mxu0 %v1990
        %4445 = vmatpush.msra.mxu0 %v1986
        %4446 = vmatpush.msra.mxu0 %v1982
        %4447 = vmatpush.msra.mxu0 %v1978
        %4448 = vmatpush.msra.mxu0 %v1974
        %4449 = vmatpush.msra.mxu0 %v1970
        %4450 = vmatpush.msra.mxu0 %v1966
        %4451 = vmatpush.msra.mxu0 %v1962
        %4452 = vmatpush.msra.mxu0 %v1958
        %4453 = vmatpush.msra.mxu0 %v1954
        %4454 = vmatpush.msra.mxu0 %v1950
        %4455 = vmatpush.msra.mxu0 %v1946
        %4456 = vmatpush.msra.mxu0 %v1942
        %4457 = vmatpush.msra.mxu0 %v1938
        %4458 = vmatpush.msra.mxu0 %v1934
        %4459 = vmatpush.msra.mxu0 %v1930
        %4460 = vmatmul.f32.gmra.mxu0 %v1420
        %v4461 = vpop.f32.mrf.mxu0
        %v4462 = vadd.f32 %v4349, %v4461
        %4463 = vmatmul.f32.gmra.mxu0 %v1428
        %v4464 = vpop.f32.mrf.mxu0
        %v4465 = vadd.f32 %v4352, %v4464
        %4466 = vmatmul.f32.gmra.mxu0 %v1436
        %v4467 = vpop.f32.mrf.mxu0
        %v4468 = vadd.f32 %v4355, %v4467
        %4469 = vmatmul.f32.gmra.mxu0 %v1444
        %v4470 = vpop.f32.mrf.mxu0
        %v4471 = vadd.f32 %v4358, %v4470
        %4472 = vmatmul.f32.gmra.mxu0 %v1452
        %v4473 = vpop.f32.mrf.mxu0
        %v4474 = vadd.f32 %v4361, %v4473
        %4475 = vmatmul.f32.gmra.mxu0 %v1460
        %v4476 = vpop.f32.mrf.mxu0
        %v4477 = vadd.f32 %v4364, %v4476
        %4478 = vmatmul.f32.gmra.mxu0 %v1468
        %v4479 = vpop.f32.mrf.mxu0
        %v4480 = vadd.f32 %v4367, %v4479
        %4481 = vmatmul.f32.gmra.mxu0 %v1476
        %v4482 = vpop.f32.mrf.mxu0
        %v4483 = vadd.f32 %v4370, %v4482
        %4484 = vmatmul.f32.gmra.mxu0 %v1484
        %v4485 = vpop.f32.mrf.mxu0
        %v4486 = vadd.f32 %v4373, %v4485
        %4487 = vmatmul.f32.gmra.mxu0 %v1492
        %v4488 = vpop.f32.mrf.mxu0
        %v4489 = vadd.f32 %v4376, %v4488
        %4490 = vmatmul.f32.gmra.mxu0 %v1500
        %v4491 = vpop.f32.mrf.mxu0
        %v4492 = vadd.f32 %v4379, %v4491
        %4493 = vmatmul.f32.gmra.mxu0 %v1508
        %v4494 = vpop.f32.mrf.mxu0
        %v4495 = vadd.f32 %v4382, %v4494
        %4496 = vmatmul.f32.gmra.mxu0 %v1516
        %v4497 = vpop.f32.mrf.mxu0
        %v4498 = vadd.f32 %v4385, %v4497
        %4499 = vmatmul.f32.gmra.mxu0 %v1524
        %v4500 = vpop.f32.mrf.mxu0
        %v4501 = vadd.f32 %v4388, %v4500
        %4502 = vmatmul.f32.gmra.mxu0 %v1532
        %v4503 = vpop.f32.mrf.mxu0
        %v4504 = vadd.f32 %v4391, %v4503
        %4505 = vmatmul.f32.gmra.mxu0 %v1540
        %v4506 = vpop.f32.mrf.mxu0
        %v4507 = vadd.f32 %v4394, %v4506
        %4508 = vmatmul.f32.gmra.mxu0 %v1548
        %v4509 = vpop.f32.mrf.mxu0
        %v4510 = vadd.f32 %v4397, %v4509
        %4511 = vmatmul.f32.gmra.mxu0 %v1556
        %v4512 = vpop.f32.mrf.mxu0
        %v4513 = vadd.f32 %v4400, %v4512
        %4514 = vmatmul.f32.gmra.mxu0 %v1564
        %v4515 = vpop.f32.mrf.mxu0
        %v4516 = vadd.f32 %v4403, %v4515
        %4517 = vmatmul.f32.gmra.mxu0 %v1572
        %v4518 = vpop.f32.mrf.mxu0
        %v4519 = vadd.f32 %v4406, %v4518
        %4520 = vmatmul.f32.gmra.mxu0 %v1580
        %v4521 = vpop.f32.mrf.mxu0
        %v4522 = vadd.f32 %v4409, %v4521
        %4523 = vmatmul.f32.gmra.mxu0 %v1588
        %v4524 = vpop.f32.mrf.mxu0
        %v4525 = vadd.f32 %v4412, %v4524
        %4526 = vmatmul.f32.gmra.mxu0 %v1596
        %v4527 = vpop.f32.mrf.mxu0
        %v4528 = vadd.f32 %v4415, %v4527
        %4529 = vmatmul.f32.gmra.mxu0 %v1604
        %v4530 = vpop.f32.mrf.mxu0
        %v4531 = vadd.f32 %v4418, %v4530
        %4532 = vmatmul.f32.gmra.mxu0 %v1612
        %v4533 = vpop.f32.mrf.mxu0
        %v4534 = vadd.f32 %v4421, %v4533
        %4535 = vmatmul.f32.gmra.mxu0 %v1620
        %v4536 = vpop.f32.mrf.mxu0
        %v4537 = vadd.f32 %v4424, %v4536
        %4538 = vmatmul.f32.gmra.mxu0 %v1628
        %v4539 = vpop.f32.mrf.mxu0
        %v4540 = vadd.f32 %v4427, %v4539
        %4541 = vmatmul.f32.gmra.mxu0 %v1636
        %v4542 = vpop.f32.mrf.mxu0
        %v4543 = vadd.f32 %v4430, %v4542
        %4544 = vmatmul.f32.gmra.mxu0 %v1644
        %v4545 = vpop.f32.mrf.mxu0
        %v4546 = vadd.f32 %v4433, %v4545
        %4547 = vmatmul.f32.gmra.mxu0 %v1652
        %v4548 = vpop.f32.mrf.mxu0
        %v4549 = vadd.f32 %v4436, %v4548
        %4550 = vmatmul.f32.gmra.mxu0 %v1660
        %v4551 = vpop.f32.mrf.mxu0
        %v4552 = vadd.f32 %v4439, %v4551
        %4553 = vmatmul.f32.gmra.mxu0 %v1668
        %v4554 = vpop.f32.mrf.mxu0
        %v4555 = vadd.f32 %v4442, %v4554
        %4556 = vdwg.mxu0
        %4557 = vmatpush.msra.mxu0 %v2054
        %4558 = vmatpush.msra.mxu0 %v2050
        %4559 = vmatpush.msra.mxu0 %v2046
        %4560 = vmatpush.msra.mxu0 %v2042
        %4561 = vmatpush.msra.mxu0 %v2038
        %4562 = vmatpush.msra.mxu0 %v2034
        %4563 = vmatpush.msra.mxu0 %v2030
        %4564 = vmatpush.msra.mxu0 %v2026
        %4565 = vmatpush.msra.mxu0 %v2022
        %4566 = vmatpush.msra.mxu0 %v2018
        %4567 = vmatpush.msra.mxu0 %v2014
        %4568 = vmatpush.msra.mxu0 %v2010
        %4569 = vmatpush.msra.mxu0 %v2006
        %4570 = vmatpush.msra.mxu0 %v2002
        %4571 = vmatpush.msra.mxu0 %v1998
        %4572 = vmatpush.msra.mxu0 %v1994
        %4573 = vmatmul.f32.gmra.mxu0 %v1421
        %v4574 = vpop.f32.mrf.mxu0
        %v4575 = vadd.f32 %v4462, %v4574
        %4576 = vmatmul.f32.gmra.mxu0 %v1429
        %v4577 = vpop.f32.mrf.mxu0
        %v4578 = vadd.f32 %v4465, %v4577
        %4579 = vmatmul.f32.gmra.mxu0 %v1437
        %v4580 = vpop.f32.mrf.mxu0
        %v4581 = vadd.f32 %v4468, %v4580
        %4582 = vmatmul.f32.gmra.mxu0 %v1445
        %v4583 = vpop.f32.mrf.mxu0
        %v4584 = vadd.f32 %v4471, %v4583
        %4585 = vmatmul.f32.gmra.mxu0 %v1453
        %v4586 = vpop.f32.mrf.mxu0
        %v4587 = vadd.f32 %v4474, %v4586
        %4588 = vmatmul.f32.gmra.mxu0 %v1461
        %v4589 = vpop.f32.mrf.mxu0
        %v4590 = vadd.f32 %v4477, %v4589
        %4591 = vmatmul.f32.gmra.mxu0 %v1469
        %v4592 = vpop.f32.mrf.mxu0
        %v4593 = vadd.f32 %v4480, %v4592
        %4594 = vmatmul.f32.gmra.mxu0 %v1477
        %v4595 = vpop.f32.mrf.mxu0
        %v4596 = vadd.f32 %v4483, %v4595
        %4597 = vmatmul.f32.gmra.mxu0 %v1485
        %v4598 = vpop.f32.mrf.mxu0
        %v4599 = vadd.f32 %v4486, %v4598
        %4600 = vmatmul.f32.gmra.mxu0 %v1493
        %v4601 = vpop.f32.mrf.mxu0
        %v4602 = vadd.f32 %v4489, %v4601
        %4603 = vmatmul.f32.gmra.mxu0 %v1501
        %v4604 = vpop.f32.mrf.mxu0
        %v4605 = vadd.f32 %v4492, %v4604
        %4606 = vmatmul.f32.gmra.mxu0 %v1509
        %v4607 = vpop.f32.mrf.mxu0
        %v4608 = vadd.f32 %v4495, %v4607
        %4609 = vmatmul.f32.gmra.mxu0 %v1517
        %v4610 = vpop.f32.mrf.mxu0
        %v4611 = vadd.f32 %v4498, %v4610
        %4612 = vmatmul.f32.gmra.mxu0 %v1525
        %v4613 = vpop.f32.mrf.mxu0
        %v4614 = vadd.f32 %v4501, %v4613
        %4615 = vmatmul.f32.gmra.mxu0 %v1533
        %v4616 = vpop.f32.mrf.mxu0
        %v4617 = vadd.f32 %v4504, %v4616
        %4618 = vmatmul.f32.gmra.mxu0 %v1541
        %v4619 = vpop.f32.mrf.mxu0
        %v4620 = vadd.f32 %v4507, %v4619
        %4621 = vmatmul.f32.gmra.mxu0 %v1549
        %v4622 = vpop.f32.mrf.mxu0
        %v4623 = vadd.f32 %v4510, %v4622
        %4624 = vmatmul.f32.gmra.mxu0 %v1557
        %v4625 = vpop.f32.mrf.mxu0
        %v4626 = vadd.f32 %v4513, %v4625
        %4627 = vmatmul.f32.gmra.mxu0 %v1565
        %v4628 = vpop.f32.mrf.mxu0
        %v4629 = vadd.f32 %v4516, %v4628
        %4630 = vmatmul.f32.gmra.mxu0 %v1573
        %v4631 = vpop.f32.mrf.mxu0
        %v4632 = vadd.f32 %v4519, %v4631
        %4633 = vmatmul.f32.gmra.mxu0 %v1581
        %v4634 = vpop.f32.mrf.mxu0
        %v4635 = vadd.f32 %v4522, %v4634
        %4636 = vmatmul.f32.gmra.mxu0 %v1589
        %v4637 = vpop.f32.mrf.mxu0
        %v4638 = vadd.f32 %v4525, %v4637
        %4639 = vmatmul.f32.gmra.mxu0 %v1597
        %v4640 = vpop.f32.mrf.mxu0
        %v4641 = vadd.f32 %v4528, %v4640
        %4642 = vmatmul.f32.gmra.mxu0 %v1605
        %v4643 = vpop.f32.mrf.mxu0
        %v4644 = vadd.f32 %v4531, %v4643
        %4645 = vmatmul.f32.gmra.mxu0 %v1613
        %v4646 = vpop.f32.mrf.mxu0
        %v4647 = vadd.f32 %v4534, %v4646
        %4648 = vmatmul.f32.gmra.mxu0 %v1621
        %v4649 = vpop.f32.mrf.mxu0
        %v4650 = vadd.f32 %v4537, %v4649
        %4651 = vmatmul.f32.gmra.mxu0 %v1629
        %v4652 = vpop.f32.mrf.mxu0
        %v4653 = vadd.f32 %v4540, %v4652
        %4654 = vmatmul.f32.gmra.mxu0 %v1637
        %v4655 = vpop.f32.mrf.mxu0
        %v4656 = vadd.f32 %v4543, %v4655
        %4657 = vmatmul.f32.gmra.mxu0 %v1645
        %v4658 = vpop.f32.mrf.mxu0
        %v4659 = vadd.f32 %v4546, %v4658
        %4660 = vmatmul.f32.gmra.mxu0 %v1653
        %v4661 = vpop.f32.mrf.mxu0
        %v4662 = vadd.f32 %v4549, %v4661
        %4663 = vmatmul.f32.gmra.mxu0 %v1661
        %v4664 = vpop.f32.mrf.mxu0
        %v4665 = vadd.f32 %v4552, %v4664
        %4666 = vmatmul.f32.gmra.mxu0 %v1669
        %v4667 = vpop.f32.mrf.mxu0
        %v4668 = vadd.f32 %v4555, %v4667
        %4669 = vdwg.mxu0
        %4670 = vmatpush.msra.mxu0 %v2118
        %4671 = vmatpush.msra.mxu0 %v2114
        %4672 = vmatpush.msra.mxu0 %v2110
        %4673 = vmatpush.msra.mxu0 %v2106
        %4674 = vmatpush.msra.mxu0 %v2102
        %4675 = vmatpush.msra.mxu0 %v2098
        %4676 = vmatpush.msra.mxu0 %v2094
        %4677 = vmatpush.msra.mxu0 %v2090
        %4678 = vmatpush.msra.mxu0 %v2086
        %4679 = vmatpush.msra.mxu0 %v2082
        %4680 = vmatpush.msra.mxu0 %v2078
        %4681 = vmatpush.msra.mxu0 %v2074
        %4682 = vmatpush.msra.mxu0 %v2070
        %4683 = vmatpush.msra.mxu0 %v2066
        %4684 = vmatpush.msra.mxu0 %v2062
        %4685 = vmatpush.msra.mxu0 %v2058
        %4686 = vmatmul.f32.gmra.mxu0 %v1422
        %v4687 = vpop.f32.mrf.mxu0
        %v4688 = vadd.f32 %v4575, %v4687
        %4689 = vmatmul.f32.gmra.mxu0 %v1430
        %v4690 = vpop.f32.mrf.mxu0
        %v4691 = vadd.f32 %v4578, %v4690
        %4692 = vmatmul.f32.gmra.mxu0 %v1438
        %v4693 = vpop.f32.mrf.mxu0
        %v4694 = vadd.f32 %v4581, %v4693
        %4695 = vmatmul.f32.gmra.mxu0 %v1446
        %v4696 = vpop.f32.mrf.mxu0
        %v4697 = vadd.f32 %v4584, %v4696
        %4698 = vmatmul.f32.gmra.mxu0 %v1454
        %v4699 = vpop.f32.mrf.mxu0
        %v4700 = vadd.f32 %v4587, %v4699
        %4701 = vmatmul.f32.gmra.mxu0 %v1462
        %v4702 = vpop.f32.mrf.mxu0
        %v4703 = vadd.f32 %v4590, %v4702
        %4704 = vmatmul.f32.gmra.mxu0 %v1470
        %v4705 = vpop.f32.mrf.mxu0
        %v4706 = vadd.f32 %v4593, %v4705
        %4707 = vmatmul.f32.gmra.mxu0 %v1478
        %v4708 = vpop.f32.mrf.mxu0
        %v4709 = vadd.f32 %v4596, %v4708
        %4710 = vmatmul.f32.gmra.mxu0 %v1486
        %v4711 = vpop.f32.mrf.mxu0
        %v4712 = vadd.f32 %v4599, %v4711
        %4713 = vmatmul.f32.gmra.mxu0 %v1494
        %v4714 = vpop.f32.mrf.mxu0
        %v4715 = vadd.f32 %v4602, %v4714
        %4716 = vmatmul.f32.gmra.mxu0 %v1502
        %v4717 = vpop.f32.mrf.mxu0
        %v4718 = vadd.f32 %v4605, %v4717
        %4719 = vmatmul.f32.gmra.mxu0 %v1510
        %v4720 = vpop.f32.mrf.mxu0
        %v4721 = vadd.f32 %v4608, %v4720
        %4722 = vmatmul.f32.gmra.mxu0 %v1518
        %v4723 = vpop.f32.mrf.mxu0
        %v4724 = vadd.f32 %v4611, %v4723
        %4725 = vmatmul.f32.gmra.mxu0 %v1526
        %v4726 = vpop.f32.mrf.mxu0
        %v4727 = vadd.f32 %v4614, %v4726
        %4728 = vmatmul.f32.gmra.mxu0 %v1534
        %v4729 = vpop.f32.mrf.mxu0
        %v4730 = vadd.f32 %v4617, %v4729
        %4731 = vmatmul.f32.gmra.mxu0 %v1542
        %v4732 = vpop.f32.mrf.mxu0
        %v4733 = vadd.f32 %v4620, %v4732
        %4734 = vmatmul.f32.gmra.mxu0 %v1550
        %v4735 = vpop.f32.mrf.mxu0
        %v4736 = vadd.f32 %v4623, %v4735
        %4737 = vmatmul.f32.gmra.mxu0 %v1558
        %v4738 = vpop.f32.mrf.mxu0
        %v4739 = vadd.f32 %v4626, %v4738
        %4740 = vmatmul.f32.gmra.mxu0 %v1566
        %v4741 = vpop.f32.mrf.mxu0
        %v4742 = vadd.f32 %v4629, %v4741
        %4743 = vmatmul.f32.gmra.mxu0 %v1574
        %v4744 = vpop.f32.mrf.mxu0
        %v4745 = vadd.f32 %v4632, %v4744
        %4746 = vmatmul.f32.gmra.mxu0 %v1582
        %v4747 = vpop.f32.mrf.mxu0
        %v4748 = vadd.f32 %v4635, %v4747
        %4749 = vmatmul.f32.gmra.mxu0 %v1590
        %v4750 = vpop.f32.mrf.mxu0
        %v4751 = vadd.f32 %v4638, %v4750
        %4752 = vmatmul.f32.gmra.mxu0 %v1598
        %v4753 = vpop.f32.mrf.mxu0
        %v4754 = vadd.f32 %v4641, %v4753
        %4755 = vmatmul.f32.gmra.mxu0 %v1606
        %v4756 = vpop.f32.mrf.mxu0
        %v4757 = vadd.f32 %v4644, %v4756
        %4758 = vmatmul.f32.gmra.mxu0 %v1614
        %v4759 = vpop.f32.mrf.mxu0
        %v4760 = vadd.f32 %v4647, %v4759
        %4761 = vmatmul.f32.gmra.mxu0 %v1622
        %v4762 = vpop.f32.mrf.mxu0
        %v4763 = vadd.f32 %v4650, %v4762
        %4764 = vmatmul.f32.gmra.mxu0 %v1630
        %v4765 = vpop.f32.mrf.mxu0
        %v4766 = vadd.f32 %v4653, %v4765
        %4767 = vmatmul.f32.gmra.mxu0 %v1638
        %v4768 = vpop.f32.mrf.mxu0
        %v4769 = vadd.f32 %v4656, %v4768
        %4770 = vmatmul.f32.gmra.mxu0 %v1646
        %v4771 = vpop.f32.mrf.mxu0
        %v4772 = vadd.f32 %v4659, %v4771
        %4773 = vmatmul.f32.gmra.mxu0 %v1654
        %v4774 = vpop.f32.mrf.mxu0
        %v4775 = vadd.f32 %v4662, %v4774
        %4776 = vmatmul.f32.gmra.mxu0 %v1662
        %v4777 = vpop.f32.mrf.mxu0
        %v4778 = vadd.f32 %v4665, %v4777
        %4779 = vmatmul.f32.gmra.mxu0 %v1670
        %v4780 = vpop.f32.mrf.mxu0
        %v4781 = vadd.f32 %v4668, %v4780
        %4782 = vdwg.mxu0
        %4783 = vmatpush.msra.mxu0 %v2182
        %4784 = vmatpush.msra.mxu0 %v2178
        %4785 = vmatpush.msra.mxu0 %v2174
        %4786 = vmatpush.msra.mxu0 %v2170
        %4787 = vmatpush.msra.mxu0 %v2166
        %4788 = vmatpush.msra.mxu0 %v2162
        %4789 = vmatpush.msra.mxu0 %v2158
        %4790 = vmatpush.msra.mxu0 %v2154
        %4791 = vmatpush.msra.mxu0 %v2150
        %4792 = vmatpush.msra.mxu0 %v2146
        %4793 = vmatpush.msra.mxu0 %v2142
        %4794 = vmatpush.msra.mxu0 %v2138
        %4795 = vmatpush.msra.mxu0 %v2134
        %4796 = vmatpush.msra.mxu0 %v2130
        %4797 = vmatpush.msra.mxu0 %v2126
        %4798 = vmatpush.msra.mxu0 %v2122
        %4799 = vmatmul.f32.gmra.mxu0 %v1423
        %v4800 = vpop.f32.mrf.mxu0
        %v4801 = vadd.f32 %v4688, %v4800
        %4802 = vmatmul.f32.gmra.mxu0 %v1431
        %v4803 = vpop.f32.mrf.mxu0
        %v4804 = vadd.f32 %v4691, %v4803
        %4805 = vmatmul.f32.gmra.mxu0 %v1439
        %v4806 = vpop.f32.mrf.mxu0
        %v4807 = vadd.f32 %v4694, %v4806
        %4808 = vmatmul.f32.gmra.mxu0 %v1447
        %v4809 = vpop.f32.mrf.mxu0
        %v4810 = vadd.f32 %v4697, %v4809
        %4811 = vmatmul.f32.gmra.mxu0 %v1455
        %v4812 = vpop.f32.mrf.mxu0
        %v4813 = vadd.f32 %v4700, %v4812
        %4814 = vmatmul.f32.gmra.mxu0 %v1463
        %v4815 = vpop.f32.mrf.mxu0
        %v4816 = vadd.f32 %v4703, %v4815
        %4817 = vmatmul.f32.gmra.mxu0 %v1471
        %v4818 = vpop.f32.mrf.mxu0
        %v4819 = vadd.f32 %v4706, %v4818
        %4820 = vmatmul.f32.gmra.mxu0 %v1479
        %v4821 = vpop.f32.mrf.mxu0
        %v4822 = vadd.f32 %v4709, %v4821
        %4823 = vmatmul.f32.gmra.mxu0 %v1487
        %v4824 = vpop.f32.mrf.mxu0
        %v4825 = vadd.f32 %v4712, %v4824
        %4826 = vmatmul.f32.gmra.mxu0 %v1495
        %v4827 = vpop.f32.mrf.mxu0
        %v4828 = vadd.f32 %v4715, %v4827
        %4829 = vmatmul.f32.gmra.mxu0 %v1503
        %v4830 = vpop.f32.mrf.mxu0
        %v4831 = vadd.f32 %v4718, %v4830
        %4832 = vmatmul.f32.gmra.mxu0 %v1511
        %v4833 = vpop.f32.mrf.mxu0
        %v4834 = vadd.f32 %v4721, %v4833
        %4835 = vmatmul.f32.gmra.mxu0 %v1519
        %v4836 = vpop.f32.mrf.mxu0
        %v4837 = vadd.f32 %v4724, %v4836
        %4838 = vmatmul.f32.gmra.mxu0 %v1527
        %v4839 = vpop.f32.mrf.mxu0
        %v4840 = vadd.f32 %v4727, %v4839
        %4841 = vmatmul.f32.gmra.mxu0 %v1535
        %v4842 = vpop.f32.mrf.mxu0
        %v4843 = vadd.f32 %v4730, %v4842
        %4844 = vmatmul.f32.gmra.mxu0 %v1543
        %v4845 = vpop.f32.mrf.mxu0
        %v4846 = vadd.f32 %v4733, %v4845
        %4847 = vmatmul.f32.gmra.mxu0 %v1551
        %v4848 = vpop.f32.mrf.mxu0
        %v4849 = vadd.f32 %v4736, %v4848
        %4850 = vmatmul.f32.gmra.mxu0 %v1559
        %v4851 = vpop.f32.mrf.mxu0
        %v4852 = vadd.f32 %v4739, %v4851
        %4853 = vmatmul.f32.gmra.mxu0 %v1567
        %v4854 = vpop.f32.mrf.mxu0
        %v4855 = vadd.f32 %v4742, %v4854
        %4856 = vmatmul.f32.gmra.mxu0 %v1575
        %v4857 = vpop.f32.mrf.mxu0
        %v4858 = vadd.f32 %v4745, %v4857
        %4859 = vmatmul.f32.gmra.mxu0 %v1583
        %v4860 = vpop.f32.mrf.mxu0
        %v4861 = vadd.f32 %v4748, %v4860
        %4862 = vmatmul.f32.gmra.mxu0 %v1591
        %v4863 = vpop.f32.mrf.mxu0
        %v4864 = vadd.f32 %v4751, %v4863
        %4865 = vmatmul.f32.gmra.mxu0 %v1599
        %v4866 = vpop.f32.mrf.mxu0
        %v4867 = vadd.f32 %v4754, %v4866
        %4868 = vmatmul.f32.gmra.mxu0 %v1607
        %v4869 = vpop.f32.mrf.mxu0
        %v4870 = vadd.f32 %v4757, %v4869
        %4871 = vmatmul.f32.gmra.mxu0 %v1615
        %v4872 = vpop.f32.mrf.mxu0
        %v4873 = vadd.f32 %v4760, %v4872
        %4874 = vmatmul.f32.gmra.mxu0 %v1623
        %v4875 = vpop.f32.mrf.mxu0
        %v4876 = vadd.f32 %v4763, %v4875
        %4877 = vmatmul.f32.gmra.mxu0 %v1631
        %v4878 = vpop.f32.mrf.mxu0
        %v4879 = vadd.f32 %v4766, %v4878
        %4880 = vmatmul.f32.gmra.mxu0 %v1639
        %v4881 = vpop.f32.mrf.mxu0
        %v4882 = vadd.f32 %v4769, %v4881
        %4883 = vmatmul.f32.gmra.mxu0 %v1647
        %v4884 = vpop.f32.mrf.mxu0
        %v4885 = vadd.f32 %v4772, %v4884
        %4886 = vmatmul.f32.gmra.mxu0 %v1655
        %v4887 = vpop.f32.mrf.mxu0
        %v4888 = vadd.f32 %v4775, %v4887
        %4889 = vmatmul.f32.gmra.mxu0 %v1663
        %v4890 = vpop.f32.mrf.mxu0
        %v4891 = vadd.f32 %v4778, %v4890
        %4892 = vmatmul.f32.gmra.mxu0 %v1671
        %v4893 = vpop.f32.mrf.mxu0
        %v4894 = vadd.f32 %v4781, %v4893
        %4895 = vdwg.mxu0
        %4896 = vmatpush.msra.mxu0 %v1735
        %4897 = vmatpush.msra.mxu0 %v1731
        %4898 = vmatpush.msra.mxu0 %v1727
        %4899 = vmatpush.msra.mxu0 %v1723
        %4900 = vmatpush.msra.mxu0 %v1719
        %4901 = vmatpush.msra.mxu0 %v1715
        %4902 = vmatpush.msra.mxu0 %v1711
        %4903 = vmatpush.msra.mxu0 %v1707
        %4904 = vmatpush.msra.mxu0 %v1703
        %4905 = vmatpush.msra.mxu0 %v1699
        %4906 = vmatpush.msra.mxu0 %v1695
        %4907 = vmatpush.msra.mxu0 %v1691
        %4908 = vmatpush.msra.mxu0 %v1687
        %4909 = vmatpush.msra.mxu0 %v1683
        %4910 = vmatpush.msra.mxu0 %v1679
        %4911 = vmatpush.msra.mxu0 %v1675
        %4912 = vmatmul.f32.gmra.mxu0 %v1416
        %v4913 = vpop.f32.mrf.mxu0
        %v4914 = vadd.f32 0.0, %v4913
        %4915 = vmatmul.f32.gmra.mxu0 %v1424
        %v4916 = vpop.f32.mrf.mxu0
        %v4917 = vadd.f32 0.0, %v4916
        %4918 = vmatmul.f32.gmra.mxu0 %v1432
        %v4919 = vpop.f32.mrf.mxu0
        %v4920 = vadd.f32 0.0, %v4919
        %4921 = vmatmul.f32.gmra.mxu0 %v1440
        %v4922 = vpop.f32.mrf.mxu0
        %v4923 = vadd.f32 0.0, %v4922
        %4924 = vmatmul.f32.gmra.mxu0 %v1448
        %v4925 = vpop.f32.mrf.mxu0
        %v4926 = vadd.f32 0.0, %v4925
        %4927 = vmatmul.f32.gmra.mxu0 %v1456
        %v4928 = vpop.f32.mrf.mxu0
        %v4929 = vadd.f32 0.0, %v4928
        %4930 = vmatmul.f32.gmra.mxu0 %v1464
        %v4931 = vpop.f32.mrf.mxu0
        %v4932 = vadd.f32 0.0, %v4931
        %4933 = vmatmul.f32.gmra.mxu0 %v1472
        %v4934 = vpop.f32.mrf.mxu0
        %v4935 = vadd.f32 0.0, %v4934
        %4936 = vmatmul.f32.gmra.mxu0 %v1480
        %v4937 = vpop.f32.mrf.mxu0
        %v4938 = vadd.f32 0.0, %v4937
        %4939 = vmatmul.f32.gmra.mxu0 %v1488
        %v4940 = vpop.f32.mrf.mxu0
        %v4941 = vadd.f32 0.0, %v4940
        %4942 = vmatmul.f32.gmra.mxu0 %v1496
        %v4943 = vpop.f32.mrf.mxu0
        %v4944 = vadd.f32 0.0, %v4943
        %4945 = vmatmul.f32.gmra.mxu0 %v1504
        %v4946 = vpop.f32.mrf.mxu0
        %v4947 = vadd.f32 0.0, %v4946
        %4948 = vmatmul.f32.gmra.mxu0 %v1512
        %v4949 = vpop.f32.mrf.mxu0
        %v4950 = vadd.f32 0.0, %v4949
        %4951 = vmatmul.f32.gmra.mxu0 %v1520
        %v4952 = vpop.f32.mrf.mxu0
        %v4953 = vadd.f32 0.0, %v4952
        %4954 = vmatmul.f32.gmra.mxu0 %v1528
        %v4955 = vpop.f32.mrf.mxu0
        %v4956 = vadd.f32 0.0, %v4955
        %4957 = vmatmul.f32.gmra.mxu0 %v1536
        %v4958 = vpop.f32.mrf.mxu0
        %v4959 = vadd.f32 0.0, %v4958
        %4960 = vmatmul.f32.gmra.mxu0 %v1544
        %v4961 = vpop.f32.mrf.mxu0
        %v4962 = vadd.f32 0.0, %v4961
        %4963 = vmatmul.f32.gmra.mxu0 %v1552
        %v4964 = vpop.f32.mrf.mxu0
        %v4965 = vadd.f32 0.0, %v4964
        %4966 = vmatmul.f32.gmra.mxu0 %v1560
        %v4967 = vpop.f32.mrf.mxu0
        %v4968 = vadd.f32 0.0, %v4967
        %4969 = vmatmul.f32.gmra.mxu0 %v1568
        %v4970 = vpop.f32.mrf.mxu0
        %v4971 = vadd.f32 0.0, %v4970
        %4972 = vmatmul.f32.gmra.mxu0 %v1576
        %v4973 = vpop.f32.mrf.mxu0
        %v4974 = vadd.f32 0.0, %v4973
        %4975 = vmatmul.f32.gmra.mxu0 %v1584
        %v4976 = vpop.f32.mrf.mxu0
        %v4977 = vadd.f32 0.0, %v4976
        %4978 = vmatmul.f32.gmra.mxu0 %v1592
        %v4979 = vpop.f32.mrf.mxu0
        %v4980 = vadd.f32 0.0, %v4979
        %4981 = vmatmul.f32.gmra.mxu0 %v1600
        %v4982 = vpop.f32.mrf.mxu0
        %v4983 = vadd.f32 0.0, %v4982
        %4984 = vmatmul.f32.gmra.mxu0 %v1608
        %v4985 = vpop.f32.mrf.mxu0
        %v4986 = vadd.f32 0.0, %v4985
        %4987 = vmatmul.f32.gmra.mxu0 %v1616
        %v4988 = vpop.f32.mrf.mxu0
        %v4989 = vadd.f32 0.0, %v4988
        %4990 = vmatmul.f32.gmra.mxu0 %v1624
        %v4991 = vpop.f32.mrf.mxu0
        %v4992 = vadd.f32 0.0, %v4991
        %4993 = vmatmul.f32.gmra.mxu0 %v1632
        %v4994 = vpop.f32.mrf.mxu0
        %v4995 = vadd.f32 0.0, %v4994
        %4996 = vmatmul.f32.gmra.mxu0 %v1640
        %v4997 = vpop.f32.mrf.mxu0
        %v4998 = vadd.f32 0.0, %v4997
        %4999 = vmatmul.f32.gmra.mxu0 %v1648
        %v5000 = vpop.f32.mrf.mxu0
        %v5001 = vadd.f32 0.0, %v5000
        %5002 = vmatmul.f32.gmra.mxu0 %v1656
        %v5003 = vpop.f32.mrf.mxu0
        %v5004 = vadd.f32 0.0, %v5003
        %5005 = vmatmul.f32.gmra.mxu0 %v1664
        %v5006 = vpop.f32.mrf.mxu0
        %v5007 = vadd.f32 0.0, %v5006
        %5008 = vdwg.mxu0
        %5009 = vmatpush.msra.mxu0 %v1799
        %5010 = vmatpush.msra.mxu0 %v1795
        %5011 = vmatpush.msra.mxu0 %v1791
        %5012 = vmatpush.msra.mxu0 %v1787
        %5013 = vmatpush.msra.mxu0 %v1783
        %5014 = vmatpush.msra.mxu0 %v1779
        %5015 = vmatpush.msra.mxu0 %v1775
        %5016 = vmatpush.msra.mxu0 %v1771
        %5017 = vmatpush.msra.mxu0 %v1767
        %5018 = vmatpush.msra.mxu0 %v1763
        %5019 = vmatpush.msra.mxu0 %v1759
        %5020 = vmatpush.msra.mxu0 %v1755
        %5021 = vmatpush.msra.mxu0 %v1751
        %5022 = vmatpush.msra.mxu0 %v1747
        %5023 = vmatpush.msra.mxu0 %v1743
        %5024 = vmatpush.msra.mxu0 %v1739
        %5025 = vmatmul.f32.gmra.mxu0 %v1417
        %v5026 = vpop.f32.mrf.mxu0
        %v5027 = vadd.f32 %v4914, %v5026
        %5028 = vmatmul.f32.gmra.mxu0 %v1425
        %v5029 = vpop.f32.mrf.mxu0
        %v5030 = vadd.f32 %v4917, %v5029
        %5031 = vmatmul.f32.gmra.mxu0 %v1433
        %v5032 = vpop.f32.mrf.mxu0
        %v5033 = vadd.f32 %v4920, %v5032
        %5034 = vmatmul.f32.gmra.mxu0 %v1441
        %v5035 = vpop.f32.mrf.mxu0
        %v5036 = vadd.f32 %v4923, %v5035
        %5037 = vmatmul.f32.gmra.mxu0 %v1449
        %v5038 = vpop.f32.mrf.mxu0
        %v5039 = vadd.f32 %v4926, %v5038
        %5040 = vmatmul.f32.gmra.mxu0 %v1457
        %v5041 = vpop.f32.mrf.mxu0
        %v5042 = vadd.f32 %v4929, %v5041
        %5043 = vmatmul.f32.gmra.mxu0 %v1465
        %v5044 = vpop.f32.mrf.mxu0
        %v5045 = vadd.f32 %v4932, %v5044
        %5046 = vmatmul.f32.gmra.mxu0 %v1473
        %v5047 = vpop.f32.mrf.mxu0
        %v5048 = vadd.f32 %v4935, %v5047
        %5049 = vmatmul.f32.gmra.mxu0 %v1481
        %v5050 = vpop.f32.mrf.mxu0
        %v5051 = vadd.f32 %v4938, %v5050
        %5052 = vmatmul.f32.gmra.mxu0 %v1489
        %v5053 = vpop.f32.mrf.mxu0
        %v5054 = vadd.f32 %v4941, %v5053
        %5055 = vmatmul.f32.gmra.mxu0 %v1497
        %v5056 = vpop.f32.mrf.mxu0
        %v5057 = vadd.f32 %v4944, %v5056
        %5058 = vmatmul.f32.gmra.mxu0 %v1505
        %v5059 = vpop.f32.mrf.mxu0
        %v5060 = vadd.f32 %v4947, %v5059
        %5061 = vmatmul.f32.gmra.mxu0 %v1513
        %v5062 = vpop.f32.mrf.mxu0
        %v5063 = vadd.f32 %v4950, %v5062
        %5064 = vmatmul.f32.gmra.mxu0 %v1521
        %v5065 = vpop.f32.mrf.mxu0
        %v5066 = vadd.f32 %v4953, %v5065
        %5067 = vmatmul.f32.gmra.mxu0 %v1529
        %v5068 = vpop.f32.mrf.mxu0
        %v5069 = vadd.f32 %v4956, %v5068
        %5070 = vmatmul.f32.gmra.mxu0 %v1537
        %v5071 = vpop.f32.mrf.mxu0
        %v5072 = vadd.f32 %v4959, %v5071
        %5073 = vmatmul.f32.gmra.mxu0 %v1545
        %v5074 = vpop.f32.mrf.mxu0
        %v5075 = vadd.f32 %v4962, %v5074
        %5076 = vmatmul.f32.gmra.mxu0 %v1553
        %v5077 = vpop.f32.mrf.mxu0
        %v5078 = vadd.f32 %v4965, %v5077
        %5079 = vmatmul.f32.gmra.mxu0 %v1561
        %v5080 = vpop.f32.mrf.mxu0
        %v5081 = vadd.f32 %v4968, %v5080
        %5082 = vmatmul.f32.gmra.mxu0 %v1569
        %v5083 = vpop.f32.mrf.mxu0
        %v5084 = vadd.f32 %v4971, %v5083
        %5085 = vmatmul.f32.gmra.mxu0 %v1577
        %v5086 = vpop.f32.mrf.mxu0
        %v5087 = vadd.f32 %v4974, %v5086
        %5088 = vmatmul.f32.gmra.mxu0 %v1585
        %v5089 = vpop.f32.mrf.mxu0
        %v5090 = vadd.f32 %v4977, %v5089
        %5091 = vmatmul.f32.gmra.mxu0 %v1593
        %v5092 = vpop.f32.mrf.mxu0
        %v5093 = vadd.f32 %v4980, %v5092
        %5094 = vmatmul.f32.gmra.mxu0 %v1601
        %v5095 = vpop.f32.mrf.mxu0
        %v5096 = vadd.f32 %v4983, %v5095
        %5097 = vmatmul.f32.gmra.mxu0 %v1609
        %v5098 = vpop.f32.mrf.mxu0
        %v5099 = vadd.f32 %v4986, %v5098
        %5100 = vmatmul.f32.gmra.mxu0 %v1617
        %v5101 = vpop.f32.mrf.mxu0
        %v5102 = vadd.f32 %v4989, %v5101
        %5103 = vmatmul.f32.gmra.mxu0 %v1625
        %v5104 = vpop.f32.mrf.mxu0
        %v5105 = vadd.f32 %v4992, %v5104
        %5106 = vmatmul.f32.gmra.mxu0 %v1633
        %v5107 = vpop.f32.mrf.mxu0
        %v5108 = vadd.f32 %v4995, %v5107
        %5109 = vmatmul.f32.gmra.mxu0 %v1641
        %v5110 = vpop.f32.mrf.mxu0
        %v5111 = vadd.f32 %v4998, %v5110
        %5112 = vmatmul.f32.gmra.mxu0 %v1649
        %v5113 = vpop.f32.mrf.mxu0
        %v5114 = vadd.f32 %v5001, %v5113
        %5115 = vmatmul.f32.gmra.mxu0 %v1657
        %v5116 = vpop.f32.mrf.mxu0
        %v5117 = vadd.f32 %v5004, %v5116
        %5118 = vmatmul.f32.gmra.mxu0 %v1665
        %v5119 = vpop.f32.mrf.mxu0
        %v5120 = vadd.f32 %v5007, %v5119
        %5121 = vdwg.mxu0
        %5122 = vmatpush.msra.mxu0 %v1863
        %5123 = vmatpush.msra.mxu0 %v1859
        %5124 = vmatpush.msra.mxu0 %v1855
        %5125 = vmatpush.msra.mxu0 %v1851
        %5126 = vmatpush.msra.mxu0 %v1847
        %5127 = vmatpush.msra.mxu0 %v1843
        %5128 = vmatpush.msra.mxu0 %v1839
        %5129 = vmatpush.msra.mxu0 %v1835
        %5130 = vmatpush.msra.mxu0 %v1831
        %5131 = vmatpush.msra.mxu0 %v1827
        %5132 = vmatpush.msra.mxu0 %v1823
        %5133 = vmatpush.msra.mxu0 %v1819
        %5134 = vmatpush.msra.mxu0 %v1815
        %5135 = vmatpush.msra.mxu0 %v1811
        %5136 = vmatpush.msra.mxu0 %v1807
        %5137 = vmatpush.msra.mxu0 %v1803
        %5138 = vmatmul.f32.gmra.mxu0 %v1418
        %v5139 = vpop.f32.mrf.mxu0
        %v5140 = vadd.f32 %v5027, %v5139
        %5141 = vmatmul.f32.gmra.mxu0 %v1426
        %v5142 = vpop.f32.mrf.mxu0
        %v5143 = vadd.f32 %v5030, %v5142
        %5144 = vmatmul.f32.gmra.mxu0 %v1434
        %v5145 = vpop.f32.mrf.mxu0
        %v5146 = vadd.f32 %v5033, %v5145
        %5147 = vmatmul.f32.gmra.mxu0 %v1442
        %v5148 = vpop.f32.mrf.mxu0
        %v5149 = vadd.f32 %v5036, %v5148
        %5150 = vmatmul.f32.gmra.mxu0 %v1450
        %v5151 = vpop.f32.mrf.mxu0
        %v5152 = vadd.f32 %v5039, %v5151
        %5153 = vmatmul.f32.gmra.mxu0 %v1458
        %v5154 = vpop.f32.mrf.mxu0
        %v5155 = vadd.f32 %v5042, %v5154
        %5156 = vmatmul.f32.gmra.mxu0 %v1466
        %v5157 = vpop.f32.mrf.mxu0
        %v5158 = vadd.f32 %v5045, %v5157
        %5159 = vmatmul.f32.gmra.mxu0 %v1474
        %v5160 = vpop.f32.mrf.mxu0
        %v5161 = vadd.f32 %v5048, %v5160
        %5162 = vmatmul.f32.gmra.mxu0 %v1482
        %v5163 = vpop.f32.mrf.mxu0
        %v5164 = vadd.f32 %v5051, %v5163
        %5165 = vmatmul.f32.gmra.mxu0 %v1490
        %v5166 = vpop.f32.mrf.mxu0
        %v5167 = vadd.f32 %v5054, %v5166
        %5168 = vmatmul.f32.gmra.mxu0 %v1498
        %v5169 = vpop.f32.mrf.mxu0
        %v5170 = vadd.f32 %v5057, %v5169
        %5171 = vmatmul.f32.gmra.mxu0 %v1506
        %v5172 = vpop.f32.mrf.mxu0
        %v5173 = vadd.f32 %v5060, %v5172
        %5174 = vmatmul.f32.gmra.mxu0 %v1514
        %v5175 = vpop.f32.mrf.mxu0
        %v5176 = vadd.f32 %v5063, %v5175
        %5177 = vmatmul.f32.gmra.mxu0 %v1522
        %v5178 = vpop.f32.mrf.mxu0
        %v5179 = vadd.f32 %v5066, %v5178
        %5180 = vmatmul.f32.gmra.mxu0 %v1530
        %v5181 = vpop.f32.mrf.mxu0
        %v5182 = vadd.f32 %v5069, %v5181
        %5183 = vmatmul.f32.gmra.mxu0 %v1538
        %v5184 = vpop.f32.mrf.mxu0
        %v5185 = vadd.f32 %v5072, %v5184
        %5186 = vmatmul.f32.gmra.mxu0 %v1546
        %v5187 = vpop.f32.mrf.mxu0
        %v5188 = vadd.f32 %v5075, %v5187
        %5189 = vmatmul.f32.gmra.mxu0 %v1554
        %v5190 = vpop.f32.mrf.mxu0
        %v5191 = vadd.f32 %v5078, %v5190
        %5192 = vmatmul.f32.gmra.mxu0 %v1562
        %v5193 = vpop.f32.mrf.mxu0
        %v5194 = vadd.f32 %v5081, %v5193
        %5195 = vmatmul.f32.gmra.mxu0 %v1570
        %v5196 = vpop.f32.mrf.mxu0
        %v5197 = vadd.f32 %v5084, %v5196
        %5198 = vmatmul.f32.gmra.mxu0 %v1578
        %v5199 = vpop.f32.mrf.mxu0
        %v5200 = vadd.f32 %v5087, %v5199
        %5201 = vmatmul.f32.gmra.mxu0 %v1586
        %v5202 = vpop.f32.mrf.mxu0
        %v5203 = vadd.f32 %v5090, %v5202
        %5204 = vmatmul.f32.gmra.mxu0 %v1594
        %v5205 = vpop.f32.mrf.mxu0
        %v5206 = vadd.f32 %v5093, %v5205
        %5207 = vmatmul.f32.gmra.mxu0 %v1602
        %v5208 = vpop.f32.mrf.mxu0
        %v5209 = vadd.f32 %v5096, %v5208
        %5210 = vmatmul.f32.gmra.mxu0 %v1610
        %v5211 = vpop.f32.mrf.mxu0
        %v5212 = vadd.f32 %v5099, %v5211
        %5213 = vmatmul.f32.gmra.mxu0 %v1618
        %v5214 = vpop.f32.mrf.mxu0
        %v5215 = vadd.f32 %v5102, %v5214
        %5216 = vmatmul.f32.gmra.mxu0 %v1626
        %v5217 = vpop.f32.mrf.mxu0
        %v5218 = vadd.f32 %v5105, %v5217
        %5219 = vmatmul.f32.gmra.mxu0 %v1634
        %v5220 = vpop.f32.mrf.mxu0
        %v5221 = vadd.f32 %v5108, %v5220
        %5222 = vmatmul.f32.gmra.mxu0 %v1642
        %v5223 = vpop.f32.mrf.mxu0
        %v5224 = vadd.f32 %v5111, %v5223
        %5225 = vmatmul.f32.gmra.mxu0 %v1650
        %v5226 = vpop.f32.mrf.mxu0
        %v5227 = vadd.f32 %v5114, %v5226
        %5228 = vmatmul.f32.gmra.mxu0 %v1658
        %v5229 = vpop.f32.mrf.mxu0
        %v5230 = vadd.f32 %v5117, %v5229
        %5231 = vmatmul.f32.gmra.mxu0 %v1666
        %v5232 = vpop.f32.mrf.mxu0
        %v5233 = vadd.f32 %v5120, %v5232
        %5234 = vdwg.mxu0
        %5235 = vmatpush.msra.mxu0 %v1927
        %5236 = vmatpush.msra.mxu0 %v1923
        %5237 = vmatpush.msra.mxu0 %v1919
        %5238 = vmatpush.msra.mxu0 %v1915
        %5239 = vmatpush.msra.mxu0 %v1911
        %5240 = vmatpush.msra.mxu0 %v1907
        %5241 = vmatpush.msra.mxu0 %v1903
        %5242 = vmatpush.msra.mxu0 %v1899
        %5243 = vmatpush.msra.mxu0 %v1895
        %5244 = vmatpush.msra.mxu0 %v1891
        %5245 = vmatpush.msra.mxu0 %v1887
        %5246 = vmatpush.msra.mxu0 %v1883
        %5247 = vmatpush.msra.mxu0 %v1879
        %5248 = vmatpush.msra.mxu0 %v1875
        %5249 = vmatpush.msra.mxu0 %v1871
        %5250 = vmatpush.msra.mxu0 %v1867
        %5251 = vmatmul.f32.gmra.mxu0 %v1419
        %v5252 = vpop.f32.mrf.mxu0
        %v5253 = vadd.f32 %v5140, %v5252
        %5254 = vmatmul.f32.gmra.mxu0 %v1427
        %v5255 = vpop.f32.mrf.mxu0
        %v5256 = vadd.f32 %v5143, %v5255
        %5257 = vmatmul.f32.gmra.mxu0 %v1435
        %v5258 = vpop.f32.mrf.mxu0
        %v5259 = vadd.f32 %v5146, %v5258
        %5260 = vmatmul.f32.gmra.mxu0 %v1443
        %v5261 = vpop.f32.mrf.mxu0
        %v5262 = vadd.f32 %v5149, %v5261
        %5263 = vmatmul.f32.gmra.mxu0 %v1451
        %v5264 = vpop.f32.mrf.mxu0
        %v5265 = vadd.f32 %v5152, %v5264
        %5266 = vmatmul.f32.gmra.mxu0 %v1459
        %v5267 = vpop.f32.mrf.mxu0
        %v5268 = vadd.f32 %v5155, %v5267
        %5269 = vmatmul.f32.gmra.mxu0 %v1467
        %v5270 = vpop.f32.mrf.mxu0
        %v5271 = vadd.f32 %v5158, %v5270
        %5272 = vmatmul.f32.gmra.mxu0 %v1475
        %v5273 = vpop.f32.mrf.mxu0
        %v5274 = vadd.f32 %v5161, %v5273
        %5275 = vmatmul.f32.gmra.mxu0 %v1483
        %v5276 = vpop.f32.mrf.mxu0
        %v5277 = vadd.f32 %v5164, %v5276
        %5278 = vmatmul.f32.gmra.mxu0 %v1491
        %v5279 = vpop.f32.mrf.mxu0
        %v5280 = vadd.f32 %v5167, %v5279
        %5281 = vmatmul.f32.gmra.mxu0 %v1499
        %v5282 = vpop.f32.mrf.mxu0
        %v5283 = vadd.f32 %v5170, %v5282
        %5284 = vmatmul.f32.gmra.mxu0 %v1507
        %v5285 = vpop.f32.mrf.mxu0
        %v5286 = vadd.f32 %v5173, %v5285
        %5287 = vmatmul.f32.gmra.mxu0 %v1515
        %v5288 = vpop.f32.mrf.mxu0
        %v5289 = vadd.f32 %v5176, %v5288
        %5290 = vmatmul.f32.gmra.mxu0 %v1523
        %v5291 = vpop.f32.mrf.mxu0
        %v5292 = vadd.f32 %v5179, %v5291
        %5293 = vmatmul.f32.gmra.mxu0 %v1531
        %v5294 = vpop.f32.mrf.mxu0
        %v5295 = vadd.f32 %v5182, %v5294
        %5296 = vmatmul.f32.gmra.mxu0 %v1539
        %v5297 = vpop.f32.mrf.mxu0
        %v5298 = vadd.f32 %v5185, %v5297
        %5299 = vmatmul.f32.gmra.mxu0 %v1547
        %v5300 = vpop.f32.mrf.mxu0
        %v5301 = vadd.f32 %v5188, %v5300
        %5302 = vmatmul.f32.gmra.mxu0 %v1555
        %v5303 = vpop.f32.mrf.mxu0
        %v5304 = vadd.f32 %v5191, %v5303
        %5305 = vmatmul.f32.gmra.mxu0 %v1563
        %v5306 = vpop.f32.mrf.mxu0
        %v5307 = vadd.f32 %v5194, %v5306
        %5308 = vmatmul.f32.gmra.mxu0 %v1571
        %v5309 = vpop.f32.mrf.mxu0
        %v5310 = vadd.f32 %v5197, %v5309
        %5311 = vmatmul.f32.gmra.mxu0 %v1579
        %v5312 = vpop.f32.mrf.mxu0
        %v5313 = vadd.f32 %v5200, %v5312
        %5314 = vmatmul.f32.gmra.mxu0 %v1587
        %v5315 = vpop.f32.mrf.mxu0
        %v5316 = vadd.f32 %v5203, %v5315
        %5317 = vmatmul.f32.gmra.mxu0 %v1595
        %v5318 = vpop.f32.mrf.mxu0
        %v5319 = vadd.f32 %v5206, %v5318
        %5320 = vmatmul.f32.gmra.mxu0 %v1603
        %v5321 = vpop.f32.mrf.mxu0
        %v5322 = vadd.f32 %v5209, %v5321
        %5323 = vmatmul.f32.gmra.mxu0 %v1611
        %v5324 = vpop.f32.mrf.mxu0
        %v5325 = vadd.f32 %v5212, %v5324
        %5326 = vmatmul.f32.gmra.mxu0 %v1619
        %v5327 = vpop.f32.mrf.mxu0
        %v5328 = vadd.f32 %v5215, %v5327
        %5329 = vmatmul.f32.gmra.mxu0 %v1627
        %v5330 = vpop.f32.mrf.mxu0
        %v5331 = vadd.f32 %v5218, %v5330
        %5332 = vmatmul.f32.gmra.mxu0 %v1635
        %v5333 = vpop.f32.mrf.mxu0
        %v5334 = vadd.f32 %v5221, %v5333
        %5335 = vmatmul.f32.gmra.mxu0 %v1643
        %v5336 = vpop.f32.mrf.mxu0
        %v5337 = vadd.f32 %v5224, %v5336
        %5338 = vmatmul.f32.gmra.mxu0 %v1651
        %v5339 = vpop.f32.mrf.mxu0
        %v5340 = vadd.f32 %v5227, %v5339
        %5341 = vmatmul.f32.gmra.mxu0 %v1659
        %v5342 = vpop.f32.mrf.mxu0
        %v5343 = vadd.f32 %v5230, %v5342
        %5344 = vmatmul.f32.gmra.mxu0 %v1667
        %v5345 = vpop.f32.mrf.mxu0
        %v5346 = vadd.f32 %v5233, %v5345
        %5347 = vdwg.mxu0
        %5348 = vmatpush.msra.mxu0 %v1991
        %5349 = vmatpush.msra.mxu0 %v1987
        %5350 = vmatpush.msra.mxu0 %v1983
        %5351 = vmatpush.msra.mxu0 %v1979
        %5352 = vmatpush.msra.mxu0 %v1975
        %5353 = vmatpush.msra.mxu0 %v1971
        %5354 = vmatpush.msra.mxu0 %v1967
        %5355 = vmatpush.msra.mxu0 %v1963
        %5356 = vmatpush.msra.mxu0 %v1959
        %5357 = vmatpush.msra.mxu0 %v1955
        %5358 = vmatpush.msra.mxu0 %v1951
        %5359 = vmatpush.msra.mxu0 %v1947
        %5360 = vmatpush.msra.mxu0 %v1943
        %5361 = vmatpush.msra.mxu0 %v1939
        %5362 = vmatpush.msra.mxu0 %v1935
        %5363 = vmatpush.msra.mxu0 %v1931
        %5364 = vmatmul.f32.gmra.mxu0 %v1420
        %v5365 = vpop.f32.mrf.mxu0
        %v5366 = vadd.f32 %v5253, %v5365
        %5367 = vmatmul.f32.gmra.mxu0 %v1428
        %v5368 = vpop.f32.mrf.mxu0
        %v5369 = vadd.f32 %v5256, %v5368
        %5370 = vmatmul.f32.gmra.mxu0 %v1436
        %v5371 = vpop.f32.mrf.mxu0
        %v5372 = vadd.f32 %v5259, %v5371
        %5373 = vmatmul.f32.gmra.mxu0 %v1444
        %v5374 = vpop.f32.mrf.mxu0
        %v5375 = vadd.f32 %v5262, %v5374
        %5376 = vmatmul.f32.gmra.mxu0 %v1452
        %v5377 = vpop.f32.mrf.mxu0
        %v5378 = vadd.f32 %v5265, %v5377
        %5379 = vmatmul.f32.gmra.mxu0 %v1460
        %v5380 = vpop.f32.mrf.mxu0
        %v5381 = vadd.f32 %v5268, %v5380
        %5382 = vmatmul.f32.gmra.mxu0 %v1468
        %v5383 = vpop.f32.mrf.mxu0
        %v5384 = vadd.f32 %v5271, %v5383
        %5385 = vmatmul.f32.gmra.mxu0 %v1476
        %v5386 = vpop.f32.mrf.mxu0
        %v5387 = vadd.f32 %v5274, %v5386
        %5388 = vmatmul.f32.gmra.mxu0 %v1484
        %v5389 = vpop.f32.mrf.mxu0
        %v5390 = vadd.f32 %v5277, %v5389
        %5391 = vmatmul.f32.gmra.mxu0 %v1492
        %v5392 = vpop.f32.mrf.mxu0
        %v5393 = vadd.f32 %v5280, %v5392
        %5394 = vmatmul.f32.gmra.mxu0 %v1500
        %v5395 = vpop.f32.mrf.mxu0
        %v5396 = vadd.f32 %v5283, %v5395
        %5397 = vmatmul.f32.gmra.mxu0 %v1508
        %v5398 = vpop.f32.mrf.mxu0
        %v5399 = vadd.f32 %v5286, %v5398
        %5400 = vmatmul.f32.gmra.mxu0 %v1516
        %v5401 = vpop.f32.mrf.mxu0
        %v5402 = vadd.f32 %v5289, %v5401
        %5403 = vmatmul.f32.gmra.mxu0 %v1524
        %v5404 = vpop.f32.mrf.mxu0
        %v5405 = vadd.f32 %v5292, %v5404
        %5406 = vmatmul.f32.gmra.mxu0 %v1532
        %v5407 = vpop.f32.mrf.mxu0
        %v5408 = vadd.f32 %v5295, %v5407
        %5409 = vmatmul.f32.gmra.mxu0 %v1540
        %v5410 = vpop.f32.mrf.mxu0
        %v5411 = vadd.f32 %v5298, %v5410
        %5412 = vmatmul.f32.gmra.mxu0 %v1548
        %v5413 = vpop.f32.mrf.mxu0
        %v5414 = vadd.f32 %v5301, %v5413
        %5415 = vmatmul.f32.gmra.mxu0 %v1556
        %v5416 = vpop.f32.mrf.mxu0
        %v5417 = vadd.f32 %v5304, %v5416
        %5418 = vmatmul.f32.gmra.mxu0 %v1564
        %v5419 = vpop.f32.mrf.mxu0
        %v5420 = vadd.f32 %v5307, %v5419
        %5421 = vmatmul.f32.gmra.mxu0 %v1572
        %v5422 = vpop.f32.mrf.mxu0
        %v5423 = vadd.f32 %v5310, %v5422
        %5424 = vmatmul.f32.gmra.mxu0 %v1580
        %v5425 = vpop.f32.mrf.mxu0
        %v5426 = vadd.f32 %v5313, %v5425
        %5427 = vmatmul.f32.gmra.mxu0 %v1588
        %v5428 = vpop.f32.mrf.mxu0
        %v5429 = vadd.f32 %v5316, %v5428
        %5430 = vmatmul.f32.gmra.mxu0 %v1596
        %v5431 = vpop.f32.mrf.mxu0
        %v5432 = vadd.f32 %v5319, %v5431
        %5433 = vmatmul.f32.gmra.mxu0 %v1604
        %v5434 = vpop.f32.mrf.mxu0
        %v5435 = vadd.f32 %v5322, %v5434
        %5436 = vmatmul.f32.gmra.mxu0 %v1612
        %v5437 = vpop.f32.mrf.mxu0
        %v5438 = vadd.f32 %v5325, %v5437
        %5439 = vmatmul.f32.gmra.mxu0 %v1620
        %v5440 = vpop.f32.mrf.mxu0
        %v5441 = vadd.f32 %v5328, %v5440
        %5442 = vmatmul.f32.gmra.mxu0 %v1628
        %v5443 = vpop.f32.mrf.mxu0
        %v5444 = vadd.f32 %v5331, %v5443
        %5445 = vmatmul.f32.gmra.mxu0 %v1636
        %v5446 = vpop.f32.mrf.mxu0
        %v5447 = vadd.f32 %v5334, %v5446
        %5448 = vmatmul.f32.gmra.mxu0 %v1644
        %v5449 = vpop.f32.mrf.mxu0
        %v5450 = vadd.f32 %v5337, %v5449
        %5451 = vmatmul.f32.gmra.mxu0 %v1652
        %v5452 = vpop.f32.mrf.mxu0
        %v5453 = vadd.f32 %v5340, %v5452
        %5454 = vmatmul.f32.gmra.mxu0 %v1660
        %v5455 = vpop.f32.mrf.mxu0
        %v5456 = vadd.f32 %v5343, %v5455
        %5457 = vmatmul.f32.gmra.mxu0 %v1668
        %v5458 = vpop.f32.mrf.mxu0
        %v5459 = vadd.f32 %v5346, %v5458
        %5460 = vdwg.mxu0
        %5461 = vmatpush.msra.mxu0 %v2055
        %5462 = vmatpush.msra.mxu0 %v2051
        %5463 = vmatpush.msra.mxu0 %v2047
        %5464 = vmatpush.msra.mxu0 %v2043
        %5465 = vmatpush.msra.mxu0 %v2039
        %5466 = vmatpush.msra.mxu0 %v2035
        %5467 = vmatpush.msra.mxu0 %v2031
        %5468 = vmatpush.msra.mxu0 %v2027
        %5469 = vmatpush.msra.mxu0 %v2023
        %5470 = vmatpush.msra.mxu0 %v2019
        %5471 = vmatpush.msra.mxu0 %v2015
        %5472 = vmatpush.msra.mxu0 %v2011
        %5473 = vmatpush.msra.mxu0 %v2007
        %5474 = vmatpush.msra.mxu0 %v2003
        %5475 = vmatpush.msra.mxu0 %v1999
        %5476 = vmatpush.msra.mxu0 %v1995
        %5477 = vmatmul.f32.gmra.mxu0 %v1421
        %v5478 = vpop.f32.mrf.mxu0
        %v5479 = vadd.f32 %v5366, %v5478
        %5480 = vmatmul.f32.gmra.mxu0 %v1429
        %v5481 = vpop.f32.mrf.mxu0
        %v5482 = vadd.f32 %v5369, %v5481
        %5483 = vmatmul.f32.gmra.mxu0 %v1437
        %v5484 = vpop.f32.mrf.mxu0
        %v5485 = vadd.f32 %v5372, %v5484
        %5486 = vmatmul.f32.gmra.mxu0 %v1445
        %v5487 = vpop.f32.mrf.mxu0
        %v5488 = vadd.f32 %v5375, %v5487
        %5489 = vmatmul.f32.gmra.mxu0 %v1453
        %v5490 = vpop.f32.mrf.mxu0
        %v5491 = vadd.f32 %v5378, %v5490
        %5492 = vmatmul.f32.gmra.mxu0 %v1461
        %v5493 = vpop.f32.mrf.mxu0
        %v5494 = vadd.f32 %v5381, %v5493
        %5495 = vmatmul.f32.gmra.mxu0 %v1469
        %v5496 = vpop.f32.mrf.mxu0
        %v5497 = vadd.f32 %v5384, %v5496
        %5498 = vmatmul.f32.gmra.mxu0 %v1477
        %v5499 = vpop.f32.mrf.mxu0
        %v5500 = vadd.f32 %v5387, %v5499
        %5501 = vmatmul.f32.gmra.mxu0 %v1485
        %v5502 = vpop.f32.mrf.mxu0
        %v5503 = vadd.f32 %v5390, %v5502
        %5504 = vmatmul.f32.gmra.mxu0 %v1493
        %v5505 = vpop.f32.mrf.mxu0
        %v5506 = vadd.f32 %v5393, %v5505
        %5507 = vmatmul.f32.gmra.mxu0 %v1501
        %v5508 = vpop.f32.mrf.mxu0
        %v5509 = vadd.f32 %v5396, %v5508
        %5510 = vmatmul.f32.gmra.mxu0 %v1509
        %v5511 = vpop.f32.mrf.mxu0
        %v5512 = vadd.f32 %v5399, %v5511
        %5513 = vmatmul.f32.gmra.mxu0 %v1517
        %v5514 = vpop.f32.mrf.mxu0
        %v5515 = vadd.f32 %v5402, %v5514
        %5516 = vmatmul.f32.gmra.mxu0 %v1525
        %v5517 = vpop.f32.mrf.mxu0
        %v5518 = vadd.f32 %v5405, %v5517
        %5519 = vmatmul.f32.gmra.mxu0 %v1533
        %v5520 = vpop.f32.mrf.mxu0
        %v5521 = vadd.f32 %v5408, %v5520
        %5522 = vmatmul.f32.gmra.mxu0 %v1541
        %v5523 = vpop.f32.mrf.mxu0
        %v5524 = vadd.f32 %v5411, %v5523
        %5525 = vmatmul.f32.gmra.mxu0 %v1549
        %v5526 = vpop.f32.mrf.mxu0
        %v5527 = vadd.f32 %v5414, %v5526
        %5528 = vmatmul.f32.gmra.mxu0 %v1557
        %v5529 = vpop.f32.mrf.mxu0
        %v5530 = vadd.f32 %v5417, %v5529
        %5531 = vmatmul.f32.gmra.mxu0 %v1565
        %v5532 = vpop.f32.mrf.mxu0
        %v5533 = vadd.f32 %v5420, %v5532
        %5534 = vmatmul.f32.gmra.mxu0 %v1573
        %v5535 = vpop.f32.mrf.mxu0
        %v5536 = vadd.f32 %v5423, %v5535
        %5537 = vmatmul.f32.gmra.mxu0 %v1581
        %v5538 = vpop.f32.mrf.mxu0
        %v5539 = vadd.f32 %v5426, %v5538
        %5540 = vmatmul.f32.gmra.mxu0 %v1589
        %v5541 = vpop.f32.mrf.mxu0
        %v5542 = vadd.f32 %v5429, %v5541
        %5543 = vmatmul.f32.gmra.mxu0 %v1597
        %v5544 = vpop.f32.mrf.mxu0
        %v5545 = vadd.f32 %v5432, %v5544
        %5546 = vmatmul.f32.gmra.mxu0 %v1605
        %v5547 = vpop.f32.mrf.mxu0
        %v5548 = vadd.f32 %v5435, %v5547
        %5549 = vmatmul.f32.gmra.mxu0 %v1613
        %v5550 = vpop.f32.mrf.mxu0
        %v5551 = vadd.f32 %v5438, %v5550
        %5552 = vmatmul.f32.gmra.mxu0 %v1621
        %v5553 = vpop.f32.mrf.mxu0
        %v5554 = vadd.f32 %v5441, %v5553
        %5555 = vmatmul.f32.gmra.mxu0 %v1629
        %v5556 = vpop.f32.mrf.mxu0
        %v5557 = vadd.f32 %v5444, %v5556
        %5558 = vmatmul.f32.gmra.mxu0 %v1637
        %v5559 = vpop.f32.mrf.mxu0
        %v5560 = vadd.f32 %v5447, %v5559
        %5561 = vmatmul.f32.gmra.mxu0 %v1645
        %v5562 = vpop.f32.mrf.mxu0
        %v5563 = vadd.f32 %v5450, %v5562
        %5564 = vmatmul.f32.gmra.mxu0 %v1653
        %v5565 = vpop.f32.mrf.mxu0
        %v5566 = vadd.f32 %v5453, %v5565
        %5567 = vmatmul.f32.gmra.mxu0 %v1661
        %v5568 = vpop.f32.mrf.mxu0
        %v5569 = vadd.f32 %v5456, %v5568
        %5570 = vmatmul.f32.gmra.mxu0 %v1669
        %v5571 = vpop.f32.mrf.mxu0
        %v5572 = vadd.f32 %v5459, %v5571
        %5573 = vdwg.mxu0
        %5574 = vmatpush.msra.mxu0 %v2119
        %5575 = vmatpush.msra.mxu0 %v2115
        %5576 = vmatpush.msra.mxu0 %v2111
        %5577 = vmatpush.msra.mxu0 %v2107
        %5578 = vmatpush.msra.mxu0 %v2103
        %5579 = vmatpush.msra.mxu0 %v2099
        %5580 = vmatpush.msra.mxu0 %v2095
        %5581 = vmatpush.msra.mxu0 %v2091
        %5582 = vmatpush.msra.mxu0 %v2087
        %5583 = vmatpush.msra.mxu0 %v2083
        %5584 = vmatpush.msra.mxu0 %v2079
        %5585 = vmatpush.msra.mxu0 %v2075
        %5586 = vmatpush.msra.mxu0 %v2071
        %5587 = vmatpush.msra.mxu0 %v2067
        %5588 = vmatpush.msra.mxu0 %v2063
        %5589 = vmatpush.msra.mxu0 %v2059
        %5590 = vmatmul.f32.gmra.mxu0 %v1422
        %v5591 = vpop.f32.mrf.mxu0
        %v5592 = vadd.f32 %v5479, %v5591
        %5593 = vmatmul.f32.gmra.mxu0 %v1430
        %v5594 = vpop.f32.mrf.mxu0
        %v5595 = vadd.f32 %v5482, %v5594
        %5596 = vmatmul.f32.gmra.mxu0 %v1438
        %v5597 = vpop.f32.mrf.mxu0
        %v5598 = vadd.f32 %v5485, %v5597
        %5599 = vmatmul.f32.gmra.mxu0 %v1446
        %v5600 = vpop.f32.mrf.mxu0
        %v5601 = vadd.f32 %v5488, %v5600
        %5602 = vmatmul.f32.gmra.mxu0 %v1454
        %v5603 = vpop.f32.mrf.mxu0
        %v5604 = vadd.f32 %v5491, %v5603
        %5605 = vmatmul.f32.gmra.mxu0 %v1462
        %v5606 = vpop.f32.mrf.mxu0
        %v5607 = vadd.f32 %v5494, %v5606
        %5608 = vmatmul.f32.gmra.mxu0 %v1470
        %v5609 = vpop.f32.mrf.mxu0
        %v5610 = vadd.f32 %v5497, %v5609
        %5611 = vmatmul.f32.gmra.mxu0 %v1478
        %v5612 = vpop.f32.mrf.mxu0
        %v5613 = vadd.f32 %v5500, %v5612
        %5614 = vmatmul.f32.gmra.mxu0 %v1486
        %v5615 = vpop.f32.mrf.mxu0
        %v5616 = vadd.f32 %v5503, %v5615
        %5617 = vmatmul.f32.gmra.mxu0 %v1494
        %v5618 = vpop.f32.mrf.mxu0
        %v5619 = vadd.f32 %v5506, %v5618
        %5620 = vmatmul.f32.gmra.mxu0 %v1502
        %v5621 = vpop.f32.mrf.mxu0
        %v5622 = vadd.f32 %v5509, %v5621
        %5623 = vmatmul.f32.gmra.mxu0 %v1510
        %v5624 = vpop.f32.mrf.mxu0
        %v5625 = vadd.f32 %v5512, %v5624
        %5626 = vmatmul.f32.gmra.mxu0 %v1518
        %v5627 = vpop.f32.mrf.mxu0
        %v5628 = vadd.f32 %v5515, %v5627
        %5629 = vmatmul.f32.gmra.mxu0 %v1526
        %v5630 = vpop.f32.mrf.mxu0
        %v5631 = vadd.f32 %v5518, %v5630
        %5632 = vmatmul.f32.gmra.mxu0 %v1534
        %v5633 = vpop.f32.mrf.mxu0
        %v5634 = vadd.f32 %v5521, %v5633
        %5635 = vmatmul.f32.gmra.mxu0 %v1542
        %v5636 = vpop.f32.mrf.mxu0
        %v5637 = vadd.f32 %v5524, %v5636
        %5638 = vmatmul.f32.gmra.mxu0 %v1550
        %v5639 = vpop.f32.mrf.mxu0
        %v5640 = vadd.f32 %v5527, %v5639
        %5641 = vmatmul.f32.gmra.mxu0 %v1558
        %v5642 = vpop.f32.mrf.mxu0
        %v5643 = vadd.f32 %v5530, %v5642
        %5644 = vmatmul.f32.gmra.mxu0 %v1566
        %v5645 = vpop.f32.mrf.mxu0
        %v5646 = vadd.f32 %v5533, %v5645
        %5647 = vmatmul.f32.gmra.mxu0 %v1574
        %v5648 = vpop.f32.mrf.mxu0
        %v5649 = vadd.f32 %v5536, %v5648
        %5650 = vmatmul.f32.gmra.mxu0 %v1582
        %v5651 = vpop.f32.mrf.mxu0
        %v5652 = vadd.f32 %v5539, %v5651
        %5653 = vmatmul.f32.gmra.mxu0 %v1590
        %v5654 = vpop.f32.mrf.mxu0
        %v5655 = vadd.f32 %v5542, %v5654
        %5656 = vmatmul.f32.gmra.mxu0 %v1598
        %v5657 = vpop.f32.mrf.mxu0
        %v5658 = vadd.f32 %v5545, %v5657
        %5659 = vmatmul.f32.gmra.mxu0 %v1606
        %v5660 = vpop.f32.mrf.mxu0
        %v5661 = vadd.f32 %v5548, %v5660
        %5662 = vmatmul.f32.gmra.mxu0 %v1614
        %v5663 = vpop.f32.mrf.mxu0
        %v5664 = vadd.f32 %v5551, %v5663
        %5665 = vmatmul.f32.gmra.mxu0 %v1622
        %v5666 = vpop.f32.mrf.mxu0
        %v5667 = vadd.f32 %v5554, %v5666
        %5668 = vmatmul.f32.gmra.mxu0 %v1630
        %v5669 = vpop.f32.mrf.mxu0
        %v5670 = vadd.f32 %v5557, %v5669
        %5671 = vmatmul.f32.gmra.mxu0 %v1638
        %v5672 = vpop.f32.mrf.mxu0
        %v5673 = vadd.f32 %v5560, %v5672
        %5674 = vmatmul.f32.gmra.mxu0 %v1646
        %v5675 = vpop.f32.mrf.mxu0
        %v5676 = vadd.f32 %v5563, %v5675
        %5677 = vmatmul.f32.gmra.mxu0 %v1654
        %v5678 = vpop.f32.mrf.mxu0
        %v5679 = vadd.f32 %v5566, %v5678
        %5680 = vmatmul.f32.gmra.mxu0 %v1662
        %v5681 = vpop.f32.mrf.mxu0
        %v5682 = vadd.f32 %v5569, %v5681
        %5683 = vmatmul.f32.gmra.mxu0 %v1670
        %v5684 = vpop.f32.mrf.mxu0
        %v5685 = vadd.f32 %v5572, %v5684
        %5686 = vdwg.mxu0
        %5687 = vmatpush.msra.mxu0 %v2183
        %5688 = vmatpush.msra.mxu0 %v2179
        %5689 = vmatpush.msra.mxu0 %v2175
        %5690 = vmatpush.msra.mxu0 %v2171
        %5691 = vmatpush.msra.mxu0 %v2167
        %5692 = vmatpush.msra.mxu0 %v2163
        %5693 = vmatpush.msra.mxu0 %v2159
        %5694 = vmatpush.msra.mxu0 %v2155
        %5695 = vmatpush.msra.mxu0 %v2151
        %5696 = vmatpush.msra.mxu0 %v2147
        %5697 = vmatpush.msra.mxu0 %v2143
        %5698 = vmatpush.msra.mxu0 %v2139
        %5699 = vmatpush.msra.mxu0 %v2135
        %5700 = vmatpush.msra.mxu0 %v2131
        %5701 = vmatpush.msra.mxu0 %v2127
        %5702 = vmatpush.msra.mxu0 %v2123
        %5703 = vmatmul.f32.gmra.mxu0 %v1423
        %v5704 = vpop.f32.mrf.mxu0
        %v5705 = vadd.f32 %v5592, %v5704
        %5706 = vmatmul.f32.gmra.mxu0 %v1431
        %v5707 = vpop.f32.mrf.mxu0
        %v5708 = vadd.f32 %v5595, %v5707
        %5709 = vmatmul.f32.gmra.mxu0 %v1439
        %v5710 = vpop.f32.mrf.mxu0
        %v5711 = vadd.f32 %v5598, %v5710
        %5712 = vmatmul.f32.gmra.mxu0 %v1447
        %v5713 = vpop.f32.mrf.mxu0
        %v5714 = vadd.f32 %v5601, %v5713
        %5715 = vmatmul.f32.gmra.mxu0 %v1455
        %v5716 = vpop.f32.mrf.mxu0
        %v5717 = vadd.f32 %v5604, %v5716
        %5718 = vmatmul.f32.gmra.mxu0 %v1463
        %v5719 = vpop.f32.mrf.mxu0
        %v5720 = vadd.f32 %v5607, %v5719
        %5721 = vmatmul.f32.gmra.mxu0 %v1471
        %v5722 = vpop.f32.mrf.mxu0
        %v5723 = vadd.f32 %v5610, %v5722
        %5724 = vmatmul.f32.gmra.mxu0 %v1479
        %v5725 = vpop.f32.mrf.mxu0
        %v5726 = vadd.f32 %v5613, %v5725
        %5727 = vmatmul.f32.gmra.mxu0 %v1487
        %v5728 = vpop.f32.mrf.mxu0
        %v5729 = vadd.f32 %v5616, %v5728
        %5730 = vmatmul.f32.gmra.mxu0 %v1495
        %v5731 = vpop.f32.mrf.mxu0
        %v5732 = vadd.f32 %v5619, %v5731
        %5733 = vmatmul.f32.gmra.mxu0 %v1503
        %v5734 = vpop.f32.mrf.mxu0
        %v5735 = vadd.f32 %v5622, %v5734
        %5736 = vmatmul.f32.gmra.mxu0 %v1511
        %v5737 = vpop.f32.mrf.mxu0
        %v5738 = vadd.f32 %v5625, %v5737
        %5739 = vmatmul.f32.gmra.mxu0 %v1519
        %v5740 = vpop.f32.mrf.mxu0
        %v5741 = vadd.f32 %v5628, %v5740
        %5742 = vmatmul.f32.gmra.mxu0 %v1527
        %v5743 = vpop.f32.mrf.mxu0
        %v5744 = vadd.f32 %v5631, %v5743
        %5745 = vmatmul.f32.gmra.mxu0 %v1535
        %v5746 = vpop.f32.mrf.mxu0
        %v5747 = vadd.f32 %v5634, %v5746
        %5748 = vmatmul.f32.gmra.mxu0 %v1543
        %v5749 = vpop.f32.mrf.mxu0
        %v5750 = vadd.f32 %v5637, %v5749
        %5751 = vmatmul.f32.gmra.mxu0 %v1551
        %v5752 = vpop.f32.mrf.mxu0
        %v5753 = vadd.f32 %v5640, %v5752
        %5754 = vmatmul.f32.gmra.mxu0 %v1559
        %v5755 = vpop.f32.mrf.mxu0
        %v5756 = vadd.f32 %v5643, %v5755
        %5757 = vmatmul.f32.gmra.mxu0 %v1567
        %v5758 = vpop.f32.mrf.mxu0
        %v5759 = vadd.f32 %v5646, %v5758
        %5760 = vmatmul.f32.gmra.mxu0 %v1575
        %v5761 = vpop.f32.mrf.mxu0
        %v5762 = vadd.f32 %v5649, %v5761
        %5763 = vmatmul.f32.gmra.mxu0 %v1583
        %v5764 = vpop.f32.mrf.mxu0
        %v5765 = vadd.f32 %v5652, %v5764
        %5766 = vmatmul.f32.gmra.mxu0 %v1591
        %v5767 = vpop.f32.mrf.mxu0
        %v5768 = vadd.f32 %v5655, %v5767
        %5769 = vmatmul.f32.gmra.mxu0 %v1599
        %v5770 = vpop.f32.mrf.mxu0
        %v5771 = vadd.f32 %v5658, %v5770
        %5772 = vmatmul.f32.gmra.mxu0 %v1607
        %v5773 = vpop.f32.mrf.mxu0
        %v5774 = vadd.f32 %v5661, %v5773
        %5775 = vmatmul.f32.gmra.mxu0 %v1615
        %v5776 = vpop.f32.mrf.mxu0
        %v5777 = vadd.f32 %v5664, %v5776
        %5778 = vmatmul.f32.gmra.mxu0 %v1623
        %v5779 = vpop.f32.mrf.mxu0
        %v5780 = vadd.f32 %v5667, %v5779
        %5781 = vmatmul.f32.gmra.mxu0 %v1631
        %v5782 = vpop.f32.mrf.mxu0
        %v5783 = vadd.f32 %v5670, %v5782
        %5784 = vmatmul.f32.gmra.mxu0 %v1639
        %v5785 = vpop.f32.mrf.mxu0
        %v5786 = vadd.f32 %v5673, %v5785
        %5787 = vmatmul.f32.gmra.mxu0 %v1647
        %v5788 = vpop.f32.mrf.mxu0
        %v5789 = vadd.f32 %v5676, %v5788
        %5790 = vmatmul.f32.gmra.mxu0 %v1655
        %v5791 = vpop.f32.mrf.mxu0
        %v5792 = vadd.f32 %v5679, %v5791
        %5793 = vmatmul.f32.gmra.mxu0 %v1663
        %v5794 = vpop.f32.mrf.mxu0
        %v5795 = vadd.f32 %v5682, %v5794
        %5796 = vmatmul.f32.gmra.mxu0 %v1671
        %v5797 = vpop.f32.mrf.mxu0
        %v5798 = vadd.f32 %v5685, %v5797
        %5799 = vdwg.mxu0
        %5800 = vmatpush.msra.mxu0 %v964
        %5801 = vmatpush.msra.mxu0 %v960
        %5802 = vmatpush.msra.mxu0 %v956
        %5803 = vmatpush.msra.mxu0 %v952
        %5804 = vmatpush.msra.mxu0 %v948
        %5805 = vmatpush.msra.mxu0 %v944
        %5806 = vmatpush.msra.mxu0 %v940
        %5807 = vmatpush.msra.mxu0 %v936
        %5808 = vmatpush.msra.mxu0 %v932
        %5809 = vmatpush.msra.mxu0 %v928
        %5810 = vmatpush.msra.mxu0 %v924
        %5811 = vmatpush.msra.mxu0 %v920
        %5812 = vmatpush.msra.mxu0 %v916
        %5813 = vmatpush.msra.mxu0 %v912
        %5814 = vmatpush.msra.mxu0 %v908
        %5815 = vmatpush.msra.mxu0 %v904
        %5816 = vmatmul.f32.gmra.mxu0 %v648
        %v5817 = vpop.f32.mrf.mxu0
        %v5818 = vadd.f32 %v2993, %v5817
        %5819 = vmatmul.f32.gmra.mxu0 %v656
        %v5820 = vpop.f32.mrf.mxu0
        %v5821 = vadd.f32 %v2996, %v5820
        %5822 = vmatmul.f32.gmra.mxu0 %v664
        %v5823 = vpop.f32.mrf.mxu0
        %v5824 = vadd.f32 %v2999, %v5823
        %5825 = vmatmul.f32.gmra.mxu0 %v672
        %v5826 = vpop.f32.mrf.mxu0
        %v5827 = vadd.f32 %v3002, %v5826
        %5828 = vmatmul.f32.gmra.mxu0 %v680
        %v5829 = vpop.f32.mrf.mxu0
        %v5830 = vadd.f32 %v3005, %v5829
        %5831 = vmatmul.f32.gmra.mxu0 %v688
        %v5832 = vpop.f32.mrf.mxu0
        %v5833 = vadd.f32 %v3008, %v5832
        %5834 = vmatmul.f32.gmra.mxu0 %v696
        %v5835 = vpop.f32.mrf.mxu0
        %v5836 = vadd.f32 %v3011, %v5835
        %5837 = vmatmul.f32.gmra.mxu0 %v704
        %v5838 = vpop.f32.mrf.mxu0
        %v5839 = vadd.f32 %v3014, %v5838
        %5840 = vmatmul.f32.gmra.mxu0 %v712
        %v5841 = vpop.f32.mrf.mxu0
        %v5842 = vadd.f32 %v3017, %v5841
        %5843 = vmatmul.f32.gmra.mxu0 %v720
        %v5844 = vpop.f32.mrf.mxu0
        %v5845 = vadd.f32 %v3020, %v5844
        %5846 = vmatmul.f32.gmra.mxu0 %v728
        %v5847 = vpop.f32.mrf.mxu0
        %v5848 = vadd.f32 %v3023, %v5847
        %5849 = vmatmul.f32.gmra.mxu0 %v736
        %v5850 = vpop.f32.mrf.mxu0
        %v5851 = vadd.f32 %v3026, %v5850
        %5852 = vmatmul.f32.gmra.mxu0 %v744
        %v5853 = vpop.f32.mrf.mxu0
        %v5854 = vadd.f32 %v3029, %v5853
        %5855 = vmatmul.f32.gmra.mxu0 %v752
        %v5856 = vpop.f32.mrf.mxu0
        %v5857 = vadd.f32 %v3032, %v5856
        %5858 = vmatmul.f32.gmra.mxu0 %v760
        %v5859 = vpop.f32.mrf.mxu0
        %v5860 = vadd.f32 %v3035, %v5859
        %5861 = vmatmul.f32.gmra.mxu0 %v768
        %v5862 = vpop.f32.mrf.mxu0
        %v5863 = vadd.f32 %v3038, %v5862
        %5864 = vmatmul.f32.gmra.mxu0 %v776
        %v5865 = vpop.f32.mrf.mxu0
        %v5866 = vadd.f32 %v3041, %v5865
        %5867 = vmatmul.f32.gmra.mxu0 %v784
        %v5868 = vpop.f32.mrf.mxu0
        %v5869 = vadd.f32 %v3044, %v5868
        %5870 = vmatmul.f32.gmra.mxu0 %v792
        %v5871 = vpop.f32.mrf.mxu0
        %v5872 = vadd.f32 %v3047, %v5871
        %5873 = vmatmul.f32.gmra.mxu0 %v800
        %v5874 = vpop.f32.mrf.mxu0
        %v5875 = vadd.f32 %v3050, %v5874
        %5876 = vmatmul.f32.gmra.mxu0 %v808
        %v5877 = vpop.f32.mrf.mxu0
        %v5878 = vadd.f32 %v3053, %v5877
        %5879 = vmatmul.f32.gmra.mxu0 %v816
        %v5880 = vpop.f32.mrf.mxu0
        %v5881 = vadd.f32 %v3056, %v5880
        %5882 = vmatmul.f32.gmra.mxu0 %v824
        %v5883 = vpop.f32.mrf.mxu0
        %v5884 = vadd.f32 %v3059, %v5883
        %5885 = vmatmul.f32.gmra.mxu0 %v832
        %v5886 = vpop.f32.mrf.mxu0
        %v5887 = vadd.f32 %v3062, %v5886
        %5888 = vmatmul.f32.gmra.mxu0 %v840
        %v5889 = vpop.f32.mrf.mxu0
        %v5890 = vadd.f32 %v3065, %v5889
        %5891 = vmatmul.f32.gmra.mxu0 %v848
        %v5892 = vpop.f32.mrf.mxu0
        %v5893 = vadd.f32 %v3068, %v5892
        %5894 = vmatmul.f32.gmra.mxu0 %v856
        %v5895 = vpop.f32.mrf.mxu0
        %v5896 = vadd.f32 %v3071, %v5895
        %5897 = vmatmul.f32.gmra.mxu0 %v864
        %v5898 = vpop.f32.mrf.mxu0
        %v5899 = vadd.f32 %v3074, %v5898
        %5900 = vmatmul.f32.gmra.mxu0 %v872
        %v5901 = vpop.f32.mrf.mxu0
        %v5902 = vadd.f32 %v3077, %v5901
        %5903 = vmatmul.f32.gmra.mxu0 %v880
        %v5904 = vpop.f32.mrf.mxu0
        %v5905 = vadd.f32 %v3080, %v5904
        %5906 = vmatmul.f32.gmra.mxu0 %v888
        %v5907 = vpop.f32.mrf.mxu0
        %v5908 = vadd.f32 %v3083, %v5907
        %5909 = vmatmul.f32.gmra.mxu0 %v896
        %v5910 = vpop.f32.mrf.mxu0
        %v5911 = vadd.f32 %v3086, %v5910
        %5912 = vdwg.mxu0
        %5913 = vmatpush.msra.mxu0 %v1028
        %5914 = vmatpush.msra.mxu0 %v1024
        %5915 = vmatpush.msra.mxu0 %v1020
        %5916 = vmatpush.msra.mxu0 %v1016
        %5917 = vmatpush.msra.mxu0 %v1012
        %5918 = vmatpush.msra.mxu0 %v1008
        %5919 = vmatpush.msra.mxu0 %v1004
        %5920 = vmatpush.msra.mxu0 %v1000
        %5921 = vmatpush.msra.mxu0 %v996
        %5922 = vmatpush.msra.mxu0 %v992
        %5923 = vmatpush.msra.mxu0 %v988
        %5924 = vmatpush.msra.mxu0 %v984
        %5925 = vmatpush.msra.mxu0 %v980
        %5926 = vmatpush.msra.mxu0 %v976
        %5927 = vmatpush.msra.mxu0 %v972
        %5928 = vmatpush.msra.mxu0 %v968
        %5929 = vmatmul.f32.gmra.mxu0 %v649
        %v5930 = vpop.f32.mrf.mxu0
        %v5931 = vadd.f32 %v5818, %v5930
        %5932 = vmatmul.f32.gmra.mxu0 %v657
        %v5933 = vpop.f32.mrf.mxu0
        %v5934 = vadd.f32 %v5821, %v5933
        %5935 = vmatmul.f32.gmra.mxu0 %v665
        %v5936 = vpop.f32.mrf.mxu0
        %v5937 = vadd.f32 %v5824, %v5936
        %5938 = vmatmul.f32.gmra.mxu0 %v673
        %v5939 = vpop.f32.mrf.mxu0
        %v5940 = vadd.f32 %v5827, %v5939
        %5941 = vmatmul.f32.gmra.mxu0 %v681
        %v5942 = vpop.f32.mrf.mxu0
        %v5943 = vadd.f32 %v5830, %v5942
        %5944 = vmatmul.f32.gmra.mxu0 %v689
        %v5945 = vpop.f32.mrf.mxu0
        %v5946 = vadd.f32 %v5833, %v5945
        %5947 = vmatmul.f32.gmra.mxu0 %v697
        %v5948 = vpop.f32.mrf.mxu0
        %v5949 = vadd.f32 %v5836, %v5948
        %5950 = vmatmul.f32.gmra.mxu0 %v705
        %v5951 = vpop.f32.mrf.mxu0
        %v5952 = vadd.f32 %v5839, %v5951
        %5953 = vmatmul.f32.gmra.mxu0 %v713
        %v5954 = vpop.f32.mrf.mxu0
        %v5955 = vadd.f32 %v5842, %v5954
        %5956 = vmatmul.f32.gmra.mxu0 %v721
        %v5957 = vpop.f32.mrf.mxu0
        %v5958 = vadd.f32 %v5845, %v5957
        %5959 = vmatmul.f32.gmra.mxu0 %v729
        %v5960 = vpop.f32.mrf.mxu0
        %v5961 = vadd.f32 %v5848, %v5960
        %5962 = vmatmul.f32.gmra.mxu0 %v737
        %v5963 = vpop.f32.mrf.mxu0
        %v5964 = vadd.f32 %v5851, %v5963
        %5965 = vmatmul.f32.gmra.mxu0 %v745
        %v5966 = vpop.f32.mrf.mxu0
        %v5967 = vadd.f32 %v5854, %v5966
        %5968 = vmatmul.f32.gmra.mxu0 %v753
        %v5969 = vpop.f32.mrf.mxu0
        %v5970 = vadd.f32 %v5857, %v5969
        %5971 = vmatmul.f32.gmra.mxu0 %v761
        %v5972 = vpop.f32.mrf.mxu0
        %v5973 = vadd.f32 %v5860, %v5972
        %5974 = vmatmul.f32.gmra.mxu0 %v769
        %v5975 = vpop.f32.mrf.mxu0
        %v5976 = vadd.f32 %v5863, %v5975
        %5977 = vmatmul.f32.gmra.mxu0 %v777
        %v5978 = vpop.f32.mrf.mxu0
        %v5979 = vadd.f32 %v5866, %v5978
        %5980 = vmatmul.f32.gmra.mxu0 %v785
        %v5981 = vpop.f32.mrf.mxu0
        %v5982 = vadd.f32 %v5869, %v5981
        %5983 = vmatmul.f32.gmra.mxu0 %v793
        %v5984 = vpop.f32.mrf.mxu0
        %v5985 = vadd.f32 %v5872, %v5984
        %5986 = vmatmul.f32.gmra.mxu0 %v801
        %v5987 = vpop.f32.mrf.mxu0
        %v5988 = vadd.f32 %v5875, %v5987
        %5989 = vmatmul.f32.gmra.mxu0 %v809
        %v5990 = vpop.f32.mrf.mxu0
        %v5991 = vadd.f32 %v5878, %v5990
        %5992 = vmatmul.f32.gmra.mxu0 %v817
        %v5993 = vpop.f32.mrf.mxu0
        %v5994 = vadd.f32 %v5881, %v5993
        %5995 = vmatmul.f32.gmra.mxu0 %v825
        %v5996 = vpop.f32.mrf.mxu0
        %v5997 = vadd.f32 %v5884, %v5996
        %5998 = vmatmul.f32.gmra.mxu0 %v833
        %v5999 = vpop.f32.mrf.mxu0
        %v6000 = vadd.f32 %v5887, %v5999
        %6001 = vmatmul.f32.gmra.mxu0 %v841
        %v6002 = vpop.f32.mrf.mxu0
        %v6003 = vadd.f32 %v5890, %v6002
        %6004 = vmatmul.f32.gmra.mxu0 %v849
        %v6005 = vpop.f32.mrf.mxu0
        %v6006 = vadd.f32 %v5893, %v6005
        %6007 = vmatmul.f32.gmra.mxu0 %v857
        %v6008 = vpop.f32.mrf.mxu0
        %v6009 = vadd.f32 %v5896, %v6008
        %6010 = vmatmul.f32.gmra.mxu0 %v865
        %v6011 = vpop.f32.mrf.mxu0
        %v6012 = vadd.f32 %v5899, %v6011
        %6013 = vmatmul.f32.gmra.mxu0 %v873
        %v6014 = vpop.f32.mrf.mxu0
        %v6015 = vadd.f32 %v5902, %v6014
        %6016 = vmatmul.f32.gmra.mxu0 %v881
        %v6017 = vpop.f32.mrf.mxu0
        %v6018 = vadd.f32 %v5905, %v6017
        %6019 = vmatmul.f32.gmra.mxu0 %v889
        %v6020 = vpop.f32.mrf.mxu0
        %v6021 = vadd.f32 %v5908, %v6020
        %6022 = vmatmul.f32.gmra.mxu0 %v897
        %v6023 = vpop.f32.mrf.mxu0
        %v6024 = vadd.f32 %v5911, %v6023
        %6025 = vdwg.mxu0
        %6026 = vmatpush.msra.mxu0 %v1092
        %6027 = vmatpush.msra.mxu0 %v1088
        %6028 = vmatpush.msra.mxu0 %v1084
        %6029 = vmatpush.msra.mxu0 %v1080
        %6030 = vmatpush.msra.mxu0 %v1076
        %6031 = vmatpush.msra.mxu0 %v1072
        %6032 = vmatpush.msra.mxu0 %v1068
        %6033 = vmatpush.msra.mxu0 %v1064
        %6034 = vmatpush.msra.mxu0 %v1060
        %6035 = vmatpush.msra.mxu0 %v1056
        %6036 = vmatpush.msra.mxu0 %v1052
        %6037 = vmatpush.msra.mxu0 %v1048
        %6038 = vmatpush.msra.mxu0 %v1044
        %6039 = vmatpush.msra.mxu0 %v1040
        %6040 = vmatpush.msra.mxu0 %v1036
        %6041 = vmatpush.msra.mxu0 %v1032
        %6042 = vmatmul.f32.gmra.mxu0 %v650
        %v6043 = vpop.f32.mrf.mxu0
        %v6044 = vadd.f32 %v5931, %v6043
        %6045 = vmatmul.f32.gmra.mxu0 %v658
        %v6046 = vpop.f32.mrf.mxu0
        %v6047 = vadd.f32 %v5934, %v6046
        %6048 = vmatmul.f32.gmra.mxu0 %v666
        %v6049 = vpop.f32.mrf.mxu0
        %v6050 = vadd.f32 %v5937, %v6049
        %6051 = vmatmul.f32.gmra.mxu0 %v674
        %v6052 = vpop.f32.mrf.mxu0
        %v6053 = vadd.f32 %v5940, %v6052
        %6054 = vmatmul.f32.gmra.mxu0 %v682
        %v6055 = vpop.f32.mrf.mxu0
        %v6056 = vadd.f32 %v5943, %v6055
        %6057 = vmatmul.f32.gmra.mxu0 %v690
        %v6058 = vpop.f32.mrf.mxu0
        %v6059 = vadd.f32 %v5946, %v6058
        %6060 = vmatmul.f32.gmra.mxu0 %v698
        %v6061 = vpop.f32.mrf.mxu0
        %v6062 = vadd.f32 %v5949, %v6061
        %6063 = vmatmul.f32.gmra.mxu0 %v706
        %v6064 = vpop.f32.mrf.mxu0
        %v6065 = vadd.f32 %v5952, %v6064
        %6066 = vmatmul.f32.gmra.mxu0 %v714
        %v6067 = vpop.f32.mrf.mxu0
        %v6068 = vadd.f32 %v5955, %v6067
        %6069 = vmatmul.f32.gmra.mxu0 %v722
        %v6070 = vpop.f32.mrf.mxu0
        %v6071 = vadd.f32 %v5958, %v6070
        %6072 = vmatmul.f32.gmra.mxu0 %v730
        %v6073 = vpop.f32.mrf.mxu0
        %v6074 = vadd.f32 %v5961, %v6073
        %6075 = vmatmul.f32.gmra.mxu0 %v738
        %v6076 = vpop.f32.mrf.mxu0
        %v6077 = vadd.f32 %v5964, %v6076
        %6078 = vmatmul.f32.gmra.mxu0 %v746
        %v6079 = vpop.f32.mrf.mxu0
        %v6080 = vadd.f32 %v5967, %v6079
        %6081 = vmatmul.f32.gmra.mxu0 %v754
        %v6082 = vpop.f32.mrf.mxu0
        %v6083 = vadd.f32 %v5970, %v6082
        %6084 = vmatmul.f32.gmra.mxu0 %v762
        %v6085 = vpop.f32.mrf.mxu0
        %v6086 = vadd.f32 %v5973, %v6085
        %6087 = vmatmul.f32.gmra.mxu0 %v770
        %v6088 = vpop.f32.mrf.mxu0
        %v6089 = vadd.f32 %v5976, %v6088
        %6090 = vmatmul.f32.gmra.mxu0 %v778
        %v6091 = vpop.f32.mrf.mxu0
        %v6092 = vadd.f32 %v5979, %v6091
        %6093 = vmatmul.f32.gmra.mxu0 %v786
        %v6094 = vpop.f32.mrf.mxu0
        %v6095 = vadd.f32 %v5982, %v6094
        %6096 = vmatmul.f32.gmra.mxu0 %v794
        %v6097 = vpop.f32.mrf.mxu0
        %v6098 = vadd.f32 %v5985, %v6097
        %6099 = vmatmul.f32.gmra.mxu0 %v802
        %v6100 = vpop.f32.mrf.mxu0
        %v6101 = vadd.f32 %v5988, %v6100
        %6102 = vmatmul.f32.gmra.mxu0 %v810
        %v6103 = vpop.f32.mrf.mxu0
        %v6104 = vadd.f32 %v5991, %v6103
        %6105 = vmatmul.f32.gmra.mxu0 %v818
        %v6106 = vpop.f32.mrf.mxu0
        %v6107 = vadd.f32 %v5994, %v6106
        %6108 = vmatmul.f32.gmra.mxu0 %v826
        %v6109 = vpop.f32.mrf.mxu0
        %v6110 = vadd.f32 %v5997, %v6109
        %6111 = vmatmul.f32.gmra.mxu0 %v834
        %v6112 = vpop.f32.mrf.mxu0
        %v6113 = vadd.f32 %v6000, %v6112
        %6114 = vmatmul.f32.gmra.mxu0 %v842
        %v6115 = vpop.f32.mrf.mxu0
        %v6116 = vadd.f32 %v6003, %v6115
        %6117 = vmatmul.f32.gmra.mxu0 %v850
        %v6118 = vpop.f32.mrf.mxu0
        %v6119 = vadd.f32 %v6006, %v6118
        %6120 = vmatmul.f32.gmra.mxu0 %v858
        %v6121 = vpop.f32.mrf.mxu0
        %v6122 = vadd.f32 %v6009, %v6121
        %6123 = vmatmul.f32.gmra.mxu0 %v866
        %v6124 = vpop.f32.mrf.mxu0
        %v6125 = vadd.f32 %v6012, %v6124
        %6126 = vmatmul.f32.gmra.mxu0 %v874
        %v6127 = vpop.f32.mrf.mxu0
        %v6128 = vadd.f32 %v6015, %v6127
        %6129 = vmatmul.f32.gmra.mxu0 %v882
        %v6130 = vpop.f32.mrf.mxu0
        %v6131 = vadd.f32 %v6018, %v6130
        %6132 = vmatmul.f32.gmra.mxu0 %v890
        %v6133 = vpop.f32.mrf.mxu0
        %v6134 = vadd.f32 %v6021, %v6133
        %6135 = vmatmul.f32.gmra.mxu0 %v898
        %v6136 = vpop.f32.mrf.mxu0
        %v6137 = vadd.f32 %v6024, %v6136
        %6138 = vdwg.mxu0
        %6139 = vmatpush.msra.mxu0 %v1156
        %6140 = vmatpush.msra.mxu0 %v1152
        %6141 = vmatpush.msra.mxu0 %v1148
        %6142 = vmatpush.msra.mxu0 %v1144
        %6143 = vmatpush.msra.mxu0 %v1140
        %6144 = vmatpush.msra.mxu0 %v1136
        %6145 = vmatpush.msra.mxu0 %v1132
        %6146 = vmatpush.msra.mxu0 %v1128
        %6147 = vmatpush.msra.mxu0 %v1124
        %6148 = vmatpush.msra.mxu0 %v1120
        %6149 = vmatpush.msra.mxu0 %v1116
        %6150 = vmatpush.msra.mxu0 %v1112
        %6151 = vmatpush.msra.mxu0 %v1108
        %6152 = vmatpush.msra.mxu0 %v1104
        %6153 = vmatpush.msra.mxu0 %v1100
        %6154 = vmatpush.msra.mxu0 %v1096
        %6155 = vmatmul.f32.gmra.mxu0 %v651
        %v6156 = vpop.f32.mrf.mxu0
        %v6157 = vadd.f32 %v6044, %v6156
        %6158 = vmatmul.f32.gmra.mxu0 %v659
        %v6159 = vpop.f32.mrf.mxu0
        %v6160 = vadd.f32 %v6047, %v6159
        %6161 = vmatmul.f32.gmra.mxu0 %v667
        %v6162 = vpop.f32.mrf.mxu0
        %v6163 = vadd.f32 %v6050, %v6162
        %6164 = vmatmul.f32.gmra.mxu0 %v675
        %v6165 = vpop.f32.mrf.mxu0
        %v6166 = vadd.f32 %v6053, %v6165
        %6167 = vmatmul.f32.gmra.mxu0 %v683
        %v6168 = vpop.f32.mrf.mxu0
        %v6169 = vadd.f32 %v6056, %v6168
        %6170 = vmatmul.f32.gmra.mxu0 %v691
        %v6171 = vpop.f32.mrf.mxu0
        %v6172 = vadd.f32 %v6059, %v6171
        %6173 = vmatmul.f32.gmra.mxu0 %v699
        %v6174 = vpop.f32.mrf.mxu0
        %v6175 = vadd.f32 %v6062, %v6174
        %6176 = vmatmul.f32.gmra.mxu0 %v707
        %v6177 = vpop.f32.mrf.mxu0
        %v6178 = vadd.f32 %v6065, %v6177
        %6179 = vmatmul.f32.gmra.mxu0 %v715
        %v6180 = vpop.f32.mrf.mxu0
        %v6181 = vadd.f32 %v6068, %v6180
        %6182 = vmatmul.f32.gmra.mxu0 %v723
        %v6183 = vpop.f32.mrf.mxu0
        %v6184 = vadd.f32 %v6071, %v6183
        %6185 = vmatmul.f32.gmra.mxu0 %v731
        %v6186 = vpop.f32.mrf.mxu0
        %v6187 = vadd.f32 %v6074, %v6186
        %6188 = vmatmul.f32.gmra.mxu0 %v739
        %v6189 = vpop.f32.mrf.mxu0
        %v6190 = vadd.f32 %v6077, %v6189
        %6191 = vmatmul.f32.gmra.mxu0 %v747
        %v6192 = vpop.f32.mrf.mxu0
        %v6193 = vadd.f32 %v6080, %v6192
        %6194 = vmatmul.f32.gmra.mxu0 %v755
        %v6195 = vpop.f32.mrf.mxu0
        %v6196 = vadd.f32 %v6083, %v6195
        %6197 = vmatmul.f32.gmra.mxu0 %v763
        %v6198 = vpop.f32.mrf.mxu0
        %v6199 = vadd.f32 %v6086, %v6198
        %6200 = vmatmul.f32.gmra.mxu0 %v771
        %v6201 = vpop.f32.mrf.mxu0
        %v6202 = vadd.f32 %v6089, %v6201
        %6203 = vmatmul.f32.gmra.mxu0 %v779
        %v6204 = vpop.f32.mrf.mxu0
        %v6205 = vadd.f32 %v6092, %v6204
        %6206 = vmatmul.f32.gmra.mxu0 %v787
        %v6207 = vpop.f32.mrf.mxu0
        %v6208 = vadd.f32 %v6095, %v6207
        %6209 = vmatmul.f32.gmra.mxu0 %v795
        %v6210 = vpop.f32.mrf.mxu0
        %v6211 = vadd.f32 %v6098, %v6210
        %6212 = vmatmul.f32.gmra.mxu0 %v803
        %v6213 = vpop.f32.mrf.mxu0
        %v6214 = vadd.f32 %v6101, %v6213
        %6215 = vmatmul.f32.gmra.mxu0 %v811
        %v6216 = vpop.f32.mrf.mxu0
        %v6217 = vadd.f32 %v6104, %v6216
        %6218 = vmatmul.f32.gmra.mxu0 %v819
        %v6219 = vpop.f32.mrf.mxu0
        %v6220 = vadd.f32 %v6107, %v6219
        %6221 = vmatmul.f32.gmra.mxu0 %v827
        %v6222 = vpop.f32.mrf.mxu0
        %v6223 = vadd.f32 %v6110, %v6222
        %6224 = vmatmul.f32.gmra.mxu0 %v835
        %v6225 = vpop.f32.mrf.mxu0
        %v6226 = vadd.f32 %v6113, %v6225
        %6227 = vmatmul.f32.gmra.mxu0 %v843
        %v6228 = vpop.f32.mrf.mxu0
        %v6229 = vadd.f32 %v6116, %v6228
        %6230 = vmatmul.f32.gmra.mxu0 %v851
        %v6231 = vpop.f32.mrf.mxu0
        %v6232 = vadd.f32 %v6119, %v6231
        %6233 = vmatmul.f32.gmra.mxu0 %v859
        %v6234 = vpop.f32.mrf.mxu0
        %v6235 = vadd.f32 %v6122, %v6234
        %6236 = vmatmul.f32.gmra.mxu0 %v867
        %v6237 = vpop.f32.mrf.mxu0
        %v6238 = vadd.f32 %v6125, %v6237
        %6239 = vmatmul.f32.gmra.mxu0 %v875
        %v6240 = vpop.f32.mrf.mxu0
        %v6241 = vadd.f32 %v6128, %v6240
        %6242 = vmatmul.f32.gmra.mxu0 %v883
        %v6243 = vpop.f32.mrf.mxu0
        %v6244 = vadd.f32 %v6131, %v6243
        %6245 = vmatmul.f32.gmra.mxu0 %v891
        %v6246 = vpop.f32.mrf.mxu0
        %v6247 = vadd.f32 %v6134, %v6246
        %6248 = vmatmul.f32.gmra.mxu0 %v899
        %v6249 = vpop.f32.mrf.mxu0
        %v6250 = vadd.f32 %v6137, %v6249
        %6251 = vdwg.mxu0
        %6252 = vmatpush.msra.mxu0 %v1220
        %6253 = vmatpush.msra.mxu0 %v1216
        %6254 = vmatpush.msra.mxu0 %v1212
        %6255 = vmatpush.msra.mxu0 %v1208
        %6256 = vmatpush.msra.mxu0 %v1204
        %6257 = vmatpush.msra.mxu0 %v1200
        %6258 = vmatpush.msra.mxu0 %v1196
        %6259 = vmatpush.msra.mxu0 %v1192
        %6260 = vmatpush.msra.mxu0 %v1188
        %6261 = vmatpush.msra.mxu0 %v1184
        %6262 = vmatpush.msra.mxu0 %v1180
        %6263 = vmatpush.msra.mxu0 %v1176
        %6264 = vmatpush.msra.mxu0 %v1172
        %6265 = vmatpush.msra.mxu0 %v1168
        %6266 = vmatpush.msra.mxu0 %v1164
        %6267 = vmatpush.msra.mxu0 %v1160
        %6268 = vmatmul.f32.gmra.mxu0 %v652
        %v6269 = vpop.f32.mrf.mxu0
        %v6270 = vadd.f32 %v6157, %v6269
        %6271 = vmatmul.f32.gmra.mxu0 %v660
        %v6272 = vpop.f32.mrf.mxu0
        %v6273 = vadd.f32 %v6160, %v6272
        %6274 = vmatmul.f32.gmra.mxu0 %v668
        %v6275 = vpop.f32.mrf.mxu0
        %v6276 = vadd.f32 %v6163, %v6275
        %6277 = vmatmul.f32.gmra.mxu0 %v676
        %v6278 = vpop.f32.mrf.mxu0
        %v6279 = vadd.f32 %v6166, %v6278
        %6280 = vmatmul.f32.gmra.mxu0 %v684
        %v6281 = vpop.f32.mrf.mxu0
        %v6282 = vadd.f32 %v6169, %v6281
        %6283 = vmatmul.f32.gmra.mxu0 %v692
        %v6284 = vpop.f32.mrf.mxu0
        %v6285 = vadd.f32 %v6172, %v6284
        %6286 = vmatmul.f32.gmra.mxu0 %v700
        %v6287 = vpop.f32.mrf.mxu0
        %v6288 = vadd.f32 %v6175, %v6287
        %6289 = vmatmul.f32.gmra.mxu0 %v708
        %v6290 = vpop.f32.mrf.mxu0
        %v6291 = vadd.f32 %v6178, %v6290
        %6292 = vmatmul.f32.gmra.mxu0 %v716
        %v6293 = vpop.f32.mrf.mxu0
        %v6294 = vadd.f32 %v6181, %v6293
        %6295 = vmatmul.f32.gmra.mxu0 %v724
        %v6296 = vpop.f32.mrf.mxu0
        %v6297 = vadd.f32 %v6184, %v6296
        %6298 = vmatmul.f32.gmra.mxu0 %v732
        %v6299 = vpop.f32.mrf.mxu0
        %v6300 = vadd.f32 %v6187, %v6299
        %6301 = vmatmul.f32.gmra.mxu0 %v740
        %v6302 = vpop.f32.mrf.mxu0
        %v6303 = vadd.f32 %v6190, %v6302
        %6304 = vmatmul.f32.gmra.mxu0 %v748
        %v6305 = vpop.f32.mrf.mxu0
        %v6306 = vadd.f32 %v6193, %v6305
        %6307 = vmatmul.f32.gmra.mxu0 %v756
        %v6308 = vpop.f32.mrf.mxu0
        %v6309 = vadd.f32 %v6196, %v6308
        %6310 = vmatmul.f32.gmra.mxu0 %v764
        %v6311 = vpop.f32.mrf.mxu0
        %v6312 = vadd.f32 %v6199, %v6311
        %6313 = vmatmul.f32.gmra.mxu0 %v772
        %v6314 = vpop.f32.mrf.mxu0
        %v6315 = vadd.f32 %v6202, %v6314
        %6316 = vmatmul.f32.gmra.mxu0 %v780
        %v6317 = vpop.f32.mrf.mxu0
        %v6318 = vadd.f32 %v6205, %v6317
        %6319 = vmatmul.f32.gmra.mxu0 %v788
        %v6320 = vpop.f32.mrf.mxu0
        %v6321 = vadd.f32 %v6208, %v6320
        %6322 = vmatmul.f32.gmra.mxu0 %v796
        %v6323 = vpop.f32.mrf.mxu0
        %v6324 = vadd.f32 %v6211, %v6323
        %6325 = vmatmul.f32.gmra.mxu0 %v804
        %v6326 = vpop.f32.mrf.mxu0
        %v6327 = vadd.f32 %v6214, %v6326
        %6328 = vmatmul.f32.gmra.mxu0 %v812
        %v6329 = vpop.f32.mrf.mxu0
        %v6330 = vadd.f32 %v6217, %v6329
        %6331 = vmatmul.f32.gmra.mxu0 %v820
        %v6332 = vpop.f32.mrf.mxu0
        %v6333 = vadd.f32 %v6220, %v6332
        %6334 = vmatmul.f32.gmra.mxu0 %v828
        %v6335 = vpop.f32.mrf.mxu0
        %v6336 = vadd.f32 %v6223, %v6335
        %6337 = vmatmul.f32.gmra.mxu0 %v836
        %v6338 = vpop.f32.mrf.mxu0
        %v6339 = vadd.f32 %v6226, %v6338
        %6340 = vmatmul.f32.gmra.mxu0 %v844
        %v6341 = vpop.f32.mrf.mxu0
        %v6342 = vadd.f32 %v6229, %v6341
        %6343 = vmatmul.f32.gmra.mxu0 %v852
        %v6344 = vpop.f32.mrf.mxu0
        %v6345 = vadd.f32 %v6232, %v6344
        %6346 = vmatmul.f32.gmra.mxu0 %v860
        %v6347 = vpop.f32.mrf.mxu0
        %v6348 = vadd.f32 %v6235, %v6347
        %6349 = vmatmul.f32.gmra.mxu0 %v868
        %v6350 = vpop.f32.mrf.mxu0
        %v6351 = vadd.f32 %v6238, %v6350
        %6352 = vmatmul.f32.gmra.mxu0 %v876
        %v6353 = vpop.f32.mrf.mxu0
        %v6354 = vadd.f32 %v6241, %v6353
        %6355 = vmatmul.f32.gmra.mxu0 %v884
        %v6356 = vpop.f32.mrf.mxu0
        %v6357 = vadd.f32 %v6244, %v6356
        %6358 = vmatmul.f32.gmra.mxu0 %v892
        %v6359 = vpop.f32.mrf.mxu0
        %v6360 = vadd.f32 %v6247, %v6359
        %6361 = vmatmul.f32.gmra.mxu0 %v900
        %v6362 = vpop.f32.mrf.mxu0
        %v6363 = vadd.f32 %v6250, %v6362
        %6364 = vdwg.mxu0
        %6365 = vmatpush.msra.mxu0 %v1284
        %6366 = vmatpush.msra.mxu0 %v1280
        %6367 = vmatpush.msra.mxu0 %v1276
        %6368 = vmatpush.msra.mxu0 %v1272
        %6369 = vmatpush.msra.mxu0 %v1268
        %6370 = vmatpush.msra.mxu0 %v1264
        %6371 = vmatpush.msra.mxu0 %v1260
        %6372 = vmatpush.msra.mxu0 %v1256
        %6373 = vmatpush.msra.mxu0 %v1252
        %6374 = vmatpush.msra.mxu0 %v1248
        %6375 = vmatpush.msra.mxu0 %v1244
        %6376 = vmatpush.msra.mxu0 %v1240
        %6377 = vmatpush.msra.mxu0 %v1236
        %6378 = vmatpush.msra.mxu0 %v1232
        %6379 = vmatpush.msra.mxu0 %v1228
        %6380 = vmatpush.msra.mxu0 %v1224
        %6381 = vmatmul.f32.gmra.mxu0 %v653
        %v6382 = vpop.f32.mrf.mxu0
        %v6383 = vadd.f32 %v6270, %v6382
        %6384 = vmatmul.f32.gmra.mxu0 %v661
        %v6385 = vpop.f32.mrf.mxu0
        %v6386 = vadd.f32 %v6273, %v6385
        %6387 = vmatmul.f32.gmra.mxu0 %v669
        %v6388 = vpop.f32.mrf.mxu0
        %v6389 = vadd.f32 %v6276, %v6388
        %6390 = vmatmul.f32.gmra.mxu0 %v677
        %v6391 = vpop.f32.mrf.mxu0
        %v6392 = vadd.f32 %v6279, %v6391
        %6393 = vmatmul.f32.gmra.mxu0 %v685
        %v6394 = vpop.f32.mrf.mxu0
        %v6395 = vadd.f32 %v6282, %v6394
        %6396 = vmatmul.f32.gmra.mxu0 %v693
        %v6397 = vpop.f32.mrf.mxu0
        %v6398 = vadd.f32 %v6285, %v6397
        %6399 = vmatmul.f32.gmra.mxu0 %v701
        %v6400 = vpop.f32.mrf.mxu0
        %v6401 = vadd.f32 %v6288, %v6400
        %6402 = vmatmul.f32.gmra.mxu0 %v709
        %v6403 = vpop.f32.mrf.mxu0
        %v6404 = vadd.f32 %v6291, %v6403
        %6405 = vmatmul.f32.gmra.mxu0 %v717
        %v6406 = vpop.f32.mrf.mxu0
        %v6407 = vadd.f32 %v6294, %v6406
        %6408 = vmatmul.f32.gmra.mxu0 %v725
        %v6409 = vpop.f32.mrf.mxu0
        %v6410 = vadd.f32 %v6297, %v6409
        %6411 = vmatmul.f32.gmra.mxu0 %v733
        %v6412 = vpop.f32.mrf.mxu0
        %v6413 = vadd.f32 %v6300, %v6412
        %6414 = vmatmul.f32.gmra.mxu0 %v741
        %v6415 = vpop.f32.mrf.mxu0
        %v6416 = vadd.f32 %v6303, %v6415
        %6417 = vmatmul.f32.gmra.mxu0 %v749
        %v6418 = vpop.f32.mrf.mxu0
        %v6419 = vadd.f32 %v6306, %v6418
        %6420 = vmatmul.f32.gmra.mxu0 %v757
        %v6421 = vpop.f32.mrf.mxu0
        %v6422 = vadd.f32 %v6309, %v6421
        %6423 = vmatmul.f32.gmra.mxu0 %v765
        %v6424 = vpop.f32.mrf.mxu0
        %v6425 = vadd.f32 %v6312, %v6424
        %6426 = vmatmul.f32.gmra.mxu0 %v773
        %v6427 = vpop.f32.mrf.mxu0
        %v6428 = vadd.f32 %v6315, %v6427
        %6429 = vmatmul.f32.gmra.mxu0 %v781
        %v6430 = vpop.f32.mrf.mxu0
        %v6431 = vadd.f32 %v6318, %v6430
        %6432 = vmatmul.f32.gmra.mxu0 %v789
        %v6433 = vpop.f32.mrf.mxu0
        %v6434 = vadd.f32 %v6321, %v6433
        %6435 = vmatmul.f32.gmra.mxu0 %v797
        %v6436 = vpop.f32.mrf.mxu0
        %v6437 = vadd.f32 %v6324, %v6436
        %6438 = vmatmul.f32.gmra.mxu0 %v805
        %v6439 = vpop.f32.mrf.mxu0
        %v6440 = vadd.f32 %v6327, %v6439
        %6441 = vmatmul.f32.gmra.mxu0 %v813
        %v6442 = vpop.f32.mrf.mxu0
        %v6443 = vadd.f32 %v6330, %v6442
        %6444 = vmatmul.f32.gmra.mxu0 %v821
        %v6445 = vpop.f32.mrf.mxu0
        %v6446 = vadd.f32 %v6333, %v6445
        %6447 = vmatmul.f32.gmra.mxu0 %v829
        %v6448 = vpop.f32.mrf.mxu0
        %v6449 = vadd.f32 %v6336, %v6448
        %6450 = vmatmul.f32.gmra.mxu0 %v837
        %v6451 = vpop.f32.mrf.mxu0
        %v6452 = vadd.f32 %v6339, %v6451
        %6453 = vmatmul.f32.gmra.mxu0 %v845
        %v6454 = vpop.f32.mrf.mxu0
        %v6455 = vadd.f32 %v6342, %v6454
        %6456 = vmatmul.f32.gmra.mxu0 %v853
        %v6457 = vpop.f32.mrf.mxu0
        %v6458 = vadd.f32 %v6345, %v6457
        %6459 = vmatmul.f32.gmra.mxu0 %v861
        %v6460 = vpop.f32.mrf.mxu0
        %v6461 = vadd.f32 %v6348, %v6460
        %6462 = vmatmul.f32.gmra.mxu0 %v869
        %v6463 = vpop.f32.mrf.mxu0
        %v6464 = vadd.f32 %v6351, %v6463
        %6465 = vmatmul.f32.gmra.mxu0 %v877
        %v6466 = vpop.f32.mrf.mxu0
        %v6467 = vadd.f32 %v6354, %v6466
        %6468 = vmatmul.f32.gmra.mxu0 %v885
        %v6469 = vpop.f32.mrf.mxu0
        %v6470 = vadd.f32 %v6357, %v6469
        %6471 = vmatmul.f32.gmra.mxu0 %v893
        %v6472 = vpop.f32.mrf.mxu0
        %v6473 = vadd.f32 %v6360, %v6472
        %6474 = vmatmul.f32.gmra.mxu0 %v901
        %v6475 = vpop.f32.mrf.mxu0
        %v6476 = vadd.f32 %v6363, %v6475
        %6477 = vdwg.mxu0
        %6478 = vmatpush.msra.mxu0 %v1348
        %6479 = vmatpush.msra.mxu0 %v1344
        %6480 = vmatpush.msra.mxu0 %v1340
        %6481 = vmatpush.msra.mxu0 %v1336
        %6482 = vmatpush.msra.mxu0 %v1332
        %6483 = vmatpush.msra.mxu0 %v1328
        %6484 = vmatpush.msra.mxu0 %v1324
        %6485 = vmatpush.msra.mxu0 %v1320
        %6486 = vmatpush.msra.mxu0 %v1316
        %6487 = vmatpush.msra.mxu0 %v1312
        %6488 = vmatpush.msra.mxu0 %v1308
        %6489 = vmatpush.msra.mxu0 %v1304
        %6490 = vmatpush.msra.mxu0 %v1300
        %6491 = vmatpush.msra.mxu0 %v1296
        %6492 = vmatpush.msra.mxu0 %v1292
        %6493 = vmatpush.msra.mxu0 %v1288
        %6494 = vmatmul.f32.gmra.mxu0 %v654
        %v6495 = vpop.f32.mrf.mxu0
        %v6496 = vadd.f32 %v6383, %v6495
        %6497 = vmatmul.f32.gmra.mxu0 %v662
        %v6498 = vpop.f32.mrf.mxu0
        %v6499 = vadd.f32 %v6386, %v6498
        %6500 = vmatmul.f32.gmra.mxu0 %v670
        %v6501 = vpop.f32.mrf.mxu0
        %v6502 = vadd.f32 %v6389, %v6501
        %6503 = vmatmul.f32.gmra.mxu0 %v678
        %v6504 = vpop.f32.mrf.mxu0
        %v6505 = vadd.f32 %v6392, %v6504
        %6506 = vmatmul.f32.gmra.mxu0 %v686
        %v6507 = vpop.f32.mrf.mxu0
        %v6508 = vadd.f32 %v6395, %v6507
        %6509 = vmatmul.f32.gmra.mxu0 %v694
        %v6510 = vpop.f32.mrf.mxu0
        %v6511 = vadd.f32 %v6398, %v6510
        %6512 = vmatmul.f32.gmra.mxu0 %v702
        %v6513 = vpop.f32.mrf.mxu0
        %v6514 = vadd.f32 %v6401, %v6513
        %6515 = vmatmul.f32.gmra.mxu0 %v710
        %v6516 = vpop.f32.mrf.mxu0
        %v6517 = vadd.f32 %v6404, %v6516
        %6518 = vmatmul.f32.gmra.mxu0 %v718
        %v6519 = vpop.f32.mrf.mxu0
        %v6520 = vadd.f32 %v6407, %v6519
        %6521 = vmatmul.f32.gmra.mxu0 %v726
        %v6522 = vpop.f32.mrf.mxu0
        %v6523 = vadd.f32 %v6410, %v6522
        %6524 = vmatmul.f32.gmra.mxu0 %v734
        %v6525 = vpop.f32.mrf.mxu0
        %v6526 = vadd.f32 %v6413, %v6525
        %6527 = vmatmul.f32.gmra.mxu0 %v742
        %v6528 = vpop.f32.mrf.mxu0
        %v6529 = vadd.f32 %v6416, %v6528
        %6530 = vmatmul.f32.gmra.mxu0 %v750
        %v6531 = vpop.f32.mrf.mxu0
        %v6532 = vadd.f32 %v6419, %v6531
        %6533 = vmatmul.f32.gmra.mxu0 %v758
        %v6534 = vpop.f32.mrf.mxu0
        %v6535 = vadd.f32 %v6422, %v6534
        %6536 = vmatmul.f32.gmra.mxu0 %v766
        %v6537 = vpop.f32.mrf.mxu0
        %v6538 = vadd.f32 %v6425, %v6537
        %6539 = vmatmul.f32.gmra.mxu0 %v774
        %v6540 = vpop.f32.mrf.mxu0
        %v6541 = vadd.f32 %v6428, %v6540
        %6542 = vmatmul.f32.gmra.mxu0 %v782
        %v6543 = vpop.f32.mrf.mxu0
        %v6544 = vadd.f32 %v6431, %v6543
        %6545 = vmatmul.f32.gmra.mxu0 %v790
        %v6546 = vpop.f32.mrf.mxu0
        %v6547 = vadd.f32 %v6434, %v6546
        %6548 = vmatmul.f32.gmra.mxu0 %v798
        %v6549 = vpop.f32.mrf.mxu0
        %v6550 = vadd.f32 %v6437, %v6549
        %6551 = vmatmul.f32.gmra.mxu0 %v806
        %v6552 = vpop.f32.mrf.mxu0
        %v6553 = vadd.f32 %v6440, %v6552
        %6554 = vmatmul.f32.gmra.mxu0 %v814
        %v6555 = vpop.f32.mrf.mxu0
        %v6556 = vadd.f32 %v6443, %v6555
        %6557 = vmatmul.f32.gmra.mxu0 %v822
        %v6558 = vpop.f32.mrf.mxu0
        %v6559 = vadd.f32 %v6446, %v6558
        %6560 = vmatmul.f32.gmra.mxu0 %v830
        %v6561 = vpop.f32.mrf.mxu0
        %v6562 = vadd.f32 %v6449, %v6561
        %6563 = vmatmul.f32.gmra.mxu0 %v838
        %v6564 = vpop.f32.mrf.mxu0
        %v6565 = vadd.f32 %v6452, %v6564
        %6566 = vmatmul.f32.gmra.mxu0 %v846
        %v6567 = vpop.f32.mrf.mxu0
        %v6568 = vadd.f32 %v6455, %v6567
        %6569 = vmatmul.f32.gmra.mxu0 %v854
        %v6570 = vpop.f32.mrf.mxu0
        %v6571 = vadd.f32 %v6458, %v6570
        %6572 = vmatmul.f32.gmra.mxu0 %v862
        %v6573 = vpop.f32.mrf.mxu0
        %v6574 = vadd.f32 %v6461, %v6573
        %6575 = vmatmul.f32.gmra.mxu0 %v870
        %v6576 = vpop.f32.mrf.mxu0
        %v6577 = vadd.f32 %v6464, %v6576
        %6578 = vmatmul.f32.gmra.mxu0 %v878
        %v6579 = vpop.f32.mrf.mxu0
        %v6580 = vadd.f32 %v6467, %v6579
        %6581 = vmatmul.f32.gmra.mxu0 %v886
        %v6582 = vpop.f32.mrf.mxu0
        %v6583 = vadd.f32 %v6470, %v6582
        %6584 = vmatmul.f32.gmra.mxu0 %v894
        %v6585 = vpop.f32.mrf.mxu0
        %v6586 = vadd.f32 %v6473, %v6585
        %6587 = vmatmul.f32.gmra.mxu0 %v902
        %v6588 = vpop.f32.mrf.mxu0
        %v6589 = vadd.f32 %v6476, %v6588
        %6590 = vdwg.mxu0
        %6591 = vmatpush.msra.mxu0 %v1412
        %6592 = vmatpush.msra.mxu0 %v1408
        %6593 = vmatpush.msra.mxu0 %v1404
        %6594 = vmatpush.msra.mxu0 %v1400
        %6595 = vmatpush.msra.mxu0 %v1396
        %6596 = vmatpush.msra.mxu0 %v1392
        %6597 = vmatpush.msra.mxu0 %v1388
        %6598 = vmatpush.msra.mxu0 %v1384
        %6599 = vmatpush.msra.mxu0 %v1380
        %6600 = vmatpush.msra.mxu0 %v1376
        %6601 = vmatpush.msra.mxu0 %v1372
        %6602 = vmatpush.msra.mxu0 %v1368
        %6603 = vmatpush.msra.mxu0 %v1364
        %6604 = vmatpush.msra.mxu0 %v1360
        %6605 = vmatpush.msra.mxu0 %v1356
        %6606 = vmatpush.msra.mxu0 %v1352
        %6607 = vmatmul.f32.gmra.mxu0 %v655
        %v6608 = vpop.f32.mrf.mxu0
        %v6609 = vadd.f32 %v6496, %v6608
        %6610 = vmatmul.f32.gmra.mxu0 %v663
        %v6611 = vpop.f32.mrf.mxu0
        %v6612 = vadd.f32 %v6499, %v6611
        %6613 = vmatmul.f32.gmra.mxu0 %v671
        %v6614 = vpop.f32.mrf.mxu0
        %v6615 = vadd.f32 %v6502, %v6614
        %6616 = vmatmul.f32.gmra.mxu0 %v679
        %v6617 = vpop.f32.mrf.mxu0
        %v6618 = vadd.f32 %v6505, %v6617
        %6619 = vmatmul.f32.gmra.mxu0 %v687
        %v6620 = vpop.f32.mrf.mxu0
        %v6621 = vadd.f32 %v6508, %v6620
        %6622 = vmatmul.f32.gmra.mxu0 %v695
        %v6623 = vpop.f32.mrf.mxu0
        %v6624 = vadd.f32 %v6511, %v6623
        %6625 = vmatmul.f32.gmra.mxu0 %v703
        %v6626 = vpop.f32.mrf.mxu0
        %v6627 = vadd.f32 %v6514, %v6626
        %6628 = vmatmul.f32.gmra.mxu0 %v711
        %v6629 = vpop.f32.mrf.mxu0
        %v6630 = vadd.f32 %v6517, %v6629
        %6631 = vmatmul.f32.gmra.mxu0 %v719
        %v6632 = vpop.f32.mrf.mxu0
        %v6633 = vadd.f32 %v6520, %v6632
        %6634 = vmatmul.f32.gmra.mxu0 %v727
        %v6635 = vpop.f32.mrf.mxu0
        %v6636 = vadd.f32 %v6523, %v6635
        %6637 = vmatmul.f32.gmra.mxu0 %v735
        %v6638 = vpop.f32.mrf.mxu0
        %v6639 = vadd.f32 %v6526, %v6638
        %6640 = vmatmul.f32.gmra.mxu0 %v743
        %v6641 = vpop.f32.mrf.mxu0
        %v6642 = vadd.f32 %v6529, %v6641
        %6643 = vmatmul.f32.gmra.mxu0 %v751
        %v6644 = vpop.f32.mrf.mxu0
        %v6645 = vadd.f32 %v6532, %v6644
        %6646 = vmatmul.f32.gmra.mxu0 %v759
        %v6647 = vpop.f32.mrf.mxu0
        %v6648 = vadd.f32 %v6535, %v6647
        %6649 = vmatmul.f32.gmra.mxu0 %v767
        %v6650 = vpop.f32.mrf.mxu0
        %v6651 = vadd.f32 %v6538, %v6650
        %6652 = vmatmul.f32.gmra.mxu0 %v775
        %v6653 = vpop.f32.mrf.mxu0
        %v6654 = vadd.f32 %v6541, %v6653
        %6655 = vmatmul.f32.gmra.mxu0 %v783
        %v6656 = vpop.f32.mrf.mxu0
        %v6657 = vadd.f32 %v6544, %v6656
        %6658 = vmatmul.f32.gmra.mxu0 %v791
        %v6659 = vpop.f32.mrf.mxu0
        %v6660 = vadd.f32 %v6547, %v6659
        %6661 = vmatmul.f32.gmra.mxu0 %v799
        %v6662 = vpop.f32.mrf.mxu0
        %v6663 = vadd.f32 %v6550, %v6662
        %6664 = vmatmul.f32.gmra.mxu0 %v807
        %v6665 = vpop.f32.mrf.mxu0
        %v6666 = vadd.f32 %v6553, %v6665
        %6667 = vmatmul.f32.gmra.mxu0 %v815
        %v6668 = vpop.f32.mrf.mxu0
        %v6669 = vadd.f32 %v6556, %v6668
        %6670 = vmatmul.f32.gmra.mxu0 %v823
        %v6671 = vpop.f32.mrf.mxu0
        %v6672 = vadd.f32 %v6559, %v6671
        %6673 = vmatmul.f32.gmra.mxu0 %v831
        %v6674 = vpop.f32.mrf.mxu0
        %v6675 = vadd.f32 %v6562, %v6674
        %6676 = vmatmul.f32.gmra.mxu0 %v839
        %v6677 = vpop.f32.mrf.mxu0
        %v6678 = vadd.f32 %v6565, %v6677
        %6679 = vmatmul.f32.gmra.mxu0 %v847
        %v6680 = vpop.f32.mrf.mxu0
        %v6681 = vadd.f32 %v6568, %v6680
        %6682 = vmatmul.f32.gmra.mxu0 %v855
        %v6683 = vpop.f32.mrf.mxu0
        %v6684 = vadd.f32 %v6571, %v6683
        %6685 = vmatmul.f32.gmra.mxu0 %v863
        %v6686 = vpop.f32.mrf.mxu0
        %v6687 = vadd.f32 %v6574, %v6686
        %6688 = vmatmul.f32.gmra.mxu0 %v871
        %v6689 = vpop.f32.mrf.mxu0
        %v6690 = vadd.f32 %v6577, %v6689
        %6691 = vmatmul.f32.gmra.mxu0 %v879
        %v6692 = vpop.f32.mrf.mxu0
        %v6693 = vadd.f32 %v6580, %v6692
        %6694 = vmatmul.f32.gmra.mxu0 %v887
        %v6695 = vpop.f32.mrf.mxu0
        %v6696 = vadd.f32 %v6583, %v6695
        %6697 = vmatmul.f32.gmra.mxu0 %v895
        %v6698 = vpop.f32.mrf.mxu0
        %v6699 = vadd.f32 %v6586, %v6698
        %6700 = vmatmul.f32.gmra.mxu0 %v903
        %v6701 = vpop.f32.mrf.mxu0
        %v6702 = vadd.f32 %v6589, %v6701
        %6703 = vdwg.mxu0
        %6704 = vmatpush.msra.mxu0 %v965
        %6705 = vmatpush.msra.mxu0 %v961
        %6706 = vmatpush.msra.mxu0 %v957
        %6707 = vmatpush.msra.mxu0 %v953
        %6708 = vmatpush.msra.mxu0 %v949
        %6709 = vmatpush.msra.mxu0 %v945
        %6710 = vmatpush.msra.mxu0 %v941
        %6711 = vmatpush.msra.mxu0 %v937
        %6712 = vmatpush.msra.mxu0 %v933
        %6713 = vmatpush.msra.mxu0 %v929
        %6714 = vmatpush.msra.mxu0 %v925
        %6715 = vmatpush.msra.mxu0 %v921
        %6716 = vmatpush.msra.mxu0 %v917
        %6717 = vmatpush.msra.mxu0 %v913
        %6718 = vmatpush.msra.mxu0 %v909
        %6719 = vmatpush.msra.mxu0 %v905
        %6720 = vmatmul.f32.gmra.mxu0 %v648
        %v6721 = vpop.f32.mrf.mxu0
        %v6722 = vadd.f32 %v3897, %v6721
        %6723 = vmatmul.f32.gmra.mxu0 %v656
        %v6724 = vpop.f32.mrf.mxu0
        %v6725 = vadd.f32 %v3900, %v6724
        %6726 = vmatmul.f32.gmra.mxu0 %v664
        %v6727 = vpop.f32.mrf.mxu0
        %v6728 = vadd.f32 %v3903, %v6727
        %6729 = vmatmul.f32.gmra.mxu0 %v672
        %v6730 = vpop.f32.mrf.mxu0
        %v6731 = vadd.f32 %v3906, %v6730
        %6732 = vmatmul.f32.gmra.mxu0 %v680
        %v6733 = vpop.f32.mrf.mxu0
        %v6734 = vadd.f32 %v3909, %v6733
        %6735 = vmatmul.f32.gmra.mxu0 %v688
        %v6736 = vpop.f32.mrf.mxu0
        %v6737 = vadd.f32 %v3912, %v6736
        %6738 = vmatmul.f32.gmra.mxu0 %v696
        %v6739 = vpop.f32.mrf.mxu0
        %v6740 = vadd.f32 %v3915, %v6739
        %6741 = vmatmul.f32.gmra.mxu0 %v704
        %v6742 = vpop.f32.mrf.mxu0
        %v6743 = vadd.f32 %v3918, %v6742
        %6744 = vmatmul.f32.gmra.mxu0 %v712
        %v6745 = vpop.f32.mrf.mxu0
        %v6746 = vadd.f32 %v3921, %v6745
        %6747 = vmatmul.f32.gmra.mxu0 %v720
        %v6748 = vpop.f32.mrf.mxu0
        %v6749 = vadd.f32 %v3924, %v6748
        %6750 = vmatmul.f32.gmra.mxu0 %v728
        %v6751 = vpop.f32.mrf.mxu0
        %v6752 = vadd.f32 %v3927, %v6751
        %6753 = vmatmul.f32.gmra.mxu0 %v736
        %v6754 = vpop.f32.mrf.mxu0
        %v6755 = vadd.f32 %v3930, %v6754
        %6756 = vmatmul.f32.gmra.mxu0 %v744
        %v6757 = vpop.f32.mrf.mxu0
        %v6758 = vadd.f32 %v3933, %v6757
        %6759 = vmatmul.f32.gmra.mxu0 %v752
        %v6760 = vpop.f32.mrf.mxu0
        %v6761 = vadd.f32 %v3936, %v6760
        %6762 = vmatmul.f32.gmra.mxu0 %v760
        %v6763 = vpop.f32.mrf.mxu0
        %v6764 = vadd.f32 %v3939, %v6763
        %6765 = vmatmul.f32.gmra.mxu0 %v768
        %v6766 = vpop.f32.mrf.mxu0
        %v6767 = vadd.f32 %v3942, %v6766
        %6768 = vmatmul.f32.gmra.mxu0 %v776
        %v6769 = vpop.f32.mrf.mxu0
        %v6770 = vadd.f32 %v3945, %v6769
        %6771 = vmatmul.f32.gmra.mxu0 %v784
        %v6772 = vpop.f32.mrf.mxu0
        %v6773 = vadd.f32 %v3948, %v6772
        %6774 = vmatmul.f32.gmra.mxu0 %v792
        %v6775 = vpop.f32.mrf.mxu0
        %v6776 = vadd.f32 %v3951, %v6775
        %6777 = vmatmul.f32.gmra.mxu0 %v800
        %v6778 = vpop.f32.mrf.mxu0
        %v6779 = vadd.f32 %v3954, %v6778
        %6780 = vmatmul.f32.gmra.mxu0 %v808
        %v6781 = vpop.f32.mrf.mxu0
        %v6782 = vadd.f32 %v3957, %v6781
        %6783 = vmatmul.f32.gmra.mxu0 %v816
        %v6784 = vpop.f32.mrf.mxu0
        %v6785 = vadd.f32 %v3960, %v6784
        %6786 = vmatmul.f32.gmra.mxu0 %v824
        %v6787 = vpop.f32.mrf.mxu0
        %v6788 = vadd.f32 %v3963, %v6787
        %6789 = vmatmul.f32.gmra.mxu0 %v832
        %v6790 = vpop.f32.mrf.mxu0
        %v6791 = vadd.f32 %v3966, %v6790
        %6792 = vmatmul.f32.gmra.mxu0 %v840
        %v6793 = vpop.f32.mrf.mxu0
        %v6794 = vadd.f32 %v3969, %v6793
        %6795 = vmatmul.f32.gmra.mxu0 %v848
        %v6796 = vpop.f32.mrf.mxu0
        %v6797 = vadd.f32 %v3972, %v6796
        %6798 = vmatmul.f32.gmra.mxu0 %v856
        %v6799 = vpop.f32.mrf.mxu0
        %v6800 = vadd.f32 %v3975, %v6799
        %6801 = vmatmul.f32.gmra.mxu0 %v864
        %v6802 = vpop.f32.mrf.mxu0
        %v6803 = vadd.f32 %v3978, %v6802
        %6804 = vmatmul.f32.gmra.mxu0 %v872
        %v6805 = vpop.f32.mrf.mxu0
        %v6806 = vadd.f32 %v3981, %v6805
        %6807 = vmatmul.f32.gmra.mxu0 %v880
        %v6808 = vpop.f32.mrf.mxu0
        %v6809 = vadd.f32 %v3984, %v6808
        %6810 = vmatmul.f32.gmra.mxu0 %v888
        %v6811 = vpop.f32.mrf.mxu0
        %v6812 = vadd.f32 %v3987, %v6811
        %6813 = vmatmul.f32.gmra.mxu0 %v896
        %v6814 = vpop.f32.mrf.mxu0
        %v6815 = vadd.f32 %v3990, %v6814
        %6816 = vdwg.mxu0
        %6817 = vmatpush.msra.mxu0 %v1029
        %6818 = vmatpush.msra.mxu0 %v1025
        %6819 = vmatpush.msra.mxu0 %v1021
        %6820 = vmatpush.msra.mxu0 %v1017
        %6821 = vmatpush.msra.mxu0 %v1013
        %6822 = vmatpush.msra.mxu0 %v1009
        %6823 = vmatpush.msra.mxu0 %v1005
        %6824 = vmatpush.msra.mxu0 %v1001
        %6825 = vmatpush.msra.mxu0 %v997
        %6826 = vmatpush.msra.mxu0 %v993
        %6827 = vmatpush.msra.mxu0 %v989
        %6828 = vmatpush.msra.mxu0 %v985
        %6829 = vmatpush.msra.mxu0 %v981
        %6830 = vmatpush.msra.mxu0 %v977
        %6831 = vmatpush.msra.mxu0 %v973
        %6832 = vmatpush.msra.mxu0 %v969
        %6833 = vmatmul.f32.gmra.mxu0 %v649
        %v6834 = vpop.f32.mrf.mxu0
        %v6835 = vadd.f32 %v6722, %v6834
        %6836 = vmatmul.f32.gmra.mxu0 %v657
        %v6837 = vpop.f32.mrf.mxu0
        %v6838 = vadd.f32 %v6725, %v6837
        %6839 = vmatmul.f32.gmra.mxu0 %v665
        %v6840 = vpop.f32.mrf.mxu0
        %v6841 = vadd.f32 %v6728, %v6840
        %6842 = vmatmul.f32.gmra.mxu0 %v673
        %v6843 = vpop.f32.mrf.mxu0
        %v6844 = vadd.f32 %v6731, %v6843
        %6845 = vmatmul.f32.gmra.mxu0 %v681
        %v6846 = vpop.f32.mrf.mxu0
        %v6847 = vadd.f32 %v6734, %v6846
        %6848 = vmatmul.f32.gmra.mxu0 %v689
        %v6849 = vpop.f32.mrf.mxu0
        %v6850 = vadd.f32 %v6737, %v6849
        %6851 = vmatmul.f32.gmra.mxu0 %v697
        %v6852 = vpop.f32.mrf.mxu0
        %v6853 = vadd.f32 %v6740, %v6852
        %6854 = vmatmul.f32.gmra.mxu0 %v705
        %v6855 = vpop.f32.mrf.mxu0
        %v6856 = vadd.f32 %v6743, %v6855
        %6857 = vmatmul.f32.gmra.mxu0 %v713
        %v6858 = vpop.f32.mrf.mxu0
        %v6859 = vadd.f32 %v6746, %v6858
        %6860 = vmatmul.f32.gmra.mxu0 %v721
        %v6861 = vpop.f32.mrf.mxu0
        %v6862 = vadd.f32 %v6749, %v6861
        %6863 = vmatmul.f32.gmra.mxu0 %v729
        %v6864 = vpop.f32.mrf.mxu0
        %v6865 = vadd.f32 %v6752, %v6864
        %6866 = vmatmul.f32.gmra.mxu0 %v737
        %v6867 = vpop.f32.mrf.mxu0
        %v6868 = vadd.f32 %v6755, %v6867
        %6869 = vmatmul.f32.gmra.mxu0 %v745
        %v6870 = vpop.f32.mrf.mxu0
        %v6871 = vadd.f32 %v6758, %v6870
        %6872 = vmatmul.f32.gmra.mxu0 %v753
        %v6873 = vpop.f32.mrf.mxu0
        %v6874 = vadd.f32 %v6761, %v6873
        %6875 = vmatmul.f32.gmra.mxu0 %v761
        %v6876 = vpop.f32.mrf.mxu0
        %v6877 = vadd.f32 %v6764, %v6876
        %6878 = vmatmul.f32.gmra.mxu0 %v769
        %v6879 = vpop.f32.mrf.mxu0
        %v6880 = vadd.f32 %v6767, %v6879
        %6881 = vmatmul.f32.gmra.mxu0 %v777
        %v6882 = vpop.f32.mrf.mxu0
        %v6883 = vadd.f32 %v6770, %v6882
        %6884 = vmatmul.f32.gmra.mxu0 %v785
        %v6885 = vpop.f32.mrf.mxu0
        %v6886 = vadd.f32 %v6773, %v6885
        %6887 = vmatmul.f32.gmra.mxu0 %v793
        %v6888 = vpop.f32.mrf.mxu0
        %v6889 = vadd.f32 %v6776, %v6888
        %6890 = vmatmul.f32.gmra.mxu0 %v801
        %v6891 = vpop.f32.mrf.mxu0
        %v6892 = vadd.f32 %v6779, %v6891
        %6893 = vmatmul.f32.gmra.mxu0 %v809
        %v6894 = vpop.f32.mrf.mxu0
        %v6895 = vadd.f32 %v6782, %v6894
        %6896 = vmatmul.f32.gmra.mxu0 %v817
        %v6897 = vpop.f32.mrf.mxu0
        %v6898 = vadd.f32 %v6785, %v6897
        %6899 = vmatmul.f32.gmra.mxu0 %v825
        %v6900 = vpop.f32.mrf.mxu0
        %v6901 = vadd.f32 %v6788, %v6900
        %6902 = vmatmul.f32.gmra.mxu0 %v833
        %v6903 = vpop.f32.mrf.mxu0
        %v6904 = vadd.f32 %v6791, %v6903
        %6905 = vmatmul.f32.gmra.mxu0 %v841
        %v6906 = vpop.f32.mrf.mxu0
        %v6907 = vadd.f32 %v6794, %v6906
        %6908 = vmatmul.f32.gmra.mxu0 %v849
        %v6909 = vpop.f32.mrf.mxu0
        %v6910 = vadd.f32 %v6797, %v6909
        %6911 = vmatmul.f32.gmra.mxu0 %v857
        %v6912 = vpop.f32.mrf.mxu0
        %v6913 = vadd.f32 %v6800, %v6912
        %6914 = vmatmul.f32.gmra.mxu0 %v865
        %v6915 = vpop.f32.mrf.mxu0
        %v6916 = vadd.f32 %v6803, %v6915
        %6917 = vmatmul.f32.gmra.mxu0 %v873
        %v6918 = vpop.f32.mrf.mxu0
        %v6919 = vadd.f32 %v6806, %v6918
        %6920 = vmatmul.f32.gmra.mxu0 %v881
        %v6921 = vpop.f32.mrf.mxu0
        %v6922 = vadd.f32 %v6809, %v6921
        %6923 = vmatmul.f32.gmra.mxu0 %v889
        %v6924 = vpop.f32.mrf.mxu0
        %v6925 = vadd.f32 %v6812, %v6924
        %6926 = vmatmul.f32.gmra.mxu0 %v897
        %v6927 = vpop.f32.mrf.mxu0
        %v6928 = vadd.f32 %v6815, %v6927
        %6929 = vdwg.mxu0
        %6930 = vmatpush.msra.mxu0 %v1093
        %6931 = vmatpush.msra.mxu0 %v1089
        %6932 = vmatpush.msra.mxu0 %v1085
        %6933 = vmatpush.msra.mxu0 %v1081
        %6934 = vmatpush.msra.mxu0 %v1077
        %6935 = vmatpush.msra.mxu0 %v1073
        %6936 = vmatpush.msra.mxu0 %v1069
        %6937 = vmatpush.msra.mxu0 %v1065
        %6938 = vmatpush.msra.mxu0 %v1061
        %6939 = vmatpush.msra.mxu0 %v1057
        %6940 = vmatpush.msra.mxu0 %v1053
        %6941 = vmatpush.msra.mxu0 %v1049
        %6942 = vmatpush.msra.mxu0 %v1045
        %6943 = vmatpush.msra.mxu0 %v1041
        %6944 = vmatpush.msra.mxu0 %v1037
        %6945 = vmatpush.msra.mxu0 %v1033
        %6946 = vmatmul.f32.gmra.mxu0 %v650
        %v6947 = vpop.f32.mrf.mxu0
        %v6948 = vadd.f32 %v6835, %v6947
        %6949 = vmatmul.f32.gmra.mxu0 %v658
        %v6950 = vpop.f32.mrf.mxu0
        %v6951 = vadd.f32 %v6838, %v6950
        %6952 = vmatmul.f32.gmra.mxu0 %v666
        %v6953 = vpop.f32.mrf.mxu0
        %v6954 = vadd.f32 %v6841, %v6953
        %6955 = vmatmul.f32.gmra.mxu0 %v674
        %v6956 = vpop.f32.mrf.mxu0
        %v6957 = vadd.f32 %v6844, %v6956
        %6958 = vmatmul.f32.gmra.mxu0 %v682
        %v6959 = vpop.f32.mrf.mxu0
        %v6960 = vadd.f32 %v6847, %v6959
        %6961 = vmatmul.f32.gmra.mxu0 %v690
        %v6962 = vpop.f32.mrf.mxu0
        %v6963 = vadd.f32 %v6850, %v6962
        %6964 = vmatmul.f32.gmra.mxu0 %v698
        %v6965 = vpop.f32.mrf.mxu0
        %v6966 = vadd.f32 %v6853, %v6965
        %6967 = vmatmul.f32.gmra.mxu0 %v706
        %v6968 = vpop.f32.mrf.mxu0
        %v6969 = vadd.f32 %v6856, %v6968
        %6970 = vmatmul.f32.gmra.mxu0 %v714
        %v6971 = vpop.f32.mrf.mxu0
        %v6972 = vadd.f32 %v6859, %v6971
        %6973 = vmatmul.f32.gmra.mxu0 %v722
        %v6974 = vpop.f32.mrf.mxu0
        %v6975 = vadd.f32 %v6862, %v6974
        %6976 = vmatmul.f32.gmra.mxu0 %v730
        %v6977 = vpop.f32.mrf.mxu0
        %v6978 = vadd.f32 %v6865, %v6977
        %6979 = vmatmul.f32.gmra.mxu0 %v738
        %v6980 = vpop.f32.mrf.mxu0
        %v6981 = vadd.f32 %v6868, %v6980
        %6982 = vmatmul.f32.gmra.mxu0 %v746
        %v6983 = vpop.f32.mrf.mxu0
        %v6984 = vadd.f32 %v6871, %v6983
        %6985 = vmatmul.f32.gmra.mxu0 %v754
        %v6986 = vpop.f32.mrf.mxu0
        %v6987 = vadd.f32 %v6874, %v6986
        %6988 = vmatmul.f32.gmra.mxu0 %v762
        %v6989 = vpop.f32.mrf.mxu0
        %v6990 = vadd.f32 %v6877, %v6989
        %6991 = vmatmul.f32.gmra.mxu0 %v770
        %v6992 = vpop.f32.mrf.mxu0
        %v6993 = vadd.f32 %v6880, %v6992
        %6994 = vmatmul.f32.gmra.mxu0 %v778
        %v6995 = vpop.f32.mrf.mxu0
        %v6996 = vadd.f32 %v6883, %v6995
        %6997 = vmatmul.f32.gmra.mxu0 %v786
        %v6998 = vpop.f32.mrf.mxu0
        %v6999 = vadd.f32 %v6886, %v6998
        %7000 = vmatmul.f32.gmra.mxu0 %v794
        %v7001 = vpop.f32.mrf.mxu0
        %v7002 = vadd.f32 %v6889, %v7001
        %7003 = vmatmul.f32.gmra.mxu0 %v802
        %v7004 = vpop.f32.mrf.mxu0
        %v7005 = vadd.f32 %v6892, %v7004
        %7006 = vmatmul.f32.gmra.mxu0 %v810
        %v7007 = vpop.f32.mrf.mxu0
        %v7008 = vadd.f32 %v6895, %v7007
        %7009 = vmatmul.f32.gmra.mxu0 %v818
        %v7010 = vpop.f32.mrf.mxu0
        %v7011 = vadd.f32 %v6898, %v7010
        %7012 = vmatmul.f32.gmra.mxu0 %v826
        %v7013 = vpop.f32.mrf.mxu0
        %v7014 = vadd.f32 %v6901, %v7013
        %7015 = vmatmul.f32.gmra.mxu0 %v834
        %v7016 = vpop.f32.mrf.mxu0
        %v7017 = vadd.f32 %v6904, %v7016
        %7018 = vmatmul.f32.gmra.mxu0 %v842
        %v7019 = vpop.f32.mrf.mxu0
        %v7020 = vadd.f32 %v6907, %v7019
        %7021 = vmatmul.f32.gmra.mxu0 %v850
        %v7022 = vpop.f32.mrf.mxu0
        %v7023 = vadd.f32 %v6910, %v7022
        %7024 = vmatmul.f32.gmra.mxu0 %v858
        %v7025 = vpop.f32.mrf.mxu0
        %v7026 = vadd.f32 %v6913, %v7025
        %7027 = vmatmul.f32.gmra.mxu0 %v866
        %v7028 = vpop.f32.mrf.mxu0
        %v7029 = vadd.f32 %v6916, %v7028
        %7030 = vmatmul.f32.gmra.mxu0 %v874
        %v7031 = vpop.f32.mrf.mxu0
        %v7032 = vadd.f32 %v6919, %v7031
        %7033 = vmatmul.f32.gmra.mxu0 %v882
        %v7034 = vpop.f32.mrf.mxu0
        %v7035 = vadd.f32 %v6922, %v7034
        %7036 = vmatmul.f32.gmra.mxu0 %v890
        %v7037 = vpop.f32.mrf.mxu0
        %v7038 = vadd.f32 %v6925, %v7037
        %7039 = vmatmul.f32.gmra.mxu0 %v898
        %v7040 = vpop.f32.mrf.mxu0
        %v7041 = vadd.f32 %v6928, %v7040
        %7042 = vdwg.mxu0
        %7043 = vmatpush.msra.mxu0 %v1157
        %7044 = vmatpush.msra.mxu0 %v1153
        %7045 = vmatpush.msra.mxu0 %v1149
        %7046 = vmatpush.msra.mxu0 %v1145
        %7047 = vmatpush.msra.mxu0 %v1141
        %7048 = vmatpush.msra.mxu0 %v1137
        %7049 = vmatpush.msra.mxu0 %v1133
        %7050 = vmatpush.msra.mxu0 %v1129
        %7051 = vmatpush.msra.mxu0 %v1125
        %7052 = vmatpush.msra.mxu0 %v1121
        %7053 = vmatpush.msra.mxu0 %v1117
        %7054 = vmatpush.msra.mxu0 %v1113
        %7055 = vmatpush.msra.mxu0 %v1109
        %7056 = vmatpush.msra.mxu0 %v1105
        %7057 = vmatpush.msra.mxu0 %v1101
        %7058 = vmatpush.msra.mxu0 %v1097
        %7059 = vmatmul.f32.gmra.mxu0 %v651
        %v7060 = vpop.f32.mrf.mxu0
        %v7061 = vadd.f32 %v6948, %v7060
        %7062 = vmatmul.f32.gmra.mxu0 %v659
        %v7063 = vpop.f32.mrf.mxu0
        %v7064 = vadd.f32 %v6951, %v7063
        %7065 = vmatmul.f32.gmra.mxu0 %v667
        %v7066 = vpop.f32.mrf.mxu0
        %v7067 = vadd.f32 %v6954, %v7066
        %7068 = vmatmul.f32.gmra.mxu0 %v675
        %v7069 = vpop.f32.mrf.mxu0
        %v7070 = vadd.f32 %v6957, %v7069
        %7071 = vmatmul.f32.gmra.mxu0 %v683
        %v7072 = vpop.f32.mrf.mxu0
        %v7073 = vadd.f32 %v6960, %v7072
        %7074 = vmatmul.f32.gmra.mxu0 %v691
        %v7075 = vpop.f32.mrf.mxu0
        %v7076 = vadd.f32 %v6963, %v7075
        %7077 = vmatmul.f32.gmra.mxu0 %v699
        %v7078 = vpop.f32.mrf.mxu0
        %v7079 = vadd.f32 %v6966, %v7078
        %7080 = vmatmul.f32.gmra.mxu0 %v707
        %v7081 = vpop.f32.mrf.mxu0
        %v7082 = vadd.f32 %v6969, %v7081
        %7083 = vmatmul.f32.gmra.mxu0 %v715
        %v7084 = vpop.f32.mrf.mxu0
        %v7085 = vadd.f32 %v6972, %v7084
        %7086 = vmatmul.f32.gmra.mxu0 %v723
        %v7087 = vpop.f32.mrf.mxu0
        %v7088 = vadd.f32 %v6975, %v7087
        %7089 = vmatmul.f32.gmra.mxu0 %v731
        %v7090 = vpop.f32.mrf.mxu0
        %v7091 = vadd.f32 %v6978, %v7090
        %7092 = vmatmul.f32.gmra.mxu0 %v739
        %v7093 = vpop.f32.mrf.mxu0
        %v7094 = vadd.f32 %v6981, %v7093
        %7095 = vmatmul.f32.gmra.mxu0 %v747
        %v7096 = vpop.f32.mrf.mxu0
        %v7097 = vadd.f32 %v6984, %v7096
        %7098 = vmatmul.f32.gmra.mxu0 %v755
        %v7099 = vpop.f32.mrf.mxu0
        %v7100 = vadd.f32 %v6987, %v7099
        %7101 = vmatmul.f32.gmra.mxu0 %v763
        %v7102 = vpop.f32.mrf.mxu0
        %v7103 = vadd.f32 %v6990, %v7102
        %7104 = vmatmul.f32.gmra.mxu0 %v771
        %v7105 = vpop.f32.mrf.mxu0
        %v7106 = vadd.f32 %v6993, %v7105
        %7107 = vmatmul.f32.gmra.mxu0 %v779
        %v7108 = vpop.f32.mrf.mxu0
        %v7109 = vadd.f32 %v6996, %v7108
        %7110 = vmatmul.f32.gmra.mxu0 %v787
        %v7111 = vpop.f32.mrf.mxu0
        %v7112 = vadd.f32 %v6999, %v7111
        %7113 = vmatmul.f32.gmra.mxu0 %v795
        %v7114 = vpop.f32.mrf.mxu0
        %v7115 = vadd.f32 %v7002, %v7114
        %7116 = vmatmul.f32.gmra.mxu0 %v803
        %v7117 = vpop.f32.mrf.mxu0
        %v7118 = vadd.f32 %v7005, %v7117
        %7119 = vmatmul.f32.gmra.mxu0 %v811
        %v7120 = vpop.f32.mrf.mxu0
        %v7121 = vadd.f32 %v7008, %v7120
        %7122 = vmatmul.f32.gmra.mxu0 %v819
        %v7123 = vpop.f32.mrf.mxu0
        %v7124 = vadd.f32 %v7011, %v7123
        %7125 = vmatmul.f32.gmra.mxu0 %v827
        %v7126 = vpop.f32.mrf.mxu0
        %v7127 = vadd.f32 %v7014, %v7126
        %7128 = vmatmul.f32.gmra.mxu0 %v835
        %v7129 = vpop.f32.mrf.mxu0
        %v7130 = vadd.f32 %v7017, %v7129
        %7131 = vmatmul.f32.gmra.mxu0 %v843
        %v7132 = vpop.f32.mrf.mxu0
        %v7133 = vadd.f32 %v7020, %v7132
        %7134 = vmatmul.f32.gmra.mxu0 %v851
        %v7135 = vpop.f32.mrf.mxu0
        %v7136 = vadd.f32 %v7023, %v7135
        %7137 = vmatmul.f32.gmra.mxu0 %v859
        %v7138 = vpop.f32.mrf.mxu0
        %v7139 = vadd.f32 %v7026, %v7138
        %7140 = vmatmul.f32.gmra.mxu0 %v867
        %v7141 = vpop.f32.mrf.mxu0
        %v7142 = vadd.f32 %v7029, %v7141
        %7143 = vmatmul.f32.gmra.mxu0 %v875
        %v7144 = vpop.f32.mrf.mxu0
        %v7145 = vadd.f32 %v7032, %v7144
        %7146 = vmatmul.f32.gmra.mxu0 %v883
        %v7147 = vpop.f32.mrf.mxu0
        %v7148 = vadd.f32 %v7035, %v7147
        %7149 = vmatmul.f32.gmra.mxu0 %v891
        %v7150 = vpop.f32.mrf.mxu0
        %v7151 = vadd.f32 %v7038, %v7150
        %7152 = vmatmul.f32.gmra.mxu0 %v899
        %v7153 = vpop.f32.mrf.mxu0
        %v7154 = vadd.f32 %v7041, %v7153
        %7155 = vdwg.mxu0
        %7156 = vmatpush.msra.mxu0 %v1221
        %7157 = vmatpush.msra.mxu0 %v1217
        %7158 = vmatpush.msra.mxu0 %v1213
        %7159 = vmatpush.msra.mxu0 %v1209
        %7160 = vmatpush.msra.mxu0 %v1205
        %7161 = vmatpush.msra.mxu0 %v1201
        %7162 = vmatpush.msra.mxu0 %v1197
        %7163 = vmatpush.msra.mxu0 %v1193
        %7164 = vmatpush.msra.mxu0 %v1189
        %7165 = vmatpush.msra.mxu0 %v1185
        %7166 = vmatpush.msra.mxu0 %v1181
        %7167 = vmatpush.msra.mxu0 %v1177
        %7168 = vmatpush.msra.mxu0 %v1173
        %7169 = vmatpush.msra.mxu0 %v1169
        %7170 = vmatpush.msra.mxu0 %v1165
        %7171 = vmatpush.msra.mxu0 %v1161
        %7172 = vmatmul.f32.gmra.mxu0 %v652
        %v7173 = vpop.f32.mrf.mxu0
        %v7174 = vadd.f32 %v7061, %v7173
        %7175 = vmatmul.f32.gmra.mxu0 %v660
        %v7176 = vpop.f32.mrf.mxu0
        %v7177 = vadd.f32 %v7064, %v7176
        %7178 = vmatmul.f32.gmra.mxu0 %v668
        %v7179 = vpop.f32.mrf.mxu0
        %v7180 = vadd.f32 %v7067, %v7179
        %7181 = vmatmul.f32.gmra.mxu0 %v676
        %v7182 = vpop.f32.mrf.mxu0
        %v7183 = vadd.f32 %v7070, %v7182
        %7184 = vmatmul.f32.gmra.mxu0 %v684
        %v7185 = vpop.f32.mrf.mxu0
        %v7186 = vadd.f32 %v7073, %v7185
        %7187 = vmatmul.f32.gmra.mxu0 %v692
        %v7188 = vpop.f32.mrf.mxu0
        %v7189 = vadd.f32 %v7076, %v7188
        %7190 = vmatmul.f32.gmra.mxu0 %v700
        %v7191 = vpop.f32.mrf.mxu0
        %v7192 = vadd.f32 %v7079, %v7191
        %7193 = vmatmul.f32.gmra.mxu0 %v708
        %v7194 = vpop.f32.mrf.mxu0
        %v7195 = vadd.f32 %v7082, %v7194
        %7196 = vmatmul.f32.gmra.mxu0 %v716
        %v7197 = vpop.f32.mrf.mxu0
        %v7198 = vadd.f32 %v7085, %v7197
        %7199 = vmatmul.f32.gmra.mxu0 %v724
        %v7200 = vpop.f32.mrf.mxu0
        %v7201 = vadd.f32 %v7088, %v7200
        %7202 = vmatmul.f32.gmra.mxu0 %v732
        %v7203 = vpop.f32.mrf.mxu0
        %v7204 = vadd.f32 %v7091, %v7203
        %7205 = vmatmul.f32.gmra.mxu0 %v740
        %v7206 = vpop.f32.mrf.mxu0
        %v7207 = vadd.f32 %v7094, %v7206
        %7208 = vmatmul.f32.gmra.mxu0 %v748
        %v7209 = vpop.f32.mrf.mxu0
        %v7210 = vadd.f32 %v7097, %v7209
        %7211 = vmatmul.f32.gmra.mxu0 %v756
        %v7212 = vpop.f32.mrf.mxu0
        %v7213 = vadd.f32 %v7100, %v7212
        %7214 = vmatmul.f32.gmra.mxu0 %v764
        %v7215 = vpop.f32.mrf.mxu0
        %v7216 = vadd.f32 %v7103, %v7215
        %7217 = vmatmul.f32.gmra.mxu0 %v772
        %v7218 = vpop.f32.mrf.mxu0
        %v7219 = vadd.f32 %v7106, %v7218
        %7220 = vmatmul.f32.gmra.mxu0 %v780
        %v7221 = vpop.f32.mrf.mxu0
        %v7222 = vadd.f32 %v7109, %v7221
        %7223 = vmatmul.f32.gmra.mxu0 %v788
        %v7224 = vpop.f32.mrf.mxu0
        %v7225 = vadd.f32 %v7112, %v7224
        %7226 = vmatmul.f32.gmra.mxu0 %v796
        %v7227 = vpop.f32.mrf.mxu0
        %v7228 = vadd.f32 %v7115, %v7227
        %7229 = vmatmul.f32.gmra.mxu0 %v804
        %v7230 = vpop.f32.mrf.mxu0
        %v7231 = vadd.f32 %v7118, %v7230
        %7232 = vmatmul.f32.gmra.mxu0 %v812
        %v7233 = vpop.f32.mrf.mxu0
        %v7234 = vadd.f32 %v7121, %v7233
        %7235 = vmatmul.f32.gmra.mxu0 %v820
        %v7236 = vpop.f32.mrf.mxu0
        %v7237 = vadd.f32 %v7124, %v7236
        %7238 = vmatmul.f32.gmra.mxu0 %v828
        %v7239 = vpop.f32.mrf.mxu0
        %v7240 = vadd.f32 %v7127, %v7239
        %7241 = vmatmul.f32.gmra.mxu0 %v836
        %v7242 = vpop.f32.mrf.mxu0
        %v7243 = vadd.f32 %v7130, %v7242
        %7244 = vmatmul.f32.gmra.mxu0 %v844
        %v7245 = vpop.f32.mrf.mxu0
        %v7246 = vadd.f32 %v7133, %v7245
        %7247 = vmatmul.f32.gmra.mxu0 %v852
        %v7248 = vpop.f32.mrf.mxu0
        %v7249 = vadd.f32 %v7136, %v7248
        %7250 = vmatmul.f32.gmra.mxu0 %v860
        %v7251 = vpop.f32.mrf.mxu0
        %v7252 = vadd.f32 %v7139, %v7251
        %7253 = vmatmul.f32.gmra.mxu0 %v868
        %v7254 = vpop.f32.mrf.mxu0
        %v7255 = vadd.f32 %v7142, %v7254
        %7256 = vmatmul.f32.gmra.mxu0 %v876
        %v7257 = vpop.f32.mrf.mxu0
        %v7258 = vadd.f32 %v7145, %v7257
        %7259 = vmatmul.f32.gmra.mxu0 %v884
        %v7260 = vpop.f32.mrf.mxu0
        %v7261 = vadd.f32 %v7148, %v7260
        %7262 = vmatmul.f32.gmra.mxu0 %v892
        %v7263 = vpop.f32.mrf.mxu0
        %v7264 = vadd.f32 %v7151, %v7263
        %7265 = vmatmul.f32.gmra.mxu0 %v900
        %v7266 = vpop.f32.mrf.mxu0
        %v7267 = vadd.f32 %v7154, %v7266
        %7268 = vdwg.mxu0
        %7269 = vmatpush.msra.mxu0 %v1285
        %7270 = vmatpush.msra.mxu0 %v1281
        %7271 = vmatpush.msra.mxu0 %v1277
        %7272 = vmatpush.msra.mxu0 %v1273
        %7273 = vmatpush.msra.mxu0 %v1269
        %7274 = vmatpush.msra.mxu0 %v1265
        %7275 = vmatpush.msra.mxu0 %v1261
        %7276 = vmatpush.msra.mxu0 %v1257
        %7277 = vmatpush.msra.mxu0 %v1253
        %7278 = vmatpush.msra.mxu0 %v1249
        %7279 = vmatpush.msra.mxu0 %v1245
        %7280 = vmatpush.msra.mxu0 %v1241
        %7281 = vmatpush.msra.mxu0 %v1237
        %7282 = vmatpush.msra.mxu0 %v1233
        %7283 = vmatpush.msra.mxu0 %v1229
        %7284 = vmatpush.msra.mxu0 %v1225
        %7285 = vmatmul.f32.gmra.mxu0 %v653
        %v7286 = vpop.f32.mrf.mxu0
        %v7287 = vadd.f32 %v7174, %v7286
        %7288 = vmatmul.f32.gmra.mxu0 %v661
        %v7289 = vpop.f32.mrf.mxu0
        %v7290 = vadd.f32 %v7177, %v7289
        %7291 = vmatmul.f32.gmra.mxu0 %v669
        %v7292 = vpop.f32.mrf.mxu0
        %v7293 = vadd.f32 %v7180, %v7292
        %7294 = vmatmul.f32.gmra.mxu0 %v677
        %v7295 = vpop.f32.mrf.mxu0
        %v7296 = vadd.f32 %v7183, %v7295
        %7297 = vmatmul.f32.gmra.mxu0 %v685
        %v7298 = vpop.f32.mrf.mxu0
        %v7299 = vadd.f32 %v7186, %v7298
        %7300 = vmatmul.f32.gmra.mxu0 %v693
        %v7301 = vpop.f32.mrf.mxu0
        %v7302 = vadd.f32 %v7189, %v7301
        %7303 = vmatmul.f32.gmra.mxu0 %v701
        %v7304 = vpop.f32.mrf.mxu0
        %v7305 = vadd.f32 %v7192, %v7304
        %7306 = vmatmul.f32.gmra.mxu0 %v709
        %v7307 = vpop.f32.mrf.mxu0
        %v7308 = vadd.f32 %v7195, %v7307
        %7309 = vmatmul.f32.gmra.mxu0 %v717
        %v7310 = vpop.f32.mrf.mxu0
        %v7311 = vadd.f32 %v7198, %v7310
        %7312 = vmatmul.f32.gmra.mxu0 %v725
        %v7313 = vpop.f32.mrf.mxu0
        %v7314 = vadd.f32 %v7201, %v7313
        %7315 = vmatmul.f32.gmra.mxu0 %v733
        %v7316 = vpop.f32.mrf.mxu0
        %v7317 = vadd.f32 %v7204, %v7316
        %7318 = vmatmul.f32.gmra.mxu0 %v741
        %v7319 = vpop.f32.mrf.mxu0
        %v7320 = vadd.f32 %v7207, %v7319
        %7321 = vmatmul.f32.gmra.mxu0 %v749
        %v7322 = vpop.f32.mrf.mxu0
        %v7323 = vadd.f32 %v7210, %v7322
        %7324 = vmatmul.f32.gmra.mxu0 %v757
        %v7325 = vpop.f32.mrf.mxu0
        %v7326 = vadd.f32 %v7213, %v7325
        %7327 = vmatmul.f32.gmra.mxu0 %v765
        %v7328 = vpop.f32.mrf.mxu0
        %v7329 = vadd.f32 %v7216, %v7328
        %7330 = vmatmul.f32.gmra.mxu0 %v773
        %v7331 = vpop.f32.mrf.mxu0
        %v7332 = vadd.f32 %v7219, %v7331
        %7333 = vmatmul.f32.gmra.mxu0 %v781
        %v7334 = vpop.f32.mrf.mxu0
        %v7335 = vadd.f32 %v7222, %v7334
        %7336 = vmatmul.f32.gmra.mxu0 %v789
        %v7337 = vpop.f32.mrf.mxu0
        %v7338 = vadd.f32 %v7225, %v7337
        %7339 = vmatmul.f32.gmra.mxu0 %v797
        %v7340 = vpop.f32.mrf.mxu0
        %v7341 = vadd.f32 %v7228, %v7340
        %7342 = vmatmul.f32.gmra.mxu0 %v805
        %v7343 = vpop.f32.mrf.mxu0
        %v7344 = vadd.f32 %v7231, %v7343
        %7345 = vmatmul.f32.gmra.mxu0 %v813
        %v7346 = vpop.f32.mrf.mxu0
        %v7347 = vadd.f32 %v7234, %v7346
        %7348 = vmatmul.f32.gmra.mxu0 %v821
        %v7349 = vpop.f32.mrf.mxu0
        %v7350 = vadd.f32 %v7237, %v7349
        %7351 = vmatmul.f32.gmra.mxu0 %v829
        %v7352 = vpop.f32.mrf.mxu0
        %v7353 = vadd.f32 %v7240, %v7352
        %7354 = vmatmul.f32.gmra.mxu0 %v837
        %v7355 = vpop.f32.mrf.mxu0
        %v7356 = vadd.f32 %v7243, %v7355
        %7357 = vmatmul.f32.gmra.mxu0 %v845
        %v7358 = vpop.f32.mrf.mxu0
        %v7359 = vadd.f32 %v7246, %v7358
        %7360 = vmatmul.f32.gmra.mxu0 %v853
        %v7361 = vpop.f32.mrf.mxu0
        %v7362 = vadd.f32 %v7249, %v7361
        %7363 = vmatmul.f32.gmra.mxu0 %v861
        %v7364 = vpop.f32.mrf.mxu0
        %v7365 = vadd.f32 %v7252, %v7364
        %7366 = vmatmul.f32.gmra.mxu0 %v869
        %v7367 = vpop.f32.mrf.mxu0
        %v7368 = vadd.f32 %v7255, %v7367
        %7369 = vmatmul.f32.gmra.mxu0 %v877
        %v7370 = vpop.f32.mrf.mxu0
        %v7371 = vadd.f32 %v7258, %v7370
        %7372 = vmatmul.f32.gmra.mxu0 %v885
        %v7373 = vpop.f32.mrf.mxu0
        %v7374 = vadd.f32 %v7261, %v7373
        %7375 = vmatmul.f32.gmra.mxu0 %v893
        %v7376 = vpop.f32.mrf.mxu0
        %v7377 = vadd.f32 %v7264, %v7376
        %7378 = vmatmul.f32.gmra.mxu0 %v901
        %v7379 = vpop.f32.mrf.mxu0
        %v7380 = vadd.f32 %v7267, %v7379
        %7381 = vdwg.mxu0
        %7382 = vmatpush.msra.mxu0 %v1349
        %7383 = vmatpush.msra.mxu0 %v1345
        %7384 = vmatpush.msra.mxu0 %v1341
        %7385 = vmatpush.msra.mxu0 %v1337
        %7386 = vmatpush.msra.mxu0 %v1333
        %7387 = vmatpush.msra.mxu0 %v1329
        %7388 = vmatpush.msra.mxu0 %v1325
        %7389 = vmatpush.msra.mxu0 %v1321
        %7390 = vmatpush.msra.mxu0 %v1317
        %7391 = vmatpush.msra.mxu0 %v1313
        %7392 = vmatpush.msra.mxu0 %v1309
        %7393 = vmatpush.msra.mxu0 %v1305
        %7394 = vmatpush.msra.mxu0 %v1301
        %7395 = vmatpush.msra.mxu0 %v1297
        %7396 = vmatpush.msra.mxu0 %v1293
        %7397 = vmatpush.msra.mxu0 %v1289
        %7398 = vmatmul.f32.gmra.mxu0 %v654
        %v7399 = vpop.f32.mrf.mxu0
        %v7400 = vadd.f32 %v7287, %v7399
        %7401 = vmatmul.f32.gmra.mxu0 %v662
        %v7402 = vpop.f32.mrf.mxu0
        %v7403 = vadd.f32 %v7290, %v7402
        %7404 = vmatmul.f32.gmra.mxu0 %v670
        %v7405 = vpop.f32.mrf.mxu0
        %v7406 = vadd.f32 %v7293, %v7405
        %7407 = vmatmul.f32.gmra.mxu0 %v678
        %v7408 = vpop.f32.mrf.mxu0
        %v7409 = vadd.f32 %v7296, %v7408
        %7410 = vmatmul.f32.gmra.mxu0 %v686
        %v7411 = vpop.f32.mrf.mxu0
        %v7412 = vadd.f32 %v7299, %v7411
        %7413 = vmatmul.f32.gmra.mxu0 %v694
        %v7414 = vpop.f32.mrf.mxu0
        %v7415 = vadd.f32 %v7302, %v7414
        %7416 = vmatmul.f32.gmra.mxu0 %v702
        %v7417 = vpop.f32.mrf.mxu0
        %v7418 = vadd.f32 %v7305, %v7417
        %7419 = vmatmul.f32.gmra.mxu0 %v710
        %v7420 = vpop.f32.mrf.mxu0
        %v7421 = vadd.f32 %v7308, %v7420
        %7422 = vmatmul.f32.gmra.mxu0 %v718
        %v7423 = vpop.f32.mrf.mxu0
        %v7424 = vadd.f32 %v7311, %v7423
        %7425 = vmatmul.f32.gmra.mxu0 %v726
        %v7426 = vpop.f32.mrf.mxu0
        %v7427 = vadd.f32 %v7314, %v7426
        %7428 = vmatmul.f32.gmra.mxu0 %v734
        %v7429 = vpop.f32.mrf.mxu0
        %v7430 = vadd.f32 %v7317, %v7429
        %7431 = vmatmul.f32.gmra.mxu0 %v742
        %v7432 = vpop.f32.mrf.mxu0
        %v7433 = vadd.f32 %v7320, %v7432
        %7434 = vmatmul.f32.gmra.mxu0 %v750
        %v7435 = vpop.f32.mrf.mxu0
        %v7436 = vadd.f32 %v7323, %v7435
        %7437 = vmatmul.f32.gmra.mxu0 %v758
        %v7438 = vpop.f32.mrf.mxu0
        %v7439 = vadd.f32 %v7326, %v7438
        %7440 = vmatmul.f32.gmra.mxu0 %v766
        %v7441 = vpop.f32.mrf.mxu0
        %v7442 = vadd.f32 %v7329, %v7441
        %7443 = vmatmul.f32.gmra.mxu0 %v774
        %v7444 = vpop.f32.mrf.mxu0
        %v7445 = vadd.f32 %v7332, %v7444
        %7446 = vmatmul.f32.gmra.mxu0 %v782
        %v7447 = vpop.f32.mrf.mxu0
        %v7448 = vadd.f32 %v7335, %v7447
        %7449 = vmatmul.f32.gmra.mxu0 %v790
        %v7450 = vpop.f32.mrf.mxu0
        %v7451 = vadd.f32 %v7338, %v7450
        %7452 = vmatmul.f32.gmra.mxu0 %v798
        %v7453 = vpop.f32.mrf.mxu0
        %v7454 = vadd.f32 %v7341, %v7453
        %7455 = vmatmul.f32.gmra.mxu0 %v806
        %v7456 = vpop.f32.mrf.mxu0
        %v7457 = vadd.f32 %v7344, %v7456
        %7458 = vmatmul.f32.gmra.mxu0 %v814
        %v7459 = vpop.f32.mrf.mxu0
        %v7460 = vadd.f32 %v7347, %v7459
        %7461 = vmatmul.f32.gmra.mxu0 %v822
        %v7462 = vpop.f32.mrf.mxu0
        %v7463 = vadd.f32 %v7350, %v7462
        %7464 = vmatmul.f32.gmra.mxu0 %v830
        %v7465 = vpop.f32.mrf.mxu0
        %v7466 = vadd.f32 %v7353, %v7465
        %7467 = vmatmul.f32.gmra.mxu0 %v838
        %v7468 = vpop.f32.mrf.mxu0
        %v7469 = vadd.f32 %v7356, %v7468
        %7470 = vmatmul.f32.gmra.mxu0 %v846
        %v7471 = vpop.f32.mrf.mxu0
        %v7472 = vadd.f32 %v7359, %v7471
        %7473 = vmatmul.f32.gmra.mxu0 %v854
        %v7474 = vpop.f32.mrf.mxu0
        %v7475 = vadd.f32 %v7362, %v7474
        %7476 = vmatmul.f32.gmra.mxu0 %v862
        %v7477 = vpop.f32.mrf.mxu0
        %v7478 = vadd.f32 %v7365, %v7477
        %7479 = vmatmul.f32.gmra.mxu0 %v870
        %v7480 = vpop.f32.mrf.mxu0
        %v7481 = vadd.f32 %v7368, %v7480
        %7482 = vmatmul.f32.gmra.mxu0 %v878
        %v7483 = vpop.f32.mrf.mxu0
        %v7484 = vadd.f32 %v7371, %v7483
        %7485 = vmatmul.f32.gmra.mxu0 %v886
        %v7486 = vpop.f32.mrf.mxu0
        %v7487 = vadd.f32 %v7374, %v7486
        %7488 = vmatmul.f32.gmra.mxu0 %v894
        %v7489 = vpop.f32.mrf.mxu0
        %v7490 = vadd.f32 %v7377, %v7489
        %7491 = vmatmul.f32.gmra.mxu0 %v902
        %v7492 = vpop.f32.mrf.mxu0
        %v7493 = vadd.f32 %v7380, %v7492
        %7494 = vdwg.mxu0
        %7495 = vmatpush.msra.mxu0 %v1413
        %7496 = vmatpush.msra.mxu0 %v1409
        %7497 = vmatpush.msra.mxu0 %v1405
        %7498 = vmatpush.msra.mxu0 %v1401
        %7499 = vmatpush.msra.mxu0 %v1397
        %7500 = vmatpush.msra.mxu0 %v1393
        %7501 = vmatpush.msra.mxu0 %v1389
        %7502 = vmatpush.msra.mxu0 %v1385
        %7503 = vmatpush.msra.mxu0 %v1381
        %7504 = vmatpush.msra.mxu0 %v1377
        %7505 = vmatpush.msra.mxu0 %v1373
        %7506 = vmatpush.msra.mxu0 %v1369
        %7507 = vmatpush.msra.mxu0 %v1365
        %7508 = vmatpush.msra.mxu0 %v1361
        %7509 = vmatpush.msra.mxu0 %v1357
        %7510 = vmatpush.msra.mxu0 %v1353
        %7511 = vmatmul.f32.gmra.mxu0 %v655
        %v7512 = vpop.f32.mrf.mxu0
        %v7513 = vadd.f32 %v7400, %v7512
        %7514 = vmatmul.f32.gmra.mxu0 %v663
        %v7515 = vpop.f32.mrf.mxu0
        %v7516 = vadd.f32 %v7403, %v7515
        %7517 = vmatmul.f32.gmra.mxu0 %v671
        %v7518 = vpop.f32.mrf.mxu0
        %v7519 = vadd.f32 %v7406, %v7518
        %7520 = vmatmul.f32.gmra.mxu0 %v679
        %v7521 = vpop.f32.mrf.mxu0
        %v7522 = vadd.f32 %v7409, %v7521
        %7523 = vmatmul.f32.gmra.mxu0 %v687
        %v7524 = vpop.f32.mrf.mxu0
        %v7525 = vadd.f32 %v7412, %v7524
        %7526 = vmatmul.f32.gmra.mxu0 %v695
        %v7527 = vpop.f32.mrf.mxu0
        %v7528 = vadd.f32 %v7415, %v7527
        %7529 = vmatmul.f32.gmra.mxu0 %v703
        %v7530 = vpop.f32.mrf.mxu0
        %v7531 = vadd.f32 %v7418, %v7530
        %7532 = vmatmul.f32.gmra.mxu0 %v711
        %v7533 = vpop.f32.mrf.mxu0
        %v7534 = vadd.f32 %v7421, %v7533
        %7535 = vmatmul.f32.gmra.mxu0 %v719
        %v7536 = vpop.f32.mrf.mxu0
        %v7537 = vadd.f32 %v7424, %v7536
        %7538 = vmatmul.f32.gmra.mxu0 %v727
        %v7539 = vpop.f32.mrf.mxu0
        %v7540 = vadd.f32 %v7427, %v7539
        %7541 = vmatmul.f32.gmra.mxu0 %v735
        %v7542 = vpop.f32.mrf.mxu0
        %v7543 = vadd.f32 %v7430, %v7542
        %7544 = vmatmul.f32.gmra.mxu0 %v743
        %v7545 = vpop.f32.mrf.mxu0
        %v7546 = vadd.f32 %v7433, %v7545
        %7547 = vmatmul.f32.gmra.mxu0 %v751
        %v7548 = vpop.f32.mrf.mxu0
        %v7549 = vadd.f32 %v7436, %v7548
        %7550 = vmatmul.f32.gmra.mxu0 %v759
        %v7551 = vpop.f32.mrf.mxu0
        %v7552 = vadd.f32 %v7439, %v7551
        %7553 = vmatmul.f32.gmra.mxu0 %v767
        %v7554 = vpop.f32.mrf.mxu0
        %v7555 = vadd.f32 %v7442, %v7554
        %7556 = vmatmul.f32.gmra.mxu0 %v775
        %v7557 = vpop.f32.mrf.mxu0
        %v7558 = vadd.f32 %v7445, %v7557
        %7559 = vmatmul.f32.gmra.mxu0 %v783
        %v7560 = vpop.f32.mrf.mxu0
        %v7561 = vadd.f32 %v7448, %v7560
        %7562 = vmatmul.f32.gmra.mxu0 %v791
        %v7563 = vpop.f32.mrf.mxu0
        %v7564 = vadd.f32 %v7451, %v7563
        %7565 = vmatmul.f32.gmra.mxu0 %v799
        %v7566 = vpop.f32.mrf.mxu0
        %v7567 = vadd.f32 %v7454, %v7566
        %7568 = vmatmul.f32.gmra.mxu0 %v807
        %v7569 = vpop.f32.mrf.mxu0
        %v7570 = vadd.f32 %v7457, %v7569
        %7571 = vmatmul.f32.gmra.mxu0 %v815
        %v7572 = vpop.f32.mrf.mxu0
        %v7573 = vadd.f32 %v7460, %v7572
        %7574 = vmatmul.f32.gmra.mxu0 %v823
        %v7575 = vpop.f32.mrf.mxu0
        %v7576 = vadd.f32 %v7463, %v7575
        %7577 = vmatmul.f32.gmra.mxu0 %v831
        %v7578 = vpop.f32.mrf.mxu0
        %v7579 = vadd.f32 %v7466, %v7578
        %7580 = vmatmul.f32.gmra.mxu0 %v839
        %v7581 = vpop.f32.mrf.mxu0
        %v7582 = vadd.f32 %v7469, %v7581
        %7583 = vmatmul.f32.gmra.mxu0 %v847
        %v7584 = vpop.f32.mrf.mxu0
        %v7585 = vadd.f32 %v7472, %v7584
        %7586 = vmatmul.f32.gmra.mxu0 %v855
        %v7587 = vpop.f32.mrf.mxu0
        %v7588 = vadd.f32 %v7475, %v7587
        %7589 = vmatmul.f32.gmra.mxu0 %v863
        %v7590 = vpop.f32.mrf.mxu0
        %v7591 = vadd.f32 %v7478, %v7590
        %7592 = vmatmul.f32.gmra.mxu0 %v871
        %v7593 = vpop.f32.mrf.mxu0
        %v7594 = vadd.f32 %v7481, %v7593
        %7595 = vmatmul.f32.gmra.mxu0 %v879
        %v7596 = vpop.f32.mrf.mxu0
        %v7597 = vadd.f32 %v7484, %v7596
        %7598 = vmatmul.f32.gmra.mxu0 %v887
        %v7599 = vpop.f32.mrf.mxu0
        %v7600 = vadd.f32 %v7487, %v7599
        %7601 = vmatmul.f32.gmra.mxu0 %v895
        %v7602 = vpop.f32.mrf.mxu0
        %v7603 = vadd.f32 %v7490, %v7602
        %7604 = vmatmul.f32.gmra.mxu0 %v903
        %v7605 = vpop.f32.mrf.mxu0
        %v7606 = vadd.f32 %v7493, %v7605
        %7607 = vdwg.mxu0
        %7608 = vmatpush.msra.mxu0 %v966
        %7609 = vmatpush.msra.mxu0 %v962
        %7610 = vmatpush.msra.mxu0 %v958
        %7611 = vmatpush.msra.mxu0 %v954
        %7612 = vmatpush.msra.mxu0 %v950
        %7613 = vmatpush.msra.mxu0 %v946
        %7614 = vmatpush.msra.mxu0 %v942
        %7615 = vmatpush.msra.mxu0 %v938
        %7616 = vmatpush.msra.mxu0 %v934
        %7617 = vmatpush.msra.mxu0 %v930
        %7618 = vmatpush.msra.mxu0 %v926
        %7619 = vmatpush.msra.mxu0 %v922
        %7620 = vmatpush.msra.mxu0 %v918
        %7621 = vmatpush.msra.mxu0 %v914
        %7622 = vmatpush.msra.mxu0 %v910
        %7623 = vmatpush.msra.mxu0 %v906
        %7624 = vmatmul.f32.gmra.mxu0 %v648
        %v7625 = vpop.f32.mrf.mxu0
        %v7626 = vadd.f32 %v4801, %v7625
        %7627 = vmatmul.f32.gmra.mxu0 %v656
        %v7628 = vpop.f32.mrf.mxu0
        %v7629 = vadd.f32 %v4804, %v7628
        %7630 = vmatmul.f32.gmra.mxu0 %v664
        %v7631 = vpop.f32.mrf.mxu0
        %v7632 = vadd.f32 %v4807, %v7631
        %7633 = vmatmul.f32.gmra.mxu0 %v672
        %v7634 = vpop.f32.mrf.mxu0
        %v7635 = vadd.f32 %v4810, %v7634
        %7636 = vmatmul.f32.gmra.mxu0 %v680
        %v7637 = vpop.f32.mrf.mxu0
        %v7638 = vadd.f32 %v4813, %v7637
        %7639 = vmatmul.f32.gmra.mxu0 %v688
        %v7640 = vpop.f32.mrf.mxu0
        %v7641 = vadd.f32 %v4816, %v7640
        %7642 = vmatmul.f32.gmra.mxu0 %v696
        %v7643 = vpop.f32.mrf.mxu0
        %v7644 = vadd.f32 %v4819, %v7643
        %7645 = vmatmul.f32.gmra.mxu0 %v704
        %v7646 = vpop.f32.mrf.mxu0
        %v7647 = vadd.f32 %v4822, %v7646
        %7648 = vmatmul.f32.gmra.mxu0 %v712
        %v7649 = vpop.f32.mrf.mxu0
        %v7650 = vadd.f32 %v4825, %v7649
        %7651 = vmatmul.f32.gmra.mxu0 %v720
        %v7652 = vpop.f32.mrf.mxu0
        %v7653 = vadd.f32 %v4828, %v7652
        %7654 = vmatmul.f32.gmra.mxu0 %v728
        %v7655 = vpop.f32.mrf.mxu0
        %v7656 = vadd.f32 %v4831, %v7655
        %7657 = vmatmul.f32.gmra.mxu0 %v736
        %v7658 = vpop.f32.mrf.mxu0
        %v7659 = vadd.f32 %v4834, %v7658
        %7660 = vmatmul.f32.gmra.mxu0 %v744
        %v7661 = vpop.f32.mrf.mxu0
        %v7662 = vadd.f32 %v4837, %v7661
        %7663 = vmatmul.f32.gmra.mxu0 %v752
        %v7664 = vpop.f32.mrf.mxu0
        %v7665 = vadd.f32 %v4840, %v7664
        %7666 = vmatmul.f32.gmra.mxu0 %v760
        %v7667 = vpop.f32.mrf.mxu0
        %v7668 = vadd.f32 %v4843, %v7667
        %7669 = vmatmul.f32.gmra.mxu0 %v768
        %v7670 = vpop.f32.mrf.mxu0
        %v7671 = vadd.f32 %v4846, %v7670
        %7672 = vmatmul.f32.gmra.mxu0 %v776
        %v7673 = vpop.f32.mrf.mxu0
        %v7674 = vadd.f32 %v4849, %v7673
        %7675 = vmatmul.f32.gmra.mxu0 %v784
        %v7676 = vpop.f32.mrf.mxu0
        %v7677 = vadd.f32 %v4852, %v7676
        %7678 = vmatmul.f32.gmra.mxu0 %v792
        %v7679 = vpop.f32.mrf.mxu0
        %v7680 = vadd.f32 %v4855, %v7679
        %7681 = vmatmul.f32.gmra.mxu0 %v800
        %v7682 = vpop.f32.mrf.mxu0
        %v7683 = vadd.f32 %v4858, %v7682
        %7684 = vmatmul.f32.gmra.mxu0 %v808
        %v7685 = vpop.f32.mrf.mxu0
        %v7686 = vadd.f32 %v4861, %v7685
        %7687 = vmatmul.f32.gmra.mxu0 %v816
        %v7688 = vpop.f32.mrf.mxu0
        %v7689 = vadd.f32 %v4864, %v7688
        %7690 = vmatmul.f32.gmra.mxu0 %v824
        %v7691 = vpop.f32.mrf.mxu0
        %v7692 = vadd.f32 %v4867, %v7691
        %7693 = vmatmul.f32.gmra.mxu0 %v832
        %v7694 = vpop.f32.mrf.mxu0
        %v7695 = vadd.f32 %v4870, %v7694
        %7696 = vmatmul.f32.gmra.mxu0 %v840
        %v7697 = vpop.f32.mrf.mxu0
        %v7698 = vadd.f32 %v4873, %v7697
        %7699 = vmatmul.f32.gmra.mxu0 %v848
        %v7700 = vpop.f32.mrf.mxu0
        %v7701 = vadd.f32 %v4876, %v7700
        %7702 = vmatmul.f32.gmra.mxu0 %v856
        %v7703 = vpop.f32.mrf.mxu0
        %v7704 = vadd.f32 %v4879, %v7703
        %7705 = vmatmul.f32.gmra.mxu0 %v864
        %v7706 = vpop.f32.mrf.mxu0
        %v7707 = vadd.f32 %v4882, %v7706
        %7708 = vmatmul.f32.gmra.mxu0 %v872
        %v7709 = vpop.f32.mrf.mxu0
        %v7710 = vadd.f32 %v4885, %v7709
        %7711 = vmatmul.f32.gmra.mxu0 %v880
        %v7712 = vpop.f32.mrf.mxu0
        %v7713 = vadd.f32 %v4888, %v7712
        %7714 = vmatmul.f32.gmra.mxu0 %v888
        %v7715 = vpop.f32.mrf.mxu0
        %v7716 = vadd.f32 %v4891, %v7715
        %7717 = vmatmul.f32.gmra.mxu0 %v896
        %v7718 = vpop.f32.mrf.mxu0
        %v7719 = vadd.f32 %v4894, %v7718
        %7720 = vdwg.mxu0
        %7721 = vmatpush.msra.mxu0 %v1030
        %7722 = vmatpush.msra.mxu0 %v1026
        %7723 = vmatpush.msra.mxu0 %v1022
        %7724 = vmatpush.msra.mxu0 %v1018
        %7725 = vmatpush.msra.mxu0 %v1014
        %7726 = vmatpush.msra.mxu0 %v1010
        %7727 = vmatpush.msra.mxu0 %v1006
        %7728 = vmatpush.msra.mxu0 %v1002
        %7729 = vmatpush.msra.mxu0 %v998
        %7730 = vmatpush.msra.mxu0 %v994
        %7731 = vmatpush.msra.mxu0 %v990
        %7732 = vmatpush.msra.mxu0 %v986
        %7733 = vmatpush.msra.mxu0 %v982
        %7734 = vmatpush.msra.mxu0 %v978
        %7735 = vmatpush.msra.mxu0 %v974
        %7736 = vmatpush.msra.mxu0 %v970
        %7737 = vmatmul.f32.gmra.mxu0 %v649
        %v7738 = vpop.f32.mrf.mxu0
        %v7739 = vadd.f32 %v7626, %v7738
        %7740 = vmatmul.f32.gmra.mxu0 %v657
        %v7741 = vpop.f32.mrf.mxu0
        %v7742 = vadd.f32 %v7629, %v7741
        %7743 = vmatmul.f32.gmra.mxu0 %v665
        %v7744 = vpop.f32.mrf.mxu0
        %v7745 = vadd.f32 %v7632, %v7744
        %7746 = vmatmul.f32.gmra.mxu0 %v673
        %v7747 = vpop.f32.mrf.mxu0
        %v7748 = vadd.f32 %v7635, %v7747
        %7749 = vmatmul.f32.gmra.mxu0 %v681
        %v7750 = vpop.f32.mrf.mxu0
        %v7751 = vadd.f32 %v7638, %v7750
        %7752 = vmatmul.f32.gmra.mxu0 %v689
        %v7753 = vpop.f32.mrf.mxu0
        %v7754 = vadd.f32 %v7641, %v7753
        %7755 = vmatmul.f32.gmra.mxu0 %v697
        %v7756 = vpop.f32.mrf.mxu0
        %v7757 = vadd.f32 %v7644, %v7756
        %7758 = vmatmul.f32.gmra.mxu0 %v705
        %v7759 = vpop.f32.mrf.mxu0
        %v7760 = vadd.f32 %v7647, %v7759
        %7761 = vmatmul.f32.gmra.mxu0 %v713
        %v7762 = vpop.f32.mrf.mxu0
        %v7763 = vadd.f32 %v7650, %v7762
        %7764 = vmatmul.f32.gmra.mxu0 %v721
        %v7765 = vpop.f32.mrf.mxu0
        %v7766 = vadd.f32 %v7653, %v7765
        %7767 = vmatmul.f32.gmra.mxu0 %v729
        %v7768 = vpop.f32.mrf.mxu0
        %v7769 = vadd.f32 %v7656, %v7768
        %7770 = vmatmul.f32.gmra.mxu0 %v737
        %v7771 = vpop.f32.mrf.mxu0
        %v7772 = vadd.f32 %v7659, %v7771
        %7773 = vmatmul.f32.gmra.mxu0 %v745
        %v7774 = vpop.f32.mrf.mxu0
        %v7775 = vadd.f32 %v7662, %v7774
        %7776 = vmatmul.f32.gmra.mxu0 %v753
        %v7777 = vpop.f32.mrf.mxu0
        %v7778 = vadd.f32 %v7665, %v7777
        %7779 = vmatmul.f32.gmra.mxu0 %v761
        %v7780 = vpop.f32.mrf.mxu0
        %v7781 = vadd.f32 %v7668, %v7780
        %7782 = vmatmul.f32.gmra.mxu0 %v769
        %v7783 = vpop.f32.mrf.mxu0
        %v7784 = vadd.f32 %v7671, %v7783
        %7785 = vmatmul.f32.gmra.mxu0 %v777
        %v7786 = vpop.f32.mrf.mxu0
        %v7787 = vadd.f32 %v7674, %v7786
        %7788 = vmatmul.f32.gmra.mxu0 %v785
        %v7789 = vpop.f32.mrf.mxu0
        %v7790 = vadd.f32 %v7677, %v7789
        %7791 = vmatmul.f32.gmra.mxu0 %v793
        %v7792 = vpop.f32.mrf.mxu0
        %v7793 = vadd.f32 %v7680, %v7792
        %7794 = vmatmul.f32.gmra.mxu0 %v801
        %v7795 = vpop.f32.mrf.mxu0
        %v7796 = vadd.f32 %v7683, %v7795
        %7797 = vmatmul.f32.gmra.mxu0 %v809
        %v7798 = vpop.f32.mrf.mxu0
        %v7799 = vadd.f32 %v7686, %v7798
        %7800 = vmatmul.f32.gmra.mxu0 %v817
        %v7801 = vpop.f32.mrf.mxu0
        %v7802 = vadd.f32 %v7689, %v7801
        %7803 = vmatmul.f32.gmra.mxu0 %v825
        %v7804 = vpop.f32.mrf.mxu0
        %v7805 = vadd.f32 %v7692, %v7804
        %7806 = vmatmul.f32.gmra.mxu0 %v833
        %v7807 = vpop.f32.mrf.mxu0
        %v7808 = vadd.f32 %v7695, %v7807
        %7809 = vmatmul.f32.gmra.mxu0 %v841
        %v7810 = vpop.f32.mrf.mxu0
        %v7811 = vadd.f32 %v7698, %v7810
        %7812 = vmatmul.f32.gmra.mxu0 %v849
        %v7813 = vpop.f32.mrf.mxu0
        %v7814 = vadd.f32 %v7701, %v7813
        %7815 = vmatmul.f32.gmra.mxu0 %v857
        %v7816 = vpop.f32.mrf.mxu0
        %v7817 = vadd.f32 %v7704, %v7816
        %7818 = vmatmul.f32.gmra.mxu0 %v865
        %v7819 = vpop.f32.mrf.mxu0
        %v7820 = vadd.f32 %v7707, %v7819
        %7821 = vmatmul.f32.gmra.mxu0 %v873
        %v7822 = vpop.f32.mrf.mxu0
        %v7823 = vadd.f32 %v7710, %v7822
        %7824 = vmatmul.f32.gmra.mxu0 %v881
        %v7825 = vpop.f32.mrf.mxu0
        %v7826 = vadd.f32 %v7713, %v7825
        %7827 = vmatmul.f32.gmra.mxu0 %v889
        %v7828 = vpop.f32.mrf.mxu0
        %v7829 = vadd.f32 %v7716, %v7828
        %7830 = vmatmul.f32.gmra.mxu0 %v897
        %v7831 = vpop.f32.mrf.mxu0
        %v7832 = vadd.f32 %v7719, %v7831
        %7833 = vdwg.mxu0
        %7834 = vmatpush.msra.mxu0 %v1094
        %7835 = vmatpush.msra.mxu0 %v1090
        %7836 = vmatpush.msra.mxu0 %v1086
        %7837 = vmatpush.msra.mxu0 %v1082
        %7838 = vmatpush.msra.mxu0 %v1078
        %7839 = vmatpush.msra.mxu0 %v1074
        %7840 = vmatpush.msra.mxu0 %v1070
        %7841 = vmatpush.msra.mxu0 %v1066
        %7842 = vmatpush.msra.mxu0 %v1062
        %7843 = vmatpush.msra.mxu0 %v1058
        %7844 = vmatpush.msra.mxu0 %v1054
        %7845 = vmatpush.msra.mxu0 %v1050
        %7846 = vmatpush.msra.mxu0 %v1046
        %7847 = vmatpush.msra.mxu0 %v1042
        %7848 = vmatpush.msra.mxu0 %v1038
        %7849 = vmatpush.msra.mxu0 %v1034
        %7850 = vmatmul.f32.gmra.mxu0 %v650
        %v7851 = vpop.f32.mrf.mxu0
        %v7852 = vadd.f32 %v7739, %v7851
        %7853 = vmatmul.f32.gmra.mxu0 %v658
        %v7854 = vpop.f32.mrf.mxu0
        %v7855 = vadd.f32 %v7742, %v7854
        %7856 = vmatmul.f32.gmra.mxu0 %v666
        %v7857 = vpop.f32.mrf.mxu0
        %v7858 = vadd.f32 %v7745, %v7857
        %7859 = vmatmul.f32.gmra.mxu0 %v674
        %v7860 = vpop.f32.mrf.mxu0
        %v7861 = vadd.f32 %v7748, %v7860
        %7862 = vmatmul.f32.gmra.mxu0 %v682
        %v7863 = vpop.f32.mrf.mxu0
        %v7864 = vadd.f32 %v7751, %v7863
        %7865 = vmatmul.f32.gmra.mxu0 %v690
        %v7866 = vpop.f32.mrf.mxu0
        %v7867 = vadd.f32 %v7754, %v7866
        %7868 = vmatmul.f32.gmra.mxu0 %v698
        %v7869 = vpop.f32.mrf.mxu0
        %v7870 = vadd.f32 %v7757, %v7869
        %7871 = vmatmul.f32.gmra.mxu0 %v706
        %v7872 = vpop.f32.mrf.mxu0
        %v7873 = vadd.f32 %v7760, %v7872
        %7874 = vmatmul.f32.gmra.mxu0 %v714
        %v7875 = vpop.f32.mrf.mxu0
        %v7876 = vadd.f32 %v7763, %v7875
        %7877 = vmatmul.f32.gmra.mxu0 %v722
        %v7878 = vpop.f32.mrf.mxu0
        %v7879 = vadd.f32 %v7766, %v7878
        %7880 = vmatmul.f32.gmra.mxu0 %v730
        %v7881 = vpop.f32.mrf.mxu0
        %v7882 = vadd.f32 %v7769, %v7881
        %7883 = vmatmul.f32.gmra.mxu0 %v738
        %v7884 = vpop.f32.mrf.mxu0
        %v7885 = vadd.f32 %v7772, %v7884
        %7886 = vmatmul.f32.gmra.mxu0 %v746
        %v7887 = vpop.f32.mrf.mxu0
        %v7888 = vadd.f32 %v7775, %v7887
        %7889 = vmatmul.f32.gmra.mxu0 %v754
        %v7890 = vpop.f32.mrf.mxu0
        %v7891 = vadd.f32 %v7778, %v7890
        %7892 = vmatmul.f32.gmra.mxu0 %v762
        %v7893 = vpop.f32.mrf.mxu0
        %v7894 = vadd.f32 %v7781, %v7893
        %7895 = vmatmul.f32.gmra.mxu0 %v770
        %v7896 = vpop.f32.mrf.mxu0
        %v7897 = vadd.f32 %v7784, %v7896
        %7898 = vmatmul.f32.gmra.mxu0 %v778
        %v7899 = vpop.f32.mrf.mxu0
        %v7900 = vadd.f32 %v7787, %v7899
        %7901 = vmatmul.f32.gmra.mxu0 %v786
        %v7902 = vpop.f32.mrf.mxu0
        %v7903 = vadd.f32 %v7790, %v7902
        %7904 = vmatmul.f32.gmra.mxu0 %v794
        %v7905 = vpop.f32.mrf.mxu0
        %v7906 = vadd.f32 %v7793, %v7905
        %7907 = vmatmul.f32.gmra.mxu0 %v802
        %v7908 = vpop.f32.mrf.mxu0
        %v7909 = vadd.f32 %v7796, %v7908
        %7910 = vmatmul.f32.gmra.mxu0 %v810
        %v7911 = vpop.f32.mrf.mxu0
        %v7912 = vadd.f32 %v7799, %v7911
        %7913 = vmatmul.f32.gmra.mxu0 %v818
        %v7914 = vpop.f32.mrf.mxu0
        %v7915 = vadd.f32 %v7802, %v7914
        %7916 = vmatmul.f32.gmra.mxu0 %v826
        %v7917 = vpop.f32.mrf.mxu0
        %v7918 = vadd.f32 %v7805, %v7917
        %7919 = vmatmul.f32.gmra.mxu0 %v834
        %v7920 = vpop.f32.mrf.mxu0
        %v7921 = vadd.f32 %v7808, %v7920
        %7922 = vmatmul.f32.gmra.mxu0 %v842
        %v7923 = vpop.f32.mrf.mxu0
        %v7924 = vadd.f32 %v7811, %v7923
        %7925 = vmatmul.f32.gmra.mxu0 %v850
        %v7926 = vpop.f32.mrf.mxu0
        %v7927 = vadd.f32 %v7814, %v7926
        %7928 = vmatmul.f32.gmra.mxu0 %v858
        %v7929 = vpop.f32.mrf.mxu0
        %v7930 = vadd.f32 %v7817, %v7929
        %7931 = vmatmul.f32.gmra.mxu0 %v866
        %v7932 = vpop.f32.mrf.mxu0
        %v7933 = vadd.f32 %v7820, %v7932
        %7934 = vmatmul.f32.gmra.mxu0 %v874
        %v7935 = vpop.f32.mrf.mxu0
        %v7936 = vadd.f32 %v7823, %v7935
        %7937 = vmatmul.f32.gmra.mxu0 %v882
        %v7938 = vpop.f32.mrf.mxu0
        %v7939 = vadd.f32 %v7826, %v7938
        %7940 = vmatmul.f32.gmra.mxu0 %v890
        %v7941 = vpop.f32.mrf.mxu0
        %v7942 = vadd.f32 %v7829, %v7941
        %7943 = vmatmul.f32.gmra.mxu0 %v898
        %v7944 = vpop.f32.mrf.mxu0
        %v7945 = vadd.f32 %v7832, %v7944
        %7946 = vdwg.mxu0
        %7947 = vmatpush.msra.mxu0 %v1158
        %7948 = vmatpush.msra.mxu0 %v1154
        %7949 = vmatpush.msra.mxu0 %v1150
        %7950 = vmatpush.msra.mxu0 %v1146
        %7951 = vmatpush.msra.mxu0 %v1142
        %7952 = vmatpush.msra.mxu0 %v1138
        %7953 = vmatpush.msra.mxu0 %v1134
        %7954 = vmatpush.msra.mxu0 %v1130
        %7955 = vmatpush.msra.mxu0 %v1126
        %7956 = vmatpush.msra.mxu0 %v1122
        %7957 = vmatpush.msra.mxu0 %v1118
        %7958 = vmatpush.msra.mxu0 %v1114
        %7959 = vmatpush.msra.mxu0 %v1110
        %7960 = vmatpush.msra.mxu0 %v1106
        %7961 = vmatpush.msra.mxu0 %v1102
        %7962 = vmatpush.msra.mxu0 %v1098
        %7963 = vmatmul.f32.gmra.mxu0 %v651
        %v7964 = vpop.f32.mrf.mxu0
        %v7965 = vadd.f32 %v7852, %v7964
        %7966 = vmatmul.f32.gmra.mxu0 %v659
        %v7967 = vpop.f32.mrf.mxu0
        %v7968 = vadd.f32 %v7855, %v7967
        %7969 = vmatmul.f32.gmra.mxu0 %v667
        %v7970 = vpop.f32.mrf.mxu0
        %v7971 = vadd.f32 %v7858, %v7970
        %7972 = vmatmul.f32.gmra.mxu0 %v675
        %v7973 = vpop.f32.mrf.mxu0
        %v7974 = vadd.f32 %v7861, %v7973
        %7975 = vmatmul.f32.gmra.mxu0 %v683
        %v7976 = vpop.f32.mrf.mxu0
        %v7977 = vadd.f32 %v7864, %v7976
        %7978 = vmatmul.f32.gmra.mxu0 %v691
        %v7979 = vpop.f32.mrf.mxu0
        %v7980 = vadd.f32 %v7867, %v7979
        %7981 = vmatmul.f32.gmra.mxu0 %v699
        %v7982 = vpop.f32.mrf.mxu0
        %v7983 = vadd.f32 %v7870, %v7982
        %7984 = vmatmul.f32.gmra.mxu0 %v707
        %v7985 = vpop.f32.mrf.mxu0
        %v7986 = vadd.f32 %v7873, %v7985
        %7987 = vmatmul.f32.gmra.mxu0 %v715
        %v7988 = vpop.f32.mrf.mxu0
        %v7989 = vadd.f32 %v7876, %v7988
        %7990 = vmatmul.f32.gmra.mxu0 %v723
        %v7991 = vpop.f32.mrf.mxu0
        %v7992 = vadd.f32 %v7879, %v7991
        %7993 = vmatmul.f32.gmra.mxu0 %v731
        %v7994 = vpop.f32.mrf.mxu0
        %v7995 = vadd.f32 %v7882, %v7994
        %7996 = vmatmul.f32.gmra.mxu0 %v739
        %v7997 = vpop.f32.mrf.mxu0
        %v7998 = vadd.f32 %v7885, %v7997
        %7999 = vmatmul.f32.gmra.mxu0 %v747
        %v8000 = vpop.f32.mrf.mxu0
        %v8001 = vadd.f32 %v7888, %v8000
        %8002 = vmatmul.f32.gmra.mxu0 %v755
        %v8003 = vpop.f32.mrf.mxu0
        %v8004 = vadd.f32 %v7891, %v8003
        %8005 = vmatmul.f32.gmra.mxu0 %v763
        %v8006 = vpop.f32.mrf.mxu0
        %v8007 = vadd.f32 %v7894, %v8006
        %8008 = vmatmul.f32.gmra.mxu0 %v771
        %v8009 = vpop.f32.mrf.mxu0
        %v8010 = vadd.f32 %v7897, %v8009
        %8011 = vmatmul.f32.gmra.mxu0 %v779
        %v8012 = vpop.f32.mrf.mxu0
        %v8013 = vadd.f32 %v7900, %v8012
        %8014 = vmatmul.f32.gmra.mxu0 %v787
        %v8015 = vpop.f32.mrf.mxu0
        %v8016 = vadd.f32 %v7903, %v8015
        %8017 = vmatmul.f32.gmra.mxu0 %v795
        %v8018 = vpop.f32.mrf.mxu0
        %v8019 = vadd.f32 %v7906, %v8018
        %8020 = vmatmul.f32.gmra.mxu0 %v803
        %v8021 = vpop.f32.mrf.mxu0
        %v8022 = vadd.f32 %v7909, %v8021
        %8023 = vmatmul.f32.gmra.mxu0 %v811
        %v8024 = vpop.f32.mrf.mxu0
        %v8025 = vadd.f32 %v7912, %v8024
        %8026 = vmatmul.f32.gmra.mxu0 %v819
        %v8027 = vpop.f32.mrf.mxu0
        %v8028 = vadd.f32 %v7915, %v8027
        %8029 = vmatmul.f32.gmra.mxu0 %v827
        %v8030 = vpop.f32.mrf.mxu0
        %v8031 = vadd.f32 %v7918, %v8030
        %8032 = vmatmul.f32.gmra.mxu0 %v835
        %v8033 = vpop.f32.mrf.mxu0
        %v8034 = vadd.f32 %v7921, %v8033
        %8035 = vmatmul.f32.gmra.mxu0 %v843
        %v8036 = vpop.f32.mrf.mxu0
        %v8037 = vadd.f32 %v7924, %v8036
        %8038 = vmatmul.f32.gmra.mxu0 %v851
        %v8039 = vpop.f32.mrf.mxu0
        %v8040 = vadd.f32 %v7927, %v8039
        %8041 = vmatmul.f32.gmra.mxu0 %v859
        %v8042 = vpop.f32.mrf.mxu0
        %v8043 = vadd.f32 %v7930, %v8042
        %8044 = vmatmul.f32.gmra.mxu0 %v867
        %v8045 = vpop.f32.mrf.mxu0
        %v8046 = vadd.f32 %v7933, %v8045
        %8047 = vmatmul.f32.gmra.mxu0 %v875
        %v8048 = vpop.f32.mrf.mxu0
        %v8049 = vadd.f32 %v7936, %v8048
        %8050 = vmatmul.f32.gmra.mxu0 %v883
        %v8051 = vpop.f32.mrf.mxu0
        %v8052 = vadd.f32 %v7939, %v8051
        %8053 = vmatmul.f32.gmra.mxu0 %v891
        %v8054 = vpop.f32.mrf.mxu0
        %v8055 = vadd.f32 %v7942, %v8054
        %8056 = vmatmul.f32.gmra.mxu0 %v899
        %v8057 = vpop.f32.mrf.mxu0
        %v8058 = vadd.f32 %v7945, %v8057
        %8059 = vdwg.mxu0
        %8060 = vmatpush.msra.mxu0 %v1222
        %8061 = vmatpush.msra.mxu0 %v1218
        %8062 = vmatpush.msra.mxu0 %v1214
        %8063 = vmatpush.msra.mxu0 %v1210
        %8064 = vmatpush.msra.mxu0 %v1206
        %8065 = vmatpush.msra.mxu0 %v1202
        %8066 = vmatpush.msra.mxu0 %v1198
        %8067 = vmatpush.msra.mxu0 %v1194
        %8068 = vmatpush.msra.mxu0 %v1190
        %8069 = vmatpush.msra.mxu0 %v1186
        %8070 = vmatpush.msra.mxu0 %v1182
        %8071 = vmatpush.msra.mxu0 %v1178
        %8072 = vmatpush.msra.mxu0 %v1174
        %8073 = vmatpush.msra.mxu0 %v1170
        %8074 = vmatpush.msra.mxu0 %v1166
        %8075 = vmatpush.msra.mxu0 %v1162
        %8076 = vmatmul.f32.gmra.mxu0 %v652
        %v8077 = vpop.f32.mrf.mxu0
        %v8078 = vadd.f32 %v7965, %v8077
        %8079 = vmatmul.f32.gmra.mxu0 %v660
        %v8080 = vpop.f32.mrf.mxu0
        %v8081 = vadd.f32 %v7968, %v8080
        %8082 = vmatmul.f32.gmra.mxu0 %v668
        %v8083 = vpop.f32.mrf.mxu0
        %v8084 = vadd.f32 %v7971, %v8083
        %8085 = vmatmul.f32.gmra.mxu0 %v676
        %v8086 = vpop.f32.mrf.mxu0
        %v8087 = vadd.f32 %v7974, %v8086
        %8088 = vmatmul.f32.gmra.mxu0 %v684
        %v8089 = vpop.f32.mrf.mxu0
        %v8090 = vadd.f32 %v7977, %v8089
        %8091 = vmatmul.f32.gmra.mxu0 %v692
        %v8092 = vpop.f32.mrf.mxu0
        %v8093 = vadd.f32 %v7980, %v8092
        %8094 = vmatmul.f32.gmra.mxu0 %v700
        %v8095 = vpop.f32.mrf.mxu0
        %v8096 = vadd.f32 %v7983, %v8095
        %8097 = vmatmul.f32.gmra.mxu0 %v708
        %v8098 = vpop.f32.mrf.mxu0
        %v8099 = vadd.f32 %v7986, %v8098
        %8100 = vmatmul.f32.gmra.mxu0 %v716
        %v8101 = vpop.f32.mrf.mxu0
        %v8102 = vadd.f32 %v7989, %v8101
        %8103 = vmatmul.f32.gmra.mxu0 %v724
        %v8104 = vpop.f32.mrf.mxu0
        %v8105 = vadd.f32 %v7992, %v8104
        %8106 = vmatmul.f32.gmra.mxu0 %v732
        %v8107 = vpop.f32.mrf.mxu0
        %v8108 = vadd.f32 %v7995, %v8107
        %8109 = vmatmul.f32.gmra.mxu0 %v740
        %v8110 = vpop.f32.mrf.mxu0
        %v8111 = vadd.f32 %v7998, %v8110
        %8112 = vmatmul.f32.gmra.mxu0 %v748
        %v8113 = vpop.f32.mrf.mxu0
        %v8114 = vadd.f32 %v8001, %v8113
        %8115 = vmatmul.f32.gmra.mxu0 %v756
        %v8116 = vpop.f32.mrf.mxu0
        %v8117 = vadd.f32 %v8004, %v8116
        %8118 = vmatmul.f32.gmra.mxu0 %v764
        %v8119 = vpop.f32.mrf.mxu0
        %v8120 = vadd.f32 %v8007, %v8119
        %8121 = vmatmul.f32.gmra.mxu0 %v772
        %v8122 = vpop.f32.mrf.mxu0
        %v8123 = vadd.f32 %v8010, %v8122
        %8124 = vmatmul.f32.gmra.mxu0 %v780
        %v8125 = vpop.f32.mrf.mxu0
        %v8126 = vadd.f32 %v8013, %v8125
        %8127 = vmatmul.f32.gmra.mxu0 %v788
        %v8128 = vpop.f32.mrf.mxu0
        %v8129 = vadd.f32 %v8016, %v8128
        %8130 = vmatmul.f32.gmra.mxu0 %v796
        %v8131 = vpop.f32.mrf.mxu0
        %v8132 = vadd.f32 %v8019, %v8131
        %8133 = vmatmul.f32.gmra.mxu0 %v804
        %v8134 = vpop.f32.mrf.mxu0
        %v8135 = vadd.f32 %v8022, %v8134
        %8136 = vmatmul.f32.gmra.mxu0 %v812
        %v8137 = vpop.f32.mrf.mxu0
        %v8138 = vadd.f32 %v8025, %v8137
        %8139 = vmatmul.f32.gmra.mxu0 %v820
        %v8140 = vpop.f32.mrf.mxu0
        %v8141 = vadd.f32 %v8028, %v8140
        %8142 = vmatmul.f32.gmra.mxu0 %v828
        %v8143 = vpop.f32.mrf.mxu0
        %v8144 = vadd.f32 %v8031, %v8143
        %8145 = vmatmul.f32.gmra.mxu0 %v836
        %v8146 = vpop.f32.mrf.mxu0
        %v8147 = vadd.f32 %v8034, %v8146
        %8148 = vmatmul.f32.gmra.mxu0 %v844
        %v8149 = vpop.f32.mrf.mxu0
        %v8150 = vadd.f32 %v8037, %v8149
        %8151 = vmatmul.f32.gmra.mxu0 %v852
        %v8152 = vpop.f32.mrf.mxu0
        %v8153 = vadd.f32 %v8040, %v8152
        %8154 = vmatmul.f32.gmra.mxu0 %v860
        %v8155 = vpop.f32.mrf.mxu0
        %v8156 = vadd.f32 %v8043, %v8155
        %8157 = vmatmul.f32.gmra.mxu0 %v868
        %v8158 = vpop.f32.mrf.mxu0
        %v8159 = vadd.f32 %v8046, %v8158
        %8160 = vmatmul.f32.gmra.mxu0 %v876
        %v8161 = vpop.f32.mrf.mxu0
        %v8162 = vadd.f32 %v8049, %v8161
        %8163 = vmatmul.f32.gmra.mxu0 %v884
        %v8164 = vpop.f32.mrf.mxu0
        %v8165 = vadd.f32 %v8052, %v8164
        %8166 = vmatmul.f32.gmra.mxu0 %v892
        %v8167 = vpop.f32.mrf.mxu0
        %v8168 = vadd.f32 %v8055, %v8167
        %8169 = vmatmul.f32.gmra.mxu0 %v900
        %v8170 = vpop.f32.mrf.mxu0
        %v8171 = vadd.f32 %v8058, %v8170
        %8172 = vdwg.mxu0
        %8173 = vmatpush.msra.mxu0 %v1286
        %8174 = vmatpush.msra.mxu0 %v1282
        %8175 = vmatpush.msra.mxu0 %v1278
        %8176 = vmatpush.msra.mxu0 %v1274
        %8177 = vmatpush.msra.mxu0 %v1270
        %8178 = vmatpush.msra.mxu0 %v1266
        %8179 = vmatpush.msra.mxu0 %v1262
        %8180 = vmatpush.msra.mxu0 %v1258
        %8181 = vmatpush.msra.mxu0 %v1254
        %8182 = vmatpush.msra.mxu0 %v1250
        %8183 = vmatpush.msra.mxu0 %v1246
        %8184 = vmatpush.msra.mxu0 %v1242
        %8185 = vmatpush.msra.mxu0 %v1238
        %8186 = vmatpush.msra.mxu0 %v1234
        %8187 = vmatpush.msra.mxu0 %v1230
        %8188 = vmatpush.msra.mxu0 %v1226
        %8189 = vmatmul.f32.gmra.mxu0 %v653
        %v8190 = vpop.f32.mrf.mxu0
        %v8191 = vadd.f32 %v8078, %v8190
        %8192 = vmatmul.f32.gmra.mxu0 %v661
        %v8193 = vpop.f32.mrf.mxu0
        %v8194 = vadd.f32 %v8081, %v8193
        %8195 = vmatmul.f32.gmra.mxu0 %v669
        %v8196 = vpop.f32.mrf.mxu0
        %v8197 = vadd.f32 %v8084, %v8196
        %8198 = vmatmul.f32.gmra.mxu0 %v677
        %v8199 = vpop.f32.mrf.mxu0
        %v8200 = vadd.f32 %v8087, %v8199
        %8201 = vmatmul.f32.gmra.mxu0 %v685
        %v8202 = vpop.f32.mrf.mxu0
        %v8203 = vadd.f32 %v8090, %v8202
        %8204 = vmatmul.f32.gmra.mxu0 %v693
        %v8205 = vpop.f32.mrf.mxu0
        %v8206 = vadd.f32 %v8093, %v8205
        %8207 = vmatmul.f32.gmra.mxu0 %v701
        %v8208 = vpop.f32.mrf.mxu0
        %v8209 = vadd.f32 %v8096, %v8208
        %8210 = vmatmul.f32.gmra.mxu0 %v709
        %v8211 = vpop.f32.mrf.mxu0
        %v8212 = vadd.f32 %v8099, %v8211
        %8213 = vmatmul.f32.gmra.mxu0 %v717
        %v8214 = vpop.f32.mrf.mxu0
        %v8215 = vadd.f32 %v8102, %v8214
        %8216 = vmatmul.f32.gmra.mxu0 %v725
        %v8217 = vpop.f32.mrf.mxu0
        %v8218 = vadd.f32 %v8105, %v8217
        %8219 = vmatmul.f32.gmra.mxu0 %v733
        %v8220 = vpop.f32.mrf.mxu0
        %v8221 = vadd.f32 %v8108, %v8220
        %8222 = vmatmul.f32.gmra.mxu0 %v741
        %v8223 = vpop.f32.mrf.mxu0
        %v8224 = vadd.f32 %v8111, %v8223
        %8225 = vmatmul.f32.gmra.mxu0 %v749
        %v8226 = vpop.f32.mrf.mxu0
        %v8227 = vadd.f32 %v8114, %v8226
        %8228 = vmatmul.f32.gmra.mxu0 %v757
        %v8229 = vpop.f32.mrf.mxu0
        %v8230 = vadd.f32 %v8117, %v8229
        %8231 = vmatmul.f32.gmra.mxu0 %v765
        %v8232 = vpop.f32.mrf.mxu0
        %v8233 = vadd.f32 %v8120, %v8232
        %8234 = vmatmul.f32.gmra.mxu0 %v773
        %v8235 = vpop.f32.mrf.mxu0
        %v8236 = vadd.f32 %v8123, %v8235
        %8237 = vmatmul.f32.gmra.mxu0 %v781
        %v8238 = vpop.f32.mrf.mxu0
        %v8239 = vadd.f32 %v8126, %v8238
        %8240 = vmatmul.f32.gmra.mxu0 %v789
        %v8241 = vpop.f32.mrf.mxu0
        %v8242 = vadd.f32 %v8129, %v8241
        %8243 = vmatmul.f32.gmra.mxu0 %v797
        %v8244 = vpop.f32.mrf.mxu0
        %v8245 = vadd.f32 %v8132, %v8244
        %8246 = vmatmul.f32.gmra.mxu0 %v805
        %v8247 = vpop.f32.mrf.mxu0
        %v8248 = vadd.f32 %v8135, %v8247
        %8249 = vmatmul.f32.gmra.mxu0 %v813
        %v8250 = vpop.f32.mrf.mxu0
        %v8251 = vadd.f32 %v8138, %v8250
        %8252 = vmatmul.f32.gmra.mxu0 %v821
        %v8253 = vpop.f32.mrf.mxu0
        %v8254 = vadd.f32 %v8141, %v8253
        %8255 = vmatmul.f32.gmra.mxu0 %v829
        %v8256 = vpop.f32.mrf.mxu0
        %v8257 = vadd.f32 %v8144, %v8256
        %8258 = vmatmul.f32.gmra.mxu0 %v837
        %v8259 = vpop.f32.mrf.mxu0
        %v8260 = vadd.f32 %v8147, %v8259
        %8261 = vmatmul.f32.gmra.mxu0 %v845
        %v8262 = vpop.f32.mrf.mxu0
        %v8263 = vadd.f32 %v8150, %v8262
        %8264 = vmatmul.f32.gmra.mxu0 %v853
        %v8265 = vpop.f32.mrf.mxu0
        %v8266 = vadd.f32 %v8153, %v8265
        %8267 = vmatmul.f32.gmra.mxu0 %v861
        %v8268 = vpop.f32.mrf.mxu0
        %v8269 = vadd.f32 %v8156, %v8268
        %8270 = vmatmul.f32.gmra.mxu0 %v869
        %v8271 = vpop.f32.mrf.mxu0
        %v8272 = vadd.f32 %v8159, %v8271
        %8273 = vmatmul.f32.gmra.mxu0 %v877
        %v8274 = vpop.f32.mrf.mxu0
        %v8275 = vadd.f32 %v8162, %v8274
        %8276 = vmatmul.f32.gmra.mxu0 %v885
        %v8277 = vpop.f32.mrf.mxu0
        %v8278 = vadd.f32 %v8165, %v8277
        %8279 = vmatmul.f32.gmra.mxu0 %v893
        %v8280 = vpop.f32.mrf.mxu0
        %v8281 = vadd.f32 %v8168, %v8280
        %8282 = vmatmul.f32.gmra.mxu0 %v901
        %v8283 = vpop.f32.mrf.mxu0
        %v8284 = vadd.f32 %v8171, %v8283
        %8285 = vdwg.mxu0
        %8286 = vmatpush.msra.mxu0 %v1350
        %8287 = vmatpush.msra.mxu0 %v1346
        %8288 = vmatpush.msra.mxu0 %v1342
        %8289 = vmatpush.msra.mxu0 %v1338
        %8290 = vmatpush.msra.mxu0 %v1334
        %8291 = vmatpush.msra.mxu0 %v1330
        %8292 = vmatpush.msra.mxu0 %v1326
        %8293 = vmatpush.msra.mxu0 %v1322
        %8294 = vmatpush.msra.mxu0 %v1318
        %8295 = vmatpush.msra.mxu0 %v1314
        %8296 = vmatpush.msra.mxu0 %v1310
        %8297 = vmatpush.msra.mxu0 %v1306
        %8298 = vmatpush.msra.mxu0 %v1302
        %8299 = vmatpush.msra.mxu0 %v1298
        %8300 = vmatpush.msra.mxu0 %v1294
        %8301 = vmatpush.msra.mxu0 %v1290
        %8302 = vmatmul.f32.gmra.mxu0 %v654
        %v8303 = vpop.f32.mrf.mxu0
        %v8304 = vadd.f32 %v8191, %v8303
        %8305 = vmatmul.f32.gmra.mxu0 %v662
        %v8306 = vpop.f32.mrf.mxu0
        %v8307 = vadd.f32 %v8194, %v8306
        %8308 = vmatmul.f32.gmra.mxu0 %v670
        %v8309 = vpop.f32.mrf.mxu0
        %v8310 = vadd.f32 %v8197, %v8309
        %8311 = vmatmul.f32.gmra.mxu0 %v678
        %v8312 = vpop.f32.mrf.mxu0
        %v8313 = vadd.f32 %v8200, %v8312
        %8314 = vmatmul.f32.gmra.mxu0 %v686
        %v8315 = vpop.f32.mrf.mxu0
        %v8316 = vadd.f32 %v8203, %v8315
        %8317 = vmatmul.f32.gmra.mxu0 %v694
        %v8318 = vpop.f32.mrf.mxu0
        %v8319 = vadd.f32 %v8206, %v8318
        %8320 = vmatmul.f32.gmra.mxu0 %v702
        %v8321 = vpop.f32.mrf.mxu0
        %v8322 = vadd.f32 %v8209, %v8321
        %8323 = vmatmul.f32.gmra.mxu0 %v710
        %v8324 = vpop.f32.mrf.mxu0
        %v8325 = vadd.f32 %v8212, %v8324
        %8326 = vmatmul.f32.gmra.mxu0 %v718
        %v8327 = vpop.f32.mrf.mxu0
        %v8328 = vadd.f32 %v8215, %v8327
        %8329 = vmatmul.f32.gmra.mxu0 %v726
        %v8330 = vpop.f32.mrf.mxu0
        %v8331 = vadd.f32 %v8218, %v8330
        %8332 = vmatmul.f32.gmra.mxu0 %v734
        %v8333 = vpop.f32.mrf.mxu0
        %v8334 = vadd.f32 %v8221, %v8333
        %8335 = vmatmul.f32.gmra.mxu0 %v742
        %v8336 = vpop.f32.mrf.mxu0
        %v8337 = vadd.f32 %v8224, %v8336
        %8338 = vmatmul.f32.gmra.mxu0 %v750
        %v8339 = vpop.f32.mrf.mxu0
        %v8340 = vadd.f32 %v8227, %v8339
        %8341 = vmatmul.f32.gmra.mxu0 %v758
        %v8342 = vpop.f32.mrf.mxu0
        %v8343 = vadd.f32 %v8230, %v8342
        %8344 = vmatmul.f32.gmra.mxu0 %v766
        %v8345 = vpop.f32.mrf.mxu0
        %v8346 = vadd.f32 %v8233, %v8345
        %8347 = vmatmul.f32.gmra.mxu0 %v774
        %v8348 = vpop.f32.mrf.mxu0
        %v8349 = vadd.f32 %v8236, %v8348
        %8350 = vmatmul.f32.gmra.mxu0 %v782
        %v8351 = vpop.f32.mrf.mxu0
        %v8352 = vadd.f32 %v8239, %v8351
        %8353 = vmatmul.f32.gmra.mxu0 %v790
        %v8354 = vpop.f32.mrf.mxu0
        %v8355 = vadd.f32 %v8242, %v8354
        %8356 = vmatmul.f32.gmra.mxu0 %v798
        %v8357 = vpop.f32.mrf.mxu0
        %v8358 = vadd.f32 %v8245, %v8357
        %8359 = vmatmul.f32.gmra.mxu0 %v806
        %v8360 = vpop.f32.mrf.mxu0
        %v8361 = vadd.f32 %v8248, %v8360
        %8362 = vmatmul.f32.gmra.mxu0 %v814
        %v8363 = vpop.f32.mrf.mxu0
        %v8364 = vadd.f32 %v8251, %v8363
        %8365 = vmatmul.f32.gmra.mxu0 %v822
        %v8366 = vpop.f32.mrf.mxu0
        %v8367 = vadd.f32 %v8254, %v8366
        %8368 = vmatmul.f32.gmra.mxu0 %v830
        %v8369 = vpop.f32.mrf.mxu0
        %v8370 = vadd.f32 %v8257, %v8369
        %8371 = vmatmul.f32.gmra.mxu0 %v838
        %v8372 = vpop.f32.mrf.mxu0
        %v8373 = vadd.f32 %v8260, %v8372
        %8374 = vmatmul.f32.gmra.mxu0 %v846
        %v8375 = vpop.f32.mrf.mxu0
        %v8376 = vadd.f32 %v8263, %v8375
        %8377 = vmatmul.f32.gmra.mxu0 %v854
        %v8378 = vpop.f32.mrf.mxu0
        %v8379 = vadd.f32 %v8266, %v8378
        %8380 = vmatmul.f32.gmra.mxu0 %v862
        %v8381 = vpop.f32.mrf.mxu0
        %v8382 = vadd.f32 %v8269, %v8381
        %8383 = vmatmul.f32.gmra.mxu0 %v870
        %v8384 = vpop.f32.mrf.mxu0
        %v8385 = vadd.f32 %v8272, %v8384
        %8386 = vmatmul.f32.gmra.mxu0 %v878
        %v8387 = vpop.f32.mrf.mxu0
        %v8388 = vadd.f32 %v8275, %v8387
        %8389 = vmatmul.f32.gmra.mxu0 %v886
        %v8390 = vpop.f32.mrf.mxu0
        %v8391 = vadd.f32 %v8278, %v8390
        %8392 = vmatmul.f32.gmra.mxu0 %v894
        %v8393 = vpop.f32.mrf.mxu0
        %v8394 = vadd.f32 %v8281, %v8393
        %8395 = vmatmul.f32.gmra.mxu0 %v902
        %v8396 = vpop.f32.mrf.mxu0
        %v8397 = vadd.f32 %v8284, %v8396
        %8398 = vdwg.mxu0
        %8399 = vmatpush.msra.mxu0 %v1414
        %8400 = vmatpush.msra.mxu0 %v1410
        %8401 = vmatpush.msra.mxu0 %v1406
        %8402 = vmatpush.msra.mxu0 %v1402
        %8403 = vmatpush.msra.mxu0 %v1398
        %8404 = vmatpush.msra.mxu0 %v1394
        %8405 = vmatpush.msra.mxu0 %v1390
        %8406 = vmatpush.msra.mxu0 %v1386
        %8407 = vmatpush.msra.mxu0 %v1382
        %8408 = vmatpush.msra.mxu0 %v1378
        %8409 = vmatpush.msra.mxu0 %v1374
        %8410 = vmatpush.msra.mxu0 %v1370
        %8411 = vmatpush.msra.mxu0 %v1366
        %8412 = vmatpush.msra.mxu0 %v1362
        %8413 = vmatpush.msra.mxu0 %v1358
        %8414 = vmatpush.msra.mxu0 %v1354
        %8415 = vmatmul.f32.gmra.mxu0 %v655
        %v8416 = vpop.f32.mrf.mxu0
        %v8417 = vadd.f32 %v8304, %v8416
        %8418 = vmatmul.f32.gmra.mxu0 %v663
        %v8419 = vpop.f32.mrf.mxu0
        %v8420 = vadd.f32 %v8307, %v8419
        %8421 = vmatmul.f32.gmra.mxu0 %v671
        %v8422 = vpop.f32.mrf.mxu0
        %v8423 = vadd.f32 %v8310, %v8422
        %8424 = vmatmul.f32.gmra.mxu0 %v679
        %v8425 = vpop.f32.mrf.mxu0
        %v8426 = vadd.f32 %v8313, %v8425
        %8427 = vmatmul.f32.gmra.mxu0 %v687
        %v8428 = vpop.f32.mrf.mxu0
        %v8429 = vadd.f32 %v8316, %v8428
        %8430 = vmatmul.f32.gmra.mxu0 %v695
        %v8431 = vpop.f32.mrf.mxu0
        %v8432 = vadd.f32 %v8319, %v8431
        %8433 = vmatmul.f32.gmra.mxu0 %v703
        %v8434 = vpop.f32.mrf.mxu0
        %v8435 = vadd.f32 %v8322, %v8434
        %8436 = vmatmul.f32.gmra.mxu0 %v711
        %v8437 = vpop.f32.mrf.mxu0
        %v8438 = vadd.f32 %v8325, %v8437
        %8439 = vmatmul.f32.gmra.mxu0 %v719
        %v8440 = vpop.f32.mrf.mxu0
        %v8441 = vadd.f32 %v8328, %v8440
        %8442 = vmatmul.f32.gmra.mxu0 %v727
        %v8443 = vpop.f32.mrf.mxu0
        %v8444 = vadd.f32 %v8331, %v8443
        %8445 = vmatmul.f32.gmra.mxu0 %v735
        %v8446 = vpop.f32.mrf.mxu0
        %v8447 = vadd.f32 %v8334, %v8446
        %8448 = vmatmul.f32.gmra.mxu0 %v743
        %v8449 = vpop.f32.mrf.mxu0
        %v8450 = vadd.f32 %v8337, %v8449
        %8451 = vmatmul.f32.gmra.mxu0 %v751
        %v8452 = vpop.f32.mrf.mxu0
        %v8453 = vadd.f32 %v8340, %v8452
        %8454 = vmatmul.f32.gmra.mxu0 %v759
        %v8455 = vpop.f32.mrf.mxu0
        %v8456 = vadd.f32 %v8343, %v8455
        %8457 = vmatmul.f32.gmra.mxu0 %v767
        %v8458 = vpop.f32.mrf.mxu0
        %v8459 = vadd.f32 %v8346, %v8458
        %8460 = vmatmul.f32.gmra.mxu0 %v775
        %v8461 = vpop.f32.mrf.mxu0
        %v8462 = vadd.f32 %v8349, %v8461
        %8463 = vmatmul.f32.gmra.mxu0 %v783
        %v8464 = vpop.f32.mrf.mxu0
        %v8465 = vadd.f32 %v8352, %v8464
        %8466 = vmatmul.f32.gmra.mxu0 %v791
        %v8467 = vpop.f32.mrf.mxu0
        %v8468 = vadd.f32 %v8355, %v8467
        %8469 = vmatmul.f32.gmra.mxu0 %v799
        %v8470 = vpop.f32.mrf.mxu0
        %v8471 = vadd.f32 %v8358, %v8470
        %8472 = vmatmul.f32.gmra.mxu0 %v807
        %v8473 = vpop.f32.mrf.mxu0
        %v8474 = vadd.f32 %v8361, %v8473
        %8475 = vmatmul.f32.gmra.mxu0 %v815
        %v8476 = vpop.f32.mrf.mxu0
        %v8477 = vadd.f32 %v8364, %v8476
        %8478 = vmatmul.f32.gmra.mxu0 %v823
        %v8479 = vpop.f32.mrf.mxu0
        %v8480 = vadd.f32 %v8367, %v8479
        %8481 = vmatmul.f32.gmra.mxu0 %v831
        %v8482 = vpop.f32.mrf.mxu0
        %v8483 = vadd.f32 %v8370, %v8482
        %8484 = vmatmul.f32.gmra.mxu0 %v839
        %v8485 = vpop.f32.mrf.mxu0
        %v8486 = vadd.f32 %v8373, %v8485
        %8487 = vmatmul.f32.gmra.mxu0 %v847
        %v8488 = vpop.f32.mrf.mxu0
        %v8489 = vadd.f32 %v8376, %v8488
        %8490 = vmatmul.f32.gmra.mxu0 %v855
        %v8491 = vpop.f32.mrf.mxu0
        %v8492 = vadd.f32 %v8379, %v8491
        %8493 = vmatmul.f32.gmra.mxu0 %v863
        %v8494 = vpop.f32.mrf.mxu0
        %v8495 = vadd.f32 %v8382, %v8494
        %8496 = vmatmul.f32.gmra.mxu0 %v871
        %v8497 = vpop.f32.mrf.mxu0
        %v8498 = vadd.f32 %v8385, %v8497
        %8499 = vmatmul.f32.gmra.mxu0 %v879
        %v8500 = vpop.f32.mrf.mxu0
        %v8501 = vadd.f32 %v8388, %v8500
        %8502 = vmatmul.f32.gmra.mxu0 %v887
        %v8503 = vpop.f32.mrf.mxu0
        %v8504 = vadd.f32 %v8391, %v8503
        %8505 = vmatmul.f32.gmra.mxu0 %v895
        %v8506 = vpop.f32.mrf.mxu0
        %v8507 = vadd.f32 %v8394, %v8506
        %8508 = vmatmul.f32.gmra.mxu0 %v903
        %v8509 = vpop.f32.mrf.mxu0
        %v8510 = vadd.f32 %v8397, %v8509
        %8511 = vdwg.mxu0
        %8512 = vmatpush.msra.mxu0 %v967
        %8513 = vmatpush.msra.mxu0 %v963
        %8514 = vmatpush.msra.mxu0 %v959
        %8515 = vmatpush.msra.mxu0 %v955
        %8516 = vmatpush.msra.mxu0 %v951
        %8517 = vmatpush.msra.mxu0 %v947
        %8518 = vmatpush.msra.mxu0 %v943
        %8519 = vmatpush.msra.mxu0 %v939
        %8520 = vmatpush.msra.mxu0 %v935
        %8521 = vmatpush.msra.mxu0 %v931
        %8522 = vmatpush.msra.mxu0 %v927
        %8523 = vmatpush.msra.mxu0 %v923
        %8524 = vmatpush.msra.mxu0 %v919
        %8525 = vmatpush.msra.mxu0 %v915
        %8526 = vmatpush.msra.mxu0 %v911
        %8527 = vmatpush.msra.mxu0 %v907
        %8528 = vmatmul.f32.gmra.mxu0 %v648
        %v8529 = vpop.f32.mrf.mxu0
        %v8530 = vadd.f32 %v5705, %v8529
        %8531 = vmatmul.f32.gmra.mxu0 %v656
        %v8532 = vpop.f32.mrf.mxu0
        %v8533 = vadd.f32 %v5708, %v8532
        %8534 = vmatmul.f32.gmra.mxu0 %v664
        %v8535 = vpop.f32.mrf.mxu0
        %v8536 = vadd.f32 %v5711, %v8535
        %8537 = vmatmul.f32.gmra.mxu0 %v672
        %v8538 = vpop.f32.mrf.mxu0
        %v8539 = vadd.f32 %v5714, %v8538
        %8540 = vmatmul.f32.gmra.mxu0 %v680
        %v8541 = vpop.f32.mrf.mxu0
        %v8542 = vadd.f32 %v5717, %v8541
        %8543 = vmatmul.f32.gmra.mxu0 %v688
        %v8544 = vpop.f32.mrf.mxu0
        %v8545 = vadd.f32 %v5720, %v8544
        %8546 = vmatmul.f32.gmra.mxu0 %v696
        %v8547 = vpop.f32.mrf.mxu0
        %v8548 = vadd.f32 %v5723, %v8547
        %8549 = vmatmul.f32.gmra.mxu0 %v704
        %v8550 = vpop.f32.mrf.mxu0
        %v8551 = vadd.f32 %v5726, %v8550
        %8552 = vmatmul.f32.gmra.mxu0 %v712
        %v8553 = vpop.f32.mrf.mxu0
        %v8554 = vadd.f32 %v5729, %v8553
        %8555 = vmatmul.f32.gmra.mxu0 %v720
        %v8556 = vpop.f32.mrf.mxu0
        %v8557 = vadd.f32 %v5732, %v8556
        %8558 = vmatmul.f32.gmra.mxu0 %v728
        %v8559 = vpop.f32.mrf.mxu0
        %v8560 = vadd.f32 %v5735, %v8559
        %8561 = vmatmul.f32.gmra.mxu0 %v736
        %v8562 = vpop.f32.mrf.mxu0
        %v8563 = vadd.f32 %v5738, %v8562
        %8564 = vmatmul.f32.gmra.mxu0 %v744
        %v8565 = vpop.f32.mrf.mxu0
        %v8566 = vadd.f32 %v5741, %v8565
        %8567 = vmatmul.f32.gmra.mxu0 %v752
        %v8568 = vpop.f32.mrf.mxu0
        %v8569 = vadd.f32 %v5744, %v8568
        %8570 = vmatmul.f32.gmra.mxu0 %v760
        %v8571 = vpop.f32.mrf.mxu0
        %v8572 = vadd.f32 %v5747, %v8571
        %8573 = vmatmul.f32.gmra.mxu0 %v768
        %v8574 = vpop.f32.mrf.mxu0
        %v8575 = vadd.f32 %v5750, %v8574
        %8576 = vmatmul.f32.gmra.mxu0 %v776
        %v8577 = vpop.f32.mrf.mxu0
        %v8578 = vadd.f32 %v5753, %v8577
        %8579 = vmatmul.f32.gmra.mxu0 %v784
        %v8580 = vpop.f32.mrf.mxu0
        %v8581 = vadd.f32 %v5756, %v8580
        %8582 = vmatmul.f32.gmra.mxu0 %v792
        %v8583 = vpop.f32.mrf.mxu0
        %v8584 = vadd.f32 %v5759, %v8583
        %8585 = vmatmul.f32.gmra.mxu0 %v800
        %v8586 = vpop.f32.mrf.mxu0
        %v8587 = vadd.f32 %v5762, %v8586
        %8588 = vmatmul.f32.gmra.mxu0 %v808
        %v8589 = vpop.f32.mrf.mxu0
        %v8590 = vadd.f32 %v5765, %v8589
        %8591 = vmatmul.f32.gmra.mxu0 %v816
        %v8592 = vpop.f32.mrf.mxu0
        %v8593 = vadd.f32 %v5768, %v8592
        %8594 = vmatmul.f32.gmra.mxu0 %v824
        %v8595 = vpop.f32.mrf.mxu0
        %v8596 = vadd.f32 %v5771, %v8595
        %8597 = vmatmul.f32.gmra.mxu0 %v832
        %v8598 = vpop.f32.mrf.mxu0
        %v8599 = vadd.f32 %v5774, %v8598
        %8600 = vmatmul.f32.gmra.mxu0 %v840
        %v8601 = vpop.f32.mrf.mxu0
        %v8602 = vadd.f32 %v5777, %v8601
        %8603 = vmatmul.f32.gmra.mxu0 %v848
        %v8604 = vpop.f32.mrf.mxu0
        %v8605 = vadd.f32 %v5780, %v8604
        %8606 = vmatmul.f32.gmra.mxu0 %v856
        %v8607 = vpop.f32.mrf.mxu0
        %v8608 = vadd.f32 %v5783, %v8607
        %8609 = vmatmul.f32.gmra.mxu0 %v864
        %v8610 = vpop.f32.mrf.mxu0
        %v8611 = vadd.f32 %v5786, %v8610
        %8612 = vmatmul.f32.gmra.mxu0 %v872
        %v8613 = vpop.f32.mrf.mxu0
        %v8614 = vadd.f32 %v5789, %v8613
        %8615 = vmatmul.f32.gmra.mxu0 %v880
        %v8616 = vpop.f32.mrf.mxu0
        %v8617 = vadd.f32 %v5792, %v8616
        %8618 = vmatmul.f32.gmra.mxu0 %v888
        %v8619 = vpop.f32.mrf.mxu0
        %v8620 = vadd.f32 %v5795, %v8619
        %8621 = vmatmul.f32.gmra.mxu0 %v896
        %v8622 = vpop.f32.mrf.mxu0
        %v8623 = vadd.f32 %v5798, %v8622
        %8624 = vdwg.mxu0
        %8625 = vmatpush.msra.mxu0 %v1031
        %8626 = vmatpush.msra.mxu0 %v1027
        %8627 = vmatpush.msra.mxu0 %v1023
        %8628 = vmatpush.msra.mxu0 %v1019
        %8629 = vmatpush.msra.mxu0 %v1015
        %8630 = vmatpush.msra.mxu0 %v1011
        %8631 = vmatpush.msra.mxu0 %v1007
        %8632 = vmatpush.msra.mxu0 %v1003
        %8633 = vmatpush.msra.mxu0 %v999
        %8634 = vmatpush.msra.mxu0 %v995
        %8635 = vmatpush.msra.mxu0 %v991
        %8636 = vmatpush.msra.mxu0 %v987
        %8637 = vmatpush.msra.mxu0 %v983
        %8638 = vmatpush.msra.mxu0 %v979
        %8639 = vmatpush.msra.mxu0 %v975
        %8640 = vmatpush.msra.mxu0 %v971
        %8641 = vmatmul.f32.gmra.mxu0 %v649
        %v8642 = vpop.f32.mrf.mxu0
        %v8643 = vadd.f32 %v8530, %v8642
        %8644 = vmatmul.f32.gmra.mxu0 %v657
        %v8645 = vpop.f32.mrf.mxu0
        %v8646 = vadd.f32 %v8533, %v8645
        %8647 = vmatmul.f32.gmra.mxu0 %v665
        %v8648 = vpop.f32.mrf.mxu0
        %v8649 = vadd.f32 %v8536, %v8648
        %8650 = vmatmul.f32.gmra.mxu0 %v673
        %v8651 = vpop.f32.mrf.mxu0
        %v8652 = vadd.f32 %v8539, %v8651
        %8653 = vmatmul.f32.gmra.mxu0 %v681
        %v8654 = vpop.f32.mrf.mxu0
        %v8655 = vadd.f32 %v8542, %v8654
        %8656 = vmatmul.f32.gmra.mxu0 %v689
        %v8657 = vpop.f32.mrf.mxu0
        %v8658 = vadd.f32 %v8545, %v8657
        %8659 = vmatmul.f32.gmra.mxu0 %v697
        %v8660 = vpop.f32.mrf.mxu0
        %v8661 = vadd.f32 %v8548, %v8660
        %8662 = vmatmul.f32.gmra.mxu0 %v705
        %v8663 = vpop.f32.mrf.mxu0
        %v8664 = vadd.f32 %v8551, %v8663
        %8665 = vmatmul.f32.gmra.mxu0 %v713
        %v8666 = vpop.f32.mrf.mxu0
        %v8667 = vadd.f32 %v8554, %v8666
        %8668 = vmatmul.f32.gmra.mxu0 %v721
        %v8669 = vpop.f32.mrf.mxu0
        %v8670 = vadd.f32 %v8557, %v8669
        %8671 = vmatmul.f32.gmra.mxu0 %v729
        %v8672 = vpop.f32.mrf.mxu0
        %v8673 = vadd.f32 %v8560, %v8672
        %8674 = vmatmul.f32.gmra.mxu0 %v737
        %v8675 = vpop.f32.mrf.mxu0
        %v8676 = vadd.f32 %v8563, %v8675
        %8677 = vmatmul.f32.gmra.mxu0 %v745
        %v8678 = vpop.f32.mrf.mxu0
        %v8679 = vadd.f32 %v8566, %v8678
        %8680 = vmatmul.f32.gmra.mxu0 %v753
        %v8681 = vpop.f32.mrf.mxu0
        %v8682 = vadd.f32 %v8569, %v8681
        %8683 = vmatmul.f32.gmra.mxu0 %v761
        %v8684 = vpop.f32.mrf.mxu0
        %v8685 = vadd.f32 %v8572, %v8684
        %8686 = vmatmul.f32.gmra.mxu0 %v769
        %v8687 = vpop.f32.mrf.mxu0
        %v8688 = vadd.f32 %v8575, %v8687
        %8689 = vmatmul.f32.gmra.mxu0 %v777
        %v8690 = vpop.f32.mrf.mxu0
        %v8691 = vadd.f32 %v8578, %v8690
        %8692 = vmatmul.f32.gmra.mxu0 %v785
        %v8693 = vpop.f32.mrf.mxu0
        %v8694 = vadd.f32 %v8581, %v8693
        %8695 = vmatmul.f32.gmra.mxu0 %v793
        %v8696 = vpop.f32.mrf.mxu0
        %v8697 = vadd.f32 %v8584, %v8696
        %8698 = vmatmul.f32.gmra.mxu0 %v801
        %v8699 = vpop.f32.mrf.mxu0
        %v8700 = vadd.f32 %v8587, %v8699
        %8701 = vmatmul.f32.gmra.mxu0 %v809
        %v8702 = vpop.f32.mrf.mxu0
        %v8703 = vadd.f32 %v8590, %v8702
        %8704 = vmatmul.f32.gmra.mxu0 %v817
        %v8705 = vpop.f32.mrf.mxu0
        %v8706 = vadd.f32 %v8593, %v8705
        %8707 = vmatmul.f32.gmra.mxu0 %v825
        %v8708 = vpop.f32.mrf.mxu0
        %v8709 = vadd.f32 %v8596, %v8708
        %8710 = vmatmul.f32.gmra.mxu0 %v833
        %v8711 = vpop.f32.mrf.mxu0
        %v8712 = vadd.f32 %v8599, %v8711
        %8713 = vmatmul.f32.gmra.mxu0 %v841
        %v8714 = vpop.f32.mrf.mxu0
        %v8715 = vadd.f32 %v8602, %v8714
        %8716 = vmatmul.f32.gmra.mxu0 %v849
        %v8717 = vpop.f32.mrf.mxu0
        %v8718 = vadd.f32 %v8605, %v8717
        %8719 = vmatmul.f32.gmra.mxu0 %v857
        %v8720 = vpop.f32.mrf.mxu0
        %v8721 = vadd.f32 %v8608, %v8720
        %8722 = vmatmul.f32.gmra.mxu0 %v865
        %v8723 = vpop.f32.mrf.mxu0
        %v8724 = vadd.f32 %v8611, %v8723
        %8725 = vmatmul.f32.gmra.mxu0 %v873
        %v8726 = vpop.f32.mrf.mxu0
        %v8727 = vadd.f32 %v8614, %v8726
        %8728 = vmatmul.f32.gmra.mxu0 %v881
        %v8729 = vpop.f32.mrf.mxu0
        %v8730 = vadd.f32 %v8617, %v8729
        %8731 = vmatmul.f32.gmra.mxu0 %v889
        %v8732 = vpop.f32.mrf.mxu0
        %v8733 = vadd.f32 %v8620, %v8732
        %8734 = vmatmul.f32.gmra.mxu0 %v897
        %v8735 = vpop.f32.mrf.mxu0
        %v8736 = vadd.f32 %v8623, %v8735
        %8737 = vdwg.mxu0
        %8738 = vmatpush.msra.mxu0 %v1095
        %8739 = vmatpush.msra.mxu0 %v1091
        %8740 = vmatpush.msra.mxu0 %v1087
        %8741 = vmatpush.msra.mxu0 %v1083
        %8742 = vmatpush.msra.mxu0 %v1079
        %8743 = vmatpush.msra.mxu0 %v1075
        %8744 = vmatpush.msra.mxu0 %v1071
        %8745 = vmatpush.msra.mxu0 %v1067
        %8746 = vmatpush.msra.mxu0 %v1063
        %8747 = vmatpush.msra.mxu0 %v1059
        %8748 = vmatpush.msra.mxu0 %v1055
        %8749 = vmatpush.msra.mxu0 %v1051
        %8750 = vmatpush.msra.mxu0 %v1047
        %8751 = vmatpush.msra.mxu0 %v1043
        %8752 = vmatpush.msra.mxu0 %v1039
        %8753 = vmatpush.msra.mxu0 %v1035
        %8754 = vmatmul.f32.gmra.mxu0 %v650
        %v8755 = vpop.f32.mrf.mxu0
        %v8756 = vadd.f32 %v8643, %v8755
        %8757 = vmatmul.f32.gmra.mxu0 %v658
        %v8758 = vpop.f32.mrf.mxu0
        %v8759 = vadd.f32 %v8646, %v8758
        %8760 = vmatmul.f32.gmra.mxu0 %v666
        %v8761 = vpop.f32.mrf.mxu0
        %v8762 = vadd.f32 %v8649, %v8761
        %8763 = vmatmul.f32.gmra.mxu0 %v674
        %v8764 = vpop.f32.mrf.mxu0
        %v8765 = vadd.f32 %v8652, %v8764
        %8766 = vmatmul.f32.gmra.mxu0 %v682
        %v8767 = vpop.f32.mrf.mxu0
        %v8768 = vadd.f32 %v8655, %v8767
        %8769 = vmatmul.f32.gmra.mxu0 %v690
        %v8770 = vpop.f32.mrf.mxu0
        %v8771 = vadd.f32 %v8658, %v8770
        %8772 = vmatmul.f32.gmra.mxu0 %v698
        %v8773 = vpop.f32.mrf.mxu0
        %v8774 = vadd.f32 %v8661, %v8773
        %8775 = vmatmul.f32.gmra.mxu0 %v706
        %v8776 = vpop.f32.mrf.mxu0
        %v8777 = vadd.f32 %v8664, %v8776
        %8778 = vmatmul.f32.gmra.mxu0 %v714
        %v8779 = vpop.f32.mrf.mxu0
        %v8780 = vadd.f32 %v8667, %v8779
        %8781 = vmatmul.f32.gmra.mxu0 %v722
        %v8782 = vpop.f32.mrf.mxu0
        %v8783 = vadd.f32 %v8670, %v8782
        %8784 = vmatmul.f32.gmra.mxu0 %v730
        %v8785 = vpop.f32.mrf.mxu0
        %v8786 = vadd.f32 %v8673, %v8785
        %8787 = vmatmul.f32.gmra.mxu0 %v738
        %v8788 = vpop.f32.mrf.mxu0
        %v8789 = vadd.f32 %v8676, %v8788
        %8790 = vmatmul.f32.gmra.mxu0 %v746
        %v8791 = vpop.f32.mrf.mxu0
        %v8792 = vadd.f32 %v8679, %v8791
        %8793 = vmatmul.f32.gmra.mxu0 %v754
        %v8794 = vpop.f32.mrf.mxu0
        %v8795 = vadd.f32 %v8682, %v8794
        %8796 = vmatmul.f32.gmra.mxu0 %v762
        %v8797 = vpop.f32.mrf.mxu0
        %v8798 = vadd.f32 %v8685, %v8797
        %8799 = vmatmul.f32.gmra.mxu0 %v770
        %v8800 = vpop.f32.mrf.mxu0
        %v8801 = vadd.f32 %v8688, %v8800
        %8802 = vmatmul.f32.gmra.mxu0 %v778
        %v8803 = vpop.f32.mrf.mxu0
        %v8804 = vadd.f32 %v8691, %v8803
        %8805 = vmatmul.f32.gmra.mxu0 %v786
        %v8806 = vpop.f32.mrf.mxu0
        %v8807 = vadd.f32 %v8694, %v8806
        %8808 = vmatmul.f32.gmra.mxu0 %v794
        %v8809 = vpop.f32.mrf.mxu0
        %v8810 = vadd.f32 %v8697, %v8809
        %8811 = vmatmul.f32.gmra.mxu0 %v802
        %v8812 = vpop.f32.mrf.mxu0
        %v8813 = vadd.f32 %v8700, %v8812
        %8814 = vmatmul.f32.gmra.mxu0 %v810
        %v8815 = vpop.f32.mrf.mxu0
        %v8816 = vadd.f32 %v8703, %v8815
        %8817 = vmatmul.f32.gmra.mxu0 %v818
        %v8818 = vpop.f32.mrf.mxu0
        %v8819 = vadd.f32 %v8706, %v8818
        %8820 = vmatmul.f32.gmra.mxu0 %v826
        %v8821 = vpop.f32.mrf.mxu0
        %v8822 = vadd.f32 %v8709, %v8821
        %8823 = vmatmul.f32.gmra.mxu0 %v834
        %v8824 = vpop.f32.mrf.mxu0
        %v8825 = vadd.f32 %v8712, %v8824
        %8826 = vmatmul.f32.gmra.mxu0 %v842
        %v8827 = vpop.f32.mrf.mxu0
        %v8828 = vadd.f32 %v8715, %v8827
        %8829 = vmatmul.f32.gmra.mxu0 %v850
        %v8830 = vpop.f32.mrf.mxu0
        %v8831 = vadd.f32 %v8718, %v8830
        %8832 = vmatmul.f32.gmra.mxu0 %v858
        %v8833 = vpop.f32.mrf.mxu0
        %v8834 = vadd.f32 %v8721, %v8833
        %8835 = vmatmul.f32.gmra.mxu0 %v866
        %v8836 = vpop.f32.mrf.mxu0
        %v8837 = vadd.f32 %v8724, %v8836
        %8838 = vmatmul.f32.gmra.mxu0 %v874
        %v8839 = vpop.f32.mrf.mxu0
        %v8840 = vadd.f32 %v8727, %v8839
        %8841 = vmatmul.f32.gmra.mxu0 %v882
        %v8842 = vpop.f32.mrf.mxu0
        %v8843 = vadd.f32 %v8730, %v8842
        %8844 = vmatmul.f32.gmra.mxu0 %v890
        %v8845 = vpop.f32.mrf.mxu0
        %v8846 = vadd.f32 %v8733, %v8845
        %8847 = vmatmul.f32.gmra.mxu0 %v898
        %v8848 = vpop.f32.mrf.mxu0
        %v8849 = vadd.f32 %v8736, %v8848
        %8850 = vdwg.mxu0
        %8851 = vmatpush.msra.mxu0 %v1159
        %8852 = vmatpush.msra.mxu0 %v1155
        %8853 = vmatpush.msra.mxu0 %v1151
        %8854 = vmatpush.msra.mxu0 %v1147
        %8855 = vmatpush.msra.mxu0 %v1143
        %8856 = vmatpush.msra.mxu0 %v1139
        %8857 = vmatpush.msra.mxu0 %v1135
        %8858 = vmatpush.msra.mxu0 %v1131
        %8859 = vmatpush.msra.mxu0 %v1127
        %8860 = vmatpush.msra.mxu0 %v1123
        %8861 = vmatpush.msra.mxu0 %v1119
        %8862 = vmatpush.msra.mxu0 %v1115
        %8863 = vmatpush.msra.mxu0 %v1111
        %8864 = vmatpush.msra.mxu0 %v1107
        %8865 = vmatpush.msra.mxu0 %v1103
        %8866 = vmatpush.msra.mxu0 %v1099
        %8867 = vmatmul.f32.gmra.mxu0 %v651
        %v8868 = vpop.f32.mrf.mxu0
        %v8869 = vadd.f32 %v8756, %v8868
        %8870 = vmatmul.f32.gmra.mxu0 %v659
        %v8871 = vpop.f32.mrf.mxu0
        %v8872 = vadd.f32 %v8759, %v8871
        %8873 = vmatmul.f32.gmra.mxu0 %v667
        %v8874 = vpop.f32.mrf.mxu0
        %v8875 = vadd.f32 %v8762, %v8874
        %8876 = vmatmul.f32.gmra.mxu0 %v675
        %v8877 = vpop.f32.mrf.mxu0
        %v8878 = vadd.f32 %v8765, %v8877
        %8879 = vmatmul.f32.gmra.mxu0 %v683
        %v8880 = vpop.f32.mrf.mxu0
        %v8881 = vadd.f32 %v8768, %v8880
        %8882 = vmatmul.f32.gmra.mxu0 %v691
        %v8883 = vpop.f32.mrf.mxu0
        %v8884 = vadd.f32 %v8771, %v8883
        %8885 = vmatmul.f32.gmra.mxu0 %v699
        %v8886 = vpop.f32.mrf.mxu0
        %v8887 = vadd.f32 %v8774, %v8886
        %8888 = vmatmul.f32.gmra.mxu0 %v707
        %v8889 = vpop.f32.mrf.mxu0
        %v8890 = vadd.f32 %v8777, %v8889
        %8891 = vmatmul.f32.gmra.mxu0 %v715
        %v8892 = vpop.f32.mrf.mxu0
        %v8893 = vadd.f32 %v8780, %v8892
        %8894 = vmatmul.f32.gmra.mxu0 %v723
        %v8895 = vpop.f32.mrf.mxu0
        %v8896 = vadd.f32 %v8783, %v8895
        %8897 = vmatmul.f32.gmra.mxu0 %v731
        %v8898 = vpop.f32.mrf.mxu0
        %v8899 = vadd.f32 %v8786, %v8898
        %8900 = vmatmul.f32.gmra.mxu0 %v739
        %v8901 = vpop.f32.mrf.mxu0
        %v8902 = vadd.f32 %v8789, %v8901
        %8903 = vmatmul.f32.gmra.mxu0 %v747
        %v8904 = vpop.f32.mrf.mxu0
        %v8905 = vadd.f32 %v8792, %v8904
        %8906 = vmatmul.f32.gmra.mxu0 %v755
        %v8907 = vpop.f32.mrf.mxu0
        %v8908 = vadd.f32 %v8795, %v8907
        %8909 = vmatmul.f32.gmra.mxu0 %v763
        %v8910 = vpop.f32.mrf.mxu0
        %v8911 = vadd.f32 %v8798, %v8910
        %8912 = vmatmul.f32.gmra.mxu0 %v771
        %v8913 = vpop.f32.mrf.mxu0
        %v8914 = vadd.f32 %v8801, %v8913
        %8915 = vmatmul.f32.gmra.mxu0 %v779
        %v8916 = vpop.f32.mrf.mxu0
        %v8917 = vadd.f32 %v8804, %v8916
        %8918 = vmatmul.f32.gmra.mxu0 %v787
        %v8919 = vpop.f32.mrf.mxu0
        %v8920 = vadd.f32 %v8807, %v8919
        %8921 = vmatmul.f32.gmra.mxu0 %v795
        %v8922 = vpop.f32.mrf.mxu0
        %v8923 = vadd.f32 %v8810, %v8922
        %8924 = vmatmul.f32.gmra.mxu0 %v803
        %v8925 = vpop.f32.mrf.mxu0
        %v8926 = vadd.f32 %v8813, %v8925
        %8927 = vmatmul.f32.gmra.mxu0 %v811
        %v8928 = vpop.f32.mrf.mxu0
        %v8929 = vadd.f32 %v8816, %v8928
        %8930 = vmatmul.f32.gmra.mxu0 %v819
        %v8931 = vpop.f32.mrf.mxu0
        %v8932 = vadd.f32 %v8819, %v8931
        %8933 = vmatmul.f32.gmra.mxu0 %v827
        %v8934 = vpop.f32.mrf.mxu0
        %v8935 = vadd.f32 %v8822, %v8934
        %8936 = vmatmul.f32.gmra.mxu0 %v835
        %v8937 = vpop.f32.mrf.mxu0
        %v8938 = vadd.f32 %v8825, %v8937
        %8939 = vmatmul.f32.gmra.mxu0 %v843
        %v8940 = vpop.f32.mrf.mxu0
        %v8941 = vadd.f32 %v8828, %v8940
        %8942 = vmatmul.f32.gmra.mxu0 %v851
        %v8943 = vpop.f32.mrf.mxu0
        %v8944 = vadd.f32 %v8831, %v8943
        %8945 = vmatmul.f32.gmra.mxu0 %v859
        %v8946 = vpop.f32.mrf.mxu0
        %v8947 = vadd.f32 %v8834, %v8946
        %8948 = vmatmul.f32.gmra.mxu0 %v867
        %v8949 = vpop.f32.mrf.mxu0
        %v8950 = vadd.f32 %v8837, %v8949
        %8951 = vmatmul.f32.gmra.mxu0 %v875
        %v8952 = vpop.f32.mrf.mxu0
        %v8953 = vadd.f32 %v8840, %v8952
        %8954 = vmatmul.f32.gmra.mxu0 %v883
        %v8955 = vpop.f32.mrf.mxu0
        %v8956 = vadd.f32 %v8843, %v8955
        %8957 = vmatmul.f32.gmra.mxu0 %v891
        %v8958 = vpop.f32.mrf.mxu0
        %v8959 = vadd.f32 %v8846, %v8958
        %8960 = vmatmul.f32.gmra.mxu0 %v899
        %v8961 = vpop.f32.mrf.mxu0
        %v8962 = vadd.f32 %v8849, %v8961
        %8963 = vdwg.mxu0
        %8964 = vmatpush.msra.mxu0 %v1223
        %8965 = vmatpush.msra.mxu0 %v1219
        %8966 = vmatpush.msra.mxu0 %v1215
        %8967 = vmatpush.msra.mxu0 %v1211
        %8968 = vmatpush.msra.mxu0 %v1207
        %8969 = vmatpush.msra.mxu0 %v1203
        %8970 = vmatpush.msra.mxu0 %v1199
        %8971 = vmatpush.msra.mxu0 %v1195
        %8972 = vmatpush.msra.mxu0 %v1191
        %8973 = vmatpush.msra.mxu0 %v1187
        %8974 = vmatpush.msra.mxu0 %v1183
        %8975 = vmatpush.msra.mxu0 %v1179
        %8976 = vmatpush.msra.mxu0 %v1175
        %8977 = vmatpush.msra.mxu0 %v1171
        %8978 = vmatpush.msra.mxu0 %v1167
        %8979 = vmatpush.msra.mxu0 %v1163
        %8980 = vmatmul.f32.gmra.mxu0 %v652
        %v8981 = vpop.f32.mrf.mxu0
        %v8982 = vadd.f32 %v8869, %v8981
        %8983 = vmatmul.f32.gmra.mxu0 %v660
        %v8984 = vpop.f32.mrf.mxu0
        %v8985 = vadd.f32 %v8872, %v8984
        %8986 = vmatmul.f32.gmra.mxu0 %v668
        %v8987 = vpop.f32.mrf.mxu0
        %v8988 = vadd.f32 %v8875, %v8987
        %8989 = vmatmul.f32.gmra.mxu0 %v676
        %v8990 = vpop.f32.mrf.mxu0
        %v8991 = vadd.f32 %v8878, %v8990
        %8992 = vmatmul.f32.gmra.mxu0 %v684
        %v8993 = vpop.f32.mrf.mxu0
        %v8994 = vadd.f32 %v8881, %v8993
        %8995 = vmatmul.f32.gmra.mxu0 %v692
        %v8996 = vpop.f32.mrf.mxu0
        %v8997 = vadd.f32 %v8884, %v8996
        %8998 = vmatmul.f32.gmra.mxu0 %v700
        %v8999 = vpop.f32.mrf.mxu0
        %v9000 = vadd.f32 %v8887, %v8999
        %9001 = vmatmul.f32.gmra.mxu0 %v708
        %v9002 = vpop.f32.mrf.mxu0
        %v9003 = vadd.f32 %v8890, %v9002
        %9004 = vmatmul.f32.gmra.mxu0 %v716
        %v9005 = vpop.f32.mrf.mxu0
        %v9006 = vadd.f32 %v8893, %v9005
        %9007 = vmatmul.f32.gmra.mxu0 %v724
        %v9008 = vpop.f32.mrf.mxu0
        %v9009 = vadd.f32 %v8896, %v9008
        %9010 = vmatmul.f32.gmra.mxu0 %v732
        %v9011 = vpop.f32.mrf.mxu0
        %v9012 = vadd.f32 %v8899, %v9011
        %9013 = vmatmul.f32.gmra.mxu0 %v740
        %v9014 = vpop.f32.mrf.mxu0
        %v9015 = vadd.f32 %v8902, %v9014
        %9016 = vmatmul.f32.gmra.mxu0 %v748
        %v9017 = vpop.f32.mrf.mxu0
        %v9018 = vadd.f32 %v8905, %v9017
        %9019 = vmatmul.f32.gmra.mxu0 %v756
        %v9020 = vpop.f32.mrf.mxu0
        %v9021 = vadd.f32 %v8908, %v9020
        %9022 = vmatmul.f32.gmra.mxu0 %v764
        %v9023 = vpop.f32.mrf.mxu0
        %v9024 = vadd.f32 %v8911, %v9023
        %9025 = vmatmul.f32.gmra.mxu0 %v772
        %v9026 = vpop.f32.mrf.mxu0
        %v9027 = vadd.f32 %v8914, %v9026
        %9028 = vmatmul.f32.gmra.mxu0 %v780
        %v9029 = vpop.f32.mrf.mxu0
        %v9030 = vadd.f32 %v8917, %v9029
        %9031 = vmatmul.f32.gmra.mxu0 %v788
        %v9032 = vpop.f32.mrf.mxu0
        %v9033 = vadd.f32 %v8920, %v9032
        %9034 = vmatmul.f32.gmra.mxu0 %v796
        %v9035 = vpop.f32.mrf.mxu0
        %v9036 = vadd.f32 %v8923, %v9035
        %9037 = vmatmul.f32.gmra.mxu0 %v804
        %v9038 = vpop.f32.mrf.mxu0
        %v9039 = vadd.f32 %v8926, %v9038
        %9040 = vmatmul.f32.gmra.mxu0 %v812
        %v9041 = vpop.f32.mrf.mxu0
        %v9042 = vadd.f32 %v8929, %v9041
        %9043 = vmatmul.f32.gmra.mxu0 %v820
        %v9044 = vpop.f32.mrf.mxu0
        %v9045 = vadd.f32 %v8932, %v9044
        %9046 = vmatmul.f32.gmra.mxu0 %v828
        %v9047 = vpop.f32.mrf.mxu0
        %v9048 = vadd.f32 %v8935, %v9047
        %9049 = vmatmul.f32.gmra.mxu0 %v836
        %v9050 = vpop.f32.mrf.mxu0
        %v9051 = vadd.f32 %v8938, %v9050
        %9052 = vmatmul.f32.gmra.mxu0 %v844
        %v9053 = vpop.f32.mrf.mxu0
        %v9054 = vadd.f32 %v8941, %v9053
        %9055 = vmatmul.f32.gmra.mxu0 %v852
        %v9056 = vpop.f32.mrf.mxu0
        %v9057 = vadd.f32 %v8944, %v9056
        %9058 = vmatmul.f32.gmra.mxu0 %v860
        %v9059 = vpop.f32.mrf.mxu0
        %v9060 = vadd.f32 %v8947, %v9059
        %9061 = vmatmul.f32.gmra.mxu0 %v868
        %v9062 = vpop.f32.mrf.mxu0
        %v9063 = vadd.f32 %v8950, %v9062
        %9064 = vmatmul.f32.gmra.mxu0 %v876
        %v9065 = vpop.f32.mrf.mxu0
        %v9066 = vadd.f32 %v8953, %v9065
        %9067 = vmatmul.f32.gmra.mxu0 %v884
        %v9068 = vpop.f32.mrf.mxu0
        %v9069 = vadd.f32 %v8956, %v9068
        %9070 = vmatmul.f32.gmra.mxu0 %v892
        %v9071 = vpop.f32.mrf.mxu0
        %v9072 = vadd.f32 %v8959, %v9071
        %9073 = vmatmul.f32.gmra.mxu0 %v900
        %v9074 = vpop.f32.mrf.mxu0
        %v9075 = vadd.f32 %v8962, %v9074
        %9076 = vdwg.mxu0
        %9077 = vmatpush.msra.mxu0 %v1287
        %9078 = vmatpush.msra.mxu0 %v1283
        %9079 = vmatpush.msra.mxu0 %v1279
        %9080 = vmatpush.msra.mxu0 %v1275
        %9081 = vmatpush.msra.mxu0 %v1271
        %9082 = vmatpush.msra.mxu0 %v1267
        %9083 = vmatpush.msra.mxu0 %v1263
        %9084 = vmatpush.msra.mxu0 %v1259
        %9085 = vmatpush.msra.mxu0 %v1255
        %9086 = vmatpush.msra.mxu0 %v1251
        %9087 = vmatpush.msra.mxu0 %v1247
        %9088 = vmatpush.msra.mxu0 %v1243
        %9089 = vmatpush.msra.mxu0 %v1239
        %9090 = vmatpush.msra.mxu0 %v1235
        %9091 = vmatpush.msra.mxu0 %v1231
        %9092 = vmatpush.msra.mxu0 %v1227
        %9093 = vmatmul.f32.gmra.mxu0 %v653
        %v9094 = vpop.f32.mrf.mxu0
        %v9095 = vadd.f32 %v8982, %v9094
        %9096 = vmatmul.f32.gmra.mxu0 %v661
        %v9097 = vpop.f32.mrf.mxu0
        %v9098 = vadd.f32 %v8985, %v9097
        %9099 = vmatmul.f32.gmra.mxu0 %v669
        %v9100 = vpop.f32.mrf.mxu0
        %v9101 = vadd.f32 %v8988, %v9100
        %9102 = vmatmul.f32.gmra.mxu0 %v677
        %v9103 = vpop.f32.mrf.mxu0
        %v9104 = vadd.f32 %v8991, %v9103
        %9105 = vmatmul.f32.gmra.mxu0 %v685
        %v9106 = vpop.f32.mrf.mxu0
        %v9107 = vadd.f32 %v8994, %v9106
        %9108 = vmatmul.f32.gmra.mxu0 %v693
        %v9109 = vpop.f32.mrf.mxu0
        %v9110 = vadd.f32 %v8997, %v9109
        %9111 = vmatmul.f32.gmra.mxu0 %v701
        %v9112 = vpop.f32.mrf.mxu0
        %v9113 = vadd.f32 %v9000, %v9112
        %9114 = vmatmul.f32.gmra.mxu0 %v709
        %v9115 = vpop.f32.mrf.mxu0
        %v9116 = vadd.f32 %v9003, %v9115
        %9117 = vmatmul.f32.gmra.mxu0 %v717
        %v9118 = vpop.f32.mrf.mxu0
        %v9119 = vadd.f32 %v9006, %v9118
        %9120 = vmatmul.f32.gmra.mxu0 %v725
        %v9121 = vpop.f32.mrf.mxu0
        %v9122 = vadd.f32 %v9009, %v9121
        %9123 = vmatmul.f32.gmra.mxu0 %v733
        %v9124 = vpop.f32.mrf.mxu0
        %v9125 = vadd.f32 %v9012, %v9124
        %9126 = vmatmul.f32.gmra.mxu0 %v741
        %v9127 = vpop.f32.mrf.mxu0
        %v9128 = vadd.f32 %v9015, %v9127
        %9129 = vmatmul.f32.gmra.mxu0 %v749
        %v9130 = vpop.f32.mrf.mxu0
        %v9131 = vadd.f32 %v9018, %v9130
        %9132 = vmatmul.f32.gmra.mxu0 %v757
        %v9133 = vpop.f32.mrf.mxu0
        %v9134 = vadd.f32 %v9021, %v9133
        %9135 = vmatmul.f32.gmra.mxu0 %v765
        %v9136 = vpop.f32.mrf.mxu0
        %v9137 = vadd.f32 %v9024, %v9136
        %9138 = vmatmul.f32.gmra.mxu0 %v773
        %v9139 = vpop.f32.mrf.mxu0
        %v9140 = vadd.f32 %v9027, %v9139
        %9141 = vmatmul.f32.gmra.mxu0 %v781
        %v9142 = vpop.f32.mrf.mxu0
        %v9143 = vadd.f32 %v9030, %v9142
        %9144 = vmatmul.f32.gmra.mxu0 %v789
        %v9145 = vpop.f32.mrf.mxu0
        %v9146 = vadd.f32 %v9033, %v9145
        %9147 = vmatmul.f32.gmra.mxu0 %v797
        %v9148 = vpop.f32.mrf.mxu0
        %v9149 = vadd.f32 %v9036, %v9148
        %9150 = vmatmul.f32.gmra.mxu0 %v805
        %v9151 = vpop.f32.mrf.mxu0
        %v9152 = vadd.f32 %v9039, %v9151
        %9153 = vmatmul.f32.gmra.mxu0 %v813
        %v9154 = vpop.f32.mrf.mxu0
        %v9155 = vadd.f32 %v9042, %v9154
        %9156 = vmatmul.f32.gmra.mxu0 %v821
        %v9157 = vpop.f32.mrf.mxu0
        %v9158 = vadd.f32 %v9045, %v9157
        %9159 = vmatmul.f32.gmra.mxu0 %v829
        %v9160 = vpop.f32.mrf.mxu0
        %v9161 = vadd.f32 %v9048, %v9160
        %9162 = vmatmul.f32.gmra.mxu0 %v837
        %v9163 = vpop.f32.mrf.mxu0
        %v9164 = vadd.f32 %v9051, %v9163
        %9165 = vmatmul.f32.gmra.mxu0 %v845
        %v9166 = vpop.f32.mrf.mxu0
        %v9167 = vadd.f32 %v9054, %v9166
        %9168 = vmatmul.f32.gmra.mxu0 %v853
        %v9169 = vpop.f32.mrf.mxu0
        %v9170 = vadd.f32 %v9057, %v9169
        %9171 = vmatmul.f32.gmra.mxu0 %v861
        %v9172 = vpop.f32.mrf.mxu0
        %v9173 = vadd.f32 %v9060, %v9172
        %9174 = vmatmul.f32.gmra.mxu0 %v869
        %v9175 = vpop.f32.mrf.mxu0
        %v9176 = vadd.f32 %v9063, %v9175
        %9177 = vmatmul.f32.gmra.mxu0 %v877
        %v9178 = vpop.f32.mrf.mxu0
        %v9179 = vadd.f32 %v9066, %v9178
        %9180 = vmatmul.f32.gmra.mxu0 %v885
        %v9181 = vpop.f32.mrf.mxu0
        %v9182 = vadd.f32 %v9069, %v9181
        %9183 = vmatmul.f32.gmra.mxu0 %v893
        %v9184 = vpop.f32.mrf.mxu0
        %v9185 = vadd.f32 %v9072, %v9184
        %9186 = vmatmul.f32.gmra.mxu0 %v901
        %v9187 = vpop.f32.mrf.mxu0
        %v9188 = vadd.f32 %v9075, %v9187
        %9189 = vdwg.mxu0
        %9190 = vmatpush.msra.mxu0 %v1351
        %9191 = vmatpush.msra.mxu0 %v1347
        %9192 = vmatpush.msra.mxu0 %v1343
        %9193 = vmatpush.msra.mxu0 %v1339
        %9194 = vmatpush.msra.mxu0 %v1335
        %9195 = vmatpush.msra.mxu0 %v1331
        %9196 = vmatpush.msra.mxu0 %v1327
        %9197 = vmatpush.msra.mxu0 %v1323
        %9198 = vmatpush.msra.mxu0 %v1319
        %9199 = vmatpush.msra.mxu0 %v1315
        %9200 = vmatpush.msra.mxu0 %v1311
        %9201 = vmatpush.msra.mxu0 %v1307
        %9202 = vmatpush.msra.mxu0 %v1303
        %9203 = vmatpush.msra.mxu0 %v1299
        %9204 = vmatpush.msra.mxu0 %v1295
        %9205 = vmatpush.msra.mxu0 %v1291
        %9206 = vmatmul.f32.gmra.mxu0 %v654
        %v9207 = vpop.f32.mrf.mxu0
        %v9208 = vadd.f32 %v9095, %v9207
        %9209 = vmatmul.f32.gmra.mxu0 %v662
        %v9210 = vpop.f32.mrf.mxu0
        %v9211 = vadd.f32 %v9098, %v9210
        %9212 = vmatmul.f32.gmra.mxu0 %v670
        %v9213 = vpop.f32.mrf.mxu0
        %v9214 = vadd.f32 %v9101, %v9213
        %9215 = vmatmul.f32.gmra.mxu0 %v678
        %v9216 = vpop.f32.mrf.mxu0
        %v9217 = vadd.f32 %v9104, %v9216
        %9218 = vmatmul.f32.gmra.mxu0 %v686
        %v9219 = vpop.f32.mrf.mxu0
        %v9220 = vadd.f32 %v9107, %v9219
        %9221 = vmatmul.f32.gmra.mxu0 %v694
        %v9222 = vpop.f32.mrf.mxu0
        %v9223 = vadd.f32 %v9110, %v9222
        %9224 = vmatmul.f32.gmra.mxu0 %v702
        %v9225 = vpop.f32.mrf.mxu0
        %v9226 = vadd.f32 %v9113, %v9225
        %9227 = vmatmul.f32.gmra.mxu0 %v710
        %v9228 = vpop.f32.mrf.mxu0
        %v9229 = vadd.f32 %v9116, %v9228
        %9230 = vmatmul.f32.gmra.mxu0 %v718
        %v9231 = vpop.f32.mrf.mxu0
        %v9232 = vadd.f32 %v9119, %v9231
        %9233 = vmatmul.f32.gmra.mxu0 %v726
        %v9234 = vpop.f32.mrf.mxu0
        %v9235 = vadd.f32 %v9122, %v9234
        %9236 = vmatmul.f32.gmra.mxu0 %v734
        %v9237 = vpop.f32.mrf.mxu0
        %v9238 = vadd.f32 %v9125, %v9237
        %9239 = vmatmul.f32.gmra.mxu0 %v742
        %v9240 = vpop.f32.mrf.mxu0
        %v9241 = vadd.f32 %v9128, %v9240
        %9242 = vmatmul.f32.gmra.mxu0 %v750
        %v9243 = vpop.f32.mrf.mxu0
        %v9244 = vadd.f32 %v9131, %v9243
        %9245 = vmatmul.f32.gmra.mxu0 %v758
        %v9246 = vpop.f32.mrf.mxu0
        %v9247 = vadd.f32 %v9134, %v9246
        %9248 = vmatmul.f32.gmra.mxu0 %v766
        %v9249 = vpop.f32.mrf.mxu0
        %v9250 = vadd.f32 %v9137, %v9249
        %9251 = vmatmul.f32.gmra.mxu0 %v774
        %v9252 = vpop.f32.mrf.mxu0
        %v9253 = vadd.f32 %v9140, %v9252
        %9254 = vmatmul.f32.gmra.mxu0 %v782
        %v9255 = vpop.f32.mrf.mxu0
        %v9256 = vadd.f32 %v9143, %v9255
        %9257 = vmatmul.f32.gmra.mxu0 %v790
        %v9258 = vpop.f32.mrf.mxu0
        %v9259 = vadd.f32 %v9146, %v9258
        %9260 = vmatmul.f32.gmra.mxu0 %v798
        %v9261 = vpop.f32.mrf.mxu0
        %v9262 = vadd.f32 %v9149, %v9261
        %9263 = vmatmul.f32.gmra.mxu0 %v806
        %v9264 = vpop.f32.mrf.mxu0
        %v9265 = vadd.f32 %v9152, %v9264
        %9266 = vmatmul.f32.gmra.mxu0 %v814
        %v9267 = vpop.f32.mrf.mxu0
        %v9268 = vadd.f32 %v9155, %v9267
        %9269 = vmatmul.f32.gmra.mxu0 %v822
        %v9270 = vpop.f32.mrf.mxu0
        %v9271 = vadd.f32 %v9158, %v9270
        %9272 = vmatmul.f32.gmra.mxu0 %v830
        %v9273 = vpop.f32.mrf.mxu0
        %v9274 = vadd.f32 %v9161, %v9273
        %9275 = vmatmul.f32.gmra.mxu0 %v838
        %v9276 = vpop.f32.mrf.mxu0
        %v9277 = vadd.f32 %v9164, %v9276
        %9278 = vmatmul.f32.gmra.mxu0 %v846
        %v9279 = vpop.f32.mrf.mxu0
        %v9280 = vadd.f32 %v9167, %v9279
        %9281 = vmatmul.f32.gmra.mxu0 %v854
        %v9282 = vpop.f32.mrf.mxu0
        %v9283 = vadd.f32 %v9170, %v9282
        %9284 = vmatmul.f32.gmra.mxu0 %v862
        %v9285 = vpop.f32.mrf.mxu0
        %v9286 = vadd.f32 %v9173, %v9285
        %9287 = vmatmul.f32.gmra.mxu0 %v870
        %v9288 = vpop.f32.mrf.mxu0
        %v9289 = vadd.f32 %v9176, %v9288
        %9290 = vmatmul.f32.gmra.mxu0 %v878
        %v9291 = vpop.f32.mrf.mxu0
        %v9292 = vadd.f32 %v9179, %v9291
        %9293 = vmatmul.f32.gmra.mxu0 %v886
        %v9294 = vpop.f32.mrf.mxu0
        %v9295 = vadd.f32 %v9182, %v9294
        %9296 = vmatmul.f32.gmra.mxu0 %v894
        %v9297 = vpop.f32.mrf.mxu0
        %v9298 = vadd.f32 %v9185, %v9297
        %9299 = vmatmul.f32.gmra.mxu0 %v902
        %v9300 = vpop.f32.mrf.mxu0
        %v9301 = vadd.f32 %v9188, %v9300
        %9302 = vdwg.mxu0
        %9303 = vmatpush.msra.mxu0 %v1415
        %9304 = vmatpush.msra.mxu0 %v1411
        %9305 = vmatpush.msra.mxu0 %v1407
        %9306 = vmatpush.msra.mxu0 %v1403
        %9307 = vmatpush.msra.mxu0 %v1399
        %9308 = vmatpush.msra.mxu0 %v1395
        %9309 = vmatpush.msra.mxu0 %v1391
        %9310 = vmatpush.msra.mxu0 %v1387
        %9311 = vmatpush.msra.mxu0 %v1383
        %9312 = vmatpush.msra.mxu0 %v1379
        %9313 = vmatpush.msra.mxu0 %v1375
        %9314 = vmatpush.msra.mxu0 %v1371
        %9315 = vmatpush.msra.mxu0 %v1367
        %9316 = vmatpush.msra.mxu0 %v1363
        %9317 = vmatpush.msra.mxu0 %v1359
        %9318 = vmatpush.msra.mxu0 %v1355
        %9319 = vmatmul.f32.gmra.mxu0 %v655
        %v9320 = vpop.f32.mrf.mxu0
        %v9321 = vadd.f32 %v9208, %v9320
        %9322 = vmatmul.f32.gmra.mxu0 %v663
        %v9323 = vpop.f32.mrf.mxu0
        %v9324 = vadd.f32 %v9211, %v9323
        %9325 = vmatmul.f32.gmra.mxu0 %v671
        %v9326 = vpop.f32.mrf.mxu0
        %v9327 = vadd.f32 %v9214, %v9326
        %9328 = vmatmul.f32.gmra.mxu0 %v679
        %v9329 = vpop.f32.mrf.mxu0
        %v9330 = vadd.f32 %v9217, %v9329
        %9331 = vmatmul.f32.gmra.mxu0 %v687
        %v9332 = vpop.f32.mrf.mxu0
        %v9333 = vadd.f32 %v9220, %v9332
        %9334 = vmatmul.f32.gmra.mxu0 %v695
        %v9335 = vpop.f32.mrf.mxu0
        %v9336 = vadd.f32 %v9223, %v9335
        %9337 = vmatmul.f32.gmra.mxu0 %v703
        %v9338 = vpop.f32.mrf.mxu0
        %v9339 = vadd.f32 %v9226, %v9338
        %9340 = vmatmul.f32.gmra.mxu0 %v711
        %v9341 = vpop.f32.mrf.mxu0
        %v9342 = vadd.f32 %v9229, %v9341
        %9343 = vmatmul.f32.gmra.mxu0 %v719
        %v9344 = vpop.f32.mrf.mxu0
        %v9345 = vadd.f32 %v9232, %v9344
        %9346 = vmatmul.f32.gmra.mxu0 %v727
        %v9347 = vpop.f32.mrf.mxu0
        %v9348 = vadd.f32 %v9235, %v9347
        %9349 = vmatmul.f32.gmra.mxu0 %v735
        %v9350 = vpop.f32.mrf.mxu0
        %v9351 = vadd.f32 %v9238, %v9350
        %9352 = vmatmul.f32.gmra.mxu0 %v743
        %v9353 = vpop.f32.mrf.mxu0
        %v9354 = vadd.f32 %v9241, %v9353
        %9355 = vmatmul.f32.gmra.mxu0 %v751
        %v9356 = vpop.f32.mrf.mxu0
        %v9357 = vadd.f32 %v9244, %v9356
        %9358 = vmatmul.f32.gmra.mxu0 %v759
        %v9359 = vpop.f32.mrf.mxu0
        %v9360 = vadd.f32 %v9247, %v9359
        %9361 = vmatmul.f32.gmra.mxu0 %v767
        %v9362 = vpop.f32.mrf.mxu0
        %v9363 = vadd.f32 %v9250, %v9362
        %9364 = vmatmul.f32.gmra.mxu0 %v775
        %v9365 = vpop.f32.mrf.mxu0
        %v9366 = vadd.f32 %v9253, %v9365
        %9367 = vmatmul.f32.gmra.mxu0 %v783
        %v9368 = vpop.f32.mrf.mxu0
        %v9369 = vadd.f32 %v9256, %v9368
        %9370 = vmatmul.f32.gmra.mxu0 %v791
        %v9371 = vpop.f32.mrf.mxu0
        %v9372 = vadd.f32 %v9259, %v9371
        %9373 = vmatmul.f32.gmra.mxu0 %v799
        %v9374 = vpop.f32.mrf.mxu0
        %v9375 = vadd.f32 %v9262, %v9374
        %9376 = vmatmul.f32.gmra.mxu0 %v807
        %v9377 = vpop.f32.mrf.mxu0
        %v9378 = vadd.f32 %v9265, %v9377
        %9379 = vmatmul.f32.gmra.mxu0 %v815
        %v9380 = vpop.f32.mrf.mxu0
        %v9381 = vadd.f32 %v9268, %v9380
        %9382 = vmatmul.f32.gmra.mxu0 %v823
        %v9383 = vpop.f32.mrf.mxu0
        %v9384 = vadd.f32 %v9271, %v9383
        %9385 = vmatmul.f32.gmra.mxu0 %v831
        %v9386 = vpop.f32.mrf.mxu0
        %v9387 = vadd.f32 %v9274, %v9386
        %9388 = vmatmul.f32.gmra.mxu0 %v839
        %v9389 = vpop.f32.mrf.mxu0
        %v9390 = vadd.f32 %v9277, %v9389
        %9391 = vmatmul.f32.gmra.mxu0 %v847
        %v9392 = vpop.f32.mrf.mxu0
        %v9393 = vadd.f32 %v9280, %v9392
        %9394 = vmatmul.f32.gmra.mxu0 %v855
        %v9395 = vpop.f32.mrf.mxu0
        %v9396 = vadd.f32 %v9283, %v9395
        %9397 = vmatmul.f32.gmra.mxu0 %v863
        %v9398 = vpop.f32.mrf.mxu0
        %v9399 = vadd.f32 %v9286, %v9398
        %9400 = vmatmul.f32.gmra.mxu0 %v871
        %v9401 = vpop.f32.mrf.mxu0
        %v9402 = vadd.f32 %v9289, %v9401
        %9403 = vmatmul.f32.gmra.mxu0 %v879
        %v9404 = vpop.f32.mrf.mxu0
        %v9405 = vadd.f32 %v9292, %v9404
        %9406 = vmatmul.f32.gmra.mxu0 %v887
        %v9407 = vpop.f32.mrf.mxu0
        %v9408 = vadd.f32 %v9295, %v9407
        %9409 = vmatmul.f32.gmra.mxu0 %v895
        %v9410 = vpop.f32.mrf.mxu0
        %v9411 = vadd.f32 %v9298, %v9410
        %9412 = vmatmul.f32.gmra.mxu0 %v903
        %v9413 = vpop.f32.mrf.mxu0
        %v9414 = vadd.f32 %v9301, %v9413
        %9415 = vdwg.mxu0
        %p9416 = scmp.eq.s32.totalorder %s34, 0
        // Predicated region
        $region53: #{tpu_custom_call.1} parent=35 // pred_check
          %p9417 = pneg %p9416
        $region54: #{tpu_custom_call.1} parent=35 // pred_check_branch
          %9419 = sbr.rel (%p9417) target = $region56
        $region55: #{tpu_custom_call.1} parent=35 // pred_region
          %9420 = vst [vmem:[%s573] sm:$0xff] %v6609
          %9421 = vst [vmem:[%s573 + $0x8] sm:$0xff] %v7513
          %9422 = vst [vmem:[%s573 + $0x10] sm:$0xff] %v8417
          %9423 = vst [vmem:[%s573 + $0x18] sm:$0xff] %v9321
          %9424 = vst [vmem:[%s573 + $0x20] sm:$0xff] %v6612
          %9425 = vst [vmem:[%s573 + $0x28] sm:$0xff] %v7516
          %9426 = vst [vmem:[%s573 + $0x30] sm:$0xff] %v8420
          %9427 = vst [vmem:[%s573 + $0x38] sm:$0xff] %v9324
          %9428 = vst [vmem:[%s573 + $0x40] sm:$0xff] %v6615
          %9429 = vst [vmem:[%s573 + $0x48] sm:$0xff] %v7519
          %9430 = vst [vmem:[%s573 + $0x50] sm:$0xff] %v8423
          %9431 = vst [vmem:[%s573 + $0x58] sm:$0xff] %v9327
          %9432 = vst [vmem:[%s573 + $0x60] sm:$0xff] %v6618
          %9433 = vst [vmem:[%s573 + $0x68] sm:$0xff] %v7522
          %9434 = vst [vmem:[%s573 + $0x70] sm:$0xff] %v8426
          %9435 = vst [vmem:[%s573 + $0x78] sm:$0xff] %v9330
          %9436 = vst [vmem:[%s573 + $0x80] sm:$0xff] %v6621
          %9437 = vst [vmem:[%s573 + $0x88] sm:$0xff] %v7525
          %9438 = vst [vmem:[%s573 + $0x90] sm:$0xff] %v8429
          %9439 = vst [vmem:[%s573 + $0x98] sm:$0xff] %v9333
          %9440 = vst [vmem:[%s573 + $0xa0] sm:$0xff] %v6624
          %9441 = vst [vmem:[%s573 + $0xa8] sm:$0xff] %v7528
          %9442 = vst [vmem:[%s573 + $0xb0] sm:$0xff] %v8432
          %9443 = vst [vmem:[%s573 + $0xb8] sm:$0xff] %v9336
          %9444 = vst [vmem:[%s573 + $0xc0] sm:$0xff] %v6627
          %9445 = vst [vmem:[%s573 + $0xc8] sm:$0xff] %v7531
          %9446 = vst [vmem:[%s573 + $0xd0] sm:$0xff] %v8435
          %9447 = vst [vmem:[%s573 + $0xd8] sm:$0xff] %v9339
          %9448 = vst [vmem:[%s573 + $0xe0] sm:$0xff] %v6630
          %9449 = vst [vmem:[%s573 + $0xe8] sm:$0xff] %v7534
          %9450 = vst [vmem:[%s573 + $0xf0] sm:$0xff] %v8438
          %9451 = vst [vmem:[%s573 + $0xf8] sm:$0xff] %v9342
          %9452 = vst [vmem:[%s573 + $0x100] sm:$0xff] %v6633
          %9453 = vst [vmem:[%s573 + $0x108] sm:$0xff] %v7537
          %9454 = vst [vmem:[%s573 + $0x110] sm:$0xff] %v8441
          %9455 = vst [vmem:[%s573 + $0x118] sm:$0xff] %v9345
          %9456 = vst [vmem:[%s573 + $0x120] sm:$0xff] %v6636
          %9457 = vst [vmem:[%s573 + $0x128] sm:$0xff] %v7540
          %9458 = vst [vmem:[%s573 + $0x130] sm:$0xff] %v8444
          %9459 = vst [vmem:[%s573 + $0x138] sm:$0xff] %v9348
          %9460 = vst [vmem:[%s573 + $0x140] sm:$0xff] %v6639
          %9461 = vst [vmem:[%s573 + $0x148] sm:$0xff] %v7543
          %9462 = vst [vmem:[%s573 + $0x150] sm:$0xff] %v8447
          %9463 = vst [vmem:[%s573 + $0x158] sm:$0xff] %v9351
          %9464 = vst [vmem:[%s573 + $0x160] sm:$0xff] %v6642
          %9465 = vst [vmem:[%s573 + $0x168] sm:$0xff] %v7546
          %9466 = vst [vmem:[%s573 + $0x170] sm:$0xff] %v8450
          %9467 = vst [vmem:[%s573 + $0x178] sm:$0xff] %v9354
          %9468 = vst [vmem:[%s573 + $0x180] sm:$0xff] %v6645
          %9469 = vst [vmem:[%s573 + $0x188] sm:$0xff] %v7549
          %9470 = vst [vmem:[%s573 + $0x190] sm:$0xff] %v8453
          %9471 = vst [vmem:[%s573 + $0x198] sm:$0xff] %v9357
          %9472 = vst [vmem:[%s573 + $0x1a0] sm:$0xff] %v6648
          %9473 = vst [vmem:[%s573 + $0x1a8] sm:$0xff] %v7552
          %9474 = vst [vmem:[%s573 + $0x1b0] sm:$0xff] %v8456
          %9475 = vst [vmem:[%s573 + $0x1b8] sm:$0xff] %v9360
          %9476 = vst [vmem:[%s573 + $0x1c0] sm:$0xff] %v6651
          %9477 = vst [vmem:[%s573 + $0x1c8] sm:$0xff] %v7555
          %9478 = vst [vmem:[%s573 + $0x1d0] sm:$0xff] %v8459
          %9479 = vst [vmem:[%s573 + $0x1d8] sm:$0xff] %v9363
          %9480 = vst [vmem:[%s573 + $0x1e0] sm:$0xff] %v6654
          %9481 = vst [vmem:[%s573 + $0x1e8] sm:$0xff] %v7558
          %9482 = vst [vmem:[%s573 + $0x1f0] sm:$0xff] %v8462
          %9483 = vst [vmem:[%s573 + $0x1f8] sm:$0xff] %v9366
          %9484 = vst [vmem:[%s573 + $0x200] sm:$0xff] %v6657
          %9485 = vst [vmem:[%s573 + $0x208] sm:$0xff] %v7561
          %9486 = vst [vmem:[%s573 + $0x210] sm:$0xff] %v8465
          %9487 = vst [vmem:[%s573 + $0x218] sm:$0xff] %v9369
          %9488 = vst [vmem:[%s573 + $0x220] sm:$0xff] %v6660
          %9489 = vst [vmem:[%s573 + $0x228] sm:$0xff] %v7564
          %9490 = vst [vmem:[%s573 + $0x230] sm:$0xff] %v8468
          %9491 = vst [vmem:[%s573 + $0x238] sm:$0xff] %v9372
          %9492 = vst [vmem:[%s573 + $0x240] sm:$0xff] %v6663
          %9493 = vst [vmem:[%s573 + $0x248] sm:$0xff] %v7567
          %9494 = vst [vmem:[%s573 + $0x250] sm:$0xff] %v8471
          %9495 = vst [vmem:[%s573 + $0x258] sm:$0xff] %v9375
          %9496 = vst [vmem:[%s573 + $0x260] sm:$0xff] %v6666
          %9497 = vst [vmem:[%s573 + $0x268] sm:$0xff] %v7570
          %9498 = vst [vmem:[%s573 + $0x270] sm:$0xff] %v8474
          %9499 = vst [vmem:[%s573 + $0x278] sm:$0xff] %v9378
          %9500 = vst [vmem:[%s573 + $0x280] sm:$0xff] %v6669
          %9501 = vst [vmem:[%s573 + $0x288] sm:$0xff] %v7573
          %9502 = vst [vmem:[%s573 + $0x290] sm:$0xff] %v8477
          %9503 = vst [vmem:[%s573 + $0x298] sm:$0xff] %v9381
          %9504 = vst [vmem:[%s573 + $0x2a0] sm:$0xff] %v6672
          %9505 = vst [vmem:[%s573 + $0x2a8] sm:$0xff] %v7576
          %9506 = vst [vmem:[%s573 + $0x2b0] sm:$0xff] %v8480
          %9507 = vst [vmem:[%s573 + $0x2b8] sm:$0xff] %v9384
          %9508 = vst [vmem:[%s573 + $0x2c0] sm:$0xff] %v6675
          %9509 = vst [vmem:[%s573 + $0x2c8] sm:$0xff] %v7579
          %9510 = vst [vmem:[%s573 + $0x2d0] sm:$0xff] %v8483
          %9511 = vst [vmem:[%s573 + $0x2d8] sm:$0xff] %v9387
          %9512 = vst [vmem:[%s573 + $0x2e0] sm:$0xff] %v6678
          %9513 = vst [vmem:[%s573 + $0x2e8] sm:$0xff] %v7582
          %9514 = vst [vmem:[%s573 + $0x2f0] sm:$0xff] %v8486
          %9515 = vst [vmem:[%s573 + $0x2f8] sm:$0xff] %v9390
          %9516 = vst [vmem:[%s573 + $0x300] sm:$0xff] %v6681
          %9517 = vst [vmem:[%s573 + $0x308] sm:$0xff] %v7585
          %9518 = vst [vmem:[%s573 + $0x310] sm:$0xff] %v8489
          %9519 = vst [vmem:[%s573 + $0x318] sm:$0xff] %v9393
          %9520 = vst [vmem:[%s573 + $0x320] sm:$0xff] %v6684
          %9521 = vst [vmem:[%s573 + $0x328] sm:$0xff] %v7588
          %9522 = vst [vmem:[%s573 + $0x330] sm:$0xff] %v8492
          %9523 = vst [vmem:[%s573 + $0x338] sm:$0xff] %v9396
          %9524 = vst [vmem:[%s573 + $0x340] sm:$0xff] %v6687
          %9525 = vst [vmem:[%s573 + $0x348] sm:$0xff] %v7591
          %9526 = vst [vmem:[%s573 + $0x350] sm:$0xff] %v8495
          %9527 = vst [vmem:[%s573 + $0x358] sm:$0xff] %v9399
          %9528 = vst [vmem:[%s573 + $0x360] sm:$0xff] %v6690
          %9529 = vst [vmem:[%s573 + $0x368] sm:$0xff] %v7594
          %9530 = vst [vmem:[%s573 + $0x370] sm:$0xff] %v8498
          %9531 = vst [vmem:[%s573 + $0x378] sm:$0xff] %v9402
          %9532 = vst [vmem:[%s573 + $0x380] sm:$0xff] %v6693
          %9533 = vst [vmem:[%s573 + $0x388] sm:$0xff] %v7597
          %9534 = vst [vmem:[%s573 + $0x390] sm:$0xff] %v8501
          %9535 = vst [vmem:[%s573 + $0x398] sm:$0xff] %v9405
          %9536 = vst [vmem:[%s573 + $0x3a0] sm:$0xff] %v6696
          %9537 = vst [vmem:[%s573 + $0x3a8] sm:$0xff] %v7600
          %9538 = vst [vmem:[%s573 + $0x3b0] sm:$0xff] %v8504
          %9539 = vst [vmem:[%s573 + $0x3b8] sm:$0xff] %v9408
          %9540 = vst [vmem:[%s573 + $0x3c0] sm:$0xff] %v6699
          %9541 = vst [vmem:[%s573 + $0x3c8] sm:$0xff] %v7603
          %9542 = vst [vmem:[%s573 + $0x3d0] sm:$0xff] %v8507
          %9543 = vst [vmem:[%s573 + $0x3d8] sm:$0xff] %v9411
          %9544 = vst [vmem:[%s573 + $0x3e0] sm:$0xff] %v6702
          %9545 = vst [vmem:[%s573 + $0x3e8] sm:$0xff] %v7606
          %9546 = vst [vmem:[%s573 + $0x3f0] sm:$0xff] %v8510
          %9547 = vst [vmem:[%s573 + $0x3f8] sm:$0xff] %v9414
        $region56: #{tpu_custom_call.1} parent=35 // pred_fallthru
          _
        %p9548 = scmp.ne.s32.totalorder %s34, 0
        // Predicated region
        $region57: #{tpu_custom_call.1} parent=35 // pred_check
          %p9549 = pneg %p9548
        $region58: #{tpu_custom_call.1} parent=35 // pred_check_branch
          %9551 = sbr.rel (%p9549) target = $region60
        $region59: #{tpu_custom_call.1} parent=35 // pred_region
          %v9552 = vld [vmem:[%s573] sm:$0xff]
          %v9553 = vld [vmem:[%s573 + $0x8] sm:$0xff]
          %v9554 = vld [vmem:[%s573 + $0x10] sm:$0xff]
          %v9555 = vld [vmem:[%s573 + $0x18] sm:$0xff]
          %v9556 = vld [vmem:[%s573 + $0x20] sm:$0xff]
          %v9557 = vld [vmem:[%s573 + $0x28] sm:$0xff]
          %v9558 = vld [vmem:[%s573 + $0x30] sm:$0xff]
          %v9559 = vld [vmem:[%s573 + $0x38] sm:$0xff]
          %v9560 = vld [vmem:[%s573 + $0x40] sm:$0xff]
          %v9561 = vld [vmem:[%s573 + $0x48] sm:$0xff]
          %v9562 = vld [vmem:[%s573 + $0x50] sm:$0xff]
          %v9563 = vld [vmem:[%s573 + $0x58] sm:$0xff]
          %v9564 = vld [vmem:[%s573 + $0x60] sm:$0xff]
          %v9565 = vld [vmem:[%s573 + $0x68] sm:$0xff]
          %v9566 = vld [vmem:[%s573 + $0x70] sm:$0xff]
          %v9567 = vld [vmem:[%s573 + $0x78] sm:$0xff]
          %v9568 = vld [vmem:[%s573 + $0x80] sm:$0xff]
          %v9569 = vld [vmem:[%s573 + $0x88] sm:$0xff]
          %v9570 = vld [vmem:[%s573 + $0x90] sm:$0xff]
          %v9571 = vld [vmem:[%s573 + $0x98] sm:$0xff]
          %v9572 = vld [vmem:[%s573 + $0xa0] sm:$0xff]
          %v9573 = vld [vmem:[%s573 + $0xa8] sm:$0xff]
          %v9574 = vld [vmem:[%s573 + $0xb0] sm:$0xff]
          %v9575 = vld [vmem:[%s573 + $0xb8] sm:$0xff]
          %v9576 = vld [vmem:[%s573 + $0xc0] sm:$0xff]
          %v9577 = vld [vmem:[%s573 + $0xc8] sm:$0xff]
          %v9578 = vld [vmem:[%s573 + $0xd0] sm:$0xff]
          %v9579 = vld [vmem:[%s573 + $0xd8] sm:$0xff]
          %v9580 = vld [vmem:[%s573 + $0xe0] sm:$0xff]
          %v9581 = vld [vmem:[%s573 + $0xe8] sm:$0xff]
          %v9582 = vld [vmem:[%s573 + $0xf0] sm:$0xff]
          %v9583 = vld [vmem:[%s573 + $0xf8] sm:$0xff]
          %v9584 = vld [vmem:[%s573 + $0x100] sm:$0xff]
          %v9585 = vld [vmem:[%s573 + $0x108] sm:$0xff]
          %v9586 = vld [vmem:[%s573 + $0x110] sm:$0xff]
          %v9587 = vld [vmem:[%s573 + $0x118] sm:$0xff]
          %v9588 = vld [vmem:[%s573 + $0x120] sm:$0xff]
          %v9589 = vld [vmem:[%s573 + $0x128] sm:$0xff]
          %v9590 = vld [vmem:[%s573 + $0x130] sm:$0xff]
          %v9591 = vld [vmem:[%s573 + $0x138] sm:$0xff]
          %v9592 = vld [vmem:[%s573 + $0x140] sm:$0xff]
          %v9593 = vld [vmem:[%s573 + $0x148] sm:$0xff]
          %v9594 = vld [vmem:[%s573 + $0x150] sm:$0xff]
          %v9595 = vld [vmem:[%s573 + $0x158] sm:$0xff]
          %v9596 = vld [vmem:[%s573 + $0x160] sm:$0xff]
          %v9597 = vld [vmem:[%s573 + $0x168] sm:$0xff]
          %v9598 = vld [vmem:[%s573 + $0x170] sm:$0xff]
          %v9599 = vld [vmem:[%s573 + $0x178] sm:$0xff]
          %v9600 = vld [vmem:[%s573 + $0x180] sm:$0xff]
          %v9601 = vld [vmem:[%s573 + $0x188] sm:$0xff]
          %v9602 = vld [vmem:[%s573 + $0x190] sm:$0xff]
          %v9603 = vld [vmem:[%s573 + $0x198] sm:$0xff]
          %v9604 = vld [vmem:[%s573 + $0x1a0] sm:$0xff]
          %v9605 = vld [vmem:[%s573 + $0x1a8] sm:$0xff]
          %v9606 = vld [vmem:[%s573 + $0x1b0] sm:$0xff]
          %v9607 = vld [vmem:[%s573 + $0x1b8] sm:$0xff]
          %v9608 = vld [vmem:[%s573 + $0x1c0] sm:$0xff]
          %v9609 = vld [vmem:[%s573 + $0x1c8] sm:$0xff]
          %v9610 = vld [vmem:[%s573 + $0x1d0] sm:$0xff]
          %v9611 = vld [vmem:[%s573 + $0x1d8] sm:$0xff]
          %v9612 = vld [vmem:[%s573 + $0x1e0] sm:$0xff]
          %v9613 = vld [vmem:[%s573 + $0x1e8] sm:$0xff]
          %v9614 = vld [vmem:[%s573 + $0x1f0] sm:$0xff]
          %v9615 = vld [vmem:[%s573 + $0x1f8] sm:$0xff]
          %v9616 = vld [vmem:[%s573 + $0x200] sm:$0xff]
          %v9617 = vld [vmem:[%s573 + $0x208] sm:$0xff]
          %v9618 = vld [vmem:[%s573 + $0x210] sm:$0xff]
          %v9619 = vld [vmem:[%s573 + $0x218] sm:$0xff]
          %v9620 = vld [vmem:[%s573 + $0x220] sm:$0xff]
          %v9621 = vld [vmem:[%s573 + $0x228] sm:$0xff]
          %v9622 = vld [vmem:[%s573 + $0x230] sm:$0xff]
          %v9623 = vld [vmem:[%s573 + $0x238] sm:$0xff]
          %v9624 = vld [vmem:[%s573 + $0x240] sm:$0xff]
          %v9625 = vld [vmem:[%s573 + $0x248] sm:$0xff]
          %v9626 = vld [vmem:[%s573 + $0x250] sm:$0xff]
          %v9627 = vld [vmem:[%s573 + $0x258] sm:$0xff]
          %v9628 = vld [vmem:[%s573 + $0x260] sm:$0xff]
          %v9629 = vld [vmem:[%s573 + $0x268] sm:$0xff]
          %v9630 = vld [vmem:[%s573 + $0x270] sm:$0xff]
          %v9631 = vld [vmem:[%s573 + $0x278] sm:$0xff]
          %v9632 = vld [vmem:[%s573 + $0x280] sm:$0xff]
          %v9633 = vld [vmem:[%s573 + $0x288] sm:$0xff]
          %v9634 = vld [vmem:[%s573 + $0x290] sm:$0xff]
          %v9635 = vld [vmem:[%s573 + $0x298] sm:$0xff]
          %v9636 = vld [vmem:[%s573 + $0x2a0] sm:$0xff]
          %v9637 = vld [vmem:[%s573 + $0x2a8] sm:$0xff]
          %v9638 = vld [vmem:[%s573 + $0x2b0] sm:$0xff]
          %v9639 = vld [vmem:[%s573 + $0x2b8] sm:$0xff]
          %v9640 = vld [vmem:[%s573 + $0x2c0] sm:$0xff]
          %v9641 = vld [vmem:[%s573 + $0x2c8] sm:$0xff]
          %v9642 = vld [vmem:[%s573 + $0x2d0] sm:$0xff]
          %v9643 = vld [vmem:[%s573 + $0x2d8] sm:$0xff]
          %v9644 = vld [vmem:[%s573 + $0x2e0] sm:$0xff]
          %v9645 = vld [vmem:[%s573 + $0x2e8] sm:$0xff]
          %v9646 = vld [vmem:[%s573 + $0x2f0] sm:$0xff]
          %v9647 = vld [vmem:[%s573 + $0x2f8] sm:$0xff]
          %v9648 = vld [vmem:[%s573 + $0x300] sm:$0xff]
          %v9649 = vld [vmem:[%s573 + $0x308] sm:$0xff]
          %v9650 = vld [vmem:[%s573 + $0x310] sm:$0xff]
          %v9651 = vld [vmem:[%s573 + $0x318] sm:$0xff]
          %v9652 = vld [vmem:[%s573 + $0x320] sm:$0xff]
          %v9653 = vld [vmem:[%s573 + $0x328] sm:$0xff]
          %v9654 = vld [vmem:[%s573 + $0x330] sm:$0xff]
          %v9655 = vld [vmem:[%s573 + $0x338] sm:$0xff]
          %v9656 = vld [vmem:[%s573 + $0x340] sm:$0xff]
          %v9657 = vld [vmem:[%s573 + $0x348] sm:$0xff]
          %v9658 = vld [vmem:[%s573 + $0x350] sm:$0xff]
          %v9659 = vld [vmem:[%s573 + $0x358] sm:$0xff]
          %v9660 = vld [vmem:[%s573 + $0x360] sm:$0xff]
          %v9661 = vld [vmem:[%s573 + $0x368] sm:$0xff]
          %v9662 = vld [vmem:[%s573 + $0x370] sm:$0xff]
          %v9663 = vld [vmem:[%s573 + $0x378] sm:$0xff]
          %v9664 = vld [vmem:[%s573 + $0x380] sm:$0xff]
          %v9665 = vld [vmem:[%s573 + $0x388] sm:$0xff]
          %v9666 = vld [vmem:[%s573 + $0x390] sm:$0xff]
          %v9667 = vld [vmem:[%s573 + $0x398] sm:$0xff]
          %v9668 = vld [vmem:[%s573 + $0x3a0] sm:$0xff]
          %v9669 = vld [vmem:[%s573 + $0x3a8] sm:$0xff]
          %v9670 = vld [vmem:[%s573 + $0x3b0] sm:$0xff]
          %v9671 = vld [vmem:[%s573 + $0x3b8] sm:$0xff]
          %v9672 = vld [vmem:[%s573 + $0x3c0] sm:$0xff]
          %v9673 = vld [vmem:[%s573 + $0x3c8] sm:$0xff]
          %v9674 = vld [vmem:[%s573 + $0x3d0] sm:$0xff]
          %v9675 = vld [vmem:[%s573 + $0x3d8] sm:$0xff]
          %v9676 = vld [vmem:[%s573 + $0x3e0] sm:$0xff]
          %v9677 = vld [vmem:[%s573 + $0x3e8] sm:$0xff]
          %v9678 = vld [vmem:[%s573 + $0x3f0] sm:$0xff]
          %v9679 = vld [vmem:[%s573 + $0x3f8] sm:$0xff]
          %v9680 = vadd.f32 %v9552, %v6609
          %v9681 = vadd.f32 %v9553, %v7513
          %v9682 = vadd.f32 %v9554, %v8417
          %v9683 = vadd.f32 %v9555, %v9321
          %v9684 = vadd.f32 %v9556, %v6612
          %v9685 = vadd.f32 %v9557, %v7516
          %v9686 = vadd.f32 %v9558, %v8420
          %v9687 = vadd.f32 %v9559, %v9324
          %v9688 = vadd.f32 %v9560, %v6615
          %v9689 = vadd.f32 %v9561, %v7519
          %v9690 = vadd.f32 %v9562, %v8423
          %v9691 = vadd.f32 %v9563, %v9327
          %v9692 = vadd.f32 %v9564, %v6618
          %v9693 = vadd.f32 %v9565, %v7522
          %v9694 = vadd.f32 %v9566, %v8426
          %v9695 = vadd.f32 %v9567, %v9330
          %v9696 = vadd.f32 %v9568, %v6621
          %v9697 = vadd.f32 %v9569, %v7525
          %v9698 = vadd.f32 %v9570, %v8429
          %v9699 = vadd.f32 %v9571, %v9333
          %v9700 = vadd.f32 %v9572, %v6624
          %v9701 = vadd.f32 %v9573, %v7528
          %v9702 = vadd.f32 %v9574, %v8432
          %v9703 = vadd.f32 %v9575, %v9336
          %v9704 = vadd.f32 %v9576, %v6627
          %v9705 = vadd.f32 %v9577, %v7531
          %v9706 = vadd.f32 %v9578, %v8435
          %v9707 = vadd.f32 %v9579, %v9339
          %v9708 = vadd.f32 %v9580, %v6630
          %v9709 = vadd.f32 %v9581, %v7534
          %v9710 = vadd.f32 %v9582, %v8438
          %v9711 = vadd.f32 %v9583, %v9342
          %v9712 = vadd.f32 %v9584, %v6633
          %v9713 = vadd.f32 %v9585, %v7537
          %v9714 = vadd.f32 %v9586, %v8441
          %v9715 = vadd.f32 %v9587, %v9345
          %v9716 = vadd.f32 %v9588, %v6636
          %v9717 = vadd.f32 %v9589, %v7540
          %v9718 = vadd.f32 %v9590, %v8444
          %v9719 = vadd.f32 %v9591, %v9348
          %v9720 = vadd.f32 %v9592, %v6639
          %v9721 = vadd.f32 %v9593, %v7543
          %v9722 = vadd.f32 %v9594, %v8447
          %v9723 = vadd.f32 %v9595, %v9351
          %v9724 = vadd.f32 %v9596, %v6642
          %v9725 = vadd.f32 %v9597, %v7546
          %v9726 = vadd.f32 %v9598, %v8450
          %v9727 = vadd.f32 %v9599, %v9354
          %v9728 = vadd.f32 %v9600, %v6645
          %v9729 = vadd.f32 %v9601, %v7549
          %v9730 = vadd.f32 %v9602, %v8453
          %v9731 = vadd.f32 %v9603, %v9357
          %v9732 = vadd.f32 %v9604, %v6648
          %v9733 = vadd.f32 %v9605, %v7552
          %v9734 = vadd.f32 %v9606, %v8456
          %v9735 = vadd.f32 %v9607, %v9360
          %v9736 = vadd.f32 %v9608, %v6651
          %v9737 = vadd.f32 %v9609, %v7555
          %v9738 = vadd.f32 %v9610, %v8459
          %v9739 = vadd.f32 %v9611, %v9363
          %v9740 = vadd.f32 %v9612, %v6654
          %v9741 = vadd.f32 %v9613, %v7558
          %v9742 = vadd.f32 %v9614, %v8462
          %v9743 = vadd.f32 %v9615, %v9366
          %v9744 = vadd.f32 %v9616, %v6657
          %v9745 = vadd.f32 %v9617, %v7561
          %v9746 = vadd.f32 %v9618, %v8465
          %v9747 = vadd.f32 %v9619, %v9369
          %v9748 = vadd.f32 %v9620, %v6660
          %v9749 = vadd.f32 %v9621, %v7564
          %v9750 = vadd.f32 %v9622, %v8468
          %v9751 = vadd.f32 %v9623, %v9372
          %v9752 = vadd.f32 %v9624, %v6663
          %v9753 = vadd.f32 %v9625, %v7567
          %v9754 = vadd.f32 %v9626, %v8471
          %v9755 = vadd.f32 %v9627, %v9375
          %v9756 = vadd.f32 %v9628, %v6666
          %v9757 = vadd.f32 %v9629, %v7570
          %v9758 = vadd.f32 %v9630, %v8474
          %v9759 = vadd.f32 %v9631, %v9378
          %v9760 = vadd.f32 %v9632, %v6669
          %v9761 = vadd.f32 %v9633, %v7573
          %v9762 = vadd.f32 %v9634, %v8477
          %v9763 = vadd.f32 %v9635, %v9381
          %v9764 = vadd.f32 %v9636, %v6672
          %v9765 = vadd.f32 %v9637, %v7576
          %v9766 = vadd.f32 %v9638, %v8480
          %v9767 = vadd.f32 %v9639, %v9384
          %v9768 = vadd.f32 %v9640, %v6675
          %v9769 = vadd.f32 %v9641, %v7579
          %v9770 = vadd.f32 %v9642, %v8483
          %v9771 = vadd.f32 %v9643, %v9387
          %v9772 = vadd.f32 %v9644, %v6678
          %v9773 = vadd.f32 %v9645, %v7582
          %v9774 = vadd.f32 %v9646, %v8486
          %v9775 = vadd.f32 %v9647, %v9390
          %v9776 = vadd.f32 %v9648, %v6681
          %v9777 = vadd.f32 %v9649, %v7585
          %v9778 = vadd.f32 %v9650, %v8489
          %v9779 = vadd.f32 %v9651, %v9393
          %v9780 = vadd.f32 %v9652, %v6684
          %v9781 = vadd.f32 %v9653, %v7588
          %v9782 = vadd.f32 %v9654, %v8492
          %v9783 = vadd.f32 %v9655, %v9396
          %v9784 = vadd.f32 %v9656, %v6687
          %v9785 = vadd.f32 %v9657, %v7591
          %v9786 = vadd.f32 %v9658, %v8495
          %v9787 = vadd.f32 %v9659, %v9399
          %v9788 = vadd.f32 %v9660, %v6690
          %v9789 = vadd.f32 %v9661, %v7594
          %v9790 = vadd.f32 %v9662, %v8498
          %v9791 = vadd.f32 %v9663, %v9402
          %v9792 = vadd.f32 %v9664, %v6693
          %v9793 = vadd.f32 %v9665, %v7597
          %v9794 = vadd.f32 %v9666, %v8501
          %v9795 = vadd.f32 %v9667, %v9405
          %v9796 = vadd.f32 %v9668, %v6696
          %v9797 = vadd.f32 %v9669, %v7600
          %v9798 = vadd.f32 %v9670, %v8504
          %v9799 = vadd.f32 %v9671, %v9408
          %v9800 = vadd.f32 %v9672, %v6699
          %v9801 = vadd.f32 %v9673, %v7603
          %v9802 = vadd.f32 %v9674, %v8507
          %v9803 = vadd.f32 %v9675, %v9411
          %v9804 = vadd.f32 %v9676, %v6702
          %v9805 = vadd.f32 %v9677, %v7606
          %v9806 = vadd.f32 %v9678, %v8510
          %v9807 = vadd.f32 %v9679, %v9414
          %9808 = vst [vmem:[%s573] sm:$0xff] %v9680
          %9809 = vst [vmem:[%s573 + $0x8] sm:$0xff] %v9681
          %9810 = vst [vmem:[%s573 + $0x10] sm:$0xff] %v9682
          %9811 = vst [vmem:[%s573 + $0x18] sm:$0xff] %v9683
          %9812 = vst [vmem:[%s573 + $0x20] sm:$0xff] %v9684
          %9813 = vst [vmem:[%s573 + $0x28] sm:$0xff] %v9685
          %9814 = vst [vmem:[%s573 + $0x30] sm:$0xff] %v9686
          %9815 = vst [vmem:[%s573 + $0x38] sm:$0xff] %v9687
          %9816 = vst [vmem:[%s573 + $0x40] sm:$0xff] %v9688
          %9817 = vst [vmem:[%s573 + $0x48] sm:$0xff] %v9689
          %9818 = vst [vmem:[%s573 + $0x50] sm:$0xff] %v9690
          %9819 = vst [vmem:[%s573 + $0x58] sm:$0xff] %v9691
          %9820 = vst [vmem:[%s573 + $0x60] sm:$0xff] %v9692
          %9821 = vst [vmem:[%s573 + $0x68] sm:$0xff] %v9693
          %9822 = vst [vmem:[%s573 + $0x70] sm:$0xff] %v9694
          %9823 = vst [vmem:[%s573 + $0x78] sm:$0xff] %v9695
          %9824 = vst [vmem:[%s573 + $0x80] sm:$0xff] %v9696
          %9825 = vst [vmem:[%s573 + $0x88] sm:$0xff] %v9697
          %9826 = vst [vmem:[%s573 + $0x90] sm:$0xff] %v9698
          %9827 = vst [vmem:[%s573 + $0x98] sm:$0xff] %v9699
          %9828 = vst [vmem:[%s573 + $0xa0] sm:$0xff] %v9700
          %9829 = vst [vmem:[%s573 + $0xa8] sm:$0xff] %v9701
          %9830 = vst [vmem:[%s573 + $0xb0] sm:$0xff] %v9702
          %9831 = vst [vmem:[%s573 + $0xb8] sm:$0xff] %v9703
          %9832 = vst [vmem:[%s573 + $0xc0] sm:$0xff] %v9704
          %9833 = vst [vmem:[%s573 + $0xc8] sm:$0xff] %v9705
          %9834 = vst [vmem:[%s573 + $0xd0] sm:$0xff] %v9706
          %9835 = vst [vmem:[%s573 + $0xd8] sm:$0xff] %v9707
          %9836 = vst [vmem:[%s573 + $0xe0] sm:$0xff] %v9708
          %9837 = vst [vmem:[%s573 + $0xe8] sm:$0xff] %v9709
          %9838 = vst [vmem:[%s573 + $0xf0] sm:$0xff] %v9710
          %9839 = vst [vmem:[%s573 + $0xf8] sm:$0xff] %v9711
          %9840 = vst [vmem:[%s573 + $0x100] sm:$0xff] %v9712
          %9841 = vst [vmem:[%s573 + $0x108] sm:$0xff] %v9713
          %9842 = vst [vmem:[%s573 + $0x110] sm:$0xff] %v9714
          %9843 = vst [vmem:[%s573 + $0x118] sm:$0xff] %v9715
          %9844 = vst [vmem:[%s573 + $0x120] sm:$0xff] %v9716
          %9845 = vst [vmem:[%s573 + $0x128] sm:$0xff] %v9717
          %9846 = vst [vmem:[%s573 + $0x130] sm:$0xff] %v9718
          %9847 = vst [vmem:[%s573 + $0x138] sm:$0xff] %v9719
          %9848 = vst [vmem:[%s573 + $0x140] sm:$0xff] %v9720
          %9849 = vst [vmem:[%s573 + $0x148] sm:$0xff] %v9721
          %9850 = vst [vmem:[%s573 + $0x150] sm:$0xff] %v9722
          %9851 = vst [vmem:[%s573 + $0x158] sm:$0xff] %v9723
          %9852 = vst [vmem:[%s573 + $0x160] sm:$0xff] %v9724
          %9853 = vst [vmem:[%s573 + $0x168] sm:$0xff] %v9725
          %9854 = vst [vmem:[%s573 + $0x170] sm:$0xff] %v9726
          %9855 = vst [vmem:[%s573 + $0x178] sm:$0xff] %v9727
          %9856 = vst [vmem:[%s573 + $0x180] sm:$0xff] %v9728
          %9857 = vst [vmem:[%s573 + $0x188] sm:$0xff] %v9729
          %9858 = vst [vmem:[%s573 + $0x190] sm:$0xff] %v9730
          %9859 = vst [vmem:[%s573 + $0x198] sm:$0xff] %v9731
          %9860 = vst [vmem:[%s573 + $0x1a0] sm:$0xff] %v9732
          %9861 = vst [vmem:[%s573 + $0x1a8] sm:$0xff] %v9733
          %9862 = vst [vmem:[%s573 + $0x1b0] sm:$0xff] %v9734
          %9863 = vst [vmem:[%s573 + $0x1b8] sm:$0xff] %v9735
          %9864 = vst [vmem:[%s573 + $0x1c0] sm:$0xff] %v9736
          %9865 = vst [vmem:[%s573 + $0x1c8] sm:$0xff] %v9737
          %9866 = vst [vmem:[%s573 + $0x1d0] sm:$0xff] %v9738
          %9867 = vst [vmem:[%s573 + $0x1d8] sm:$0xff] %v9739
          %9868 = vst [vmem:[%s573 + $0x1e0] sm:$0xff] %v9740
          %9869 = vst [vmem:[%s573 + $0x1e8] sm:$0xff] %v9741
          %9870 = vst [vmem:[%s573 + $0x1f0] sm:$0xff] %v9742
          %9871 = vst [vmem:[%s573 + $0x1f8] sm:$0xff] %v9743
          %9872 = vst [vmem:[%s573 + $0x200] sm:$0xff] %v9744
          %9873 = vst [vmem:[%s573 + $0x208] sm:$0xff] %v9745
          %9874 = vst [vmem:[%s573 + $0x210] sm:$0xff] %v9746
          %9875 = vst [vmem:[%s573 + $0x218] sm:$0xff] %v9747
          %9876 = vst [vmem:[%s573 + $0x220] sm:$0xff] %v9748
          %9877 = vst [vmem:[%s573 + $0x228] sm:$0xff] %v9749
          %9878 = vst [vmem:[%s573 + $0x230] sm:$0xff] %v9750
          %9879 = vst [vmem:[%s573 + $0x238] sm:$0xff] %v9751
          %9880 = vst [vmem:[%s573 + $0x240] sm:$0xff] %v9752
          %9881 = vst [vmem:[%s573 + $0x248] sm:$0xff] %v9753
          %9882 = vst [vmem:[%s573 + $0x250] sm:$0xff] %v9754
          %9883 = vst [vmem:[%s573 + $0x258] sm:$0xff] %v9755
          %9884 = vst [vmem:[%s573 + $0x260] sm:$0xff] %v9756
          %9885 = vst [vmem:[%s573 + $0x268] sm:$0xff] %v9757
          %9886 = vst [vmem:[%s573 + $0x270] sm:$0xff] %v9758
          %9887 = vst [vmem:[%s573 + $0x278] sm:$0xff] %v9759
          %9888 = vst [vmem:[%s573 + $0x280] sm:$0xff] %v9760
          %9889 = vst [vmem:[%s573 + $0x288] sm:$0xff] %v9761
          %9890 = vst [vmem:[%s573 + $0x290] sm:$0xff] %v9762
          %9891 = vst [vmem:[%s573 + $0x298] sm:$0xff] %v9763
          %9892 = vst [vmem:[%s573 + $0x2a0] sm:$0xff] %v9764
          %9893 = vst [vmem:[%s573 + $0x2a8] sm:$0xff] %v9765
          %9894 = vst [vmem:[%s573 + $0x2b0] sm:$0xff] %v9766
          %9895 = vst [vmem:[%s573 + $0x2b8] sm:$0xff] %v9767
          %9896 = vst [vmem:[%s573 + $0x2c0] sm:$0xff] %v9768
          %9897 = vst [vmem:[%s573 + $0x2c8] sm:$0xff] %v9769
          %9898 = vst [vmem:[%s573 + $0x2d0] sm:$0xff] %v9770
          %9899 = vst [vmem:[%s573 + $0x2d8] sm:$0xff] %v9771
          %9900 = vst [vmem:[%s573 + $0x2e0] sm:$0xff] %v9772
          %9901 = vst [vmem:[%s573 + $0x2e8] sm:$0xff] %v9773
          %9902 = vst [vmem:[%s573 + $0x2f0] sm:$0xff] %v9774
          %9903 = vst [vmem:[%s573 + $0x2f8] sm:$0xff] %v9775
          %9904 = vst [vmem:[%s573 + $0x300] sm:$0xff] %v9776
          %9905 = vst [vmem:[%s573 + $0x308] sm:$0xff] %v9777
          %9906 = vst [vmem:[%s573 + $0x310] sm:$0xff] %v9778
          %9907 = vst [vmem:[%s573 + $0x318] sm:$0xff] %v9779
          %9908 = vst [vmem:[%s573 + $0x320] sm:$0xff] %v9780
          %9909 = vst [vmem:[%s573 + $0x328] sm:$0xff] %v9781
          %9910 = vst [vmem:[%s573 + $0x330] sm:$0xff] %v9782
          %9911 = vst [vmem:[%s573 + $0x338] sm:$0xff] %v9783
          %9912 = vst [vmem:[%s573 + $0x340] sm:$0xff] %v9784
          %9913 = vst [vmem:[%s573 + $0x348] sm:$0xff] %v9785
          %9914 = vst [vmem:[%s573 + $0x350] sm:$0xff] %v9786
          %9915 = vst [vmem:[%s573 + $0x358] sm:$0xff] %v9787
          %9916 = vst [vmem:[%s573 + $0x360] sm:$0xff] %v9788
          %9917 = vst [vmem:[%s573 + $0x368] sm:$0xff] %v9789
          %9918 = vst [vmem:[%s573 + $0x370] sm:$0xff] %v9790
          %9919 = vst [vmem:[%s573 + $0x378] sm:$0xff] %v9791
          %9920 = vst [vmem:[%s573 + $0x380] sm:$0xff] %v9792
          %9921 = vst [vmem:[%s573 + $0x388] sm:$0xff] %v9793
          %9922 = vst [vmem:[%s573 + $0x390] sm:$0xff] %v9794
          %9923 = vst [vmem:[%s573 + $0x398] sm:$0xff] %v9795
          %9924 = vst [vmem:[%s573 + $0x3a0] sm:$0xff] %v9796
          %9925 = vst [vmem:[%s573 + $0x3a8] sm:$0xff] %v9797
          %9926 = vst [vmem:[%s573 + $0x3b0] sm:$0xff] %v9798
          %9927 = vst [vmem:[%s573 + $0x3b8] sm:$0xff] %v9799
          %9928 = vst [vmem:[%s573 + $0x3c0] sm:$0xff] %v9800
          %9929 = vst [vmem:[%s573 + $0x3c8] sm:$0xff] %v9801
          %9930 = vst [vmem:[%s573 + $0x3d0] sm:$0xff] %v9802
          %9931 = vst [vmem:[%s573 + $0x3d8] sm:$0xff] %v9803
          %9932 = vst [vmem:[%s573 + $0x3e0] sm:$0xff] %v9804
          %9933 = vst [vmem:[%s573 + $0x3e8] sm:$0xff] %v9805
          %9934 = vst [vmem:[%s573 + $0x3f0] sm:$0xff] %v9806
          %9935 = vst [vmem:[%s573 + $0x3f8] sm:$0xff] %v9807
        $region60: #{tpu_custom_call.1} parent=35 // pred_fallthru
          _
        %s9936 = sand.u32 %s296, 1
        %s9937 = scalar_lea.sflag [#allocation4], %s9936
        %s9938 = sand.u32 %s296, 1
        %s9939 = smul.addr %s9938, 1024
        %s9940 = scalar_lea.vmem [#allocation10], %s9939
        // Predicated region
        $region61: #{tpu_custom_call.1} parent=35 // pred_check
          %p9941 = pneg %p306
        $region62: #{tpu_custom_call.1} parent=35 // pred_check_branch
          %9943 = sbr.rel (%p9941) target = $region64
        $region63: #{tpu_custom_call.1} parent=35 // pred_region
          %s9944 = smul.u32 32, %s32
          %s9945 = smul.u32 4, %s33
          %9947 = vsyncadd %s9937, 0
          %s9948 = smul.addr %s9944, 4
          %s9949 = sadd.s32 %s9945, %s9948
          %s9950 = smul.addr %s9949, 8
          %s9951 = scalar_lea.hbm %s4, %s9950
          %s9952 = sshll.u32 %s9940, 4
          %s9953 = int_to_ptr.vmem [resolvable:$true] %s9952
          %s9954 = sshll.u32 %s9951, 4
          %s9955 = int_to_ptr.hbm [resolvable:$true] %s9954
          %9960 = dma.vmem_to_hbm [thread:$0]  %s9953, 16384, %s9955, %s9937, 512, 512, 32
        $region64: #{tpu_custom_call.1} parent=35 // pred_fallthru
          _
      $region36: #{tpu_custom_call.1} parent=5 // pred_fallthru
        _
      %p9961 = scmp.le.s32.totalorder 2, %s22
      // Predicated region
      $region65: #{tpu_custom_call.1} parent=5 // pred_check
        %p9962 = pneg %p9961
      $region66: #{tpu_custom_call.1} parent=5 // pred_check_branch
        %9964 = sbr.rel (%p9962) target = $region68
      $region67: #{tpu_custom_call.1} parent=5 // pred_region
        %s9965 = ssub.s32 %s22, 2
        // Predicated region
        $region69: #{tpu_custom_call.1} parent=67 // pred_check
          %p9966 = pneg %p312
        $region70: #{tpu_custom_call.1} parent=67 // pred_check_branch
          %9968 = sbr.rel (%p9966) target = $region72
        $region71: #{tpu_custom_call.1} parent=67 // pred_region
          %s9969 = sand.u32 %s297, 1
          %s9970 = scalar_lea.sflag [#allocation4], %s9969
          %s9971 = sand.u32 %s297, 1
          %s9972 = smul.addr %s9971, 1024
          %s9973 = scalar_lea.vmem [#allocation10], %s9972
          %9975 = dma.done %s9970, 16384
        $region72: #{tpu_custom_call.1} parent=67 // pred_fallthru
          _
      $region68: #{tpu_custom_call.1} parent=5 // pred_fallthru
        _
    $region6: #{tpu_custom_call.1} parent=1 // loop_footer
      %s26 = sadd.s32 1, %s22
    $region7: #{tpu_custom_call.1} parent=1 // loop_footer_branch
      %21 = sbr.rel target = $region3
    $region8: #{tpu_custom_call.1} parent=1 // loop_exit
      _
    %9976 = vsyncpa [#allocation3], 1
    %s9977 = scalar_lea.sflag [#allocation3], 1
    %9978 = vsyncpa %s9977, 1
    %9979 = vsyncpa [#allocation6], 1
    %s9980 = scalar_lea.sflag [#allocation6], 1
    %9981 = vsyncpa %s9980, 1
    %9982 = vsyncpa [#allocation9], 1
    %s9983 = scalar_lea.sflag [#allocation9], 1
    %9984 = vsyncpa %s9983, 1
    %9985 = vsyncpa [#allocation4], 1
    %s9986 = scalar_lea.sflag [#allocation4], 1
    %9987 = vsyncpa %s9986, 1

</llo_original>
